<compile_context>
chip_gen: v7x
topology: tpu7x:2x2x1
jax: 0.10.0
libtpu: 0.0.40
codegen_flags: <defaults>
</compile_context>

<pallas_src>
import functools
import jax
import jax.numpy as jnp
from jax.experimental import pallas as pl
from jax.experimental.pallas import tpu as pltpu


# ---------------------------------------------------------------------------
# 1) Bidirectional GRU layer, one kernel per layer.
#    grid=(2,) over direction ("parallel"); per direction:
#      - hoisted fused-gate input projection: gi[t] = x[t] @ Wih(3H) + bih
#      - serial recurrence over S inside an unrolled fori_loop:
#          gh = h @ Whh(3H) + bhh
#          r = sig(gi_r+gh_r); z = sig(gi_z+gh_z); n = tanh(gi_n + r*gh_n)
#          h' = (1-z)*n + z*h
#      - backward direction uses time index S-1-t for both read and write.
# ---------------------------------------------------------------------------
def _bigru_layer_kernel(x_ref, wih_ref, whh_ref, bih_ref, bhh_ref, y_ref,
                        gi_scr, y_scr):
    d = pl.program_id(0)                      # 0 = forward, 1 = backward
    S = x_ref.shape[0]
    B = x_ref.shape[1]
    H = whh_ref.shape[1]

    wih = wih_ref[0]                          # (Din, 3H)
    whh = whh_ref[0]                          # (H, 3H)
    bih = bih_ref[0]                          # (1, 3H)
    bhh = bhh_ref[0]                          # (1, 3H)

    # Hoisted input projections: independent of h, off the serial critical path.
    for t in range(S):                        # static, fully unrolled
        gi_scr[t] = jnp.dot(x_ref[t], wih,
                            preferred_element_type=jnp.float32) + bih

    def step(t, h):
        tt = jnp.where(d == 0, t, S - 1 - t)  # reversed time for backward dir
        gi = gi_scr[tt]                       # (B, 3H)
        gh = jnp.dot(h, whh, preferred_element_type=jnp.float32) + bhh
        r = jax.nn.sigmoid(gi[:, 0:H] + gh[:, 0:H])
        z = jax.nn.sigmoid(gi[:, H:2 * H] + gh[:, H:2 * H])
        n = jnp.tanh(gi[:, 2 * H:3 * H] + r * gh[:, 2 * H:3 * H])
        h_new = (1.0 - z) * n + z * h
        y_scr[tt] = h_new
        return h_new

    _ = jax.lax.fori_loop(0, S, step, jnp.zeros((B, H), jnp.float32),
                          unroll=True)
    y_ref[0] = y_scr[...]


def bigru_layer(x_tbd, wih, whh, bih, bhh):
    # x_tbd: (S, B, Din) time-major.
    # wih: (2, Din, 3H), whh: (2, H, 3H), bih/bhh: (2, 1, 3H)  (dir 0=fwd, 1=bwd)
    # Returns (S, B, 2H) time-major (fwd | bwd concatenated on features).
    S, B, Din = x_tbd.shape
    H = whh.shape[1]
    y = pl.pallas_call(
        _bigru_layer_kernel,
        out_shape=jax.ShapeDtypeStruct((2, S, B, H), jnp.float32),
        grid=(2,),
        in_specs=[
            pl.BlockSpec((S, B, Din), lambda d: (0, 0, 0)),
            pl.BlockSpec((1, Din, 3 * H), lambda d: (d, 0, 0)),
            pl.BlockSpec((1, H, 3 * H), lambda d: (d, 0, 0)),
            pl.BlockSpec((1, 1, 3 * H), lambda d: (d, 0, 0)),
            pl.BlockSpec((1, 1, 3 * H), lambda d: (d, 0, 0)),
        ],
        out_specs=pl.BlockSpec((1, S, B, H), lambda d: (d, 0, 0, 0)),
        scratch_shapes=[pltpu.VMEM((S, B, 3 * H), jnp.float32),
                        pltpu.VMEM((S, B, H), jnp.float32)],
        compiler_params=pltpu.CompilerParams(
            dimension_semantics=("parallel",)),   # v7x: one direction per TC
    )(x_tbd, wih, whh, bih, bhh)
    return jnp.concatenate([y[0], y[1]], axis=-1)     # (S, B, 2H)


# ---------------------------------------------------------------------------
# 2) Full GCN stack, fused: for each of gcn_layer iterations,
#      x = x + relu(adj^T @ (x @ W1 + b1))
#      x = x + relu(adj   @ (x @ W2 + b2))
#    grid over batch (one batch element per step, "parallel").
# ---------------------------------------------------------------------------
def _gcn_stack_kernel(x_ref, adjt_ref, adj_ref, w1_ref, b1_ref, w2_ref, b2_ref,
                      o_ref):
    x = x_ref[0]                                  # (S, D)
    adjt = adjt_ref[0]                            # (S, S)
    adj = adj_ref[0]                              # (S, S)
    L = w1_ref.shape[0]
    for l in range(L):                            # static, fully unrolled
        t1 = jnp.dot(x, w1_ref[l], preferred_element_type=jnp.float32) + b1_ref[l]
        x = x + jnp.maximum(
            jnp.dot(adjt, t1, preferred_element_type=jnp.float32), 0.0)
        t2 = jnp.dot(x, w2_ref[l], preferred_element_type=jnp.float32) + b2_ref[l]
        x = x + jnp.maximum(
            jnp.dot(adj, t2, preferred_element_type=jnp.float32), 0.0)
    o_ref[0] = x


def gcn_stack(x, adj_t, adj, gp):
    B, S, D = x.shape
    full = lambda a: pl.BlockSpec(a.shape, lambda i, n=a.ndim: (0,) * n)
    return pl.pallas_call(
        _gcn_stack_kernel,
        out_shape=jax.ShapeDtypeStruct((B, S, D), jnp.float32),
        grid=(B,),
        in_specs=[
            pl.BlockSpec((1, S, D), lambda i: (i, 0, 0)),
            pl.BlockSpec((1, S, S), lambda i: (i, 0, 0)),
            pl.BlockSpec((1, S, S), lambda i: (i, 0, 0)),
            full(gp["w1"]), full(gp["b1"]), full(gp["w2"]), full(gp["b2"]),
        ],
        out_specs=pl.BlockSpec((1, S, D), lambda i: (i, 0, 0)),
        compiler_params=pltpu.CompilerParams(dimension_semantics=("parallel",)),
    )(x, adj_t, adj, gp["w1"], gp["b1"], gp["w2"], gp["b2"])


# ---------------------------------------------------------------------------
# 3) Relation head, fully fused per batch element, lane-dense padded output:
#    e1 = relu((pos_e1 @ out) @ W1 + b1); e2 = relu((pos_e2 @ out) @ W2 + b2)
#    r1 = relu(e1 @ Wp1a + e2 @ Wp1b + bp1)   (== relu(concat(e1,e2) @ Wp1 + bp1))
#    r2 = relu(r1 @ Wp2 + bp2)
#    logits = r2 @ Wp3_pad + bp3_pad   (padded classes get -1e30 -> softmax-safe)
#    out = log_softmax(logits)   -> wrapper slices back to num_rel lanes.
# ---------------------------------------------------------------------------
def _head_kernel(out_ref, pe1_ref, pe2_ref,
                 w1_ref, b1_ref, w2_ref, b2_ref,
                 wp1a_ref, wp1b_ref, bp1_ref,
                 wp2_ref, bp2_ref, wp3_ref, bp3_ref, o_ref):
    out = out_ref[0]                              # (S, 2H)
    oe1 = jnp.dot(pe1_ref[0], out, preferred_element_type=jnp.float32)
    oe2 = jnp.dot(pe2_ref[0], out, preferred_element_type=jnp.float32)

    e1 = jnp.maximum(
        jnp.dot(oe1, w1_ref[...], preferred_element_type=jnp.float32)
        + b1_ref[...], 0.0)
    e2 = jnp.maximum(
        jnp.dot(oe2, w2_ref[...], preferred_element_type=jnp.float32)
        + b2_ref[...], 0.0)

    r1 = jnp.maximum(
        jnp.dot(e1, wp1a_ref[...], preferred_element_type=jnp.float32)
        + jnp.dot(e2, wp1b_ref[...], preferred_element_type=jnp.float32)
        + bp1_ref[...], 0.0)
    r2 = jnp.maximum(
        jnp.dot(r1, wp2_ref[...], preferred_element_type=jnp.float32)
        + bp2_ref[...], 0.0)
    logits = jnp.dot(r2, wp3_ref[...], preferred_element_type=jnp.float32) \
        + bp3_ref[...]                            # (S, R_PAD), pads = -1e30

    m = jnp.max(logits, axis=-1, keepdims=True)
    lse = m + jnp.log(jnp.sum(jnp.exp(logits - m), axis=-1, keepdims=True))
    o_ref[0] = logits - lse


def relation_head(out, pos_e1, pos_e2, hp):
    B, S, D2 = out.shape
    RP = hp["wp3p"].shape[-1]
    full = lambda a: pl.BlockSpec(a.shape, lambda i, n=a.ndim: (0,) * n)
    return pl.pallas_call(
        _head_kernel,
        out_shape=jax.ShapeDtypeStruct((B, S, RP), jnp.float32),
        grid=(B,),
        in_specs=[
            pl.BlockSpec((1, S, D2), lambda i: (i, 0, 0)),
            pl.BlockSpec((1, S, S), lambda i: (i, 0, 0)),
            pl.BlockSpec((1, S, S), lambda i: (i, 0, 0)),
            full(hp["w1"]), full(hp["b1"]),
            full(hp["w2"]), full(hp["b2"]),
            full(hp["wp1a"]), full(hp["wp1b"]), full(hp["bp1"]),
            full(hp["wp2"]), full(hp["bp2"]),
            full(hp["wp3p"]), full(hp["bp3p"]),
        ],
        out_specs=pl.BlockSpec((1, S, RP), lambda i: (i, 0, 0)),
        compiler_params=pltpu.CompilerParams(dimension_semantics=("parallel",)),
    )(out, pos_e1, pos_e2,
      hp["w1"], hp["b1"], hp["w2"], hp["b2"],
      hp["wp1a"], hp["wp1b"], hp["bp1"],
      hp["wp2"], hp["bp2"], hp["wp3p"], hp["bp3p"])


# ---------------------------------------------------------------------------
# Parameter construction (deterministic, synthetic). Gate order = r, z, n
# (PyTorch GRU order), concatenated along the 3H output axis.
# ---------------------------------------------------------------------------
def _uni(key, shape, bound):
    return jax.random.uniform(key, shape, jnp.float32, -bound, bound)


def init_params(key, din, hid, num_rel, r_pad, rnn_layer, gcn_layer):
    H, H2, H3 = hid, hid * 2, hid * 3
    keys = iter(jax.random.split(key, 64))
    params = {"gru": []}

    gru_bound = 1.0 / jnp.sqrt(jnp.float32(hid))
    for layer in range(rnn_layer):
        in_l = din if layer == 0 else H2
        params["gru"].append(dict(
            wih=_uni(next(keys), (2, in_l, H3), gru_bound),
            whh=_uni(next(keys), (2, H, H3), gru_bound),
            bih=_uni(next(keys), (2, 1, H3), gru_bound),
            bhh=_uni(next(keys), (2, 1, H3), gru_bound),
        ))

    gcn_bound = 1.0 / jnp.sqrt(jnp.float32(H2 // 2))
    params["gcn"] = dict(
        w1=_uni(next(keys), (gcn_layer, H2, H2), gcn_bound),
        b1=_uni(next(keys), (gcn_layer, 1, H2), gcn_bound),
        w2=_uni(next(keys), (gcn_layer, H2, H2), gcn_bound),
        b2=_uni(next(keys), (gcn_layer, 1, H2), gcn_bound),
    )

    lb2 = 1.0 / jnp.sqrt(jnp.float32(H2))
    lbh = 1.0 / jnp.sqrt(jnp.float32(H))
    wp1_full = _uni(next(keys), (H2, H), lb2)          # pr_rel1 weight, split
    wp3 = _uni(next(keys), (H, num_rel), lbh)
    bp3 = _uni(next(keys), (1, num_rel), lbh)
    # Lane-dense padding: zero weight columns, -1e30 bias for padded classes.
    wp3p = jnp.zeros((H, r_pad), jnp.float32).at[:, :num_rel].set(wp3)
    bp3p = jnp.full((1, r_pad), -1e30, jnp.float32).at[:, :num_rel].set(bp3)
    params["head"] = dict(
        w1=_uni(next(keys), (H2, H), lb2), b1=_uni(next(keys), (1, H), lb2),
        w2=_uni(next(keys), (H2, H), lb2), b2=_uni(next(keys), (1, H), lb2),
        wp1a=wp1_full[:H], wp1b=wp1_full[H:], bp1=_uni(next(keys), (1, H), lb2),
        wp2=_uni(next(keys), (H, H), lbh), bp2=_uni(next(keys), (1, H), lbh),
        wp3p=wp3p, bp3p=bp3p,
    )
    return params


# ---------------------------------------------------------------------------
# Full forward pass (glue in plain JAX, compute in the Pallas kernels above).
# ---------------------------------------------------------------------------
def model_graphrel_forward(params, inp, pos_e1, pos_e2, dep_w12,
                           num_rel, rnn_layer, gcn_layer):
    # Time-major once for the whole RNN stack.
    x_t = jnp.transpose(inp, (1, 0, 2))              # (S, B, Din)
    for layer in range(rnn_layer):
        p = params["gru"][layer]
        x_t = bigru_layer(x_t, p["wih"], p["whh"], p["bih"], p["bhh"])
    out = jnp.transpose(x_t, (1, 0, 2))              # (B, S, 2H)

    adj_t = jnp.transpose(dep_w12, (0, 2, 1))
    out = gcn_stack(out, adj_t, dep_w12, params["gcn"])        # all GCN layers

    logp_pad = relation_head(out, pos_e1, pos_e2, params["head"])  # (B,S,R_PAD)
    return logp_pad[..., :num_rel].reshape(-1, num_rel)


if __name__ == "__main__":
    B, S = 2, 8
    DIN, HID = 32, 32          # scaled-down from the original 300/300
    NUM_REL, RNN_LAYER, GCN_LAYER = 10, 2, 2
    R_PAD = 128                # lane-dense padded class dimension

    root = jax.random.PRNGKey(0)
    kp, k_inp, k_p1, k_p2, k_adj = jax.random.split(root, 5)

    params = init_params(kp, DIN, HID, NUM_REL, R_PAD, RNN_LAYER, GCN_LAYER)

    inp = jax.random.normal(k_inp, (B, S, DIN), jnp.float32)
    pos_e1 = jax.nn.softmax(jax.random.normal(k_p1, (B, S, S), jnp.float32), axis=-1)
    pos_e2 = jax.nn.softmax(jax.random.normal(k_p2, (B, S, S), jnp.float32), axis=-1)
    dep_w12 = jax.nn.softmax(jax.random.normal(k_adj, (B, S, S), jnp.float32), axis=-1)

    fwd = jax.jit(functools.partial(model_graphrel_forward,
                                    num_rel=NUM_REL,
                                    rnn_layer=RNN_LAYER,
                                    gcn_layer=GCN_LAYER))
    out = fwd(params, inp, pos_e1, pos_e2, dep_w12)
    out = jax.block_until_ready(out)

    assert out.shape == (B * S, NUM_REL), out.shape
    # log-softmax rows must exponentiate to ~1
    assert jnp.allclose(jnp.sum(jnp.exp(out), axis=1), 1.0, atol=1e-4)
    print("KERNEL_OK")
</pallas_src>

<mosaic_0001>
module attributes {stable_mosaic.version = 11 : i64} {
  func.func @_bigru_layer_kernel(%arg0: i32, %arg1: memref<8x2x32xf32, #tpu.memory_space<vmem>>, %arg2: memref<1x32x96xf32, #tpu.memory_space<vmem>>, %arg3: memref<1x32x96xf32, #tpu.memory_space<vmem>>, %arg4: memref<1x1x96xf32, #tpu.memory_space<vmem>>, %arg5: memref<1x1x96xf32, #tpu.memory_space<vmem>>, %arg6: memref<1x8x2x32xf32, #tpu.memory_space<vmem>>, %arg7: memref<8x2x96xf32, #tpu.memory_space<vmem>>, %arg8: memref<8x2x32xf32, #tpu.memory_space<vmem>>) attributes {dimension_semantics = [#tpu.dimension_semantics<parallel>], iteration_bounds = array<i64: 2>, scalar_prefetch = 0 : i64, scratch_operands = 2 : i64, tpu.core_type = #tpu.core_type<tc>, window_params = [{pipeline_mode = #tpu.pipeline_mode<synchronous>, transform_indices = @transform_0, window_bounds = array<i64: 8, 2, 32>}, {transform_indices = @transform_1, window_bounds = array<i64: 1, 32, 96>}, {transform_indices = @transform_2, window_bounds = array<i64: 1, 32, 96>}, {transform_indices = @transform_3, window_bounds = array<i64: 1, 1, 96>}, {transform_indices = @transform_4, window_bounds = array<i64: 1, 1, 96>}, {transform_indices = @transform_5, window_bounds = array<i64: 1, 8, 2, 32>}]} {
    %c0 = arith.constant 0 : index
    %c0_0 = arith.constant 0 : index
    %c0_1 = arith.constant 0 : index
    %0 = vector.load %arg2[%c0, %c0_0, %c0_1] : memref<1x32x96xf32, #tpu.memory_space<vmem>>, vector<1x32x96xf32>
    %1 = vector.shape_cast %0 : vector<1x32x96xf32> to vector<32x96xf32>
    %c0_2 = arith.constant 0 : index
    %c0_3 = arith.constant 0 : index
    %c0_4 = arith.constant 0 : index
    %2 = vector.load %arg3[%c0_2, %c0_3, %c0_4] : memref<1x32x96xf32, #tpu.memory_space<vmem>>, vector<1x32x96xf32>
    %3 = vector.shape_cast %2 : vector<1x32x96xf32> to vector<32x96xf32>
    %c0_5 = arith.constant 0 : index
    %c0_6 = arith.constant 0 : index
    %c0_7 = arith.constant 0 : index
    %4 = vector.load %arg4[%c0_5, %c0_6, %c0_7] : memref<1x1x96xf32, #tpu.memory_space<vmem>>, vector<1x1x96xf32>
    %5 = vector.shape_cast %4 : vector<1x1x96xf32> to vector<1x96xf32>
    %c0_8 = arith.constant 0 : index
    %c0_9 = arith.constant 0 : index
    %c0_10 = arith.constant 0 : index
    %6 = vector.load %arg5[%c0_8, %c0_9, %c0_10] : memref<1x1x96xf32, #tpu.memory_space<vmem>>, vector<1x1x96xf32>
    %7 = vector.shape_cast %6 : vector<1x1x96xf32> to vector<1x96xf32>
    %c0_11 = arith.constant 0 : index
    %c0_12 = arith.constant 0 : index
    %c0_13 = arith.constant 0 : index
    %8 = vector.load %arg1[%c0_11, %c0_12, %c0_13] : memref<8x2x32xf32, #tpu.memory_space<vmem>>, vector<1x2x32xf32>
    %9 = vector.shape_cast %8 : vector<1x2x32xf32> to vector<2x32xf32>
    %cst = arith.constant dense<0.000000e+00> : vector<2x96xf32>
    %10 = tpu.matmul %9, %1, %cst {dimension_numbers = #tpu.dot_dimension_numbers<[1], [0], [0], [1], [0, 0, 1, 1], [], []>} : vector<2x32xf32>, vector<32x96xf32>, vector<2x96xf32> -> vector<2x96xf32>
    %11 = vector.broadcast %5 : vector<1x96xf32> to vector<2x96xf32>
    %12 = arith.addf %10, %11 : vector<2x96xf32>
    %c0_14 = arith.constant 0 : index
    %c0_15 = arith.constant 0 : index
    %c0_16 = arith.constant 0 : index
    %13 = vector.load %arg7[%c0_14, %c0_15, %c0_16] : memref<8x2x96xf32, #tpu.memory_space<vmem>>, vector<1x2x96xf32>
    %14 = vector.shape_cast %13 : vector<1x2x96xf32> to vector<2x96xf32>
    %15 = vector.shape_cast %12 : vector<2x96xf32> to vector<1x2x96xf32>
    tpu.vector_store %arg7[%c0_14, %c0_15, %c0_16], %15 {strides = array<i32>} : memref<8x2x96xf32, #tpu.memory_space<vmem>>, vector<1x2x96xf32>,
    %c1 = arith.constant 1 : index
    %c0_17 = arith.constant 0 : index
    %c0_18 = arith.constant 0 : index
    %16 = vector.load %arg1[%c1, %c0_17, %c0_18] : memref<8x2x32xf32, #tpu.memory_space<vmem>>, vector<1x2x32xf32>
    %17 = vector.shape_cast %16 : vector<1x2x32xf32> to vector<2x32xf32>
    %cst_19 = arith.constant dense<0.000000e+00> : vector<2x96xf32>
    %18 = tpu.matmul %17, %1, %cst_19 {dimension_numbers = #tpu.dot_dimension_numbers<[1], [0], [0], [1], [0, 0, 1, 1], [], []>} : vector<2x32xf32>, vector<32x96xf32>, vector<2x96xf32> -> vector<2x96xf32>
    %19 = vector.broadcast %5 : vector<1x96xf32> to vector<2x96xf32>
    %20 = arith.addf %18, %19 : vector<2x96xf32>
    %c1_20 = arith.constant 1 : index
    %c0_21 = arith.constant 0 : index
    %c0_22 = arith.constant 0 : index
    %21 = vector.load %arg7[%c1_20, %c0_21, %c0_22] : memref<8x2x96xf32, #tpu.memory_space<vmem>>, vector<1x2x96xf32>
    %22 = vector.shape_cast %21 : vector<1x2x96xf32> to vector<2x96xf32>
    %23 = vector.shape_cast %20 : vector<2x96xf32> to vector<1x2x96xf32>
    tpu.vector_store %arg7[%c1_20, %c0_21, %c0_22], %23 {strides = array<i32>} : memref<8x2x96xf32, #tpu.memory_space<vmem>>, vector<1x2x96xf32>,
    %c2 = arith.constant 2 : index
    %c0_23 = arith.constant 0 : index
    %c0_24 = arith.constant 0 : index
    %24 = vector.load %arg1[%c2, %c0_23, %c0_24] : memref<8x2x32xf32, #tpu.memory_space<vmem>>, vector<1x2x32xf32>
    %25 = vector.shape_cast %24 : vector<1x2x32xf32> to vector<2x32xf32>
    %cst_25 = arith.constant dense<0.000000e+00> : vector<2x96xf32>
    %26 = tpu.matmul %25, %1, %cst_25 {dimension_numbers = #tpu.dot_dimension_numbers<[1], [0], [0], [1], [0, 0, 1, 1], [], []>} : vector<2x32xf32>, vector<32x96xf32>, vector<2x96xf32> -> vector<2x96xf32>
    %27 = vector.broadcast %5 : vector<1x96xf32> to vector<2x96xf32>
    %28 = arith.addf %26, %27 : vector<2x96xf32>
    %c2_26 = arith.constant 2 : index
    %c0_27 = arith.constant 0 : index
    %c0_28 = arith.constant 0 : index
    %29 = vector.load %arg7[%c2_26, %c0_27, %c0_28] : memref<8x2x96xf32, #tpu.memory_space<vmem>>, vector<1x2x96xf32>
    %30 = vector.shape_cast %29 : vector<1x2x96xf32> to vector<2x96xf32>
    %31 = vector.shape_cast %28 : vector<2x96xf32> to vector<1x2x96xf32>
    tpu.vector_store %arg7[%c2_26, %c0_27, %c0_28], %31 {strides = array<i32>} : memref<8x2x96xf32, #tpu.memory_space<vmem>>, vector<1x2x96xf32>,
    %c3 = arith.constant 3 : index
    %c0_29 = arith.constant 0 : index
    %c0_30 = arith.constant 0 : index
    %32 = vector.load %arg1[%c3, %c0_29, %c0_30] : memref<8x2x32xf32, #tpu.memory_space<vmem>>, vector<1x2x32xf32>
    %33 = vector.shape_cast %32 : vector<1x2x32xf32> to vector<2x32xf32>
    %cst_31 = arith.constant dense<0.000000e+00> : vector<2x96xf32>
    %34 = tpu.matmul %33, %1, %cst_31 {dimension_numbers = #tpu.dot_dimension_numbers<[1], [0], [0], [1], [0, 0, 1, 1], [], []>} : vector<2x32xf32>, vector<32x96xf32>, vector<2x96xf32> -> vector<2x96xf32>
    %35 = vector.broadcast %5 : vector<1x96xf32> to vector<2x96xf32>
    %36 = arith.addf %34, %35 : vector<2x96xf32>
    %c3_32 = arith.constant 3 : index
    %c0_33 = arith.constant 0 : index
    %c0_34 = arith.constant 0 : index
    %37 = vector.load %arg7[%c3_32, %c0_33, %c0_34] : memref<8x2x96xf32, #tpu.memory_space<vmem>>, vector<1x2x96xf32>
    %38 = vector.shape_cast %37 : vector<1x2x96xf32> to vector<2x96xf32>
    %39 = vector.shape_cast %36 : vector<2x96xf32> to vector<1x2x96xf32>
    tpu.vector_store %arg7[%c3_32, %c0_33, %c0_34], %39 {strides = array<i32>} : memref<8x2x96xf32, #tpu.memory_space<vmem>>, vector<1x2x96xf32>,
    %c4 = arith.constant 4 : index
    %c0_35 = arith.constant 0 : index
    %c0_36 = arith.constant 0 : index
    %40 = vector.load %arg1[%c4, %c0_35, %c0_36] : memref<8x2x32xf32, #tpu.memory_space<vmem>>, vector<1x2x32xf32>
    %41 = vector.shape_cast %40 : vector<1x2x32xf32> to vector<2x32xf32>
    %cst_37 = arith.constant dense<0.000000e+00> : vector<2x96xf32>
    %42 = tpu.matmul %41, %1, %cst_37 {dimension_numbers = #tpu.dot_dimension_numbers<[1], [0], [0], [1], [0, 0, 1, 1], [], []>} : vector<2x32xf32>, vector<32x96xf32>, vector<2x96xf32> -> vector<2x96xf32>
    %43 = vector.broadcast %5 : vector<1x96xf32> to vector<2x96xf32>
    %44 = arith.addf %42, %43 : vector<2x96xf32>
    %c4_38 = arith.constant 4 : index
    %c0_39 = arith.constant 0 : index
    %c0_40 = arith.constant 0 : index
    %45 = vector.load %arg7[%c4_38, %c0_39, %c0_40] : memref<8x2x96xf32, #tpu.memory_space<vmem>>, vector<1x2x96xf32>
    %46 = vector.shape_cast %45 : vector<1x2x96xf32> to vector<2x96xf32>
    %47 = vector.shape_cast %44 : vector<2x96xf32> to vector<1x2x96xf32>
    tpu.vector_store %arg7[%c4_38, %c0_39, %c0_40], %47 {strides = array<i32>} : memref<8x2x96xf32, #tpu.memory_space<vmem>>, vector<1x2x96xf32>,
    %c5 = arith.constant 5 : index
    %c0_41 = arith.constant 0 : index
    %c0_42 = arith.constant 0 : index
    %48 = vector.load %arg1[%c5, %c0_41, %c0_42] : memref<8x2x32xf32, #tpu.memory_space<vmem>>, vector<1x2x32xf32>
    %49 = vector.shape_cast %48 : vector<1x2x32xf32> to vector<2x32xf32>
    %cst_43 = arith.constant dense<0.000000e+00> : vector<2x96xf32>
    %50 = tpu.matmul %49, %1, %cst_43 {dimension_numbers = #tpu.dot_dimension_numbers<[1], [0], [0], [1], [0, 0, 1, 1], [], []>} : vector<2x32xf32>, vector<32x96xf32>, vector<2x96xf32> -> vector<2x96xf32>
    %51 = vector.broadcast %5 : vector<1x96xf32> to vector<2x96xf32>
    %52 = arith.addf %50, %51 : vector<2x96xf32>
    %c5_44 = arith.constant 5 : index
    %c0_45 = arith.constant 0 : index
    %c0_46 = arith.constant 0 : index
    %53 = vector.load %arg7[%c5_44, %c0_45, %c0_46] : memref<8x2x96xf32, #tpu.memory_space<vmem>>, vector<1x2x96xf32>
    %54 = vector.shape_cast %53 : vector<1x2x96xf32> to vector<2x96xf32>
    %55 = vector.shape_cast %52 : vector<2x96xf32> to vector<1x2x96xf32>
    tpu.vector_store %arg7[%c5_44, %c0_45, %c0_46], %55 {strides = array<i32>} : memref<8x2x96xf32, #tpu.memory_space<vmem>>, vector<1x2x96xf32>,
    %c6 = arith.constant 6 : index
    %c0_47 = arith.constant 0 : index
    %c0_48 = arith.constant 0 : index
    %56 = vector.load %arg1[%c6, %c0_47, %c0_48] : memref<8x2x32xf32, #tpu.memory_space<vmem>>, vector<1x2x32xf32>
    %57 = vector.shape_cast %56 : vector<1x2x32xf32> to vector<2x32xf32>
    %cst_49 = arith.constant dense<0.000000e+00> : vector<2x96xf32>
    %58 = tpu.matmul %57, %1, %cst_49 {dimension_numbers = #tpu.dot_dimension_numbers<[1], [0], [0], [1], [0, 0, 1, 1], [], []>} : vector<2x32xf32>, vector<32x96xf32>, vector<2x96xf32> -> vector<2x96xf32>
    %59 = vector.broadcast %5 : vector<1x96xf32> to vector<2x96xf32>
    %60 = arith.addf %58, %59 : vector<2x96xf32>
    %c6_50 = arith.constant 6 : index
    %c0_51 = arith.constant 0 : index
    %c0_52 = arith.constant 0 : index
    %61 = vector.load %arg7[%c6_50, %c0_51, %c0_52] : memref<8x2x96xf32, #tpu.memory_space<vmem>>, vector<1x2x96xf32>
    %62 = vector.shape_cast %61 : vector<1x2x96xf32> to vector<2x96xf32>
    %63 = vector.shape_cast %60 : vector<2x96xf32> to vector<1x2x96xf32>
    tpu.vector_store %arg7[%c6_50, %c0_51, %c0_52], %63 {strides = array<i32>} : memref<8x2x96xf32, #tpu.memory_space<vmem>>, vector<1x2x96xf32>,
    %c7 = arith.constant 7 : index
    %c0_53 = arith.constant 0 : index
    %c0_54 = arith.constant 0 : index
    %64 = vector.load %arg1[%c7, %c0_53, %c0_54] : memref<8x2x32xf32, #tpu.memory_space<vmem>>, vector<1x2x32xf32>
    %65 = vector.shape_cast %64 : vector<1x2x32xf32> to vector<2x32xf32>
    %cst_55 = arith.constant dense<0.000000e+00> : vector<2x96xf32>
    %66 = tpu.matmul %65, %1, %cst_55 {dimension_numbers = #tpu.dot_dimension_numbers<[1], [0], [0], [1], [0, 0, 1, 1], [], []>} : vector<2x32xf32>, vector<32x96xf32>, vector<2x96xf32> -> vector<2x96xf32>
    %67 = vector.broadcast %5 : vector<1x96xf32> to vector<2x96xf32>
    %68 = arith.addf %66, %67 : vector<2x96xf32>
    %c7_56 = arith.constant 7 : index
    %c0_57 = arith.constant 0 : index
    %c0_58 = arith.constant 0 : index
    %69 = vector.load %arg7[%c7_56, %c0_57, %c0_58] : memref<8x2x96xf32, #tpu.memory_space<vmem>>, vector<1x2x96xf32>
    %70 = vector.shape_cast %69 : vector<1x2x96xf32> to vector<2x96xf32>
    %71 = vector.shape_cast %68 : vector<2x96xf32> to vector<1x2x96xf32>
    tpu.vector_store %arg7[%c7_56, %c0_57, %c0_58], %71 {strides = array<i32>} : memref<8x2x96xf32, #tpu.memory_space<vmem>>, vector<1x2x96xf32>,
    %cst_59 = arith.constant 0.000000e+00 : f32
    %72 = vector.broadcast %cst_59 : f32 to vector<2x32xf32>
    %c0_i32 = arith.constant 0 : i32
    %c0_i32_60 = arith.constant 0 : i32
    %73 = arith.cmpi eq, %arg0, %c0_i32_60 : i32
    %c7_i32 = arith.constant 7 : i32
    %74 = arith.subi %c7_i32, %c0_i32 : i32
    %75 = arith.select %73, %c0_i32, %74 : i32
    %76 = arith.index_cast %75 : i32 to index
    %c0_61 = arith.constant 0 : index
    %c0_62 = arith.constant 0 : index
    %77 = vector.load %arg7[%76, %c0_61, %c0_62] : memref<8x2x96xf32, #tpu.memory_space<vmem>>, vector<1x2x96xf32>
    %78 = vector.shape_cast %77 : vector<1x2x96xf32> to vector<2x96xf32>
    %cst_63 = arith.constant dense<0.000000e+00> : vector<2x96xf32>
    %79 = tpu.matmul %72, %3, %cst_63 {dimension_numbers = #tpu.dot_dimension_numbers<[1], [0], [0], [1], [0, 0, 1, 1], [], []>} : vector<2x32xf32>, vector<32x96xf32>, vector<2x96xf32> -> vector<2x96xf32>
    %80 = vector.broadcast %7 : vector<1x96xf32> to vector<2x96xf32>
    %81 = arith.addf %79, %80 : vector<2x96xf32>
    %82 = vector.extract_strided_slice %78 {offsets = [0, 0], sizes = [2, 32], strides = [1, 1]} : vector<2x96xf32> to vector<2x32xf32>
    %83 = vector.extract_strided_slice %81 {offsets = [0, 0], sizes = [2, 32], strides = [1, 1]} : vector<2x96xf32> to vector<2x32xf32>
    %84 = arith.addf %82, %83 : vector<2x32xf32>
    %85 = arith.negf %84 : vector<2x32xf32>
    %86 = math.exp %85 : vector<2x32xf32>
    %cst_64 = arith.constant 1.000000e+00 : f32
    %87 = vector.broadcast %cst_64 : f32 to vector<2x32xf32>
    %88 = arith.addf %87, %86 : vector<2x32xf32>
    %89 = arith.divf %87, %88 : vector<2x32xf32>
    %90 = vector.extract_strided_slice %78 {offsets = [0, 32], sizes = [2, 32], strides = [1, 1]} : vector<2x96xf32> to vector<2x32xf32>
    %91 = vector.extract_strided_slice %81 {offsets = [0, 32], sizes = [2, 32], strides = [1, 1]} : vector<2x96xf32> to vector<2x32xf32>
    %92 = arith.addf %90, %91 : vector<2x32xf32>
    %93 = arith.negf %92 : vector<2x32xf32>
    %94 = math.exp %93 : vector<2x32xf32>
    %cst_65 = arith.constant 1.000000e+00 : f32
    %95 = vector.broadcast %cst_65 : f32 to vector<2x32xf32>
    %96 = arith.addf %95, %94 : vector<2x32xf32>
    %97 = arith.divf %95, %96 : vector<2x32xf32>
    %98 = vector.extract_strided_slice %78 {offsets = [0, 64], sizes = [2, 32], strides = [1, 1]} : vector<2x96xf32> to vector<2x32xf32>
    %99 = vector.extract_strided_slice %81 {offsets = [0, 64], sizes = [2, 32], strides = [1, 1]} : vector<2x96xf32> to vector<2x32xf32>
    %100 = arith.mulf %89, %99 : vector<2x32xf32>
    %101 = arith.addf %98, %100 : vector<2x32xf32>
    %102 = math.tanh %101 : vector<2x32xf32>
    %cst_66 = arith.constant 1.000000e+00 : f32
    %103 = vector.broadcast %cst_66 : f32 to vector<2x32xf32>
    %104 = arith.subf %103, %97 : vector<2x32xf32>
    %105 = arith.mulf %104, %102 : vector<2x32xf32>
    %106 = arith.mulf %97, %72 : vector<2x32xf32>
    %107 = arith.addf %105, %106 : vector<2x32xf32>
    %108 = arith.index_cast %75 : i32 to index
    %c0_67 = arith.constant 0 : index
    %c0_68 = arith.constant 0 : index
    %109 = vector.load %arg8[%108, %c0_67, %c0_68] : memref<8x2x32xf32, #tpu.memory_space<vmem>>, vector<1x2x32xf32>
    %110 = vector.shape_cast %109 : vector<1x2x32xf32> to vector<2x32xf32>
    %111 = vector.shape_cast %107 : vector<2x32xf32> to vector<1x2x32xf32>
    tpu.vector_store %arg8[%108, %c0_67, %c0_68], %111 {strides = array<i32>} : memref<8x2x32xf32, #tpu.memory_space<vmem>>, vector<1x2x32xf32>,
    %c1_i32 = arith.constant 1 : i32
    %c0_i32_69 = arith.constant 0 : i32
    %112 = arith.cmpi eq, %arg0, %c0_i32_69 : i32
    %c7_i32_70 = arith.constant 7 : i32
    %113 = arith.subi %c7_i32_70, %c1_i32 : i32
    %114 = arith.select %112, %c1_i32, %113 : i32
    %115 = arith.index_cast %114 : i32 to index
    %c0_71 = arith.constant 0 : index
    %c0_72 = arith.constant 0 : index
    %116 = vector.load %arg7[%115, %c0_71, %c0_72] : memref<8x2x96xf32, #tpu.memory_space<vmem>>, vector<1x2x96xf32>
    %117 = vector.shape_cast %116 : vector<1x2x96xf32> to vector<2x96xf32>
    %cst_73 = arith.constant dense<0.000000e+00> : vector<2x96xf32>
    %118 = tpu.matmul %107, %3, %cst_73 {dimension_numbers = #tpu.dot_dimension_numbers<[1], [0], [0], [1], [0, 0, 1, 1], [], []>} : vector<2x32xf32>, vector<32x96xf32>, vector<2x96xf32> -> vector<2x96xf32>
    %119 = vector.broadcast %7 : vector<1x96xf32> to vector<2x96xf32>
    %120 = arith.addf %118, %119 : vector<2x96xf32>
    %121 = vector.extract_strided_slice %117 {offsets = [0, 0], sizes = [2, 32], strides = [1, 1]} : vector<2x96xf32> to vector<2x32xf32>
    %122 = vector.extract_strided_slice %120 {offsets = [0, 0], sizes = [2, 32], strides = [1, 1]} : vector<2x96xf32> to vector<2x32xf32>
    %123 = arith.addf %121, %122 : vector<2x32xf32>
    %124 = arith.negf %123 : vector<2x32xf32>
    %125 = math.exp %124 : vector<2x32xf32>
    %cst_74 = arith.constant 1.000000e+00 : f32
    %126 = vector.broadcast %cst_74 : f32 to vector<2x32xf32>
    %127 = arith.addf %126, %125 : vector<2x32xf32>
    %128 = arith.divf %126, %127 : vector<2x32xf32>
    %129 = vector.extract_strided_slice %117 {offsets = [0, 32], sizes = [2, 32], strides = [1, 1]} : vector<2x96xf32> to vector<2x32xf32>
    %130 = vector.extract_strided_slice %120 {offsets = [0, 32], sizes = [2, 32], strides = [1, 1]} : vector<2x96xf32> to vector<2x32xf32>
    %131 = arith.addf %129, %130 : vector<2x32xf32>
    %132 = arith.negf %131 : vector<2x32xf32>
    %133 = math.exp %132 : vector<2x32xf32>
    %cst_75 = arith.constant 1.000000e+00 : f32
    %134 = vector.broadcast %cst_75 : f32 to vector<2x32xf32>
    %135 = arith.addf %134, %133 : vector<2x32xf32>
    %136 = arith.divf %134, %135 : vector<2x32xf32>
    %137 = vector.extract_strided_slice %117 {offsets = [0, 64], sizes = [2, 32], strides = [1, 1]} : vector<2x96xf32> to vector<2x32xf32>
    %138 = vector.extract_strided_slice %120 {offsets = [0, 64], sizes = [2, 32], strides = [1, 1]} : vector<2x96xf32> to vector<2x32xf32>
    %139 = arith.mulf %128, %138 : vector<2x32xf32>
    %140 = arith.addf %137, %139 : vector<2x32xf32>
    %141 = math.tanh %140 : vector<2x32xf32>
    %cst_76 = arith.constant 1.000000e+00 : f32
    %142 = vector.broadcast %cst_76 : f32 to vector<2x32xf32>
    %143 = arith.subf %142, %136 : vector<2x32xf32>
    %144 = arith.mulf %143, %141 : vector<2x32xf32>
    %145 = arith.mulf %136, %107 : vector<2x32xf32>
    %146 = arith.addf %144, %145 : vector<2x32xf32>
    %147 = arith.index_cast %114 : i32 to index
    %c0_77 = arith.constant 0 : index
    %c0_78 = arith.constant 0 : index
    %148 = vector.load %arg8[%147, %c0_77, %c0_78] : memref<8x2x32xf32, #tpu.memory_space<vmem>>, vector<1x2x32xf32>
    %149 = vector.shape_cast %148 : vector<1x2x32xf32> to vector<2x32xf32>
    %150 = vector.shape_cast %146 : vector<2x32xf32> to vector<1x2x32xf32>
    tpu.vector_store %arg8[%147, %c0_77, %c0_78], %150 {strides = array<i32>} : memref<8x2x32xf32, #tpu.memory_space<vmem>>, vector<1x2x32xf32>,
    %c2_i32 = arith.constant 2 : i32
    %c0_i32_79 = arith.constant 0 : i32
    %151 = arith.cmpi eq, %arg0, %c0_i32_79 : i32
    %c7_i32_80 = arith.constant 7 : i32
    %152 = arith.subi %c7_i32_80, %c2_i32 : i32
    %153 = arith.select %151, %c2_i32, %152 : i32
    %154 = arith.index_cast %153 : i32 to index
    %c0_81 = arith.constant 0 : index
    %c0_82 = arith.constant 0 : index
    %155 = vector.load %arg7[%154, %c0_81, %c0_82] : memref<8x2x96xf32, #tpu.memory_space<vmem>>, vector<1x2x96xf32>
    %156 = vector.shape_cast %155 : vector<1x2x96xf32> to vector<2x96xf32>
    %cst_83 = arith.constant dense<0.000000e+00> : vector<2x96xf32>
    %157 = tpu.matmul %146, %3, %cst_83 {dimension_numbers = #tpu.dot_dimension_numbers<[1], [0], [0], [1], [0, 0, 1, 1], [], []>} : vector<2x32xf32>, vector<32x96xf32>, vector<2x96xf32> -> vector<2x96xf32>
    %158 = vector.broadcast %7 : vector<1x96xf32> to vector<2x96xf32>
    %159 = arith.addf %157, %158 : vector<2x96xf32>
    %160 = vector.extract_strided_slice %156 {offsets = [0, 0], sizes = [2, 32], strides = [1, 1]} : vector<2x96xf32> to vector<2x32xf32>
    %161 = vector.extract_strided_slice %159 {offsets = [0, 0], sizes = [2, 32], strides = [1, 1]} : vector<2x96xf32> to vector<2x32xf32>
    %162 = arith.addf %160, %161 : vector<2x32xf32>
    %163 = arith.negf %162 : vector<2x32xf32>
    %164 = math.exp %163 : vector<2x32xf32>
    %cst_84 = arith.constant 1.000000e+00 : f32
    %165 = vector.broadcast %cst_84 : f32 to vector<2x32xf32>
    %166 = arith.addf %165, %164 : vector<2x32xf32>
    %167 = arith.divf %165, %166 : vector<2x32xf32>
    %168 = vector.extract_strided_slice %156 {offsets = [0, 32], sizes = [2, 32], strides = [1, 1]} : vector<2x96xf32> to vector<2x32xf32>
    %169 = vector.extract_strided_slice %159 {offsets = [0, 32], sizes = [2, 32], strides = [1, 1]} : vector<2x96xf32> to vector<2x32xf32>
    %170 = arith.addf %168, %169 : vector<2x32xf32>
    %171 = arith.negf %170 : vector<2x32xf32>
    %172 = math.exp %171 : vector<2x32xf32>
    %cst_85 = arith.constant 1.000000e+00 : f32
    %173 = vector.broadcast %cst_85 : f32 to vector<2x32xf32>
    %174 = arith.addf %173, %172 : vector<2x32xf32>
    %175 = arith.divf %173, %174 : vector<2x32xf32>
    %176 = vector.extract_strided_slice %156 {offsets = [0, 64], sizes = [2, 32], strides = [1, 1]} : vector<2x96xf32> to vector<2x32xf32>
    %177 = vector.extract_strided_slice %159 {offsets = [0, 64], sizes = [2, 32], strides = [1, 1]} : vector<2x96xf32> to vector<2x32xf32>
    %178 = arith.mulf %167, %177 : vector<2x32xf32>
    %179 = arith.addf %176, %178 : vector<2x32xf32>
    %180 = math.tanh %179 : vector<2x32xf32>
    %cst_86 = arith.constant 1.000000e+00 : f32
    %181 = vector.broadcast %cst_86 : f32 to vector<2x32xf32>
    %182 = arith.subf %181, %175 : vector<2x32xf32>
    %183 = arith.mulf %182, %180 : vector<2x32xf32>
    %184 = arith.mulf %175, %146 : vector<2x32xf32>
    %185 = arith.addf %183, %184 : vector<2x32xf32>
    %186 = arith.index_cast %153 : i32 to index
    %c0_87 = arith.constant 0 : index
    %c0_88 = arith.constant 0 : index
    %187 = vector.load %arg8[%186, %c0_87, %c0_88] : memref<8x2x32xf32, #tpu.memory_space<vmem>>, vector<1x2x32xf32>
    %188 = vector.shape_cast %187 : vector<1x2x32xf32> to vector<2x32xf32>
    %189 = vector.shape_cast %185 : vector<2x32xf32> to vector<1x2x32xf32>
    tpu.vector_store %arg8[%186, %c0_87, %c0_88], %189 {strides = array<i32>} : memref<8x2x32xf32, #tpu.memory_space<vmem>>, vector<1x2x32xf32>,
    %c3_i32 = arith.constant 3 : i32
    %c0_i32_89 = arith.constant 0 : i32
    %190 = arith.cmpi eq, %arg0, %c0_i32_89 : i32
    %c7_i32_90 = arith.constant 7 : i32
    %191 = arith.subi %c7_i32_90, %c3_i32 : i32
    %192 = arith.select %190, %c3_i32, %191 : i32
    %193 = arith.index_cast %192 : i32 to index
    %c0_91 = arith.constant 0 : index
    %c0_92 = arith.constant 0 : index
    %194 = vector.load %arg7[%193, %c0_91, %c0_92] : memref<8x2x96xf32, #tpu.memory_space<vmem>>, vector<1x2x96xf32>
    %195 = vector.shape_cast %194 : vector<1x2x96xf32> to vector<2x96xf32>
    %cst_93 = arith.constant dense<0.000000e+00> : vector<2x96xf32>
    %196 = tpu.matmul %185, %3, %cst_93 {dimension_numbers = #tpu.dot_dimension_numbers<[1], [0], [0], [1], [0, 0, 1, 1], [], []>} : vector<2x32xf32>, vector<32x96xf32>, vector<2x96xf32> -> vector<2x96xf32>
    %197 = vector.broadcast %7 : vector<1x96xf32> to vector<2x96xf32>
    %198 = arith.addf %196, %197 : vector<2x96xf32>
    %199 = vector.extract_strided_slice %195 {offsets = [0, 0], sizes = [2, 32], strides = [1, 1]} : vector<2x96xf32> to vector<2x32xf32>
    %200 = vector.extract_strided_slice %198 {offsets = [0, 0], sizes = [2, 32], strides = [1, 1]} : vector<2x96xf32> to vector<2x32xf32>
    %201 = arith.addf %199, %200 : vector<2x32xf32>
    %202 = arith.negf %201 : vector<2x32xf32>
    %203 = math.exp %202 : vector<2x32xf32>
    %cst_94 = arith.constant 1.000000e+00 : f32
    %204 = vector.broadcast %cst_94 : f32 to vector<2x32xf32>
    %205 = arith.addf %204, %203 : vector<2x32xf32>
    %206 = arith.divf %204, %205 : vector<2x32xf32>
    %207 = vector.extract_strided_slice %195 {offsets = [0, 32], sizes = [2, 32], strides = [1, 1]} : vector<2x96xf32> to vector<2x32xf32>
    %208 = vector.extract_strided_slice %198 {offsets = [0, 32], sizes = [2, 32], strides = [1, 1]} : vector<2x96xf32> to vector<2x32xf32>
    %209 = arith.addf %207, %208 : vector<2x32xf32>
    %210 = arith.negf %209 : vector<2x32xf32>
    %211 = math.exp %210 : vector<2x32xf32>
    %cst_95 = arith.constant 1.000000e+00 : f32
    %212 = vector.broadcast %cst_95 : f32 to vector<2x32xf32>
    %213 = arith.addf %212, %211 : vector<2x32xf32>
    %214 = arith.divf %212, %213 : vector<2x32xf32>
    %215 = vector.extract_strided_slice %195 {offsets = [0, 64], sizes = [2, 32], strides = [1, 1]} : vector<2x96xf32> to vector<2x32xf32>
    %216 = vector.extract_strided_slice %198 {offsets = [0, 64], sizes = [2, 32], strides = [1, 1]} : vector<2x96xf32> to vector<2x32xf32>
    %217 = arith.mulf %206, %216 : vector<2x32xf32>
    %218 = arith.addf %215, %217 : vector<2x32xf32>
    %219 = math.tanh %218 : vector<2x32xf32>
    %cst_96 = arith.constant 1.000000e+00 : f32
    %220 = vector.broadcast %cst_96 : f32 to vector<2x32xf32>
    %221 = arith.subf %220, %214 : vector<2x32xf32>
    %222 = arith.mulf %221, %219 : vector<2x32xf32>
    %223 = arith.mulf %214, %185 : vector<2x32xf32>
    %224 = arith.addf %222, %223 : vector<2x32xf32>
    %225 = arith.index_cast %192 : i32 to index
    %c0_97 = arith.constant 0 : index
    %c0_98 = arith.constant 0 : index
    %226 = vector.load %arg8[%225, %c0_97, %c0_98] : memref<8x2x32xf32, #tpu.memory_space<vmem>>, vector<1x2x32xf32>
    %227 = vector.shape_cast %226 : vector<1x2x32xf32> to vector<2x32xf32>
    %228 = vector.shape_cast %224 : vector<2x32xf32> to vector<1x2x32xf32>
    tpu.vector_store %arg8[%225, %c0_97, %c0_98], %228 {strides = array<i32>} : memref<8x2x32xf32, #tpu.memory_space<vmem>>, vector<1x2x32xf32>,
    %c4_i32 = arith.constant 4 : i32
    %c0_i32_99 = arith.constant 0 : i32
    %229 = arith.cmpi eq, %arg0, %c0_i32_99 : i32
    %c7_i32_100 = arith.constant 7 : i32
    %230 = arith.subi %c7_i32_100, %c4_i32 : i32
    %231 = arith.select %229, %c4_i32, %230 : i32
    %232 = arith.index_cast %231 : i32 to index
    %c0_101 = arith.constant 0 : index
    %c0_102 = arith.constant 0 : index
    %233 = vector.load %arg7[%232, %c0_101, %c0_102] : memref<8x2x96xf32, #tpu.memory_space<vmem>>, vector<1x2x96xf32>
    %234 = vector.shape_cast %233 : vector<1x2x96xf32> to vector<2x96xf32>
    %cst_103 = arith.constant dense<0.000000e+00> : vector<2x96xf32>
    %235 = tpu.matmul %224, %3, %cst_103 {dimension_numbers = #tpu.dot_dimension_numbers<[1], [0], [0], [1], [0, 0, 1, 1], [], []>} : vector<2x32xf32>, vector<32x96xf32>, vector<2x96xf32> -> vector<2x96xf32>
    %236 = vector.broadcast %7 : vector<1x96xf32> to vector<2x96xf32>
    %237 = arith.addf %235, %236 : vector<2x96xf32>
    %238 = vector.extract_strided_slice %234 {offsets = [0, 0], sizes = [2, 32], strides = [1, 1]} : vector<2x96xf32> to vector<2x32xf32>
    %239 = vector.extract_strided_slice %237 {offsets = [0, 0], sizes = [2, 32], strides = [1, 1]} : vector<2x96xf32> to vector<2x32xf32>
    %240 = arith.addf %238, %239 : vector<2x32xf32>
    %241 = arith.negf %240 : vector<2x32xf32>
    %242 = math.exp %241 : vector<2x32xf32>
    %cst_104 = arith.constant 1.000000e+00 : f32
    %243 = vector.broadcast %cst_104 : f32 to vector<2x32xf32>
    %244 = arith.addf %243, %242 : vector<2x32xf32>
    %245 = arith.divf %243, %244 : vector<2x32xf32>
    %246 = vector.extract_strided_slice %234 {offsets = [0, 32], sizes = [2, 32], strides = [1, 1]} : vector<2x96xf32> to vector<2x32xf32>
    %247 = vector.extract_strided_slice %237 {offsets = [0, 32], sizes = [2, 32], strides = [1, 1]} : vector<2x96xf32> to vector<2x32xf32>
    %248 = arith.addf %246, %247 : vector<2x32xf32>
    %249 = arith.negf %248 : vector<2x32xf32>
    %250 = math.exp %249 : vector<2x32xf32>
    %cst_105 = arith.constant 1.000000e+00 : f32
    %251 = vector.broadcast %cst_105 : f32 to vector<2x32xf32>
    %252 = arith.addf %251, %250 : vector<2x32xf32>
    %253 = arith.divf %251, %252 : vector<2x32xf32>
    %254 = vector.extract_strided_slice %234 {offsets = [0, 64], sizes = [2, 32], strides = [1, 1]} : vector<2x96xf32> to vector<2x32xf32>
    %255 = vector.extract_strided_slice %237 {offsets = [0, 64], sizes = [2, 32], strides = [1, 1]} : vector<2x96xf32> to vector<2x32xf32>
    %256 = arith.mulf %245, %255 : vector<2x32xf32>
    %257 = arith.addf %254, %256 : vector<2x32xf32>
    %258 = math.tanh %257 : vector<2x32xf32>
    %cst_106 = arith.constant 1.000000e+00 : f32
    %259 = vector.broadcast %cst_106 : f32 to vector<2x32xf32>
    %260 = arith.subf %259, %253 : vector<2x32xf32>
    %261 = arith.mulf %260, %258 : vector<2x32xf32>
    %262 = arith.mulf %253, %224 : vector<2x32xf32>
    %263 = arith.addf %261, %262 : vector<2x32xf32>
    %264 = arith.index_cast %231 : i32 to index
    %c0_107 = arith.constant 0 : index
    %c0_108 = arith.constant 0 : index
    %265 = vector.load %arg8[%264, %c0_107, %c0_108] : memref<8x2x32xf32, #tpu.memory_space<vmem>>, vector<1x2x32xf32>
    %266 = vector.shape_cast %265 : vector<1x2x32xf32> to vector<2x32xf32>
    %267 = vector.shape_cast %263 : vector<2x32xf32> to vector<1x2x32xf32>
    tpu.vector_store %arg8[%264, %c0_107, %c0_108], %267 {strides = array<i32>} : memref<8x2x32xf32, #tpu.memory_space<vmem>>, vector<1x2x32xf32>,
    %c5_i32 = arith.constant 5 : i32
    %c0_i32_109 = arith.constant 0 : i32
    %268 = arith.cmpi eq, %arg0, %c0_i32_109 : i32
    %c7_i32_110 = arith.constant 7 : i32
    %269 = arith.subi %c7_i32_110, %c5_i32 : i32
    %270 = arith.select %268, %c5_i32, %269 : i32
    %271 = arith.index_cast %270 : i32 to index
    %c0_111 = arith.constant 0 : index
    %c0_112 = arith.constant 0 : index
    %272 = vector.load %arg7[%271, %c0_111, %c0_112] : memref<8x2x96xf32, #tpu.memory_space<vmem>>, vector<1x2x96xf32>
    %273 = vector.shape_cast %272 : vector<1x2x96xf32> to vector<2x96xf32>
    %cst_113 = arith.constant dense<0.000000e+00> : vector<2x96xf32>
    %274 = tpu.matmul %263, %3, %cst_113 {dimension_numbers = #tpu.dot_dimension_numbers<[1], [0], [0], [1], [0, 0, 1, 1], [], []>} : vector<2x32xf32>, vector<32x96xf32>, vector<2x96xf32> -> vector<2x96xf32>
    %275 = vector.broadcast %7 : vector<1x96xf32> to vector<2x96xf32>
    %276 = arith.addf %274, %275 : vector<2x96xf32>
    %277 = vector.extract_strided_slice %273 {offsets = [0, 0], sizes = [2, 32], strides = [1, 1]} : vector<2x96xf32> to vector<2x32xf32>
    %278 = vector.extract_strided_slice %276 {offsets = [0, 0], sizes = [2, 32], strides = [1, 1]} : vector<2x96xf32> to vector<2x32xf32>
    %279 = arith.addf %277, %278 : vector<2x32xf32>
    %280 = arith.negf %279 : vector<2x32xf32>
    %281 = math.exp %280 : vector<2x32xf32>
    %cst_114 = arith.constant 1.000000e+00 : f32
    %282 = vector.broadcast %cst_114 : f32 to vector<2x32xf32>
    %283 = arith.addf %282, %281 : vector<2x32xf32>
    %284 = arith.divf %282, %283 : vector<2x32xf32>
    %285 = vector.extract_strided_slice %273 {offsets = [0, 32], sizes = [2, 32], strides = [1, 1]} : vector<2x96xf32> to vector<2x32xf32>
    %286 = vector.extract_strided_slice %276 {offsets = [0, 32], sizes = [2, 32], strides = [1, 1]} : vector<2x96xf32> to vector<2x32xf32>
    %287 = arith.addf %285, %286 : vector<2x32xf32>
    %288 = arith.negf %287 : vector<2x32xf32>
    %289 = math.exp %288 : vector<2x32xf32>
    %cst_115 = arith.constant 1.000000e+00 : f32
    %290 = vector.broadcast %cst_115 : f32 to vector<2x32xf32>
    %291 = arith.addf %290, %289 : vector<2x32xf32>
    %292 = arith.divf %290, %291 : vector<2x32xf32>
    %293 = vector.extract_strided_slice %273 {offsets = [0, 64], sizes = [2, 32], strides = [1, 1]} : vector<2x96xf32> to vector<2x32xf32>
    %294 = vector.extract_strided_slice %276 {offsets = [0, 64], sizes = [2, 32], strides = [1, 1]} : vector<2x96xf32> to vector<2x32xf32>
    %295 = arith.mulf %284, %294 : vector<2x32xf32>
    %296 = arith.addf %293, %295 : vector<2x32xf32>
    %297 = math.tanh %296 : vector<2x32xf32>
    %cst_116 = arith.constant 1.000000e+00 : f32
    %298 = vector.broadcast %cst_116 : f32 to vector<2x32xf32>
    %299 = arith.subf %298, %292 : vector<2x32xf32>
    %300 = arith.mulf %299, %297 : vector<2x32xf32>
    %301 = arith.mulf %292, %263 : vector<2x32xf32>
    %302 = arith.addf %300, %301 : vector<2x32xf32>
    %303 = arith.index_cast %270 : i32 to index
    %c0_117 = arith.constant 0 : index
    %c0_118 = arith.constant 0 : index
    %304 = vector.load %arg8[%303, %c0_117, %c0_118] : memref<8x2x32xf32, #tpu.memory_space<vmem>>, vector<1x2x32xf32>
    %305 = vector.shape_cast %304 : vector<1x2x32xf32> to vector<2x32xf32>
    %306 = vector.shape_cast %302 : vector<2x32xf32> to vector<1x2x32xf32>
    tpu.vector_store %arg8[%303, %c0_117, %c0_118], %306 {strides = array<i32>} : memref<8x2x32xf32, #tpu.memory_space<vmem>>, vector<1x2x32xf32>,
    %c6_i32 = arith.constant 6 : i32
    %c0_i32_119 = arith.constant 0 : i32
    %307 = arith.cmpi eq, %arg0, %c0_i32_119 : i32
    %c7_i32_120 = arith.constant 7 : i32
    %308 = arith.subi %c7_i32_120, %c6_i32 : i32
    %309 = arith.select %307, %c6_i32, %308 : i32
    %310 = arith.index_cast %309 : i32 to index
    %c0_121 = arith.constant 0 : index
    %c0_122 = arith.constant 0 : index
    %311 = vector.load %arg7[%310, %c0_121, %c0_122] : memref<8x2x96xf32, #tpu.memory_space<vmem>>, vector<1x2x96xf32>
    %312 = vector.shape_cast %311 : vector<1x2x96xf32> to vector<2x96xf32>
    %cst_123 = arith.constant dense<0.000000e+00> : vector<2x96xf32>
    %313 = tpu.matmul %302, %3, %cst_123 {dimension_numbers = #tpu.dot_dimension_numbers<[1], [0], [0], [1], [0, 0, 1, 1], [], []>} : vector<2x32xf32>, vector<32x96xf32>, vector<2x96xf32> -> vector<2x96xf32>
    %314 = vector.broadcast %7 : vector<1x96xf32> to vector<2x96xf32>
    %315 = arith.addf %313, %314 : vector<2x96xf32>
    %316 = vector.extract_strided_slice %312 {offsets = [0, 0], sizes = [2, 32], strides = [1, 1]} : vector<2x96xf32> to vector<2x32xf32>
    %317 = vector.extract_strided_slice %315 {offsets = [0, 0], sizes = [2, 32], strides = [1, 1]} : vector<2x96xf32> to vector<2x32xf32>
    %318 = arith.addf %316, %317 : vector<2x32xf32>
    %319 = arith.negf %318 : vector<2x32xf32>
    %320 = math.exp %319 : vector<2x32xf32>
    %cst_124 = arith.constant 1.000000e+00 : f32
    %321 = vector.broadcast %cst_124 : f32 to vector<2x32xf32>
    %322 = arith.addf %321, %320 : vector<2x32xf32>
    %323 = arith.divf %321, %322 : vector<2x32xf32>
    %324 = vector.extract_strided_slice %312 {offsets = [0, 32], sizes = [2, 32], strides = [1, 1]} : vector<2x96xf32> to vector<2x32xf32>
    %325 = vector.extract_strided_slice %315 {offsets = [0, 32], sizes = [2, 32], strides = [1, 1]} : vector<2x96xf32> to vector<2x32xf32>
    %326 = arith.addf %324, %325 : vector<2x32xf32>
    %327 = arith.negf %326 : vector<2x32xf32>
    %328 = math.exp %327 : vector<2x32xf32>
    %cst_125 = arith.constant 1.000000e+00 : f32
    %329 = vector.broadcast %cst_125 : f32 to vector<2x32xf32>
    %330 = arith.addf %329, %328 : vector<2x32xf32>
    %331 = arith.divf %329, %330 : vector<2x32xf32>
    %332 = vector.extract_strided_slice %312 {offsets = [0, 64], sizes = [2, 32], strides = [1, 1]} : vector<2x96xf32> to vector<2x32xf32>
    %333 = vector.extract_strided_slice %315 {offsets = [0, 64], sizes = [2, 32], strides = [1, 1]} : vector<2x96xf32> to vector<2x32xf32>
    %334 = arith.mulf %323, %333 : vector<2x32xf32>
    %335 = arith.addf %332, %334 : vector<2x32xf32>
    %336 = math.tanh %335 : vector<2x32xf32>
    %cst_126 = arith.constant 1.000000e+00 : f32
    %337 = vector.broadcast %cst_126 : f32 to vector<2x32xf32>
    %338 = arith.subf %337, %331 : vector<2x32xf32>
    %339 = arith.mulf %338, %336 : vector<2x32xf32>
    %340 = arith.mulf %331, %302 : vector<2x32xf32>
    %341 = arith.addf %339, %340 : vector<2x32xf32>
    %342 = arith.index_cast %309 : i32 to index
    %c0_127 = arith.constant 0 : index
    %c0_128 = arith.constant 0 : index
    %343 = vector.load %arg8[%342, %c0_127, %c0_128] : memref<8x2x32xf32, #tpu.memory_space<vmem>>, vector<1x2x32xf32>
    %344 = vector.shape_cast %343 : vector<1x2x32xf32> to vector<2x32xf32>
    %345 = vector.shape_cast %341 : vector<2x32xf32> to vector<1x2x32xf32>
    tpu.vector_store %arg8[%342, %c0_127, %c0_128], %345 {strides = array<i32>} : memref<8x2x32xf32, #tpu.memory_space<vmem>>, vector<1x2x32xf32>,
    %c7_i32_129 = arith.constant 7 : i32
    %c0_i32_130 = arith.constant 0 : i32
    %346 = arith.cmpi eq, %arg0, %c0_i32_130 : i32
    %c7_i32_131 = arith.constant 7 : i32
    %347 = arith.subi %c7_i32_131, %c7_i32_129 : i32
    %348 = arith.select %346, %c7_i32_129, %347 : i32
    %349 = arith.index_cast %348 : i32 to index
    %c0_132 = arith.constant 0 : index
    %c0_133 = arith.constant 0 : index
    %350 = vector.load %arg7[%349, %c0_132, %c0_133] : memref<8x2x96xf32, #tpu.memory_space<vmem>>, vector<1x2x96xf32>
    %351 = vector.shape_cast %350 : vector<1x2x96xf32> to vector<2x96xf32>
    %cst_134 = arith.constant dense<0.000000e+00> : vector<2x96xf32>
    %352 = tpu.matmul %341, %3, %cst_134 {dimension_numbers = #tpu.dot_dimension_numbers<[1], [0], [0], [1], [0, 0, 1, 1], [], []>} : vector<2x32xf32>, vector<32x96xf32>, vector<2x96xf32> -> vector<2x96xf32>
    %353 = vector.broadcast %7 : vector<1x96xf32> to vector<2x96xf32>
    %354 = arith.addf %352, %353 : vector<2x96xf32>
    %355 = vector.extract_strided_slice %351 {offsets = [0, 0], sizes = [2, 32], strides = [1, 1]} : vector<2x96xf32> to vector<2x32xf32>
    %356 = vector.extract_strided_slice %354 {offsets = [0, 0], sizes = [2, 32], strides = [1, 1]} : vector<2x96xf32> to vector<2x32xf32>
    %357 = arith.addf %355, %356 : vector<2x32xf32>
    %358 = arith.negf %357 : vector<2x32xf32>
    %359 = math.exp %358 : vector<2x32xf32>
    %cst_135 = arith.constant 1.000000e+00 : f32
    %360 = vector.broadcast %cst_135 : f32 to vector<2x32xf32>
    %361 = arith.addf %360, %359 : vector<2x32xf32>
    %362 = arith.divf %360, %361 : vector<2x32xf32>
    %363 = vector.extract_strided_slice %351 {offsets = [0, 32], sizes = [2, 32], strides = [1, 1]} : vector<2x96xf32> to vector<2x32xf32>
    %364 = vector.extract_strided_slice %354 {offsets = [0, 32], sizes = [2, 32], strides = [1, 1]} : vector<2x96xf32> to vector<2x32xf32>
    %365 = arith.addf %363, %364 : vector<2x32xf32>
    %366 = arith.negf %365 : vector<2x32xf32>
    %367 = math.exp %366 : vector<2x32xf32>
    %cst_136 = arith.constant 1.000000e+00 : f32
    %368 = vector.broadcast %cst_136 : f32 to vector<2x32xf32>
    %369 = arith.addf %368, %367 : vector<2x32xf32>
    %370 = arith.divf %368, %369 : vector<2x32xf32>
    %371 = vector.extract_strided_slice %351 {offsets = [0, 64], sizes = [2, 32], strides = [1, 1]} : vector<2x96xf32> to vector<2x32xf32>
    %372 = vector.extract_strided_slice %354 {offsets = [0, 64], sizes = [2, 32], strides = [1, 1]} : vector<2x96xf32> to vector<2x32xf32>
    %373 = arith.mulf %362, %372 : vector<2x32xf32>
    %374 = arith.addf %371, %373 : vector<2x32xf32>
    %375 = math.tanh %374 : vector<2x32xf32>
    %cst_137 = arith.constant 1.000000e+00 : f32
    %376 = vector.broadcast %cst_137 : f32 to vector<2x32xf32>
    %377 = arith.subf %376, %370 : vector<2x32xf32>
    %378 = arith.mulf %377, %375 : vector<2x32xf32>
    %379 = arith.mulf %370, %341 : vector<2x32xf32>
    %380 = arith.addf %378, %379 : vector<2x32xf32>
    %381 = arith.index_cast %348 : i32 to index
    %c0_138 = arith.constant 0 : index
    %c0_139 = arith.constant 0 : index
    %382 = vector.load %arg8[%381, %c0_138, %c0_139] : memref<8x2x32xf32, #tpu.memory_space<vmem>>, vector<1x2x32xf32>
    %383 = vector.shape_cast %382 : vector<1x2x32xf32> to vector<2x32xf32>
    %384 = vector.shape_cast %380 : vector<2x32xf32> to vector<1x2x32xf32>
    tpu.vector_store %arg8[%381, %c0_138, %c0_139], %384 {strides = array<i32>} : memref<8x2x32xf32, #tpu.memory_space<vmem>>, vector<1x2x32xf32>,
    %c8_i32 = arith.constant 8 : i32
    %c0_140 = arith.constant 0 : index
    %c0_141 = arith.constant 0 : index
    %c0_142 = arith.constant 0 : index
    %385 = vector.load %arg8[%c0_140, %c0_141, %c0_142] : memref<8x2x32xf32, #tpu.memory_space<vmem>>, vector<8x2x32xf32>
    %c0_143 = arith.constant 0 : index
    %c0_144 = arith.constant 0 : index
    %c0_145 = arith.constant 0 : index
    %c0_146 = arith.constant 0 : index
    %386 = vector.load %arg6[%c0_143, %c0_144, %c0_145, %c0_146] : memref<1x8x2x32xf32, #tpu.memory_space<vmem>>, vector<1x8x2x32xf32>
    %387 = vector.shape_cast %386 : vector<1x8x2x32xf32> to vector<8x2x32xf32>
    %388 = vector.shape_cast %385 : vector<8x2x32xf32> to vector<1x8x2x32xf32>
    tpu.vector_store %arg6[%c0_143, %c0_144, %c0_145, %c0_146], %388 {strides = array<i32>} : memref<1x8x2x32xf32, #tpu.memory_space<vmem>>, vector<1x8x2x32xf32>,
    return
  }
  func.func @transform_0(%arg0: i32) -> (i32, i32, i32) {
    %c0_i32 = arith.constant 0 : i32
    %c0_i32_0 = arith.constant 0 : i32
    %c0_i32_1 = arith.constant 0 : i32
    %c0_i32_2 = arith.constant 0 : i32
    return %c0_i32, %c0_i32_0, %c0_i32_1 : i32, i32, i32
  }
  func.func @transform_1(%arg0: i32) -> (i32, i32, i32) {
    %c0_i32 = arith.constant 0 : i32
    %c0_i32_0 = arith.constant 0 : i32
    %c0_i32_1 = arith.constant 0 : i32
    return %arg0, %c0_i32, %c0_i32_0 : i32, i32, i32
  }
  func.func @transform_2(%arg0: i32) -> (i32, i32, i32) {
    %c0_i32 = arith.constant 0 : i32
    %c0_i32_0 = arith.constant 0 : i32
    %c0_i32_1 = arith.constant 0 : i32
    return %arg0, %c0_i32, %c0_i32_0 : i32, i32, i32
  }
  func.func @transform_3(%arg0: i32) -> (i32, i32, i32) {
    %c0_i32 = arith.constant 0 : i32
    %c0_i32_0 = arith.constant 0 : i32
    %c0_i32_1 = arith.constant 0 : i32
    return %arg0, %c0_i32, %c0_i32_0 : i32, i32, i32
  }
  func.func @transform_4(%arg0: i32) -> (i32, i32, i32) {
    %c0_i32 = arith.constant 0 : i32
    %c0_i32_0 = arith.constant 0 : i32
    %c0_i32_1 = arith.constant 0 : i32
    return %arg0, %c0_i32, %c0_i32_0 : i32, i32, i32
  }
  func.func @transform_5(%arg0: i32) -> (i32, i32, i32, i32) {
    %c0_i32 = arith.constant 0 : i32
    %c0_i32_0 = arith.constant 0 : i32
    %c0_i32_1 = arith.constant 0 : i32
    %c0_i32_2 = arith.constant 0 : i32
    return %arg0, %c0_i32, %c0_i32_0, %c0_i32_1 : i32, i32, i32, i32
  }
}

module attributes {stable_mosaic.version = 11 : i64} {
  func.func @_gcn_stack_kernel(%arg0: i32, %arg1: memref<1x8x64xf32, #tpu.memory_space<vmem>>, %arg2: memref<1x8x8xf32, #tpu.memory_space<vmem>>, %arg3: memref<1x8x8xf32, #tpu.memory_space<vmem>>, %arg4: memref<2x64x64xf32, #tpu.memory_space<vmem>>, %arg5: memref<2x1x64xf32, #tpu.memory_space<vmem>>, %arg6: memref<2x64x64xf32, #tpu.memory_space<vmem>>, %arg7: memref<2x1x64xf32, #tpu.memory_space<vmem>>, %arg8: memref<1x8x64xf32, #tpu.memory_space<vmem>>) attributes {dimension_semantics = [#tpu.dimension_semantics<parallel>], iteration_bounds = array<i64: 2>, scalar_prefetch = 0 : i64, scratch_operands = 0 : i64, tpu.core_type = #tpu.core_type<tc>, window_params = [{transform_indices = @transform_0, window_bounds = array<i64: 1, 8, 64>}, {transform_indices = @transform_1, window_bounds = array<i64: 1, 8, 8>}, {transform_indices = @transform_2, window_bounds = array<i64: 1, 8, 8>}, {pipeline_mode = #tpu.pipeline_mode<synchronous>, transform_indices = @transform_3, window_bounds = array<i64: 2, 64, 64>}, {pipeline_mode = #tpu.pipeline_mode<synchronous>, transform_indices = @transform_4, window_bounds = array<i64: 2, 1, 64>}, {pipeline_mode = #tpu.pipeline_mode<synchronous>, transform_indices = @transform_5, window_bounds = array<i64: 2, 64, 64>}, {pipeline_mode = #tpu.pipeline_mode<synchronous>, transform_indices = @transform_6, window_bounds = array<i64: 2, 1, 64>}, {transform_indices = @transform_7, window_bounds = array<i64: 1, 8, 64>}]} {
    %c0 = arith.constant 0 : index
    %c0_0 = arith.constant 0 : index
    %c0_1 = arith.constant 0 : index
    %0 = vector.load %arg1[%c0, %c0_0, %c0_1] : memref<1x8x64xf32, #tpu.memory_space<vmem>>, vector<1x8x64xf32>
    %1 = vector.shape_cast %0 : vector<1x8x64xf32> to vector<8x64xf32>
    %c0_2 = arith.constant 0 : index
    %c0_3 = arith.constant 0 : index
    %c0_4 = arith.constant 0 : index
    %2 = vector.load %arg2[%c0_2, %c0_3, %c0_4] : memref<1x8x8xf32, #tpu.memory_space<vmem>>, vector<1x8x8xf32>
    %3 = vector.shape_cast %2 : vector<1x8x8xf32> to vector<8x8xf32>
    %c0_5 = arith.constant 0 : index
    %c0_6 = arith.constant 0 : index
    %c0_7 = arith.constant 0 : index
    %4 = vector.load %arg3[%c0_5, %c0_6, %c0_7] : memref<1x8x8xf32, #tpu.memory_space<vmem>>, vector<1x8x8xf32>
    %5 = vector.shape_cast %4 : vector<1x8x8xf32> to vector<8x8xf32>
    %c0_8 = arith.constant 0 : index
    %c0_9 = arith.constant 0 : index
    %c0_10 = arith.constant 0 : index
    %6 = vector.load %arg4[%c0_8, %c0_9, %c0_10] : memref<2x64x64xf32, #tpu.memory_space<vmem>>, vector<1x64x64xf32>
    %7 = vector.shape_cast %6 : vector<1x64x64xf32> to vector<64x64xf32>
    %cst = arith.constant dense<0.000000e+00> : vector<8x64xf32>
    %8 = tpu.matmul %1, %7, %cst {dimension_numbers = #tpu.dot_dimension_numbers<[1], [0], [0], [1], [0, 0, 1, 1], [], []>} : vector<8x64xf32>, vector<64x64xf32>, vector<8x64xf32> -> vector<8x64xf32>
    %c0_11 = arith.constant 0 : index
    %c0_12 = arith.constant 0 : index
    %c0_13 = arith.constant 0 : index
    %9 = vector.load %arg5[%c0_11, %c0_12, %c0_13] : memref<2x1x64xf32, #tpu.memory_space<vmem>>, vector<1x1x64xf32>
    %10 = vector.shape_cast %9 : vector<1x1x64xf32> to vector<1x64xf32>
    %11 = vector.broadcast %10 : vector<1x64xf32> to vector<8x64xf32>
    %12 = arith.addf %8, %11 : vector<8x64xf32>
    %cst_14 = arith.constant dense<0.000000e+00> : vector<8x64xf32>
    %13 = tpu.matmul %3, %12, %cst_14 {dimension_numbers = #tpu.dot_dimension_numbers<[1], [0], [0], [1], [0, 0, 1, 1], [], []>} : vector<8x8xf32>, vector<8x64xf32>, vector<8x64xf32> -> vector<8x64xf32>
    %cst_15 = arith.constant 0.000000e+00 : f32
    %14 = vector.broadcast %cst_15 : f32 to vector<8x64xf32>
    %15 = arith.maximumf %13, %14 : vector<8x64xf32>
    %16 = arith.addf %1, %15 : vector<8x64xf32>
    %c0_16 = arith.constant 0 : index
    %c0_17 = arith.constant 0 : index
    %c0_18 = arith.constant 0 : index
    %17 = vector.load %arg6[%c0_16, %c0_17, %c0_18] : memref<2x64x64xf32, #tpu.memory_space<vmem>>, vector<1x64x64xf32>
    %18 = vector.shape_cast %17 : vector<1x64x64xf32> to vector<64x64xf32>
    %cst_19 = arith.constant dense<0.000000e+00> : vector<8x64xf32>
    %19 = tpu.matmul %16, %18, %cst_19 {dimension_numbers = #tpu.dot_dimension_numbers<[1], [0], [0], [1], [0, 0, 1, 1], [], []>} : vector<8x64xf32>, vector<64x64xf32>, vector<8x64xf32> -> vector<8x64xf32>
    %c0_20 = arith.constant 0 : index
    %c0_21 = arith.constant 0 : index
    %c0_22 = arith.constant 0 : index
    %20 = vector.load %arg7[%c0_20, %c0_21, %c0_22] : memref<2x1x64xf32, #tpu.memory_space<vmem>>, vector<1x1x64xf32>
    %21 = vector.shape_cast %20 : vector<1x1x64xf32> to vector<1x64xf32>
    %22 = vector.broadcast %21 : vector<1x64xf32> to vector<8x64xf32>
    %23 = arith.addf %19, %22 : vector<8x64xf32>
    %cst_23 = arith.constant dense<0.000000e+00> : vector<8x64xf32>
    %24 = tpu.matmul %5, %23, %cst_23 {dimension_numbers = #tpu.dot_dimension_numbers<[1], [0], [0], [1], [0, 0, 1, 1], [], []>} : vector<8x8xf32>, vector<8x64xf32>, vector<8x64xf32> -> vector<8x64xf32>
    %cst_24 = arith.constant 0.000000e+00 : f32
    %25 = vector.broadcast %cst_24 : f32 to vector<8x64xf32>
    %26 = arith.maximumf %24, %25 : vector<8x64xf32>
    %27 = arith.addf %16, %26 : vector<8x64xf32>
    %c1 = arith.constant 1 : index
    %c0_25 = arith.constant 0 : index
    %c0_26 = arith.constant 0 : index
    %28 = vector.load %arg4[%c1, %c0_25, %c0_26] : memref<2x64x64xf32, #tpu.memory_space<vmem>>, vector<1x64x64xf32>
    %29 = vector.shape_cast %28 : vector<1x64x64xf32> to vector<64x64xf32>
    %cst_27 = arith.constant dense<0.000000e+00> : vector<8x64xf32>
    %30 = tpu.matmul %27, %29, %cst_27 {dimension_numbers = #tpu.dot_dimension_numbers<[1], [0], [0], [1], [0, 0, 1, 1], [], []>} : vector<8x64xf32>, vector<64x64xf32>, vector<8x64xf32> -> vector<8x64xf32>
    %c1_28 = arith.constant 1 : index
    %c0_29 = arith.constant 0 : index
    %c0_30 = arith.constant 0 : index
    %31 = vector.load %arg5[%c1_28, %c0_29, %c0_30] : memref<2x1x64xf32, #tpu.memory_space<vmem>>, vector<1x1x64xf32>
    %32 = vector.shape_cast %31 : vector<1x1x64xf32> to vector<1x64xf32>
    %33 = vector.broadcast %32 : vector<1x64xf32> to vector<8x64xf32>
    %34 = arith.addf %30, %33 : vector<8x64xf32>
    %cst_31 = arith.constant dense<0.000000e+00> : vector<8x64xf32>
    %35 = tpu.matmul %3, %34, %cst_31 {dimension_numbers = #tpu.dot_dimension_numbers<[1], [0], [0], [1], [0, 0, 1, 1], [], []>} : vector<8x8xf32>, vector<8x64xf32>, vector<8x64xf32> -> vector<8x64xf32>
    %cst_32 = arith.constant 0.000000e+00 : f32
    %36 = vector.broadcast %cst_32 : f32 to vector<8x64xf32>
    %37 = arith.maximumf %35, %36 : vector<8x64xf32>
    %38 = arith.addf %27, %37 : vector<8x64xf32>
    %c1_33 = arith.constant 1 : index
    %c0_34 = arith.constant 0 : index
    %c0_35 = arith.constant 0 : index
    %39 = vector.load %arg6[%c1_33, %c0_34, %c0_35] : memref<2x64x64xf32, #tpu.memory_space<vmem>>, vector<1x64x64xf32>
    %40 = vector.shape_cast %39 : vector<1x64x64xf32> to vector<64x64xf32>
    %cst_36 = arith.constant dense<0.000000e+00> : vector<8x64xf32>
    %41 = tpu.matmul %38, %40, %cst_36 {dimension_numbers = #tpu.dot_dimension_numbers<[1], [0], [0], [1], [0, 0, 1, 1], [], []>} : vector<8x64xf32>, vector<64x64xf32>, vector<8x64xf32> -> vector<8x64xf32>
    %c1_37 = arith.constant 1 : index
    %c0_38 = arith.constant 0 : index
    %c0_39 = arith.constant 0 : index
    %42 = vector.load %arg7[%c1_37, %c0_38, %c0_39] : memref<2x1x64xf32, #tpu.memory_space<vmem>>, vector<1x1x64xf32>
    %43 = vector.shape_cast %42 : vector<1x1x64xf32> to vector<1x64xf32>
    %44 = vector.broadcast %43 : vector<1x64xf32> to vector<8x64xf32>
    %45 = arith.addf %41, %44 : vector<8x64xf32>
    %cst_40 = arith.constant dense<0.000000e+00> : vector<8x64xf32>
    %46 = tpu.matmul %5, %45, %cst_40 {dimension_numbers = #tpu.dot_dimension_numbers<[1], [0], [0], [1], [0, 0, 1, 1], [], []>} : vector<8x8xf32>, vector<8x64xf32>, vector<8x64xf32> -> vector<8x64xf32>
    %cst_41 = arith.constant 0.000000e+00 : f32
    %47 = vector.broadcast %cst_41 : f32 to vector<8x64xf32>
    %48 = arith.maximumf %46, %47 : vector<8x64xf32>
    %49 = arith.addf %38, %48 : vector<8x64xf32>
    %c0_42 = arith.constant 0 : index
    %c0_43 = arith.constant 0 : index
    %c0_44 = arith.constant 0 : index
    %50 = vector.load %arg8[%c0_42, %c0_43, %c0_44] : memref<1x8x64xf32, #tpu.memory_space<vmem>>, vector<1x8x64xf32>
    %51 = vector.shape_cast %50 : vector<1x8x64xf32> to vector<8x64xf32>
    %52 = vector.shape_cast %49 : vector<8x64xf32> to vector<1x8x64xf32>
    tpu.vector_store %arg8[%c0_42, %c0_43, %c0_44], %52 {strides = array<i32>} : memref<1x8x64xf32, #tpu.memory_space<vmem>>, vector<1x8x64xf32>,
    return
  }
  func.func @transform_0(%arg0: i32) -> (i32, i32, i32) {
    %c0_i32 = arith.constant 0 : i32
    %c0_i32_0 = arith.constant 0 : i32
    %c0_i32_1 = arith.constant 0 : i32
    return %arg0, %c0_i32, %c0_i32_0 : i32, i32, i32
  }
  func.func @transform_1(%arg0: i32) -> (i32, i32, i32) {
    %c0_i32 = arith.constant 0 : i32
    %c0_i32_0 = arith.constant 0 : i32
    %c0_i32_1 = arith.constant 0 : i32
    return %arg0, %c0_i32, %c0_i32_0 : i32, i32, i32
  }
  func.func @transform_2(%arg0: i32) -> (i32, i32, i32) {
    %c0_i32 = arith.constant 0 : i32
    %c0_i32_0 = arith.constant 0 : i32
    %c0_i32_1 = arith.constant 0 : i32
    return %arg0, %c0_i32, %c0_i32_0 : i32, i32, i32
  }
  func.func @transform_3(%arg0: i32) -> (i32, i32, i32) {
    %c0_i32 = arith.constant 0 : i32
    %c0_i32_0 = arith.constant 0 : i32
    %c0_i32_1 = arith.constant 0 : i32
    %c0_i32_2 = arith.constant 0 : i32
    return %c0_i32, %c0_i32_0, %c0_i32_1 : i32, i32, i32
  }
  func.func @transform_4(%arg0: i32) -> (i32, i32, i32) {
    %c0_i32 = arith.constant 0 : i32
    %c0_i32_0 = arith.constant 0 : i32
    %c0_i32_1 = arith.constant 0 : i32
    %c0_i32_2 = arith.constant 0 : i32
    return %c0_i32, %c0_i32_0, %c0_i32_1 : i32, i32, i32
  }
  func.func @transform_5(%arg0: i32) -> (i32, i32, i32) {
    %c0_i32 = arith.constant 0 : i32
    %c0_i32_0 = arith.constant 0 : i32
    %c0_i32_1 = arith.constant 0 : i32
    %c0_i32_2 = arith.constant 0 : i32
    return %c0_i32, %c0_i32_0, %c0_i32_1 : i32, i32, i32
  }
  func.func @transform_6(%arg0: i32) -> (i32, i32, i32) {
    %c0_i32 = arith.constant 0 : i32
    %c0_i32_0 = arith.constant 0 : i32
    %c0_i32_1 = arith.constant 0 : i32
    %c0_i32_2 = arith.constant 0 : i32
    return %c0_i32, %c0_i32_0, %c0_i32_1 : i32, i32, i32
  }
  func.func @transform_7(%arg0: i32) -> (i32, i32, i32) {
    %c0_i32 = arith.constant 0 : i32
    %c0_i32_0 = arith.constant 0 : i32
    %c0_i32_1 = arith.constant 0 : i32
    return %arg0, %c0_i32, %c0_i32_0 : i32, i32, i32
  }
}

module attributes {stable_mosaic.version = 11 : i64} {
  func.func @_bigru_layer_kernel(%arg0: i32, %arg1: memref<8x2x64xf32, #tpu.memory_space<vmem>>, %arg2: memref<1x64x96xf32, #tpu.memory_space<vmem>>, %arg3: memref<1x32x96xf32, #tpu.memory_space<vmem>>, %arg4: memref<1x1x96xf32, #tpu.memory_space<vmem>>, %arg5: memref<1x1x96xf32, #tpu.memory_space<vmem>>, %arg6: memref<1x8x2x32xf32, #tpu.memory_space<vmem>>, %arg7: memref<8x2x96xf32, #tpu.memory_space<vmem>>, %arg8: memref<8x2x32xf32, #tpu.memory_space<vmem>>) attributes {dimension_semantics = [#tpu.dimension_semantics<parallel>], iteration_bounds = array<i64: 2>, scalar_prefetch = 0 : i64, scratch_operands = 2 : i64, tpu.core_type = #tpu.core_type<tc>, window_params = [{pipeline_mode = #tpu.pipeline_mode<synchronous>, transform_indices = @transform_0, window_bounds = array<i64: 8, 2, 64>}, {transform_indices = @transform_1, window_bounds = array<i64: 1, 64, 96>}, {transform_indices = @transform_2, window_bounds = array<i64: 1, 32, 96>}, {transform_indices = @transform_3, window_bounds = array<i64: 1, 1, 96>}, {transform_indices = @transform_4, window_bounds = array<i64: 1, 1, 96>}, {transform_indices = @transform_5, window_bounds = array<i64: 1, 8, 2, 32>}]} {
    %c0 = arith.constant 0 : index
    %c0_0 = arith.constant 0 : index
    %c0_1 = arith.constant 0 : index
    %0 = vector.load %arg2[%c0, %c0_0, %c0_1] : memref<1x64x96xf32, #tpu.memory_space<vmem>>, vector<1x64x96xf32>
    %1 = vector.shape_cast %0 : vector<1x64x96xf32> to vector<64x96xf32>
    %c0_2 = arith.constant 0 : index
    %c0_3 = arith.constant 0 : index
    %c0_4 = arith.constant 0 : index
    %2 = vector.load %arg3[%c0_2, %c0_3, %c0_4] : memref<1x32x96xf32, #tpu.memory_space<vmem>>, vector<1x32x96xf32>
    %3 = vector.shape_cast %2 : vector<1x32x96xf32> to vector<32x96xf32>
    %c0_5 = arith.constant 0 : index
    %c0_6 = arith.constant 0 : index
    %c0_7 = arith.constant 0 : index
    %4 = vector.load %arg4[%c0_5, %c0_6, %c0_7] : memref<1x1x96xf32, #tpu.memory_space<vmem>>, vector<1x1x96xf32>
    %5 = vector.shape_cast %4 : vector<1x1x96xf32> to vector<1x96xf32>
    %c0_8 = arith.constant 0 : index
    %c0_9 = arith.constant 0 : index
    %c0_10 = arith.constant 0 : index
    %6 = vector.load %arg5[%c0_8, %c0_9, %c0_10] : memref<1x1x96xf32, #tpu.memory_space<vmem>>, vector<1x1x96xf32>
    %7 = vector.shape_cast %6 : vector<1x1x96xf32> to vector<1x96xf32>
    %c0_11 = arith.constant 0 : index
    %c0_12 = arith.constant 0 : index
    %c0_13 = arith.constant 0 : index
    %8 = vector.load %arg1[%c0_11, %c0_12, %c0_13] : memref<8x2x64xf32, #tpu.memory_space<vmem>>, vector<1x2x64xf32>
    %9 = vector.shape_cast %8 : vector<1x2x64xf32> to vector<2x64xf32>
    %cst = arith.constant dense<0.000000e+00> : vector<2x96xf32>
    %10 = tpu.matmul %9, %1, %cst {dimension_numbers = #tpu.dot_dimension_numbers<[1], [0], [0], [1], [0, 0, 1, 1], [], []>} : vector<2x64xf32>, vector<64x96xf32>, vector<2x96xf32> -> vector<2x96xf32>
    %11 = vector.broadcast %5 : vector<1x96xf32> to vector<2x96xf32>
    %12 = arith.addf %10, %11 : vector<2x96xf32>
    %c0_14 = arith.constant 0 : index
    %c0_15 = arith.constant 0 : index
    %c0_16 = arith.constant 0 : index
    %13 = vector.load %arg7[%c0_14, %c0_15, %c0_16] : memref<8x2x96xf32, #tpu.memory_space<vmem>>, vector<1x2x96xf32>
    %14 = vector.shape_cast %13 : vector<1x2x96xf32> to vector<2x96xf32>
    %15 = vector.shape_cast %12 : vector<2x96xf32> to vector<1x2x96xf32>
    tpu.vector_store %arg7[%c0_14, %c0_15, %c0_16], %15 {strides = array<i32>} : memref<8x2x96xf32, #tpu.memory_space<vmem>>, vector<1x2x96xf32>,
    %c1 = arith.constant 1 : index
    %c0_17 = arith.constant 0 : index
    %c0_18 = arith.constant 0 : index
    %16 = vector.load %arg1[%c1, %c0_17, %c0_18] : memref<8x2x64xf32, #tpu.memory_space<vmem>>, vector<1x2x64xf32>
    %17 = vector.shape_cast %16 : vector<1x2x64xf32> to vector<2x64xf32>
    %cst_19 = arith.constant dense<0.000000e+00> : vector<2x96xf32>
    %18 = tpu.matmul %17, %1, %cst_19 {dimension_numbers = #tpu.dot_dimension_numbers<[1], [0], [0], [1], [0, 0, 1, 1], [], []>} : vector<2x64xf32>, vector<64x96xf32>, vector<2x96xf32> -> vector<2x96xf32>
    %19 = vector.broadcast %5 : vector<1x96xf32> to vector<2x96xf32>
    %20 = arith.addf %18, %19 : vector<2x96xf32>
    %c1_20 = arith.constant 1 : index
    %c0_21 = arith.constant 0 : index
    %c0_22 = arith.constant 0 : index
    %21 = vector.load %arg7[%c1_20, %c0_21, %c0_22] : memref<8x2x96xf32, #tpu.memory_space<vmem>>, vector<1x2x96xf32>
    %22 = vector.shape_cast %21 : vector<1x2x96xf32> to vector<2x96xf32>
    %23 = vector.shape_cast %20 : vector<2x96xf32> to vector<1x2x96xf32>
    tpu.vector_store %arg7[%c1_20, %c0_21, %c0_22], %23 {strides = array<i32>} : memref<8x2x96xf32, #tpu.memory_space<vmem>>, vector<1x2x96xf32>,
    %c2 = arith.constant 2 : index
    %c0_23 = arith.constant 0 : index
    %c0_24 = arith.constant 0 : index
    %24 = vector.load %arg1[%c2, %c0_23, %c0_24] : memref<8x2x64xf32, #tpu.memory_space<vmem>>, vector<1x2x64xf32>
    %25 = vector.shape_cast %24 : vector<1x2x64xf32> to vector<2x64xf32>
    %cst_25 = arith.constant dense<0.000000e+00> : vector<2x96xf32>
    %26 = tpu.matmul %25, %1, %cst_25 {dimension_numbers = #tpu.dot_dimension_numbers<[1], [0], [0], [1], [0, 0, 1, 1], [], []>} : vector<2x64xf32>, vector<64x96xf32>, vector<2x96xf32> -> vector<2x96xf32>
    %27 = vector.broadcast %5 : vector<1x96xf32> to vector<2x96xf32>
    %28 = arith.addf %26, %27 : vector<2x96xf32>
    %c2_26 = arith.constant 2 : index
    %c0_27 = arith.constant 0 : index
    %c0_28 = arith.constant 0 : index
    %29 = vector.load %arg7[%c2_26, %c0_27, %c0_28] : memref<8x2x96xf32, #tpu.memory_space<vmem>>, vector<1x2x96xf32>
    %30 = vector.shape_cast %29 : vector<1x2x96xf32> to vector<2x96xf32>
    %31 = vector.shape_cast %28 : vector<2x96xf32> to vector<1x2x96xf32>
    tpu.vector_store %arg7[%c2_26, %c0_27, %c0_28], %31 {strides = array<i32>} : memref<8x2x96xf32, #tpu.memory_space<vmem>>, vector<1x2x96xf32>,
    %c3 = arith.constant 3 : index
    %c0_29 = arith.constant 0 : index
    %c0_30 = arith.constant 0 : index
    %32 = vector.load %arg1[%c3, %c0_29, %c0_30] : memref<8x2x64xf32, #tpu.memory_space<vmem>>, vector<1x2x64xf32>
    %33 = vector.shape_cast %32 : vector<1x2x64xf32> to vector<2x64xf32>
    %cst_31 = arith.constant dense<0.000000e+00> : vector<2x96xf32>
    %34 = tpu.matmul %33, %1, %cst_31 {dimension_numbers = #tpu.dot_dimension_numbers<[1], [0], [0], [1], [0, 0, 1, 1], [], []>} : vector<2x64xf32>, vector<64x96xf32>, vector<2x96xf32> -> vector<2x96xf32>
    %35 = vector.broadcast %5 : vector<1x96xf32> to vector<2x96xf32>
    %36 = arith.addf %34, %35 : vector<2x96xf32>
    %c3_32 = arith.constant 3 : index
    %c0_33 = arith.constant 0 : index
    %c0_34 = arith.constant 0 : index
    %37 = vector.load %arg7[%c3_32, %c0_33, %c0_34] : memref<8x2x96xf32, #tpu.memory_space<vmem>>, vector<1x2x96xf32>
    %38 = vector.shape_cast %37 : vector<1x2x96xf32> to vector<2x96xf32>
    %39 = vector.shape_cast %36 : vector<2x96xf32> to vector<1x2x96xf32>
    tpu.vector_store %arg7[%c3_32, %c0_33, %c0_34], %39 {strides = array<i32>} : memref<8x2x96xf32, #tpu.memory_space<vmem>>, vector<1x2x96xf32>,
    %c4 = arith.constant 4 : index
    %c0_35 = arith.constant 0 : index
    %c0_36 = arith.constant 0 : index
    %40 = vector.load %arg1[%c4, %c0_35, %c0_36] : memref<8x2x64xf32, #tpu.memory_space<vmem>>, vector<1x2x64xf32>
    %41 = vector.shape_cast %40 : vector<1x2x64xf32> to vector<2x64xf32>
    %cst_37 = arith.constant dense<0.000000e+00> : vector<2x96xf32>
    %42 = tpu.matmul %41, %1, %cst_37 {dimension_numbers = #tpu.dot_dimension_numbers<[1], [0], [0], [1], [0, 0, 1, 1], [], []>} : vector<2x64xf32>, vector<64x96xf32>, vector<2x96xf32> -> vector<2x96xf32>
    %43 = vector.broadcast %5 : vector<1x96xf32> to vector<2x96xf32>
    %44 = arith.addf %42, %43 : vector<2x96xf32>
    %c4_38 = arith.constant 4 : index
    %c0_39 = arith.constant 0 : index
    %c0_40 = arith.constant 0 : index
    %45 = vector.load %arg7[%c4_38, %c0_39, %c0_40] : memref<8x2x96xf32, #tpu.memory_space<vmem>>, vector<1x2x96xf32>
    %46 = vector.shape_cast %45 : vector<1x2x96xf32> to vector<2x96xf32>
    %47 = vector.shape_cast %44 : vector<2x96xf32> to vector<1x2x96xf32>
    tpu.vector_store %arg7[%c4_38, %c0_39, %c0_40], %47 {strides = array<i32>} : memref<8x2x96xf32, #tpu.memory_space<vmem>>, vector<1x2x96xf32>,
    %c5 = arith.constant 5 : index
    %c0_41 = arith.constant 0 : index
    %c0_42 = arith.constant 0 : index
    %48 = vector.load %arg1[%c5, %c0_41, %c0_42] : memref<8x2x64xf32, #tpu.memory_space<vmem>>, vector<1x2x64xf32>
    %49 = vector.shape_cast %48 : vector<1x2x64xf32> to vector<2x64xf32>
    %cst_43 = arith.constant dense<0.000000e+00> : vector<2x96xf32>
    %50 = tpu.matmul %49, %1, %cst_43 {dimension_numbers = #tpu.dot_dimension_numbers<[1], [0], [0], [1], [0, 0, 1, 1], [], []>} : vector<2x64xf32>, vector<64x96xf32>, vector<2x96xf32> -> vector<2x96xf32>
    %51 = vector.broadcast %5 : vector<1x96xf32> to vector<2x96xf32>
    %52 = arith.addf %50, %51 : vector<2x96xf32>
    %c5_44 = arith.constant 5 : index
    %c0_45 = arith.constant 0 : index
    %c0_46 = arith.constant 0 : index
    %53 = vector.load %arg7[%c5_44, %c0_45, %c0_46] : memref<8x2x96xf32, #tpu.memory_space<vmem>>, vector<1x2x96xf32>
    %54 = vector.shape_cast %53 : vector<1x2x96xf32> to vector<2x96xf32>
    %55 = vector.shape_cast %52 : vector<2x96xf32> to vector<1x2x96xf32>
    tpu.vector_store %arg7[%c5_44, %c0_45, %c0_46], %55 {strides = array<i32>} : memref<8x2x96xf32, #tpu.memory_space<vmem>>, vector<1x2x96xf32>,
    %c6 = arith.constant 6 : index
    %c0_47 = arith.constant 0 : index
    %c0_48 = arith.constant 0 : index
    %56 = vector.load %arg1[%c6, %c0_47, %c0_48] : memref<8x2x64xf32, #tpu.memory_space<vmem>>, vector<1x2x64xf32>
    %57 = vector.shape_cast %56 : vector<1x2x64xf32> to vector<2x64xf32>
    %cst_49 = arith.constant dense<0.000000e+00> : vector<2x96xf32>
    %58 = tpu.matmul %57, %1, %cst_49 {dimension_numbers = #tpu.dot_dimension_numbers<[1], [0], [0], [1], [0, 0, 1, 1], [], []>} : vector<2x64xf32>, vector<64x96xf32>, vector<2x96xf32> -> vector<2x96xf32>
    %59 = vector.broadcast %5 : vector<1x96xf32> to vector<2x96xf32>
    %60 = arith.addf %58, %59 : vector<2x96xf32>
    %c6_50 = arith.constant 6 : index
    %c0_51 = arith.constant 0 : index
    %c0_52 = arith.constant 0 : index
    %61 = vector.load %arg7[%c6_50, %c0_51, %c0_52] : memref<8x2x96xf32, #tpu.memory_space<vmem>>, vector<1x2x96xf32>
    %62 = vector.shape_cast %61 : vector<1x2x96xf32> to vector<2x96xf32>
    %63 = vector.shape_cast %60 : vector<2x96xf32> to vector<1x2x96xf32>
    tpu.vector_store %arg7[%c6_50, %c0_51, %c0_52], %63 {strides = array<i32>} : memref<8x2x96xf32, #tpu.memory_space<vmem>>, vector<1x2x96xf32>,
    %c7 = arith.constant 7 : index
    %c0_53 = arith.constant 0 : index
    %c0_54 = arith.constant 0 : index
    %64 = vector.load %arg1[%c7, %c0_53, %c0_54] : memref<8x2x64xf32, #tpu.memory_space<vmem>>, vector<1x2x64xf32>
    %65 = vector.shape_cast %64 : vector<1x2x64xf32> to vector<2x64xf32>
    %cst_55 = arith.constant dense<0.000000e+00> : vector<2x96xf32>
    %66 = tpu.matmul %65, %1, %cst_55 {dimension_numbers = #tpu.dot_dimension_numbers<[1], [0], [0], [1], [0, 0, 1, 1], [], []>} : vector<2x64xf32>, vector<64x96xf32>, vector<2x96xf32> -> vector<2x96xf32>
    %67 = vector.broadcast %5 : vector<1x96xf32> to vector<2x96xf32>
    %68 = arith.addf %66, %67 : vector<2x96xf32>
    %c7_56 = arith.constant 7 : index
    %c0_57 = arith.constant 0 : index
    %c0_58 = arith.constant 0 : index
    %69 = vector.load %arg7[%c7_56, %c0_57, %c0_58] : memref<8x2x96xf32, #tpu.memory_space<vmem>>, vector<1x2x96xf32>
    %70 = vector.shape_cast %69 : vector<1x2x96xf32> to vector<2x96xf32>
    %71 = vector.shape_cast %68 : vector<2x96xf32> to vector<1x2x96xf32>
    tpu.vector_store %arg7[%c7_56, %c0_57, %c0_58], %71 {strides = array<i32>} : memref<8x2x96xf32, #tpu.memory_space<vmem>>, vector<1x2x96xf32>,
    %cst_59 = arith.constant 0.000000e+00 : f32
    %72 = vector.broadcast %cst_59 : f32 to vector<2x32xf32>
    %c0_i32 = arith.constant 0 : i32
    %c0_i32_60 = arith.constant 0 : i32
    %73 = arith.cmpi eq, %arg0, %c0_i32_60 : i32
    %c7_i32 = arith.constant 7 : i32
    %74 = arith.subi %c7_i32, %c0_i32 : i32
    %75 = arith.select %73, %c0_i32, %74 : i32
    %76 = arith.index_cast %75 : i32 to index
    %c0_61 = arith.constant 0 : index
    %c0_62 = arith.constant 0 : index
    %77 = vector.load %arg7[%76, %c0_61, %c0_62] : memref<8x2x96xf32, #tpu.memory_space<vmem>>, vector<1x2x96xf32>
    %78 = vector.shape_cast %77 : vector<1x2x96xf32> to vector<2x96xf32>
    %cst_63 = arith.constant dense<0.000000e+00> : vector<2x96xf32>
    %79 = tpu.matmul %72, %3, %cst_63 {dimension_numbers = #tpu.dot_dimension_numbers<[1], [0], [0], [1], [0, 0, 1, 1], [], []>} : vector<2x32xf32>, vector<32x96xf32>, vector<2x96xf32> -> vector<2x96xf32>
    %80 = vector.broadcast %7 : vector<1x96xf32> to vector<2x96xf32>
    %81 = arith.addf %79, %80 : vector<2x96xf32>
    %82 = vector.extract_strided_slice %78 {offsets = [0, 0], sizes = [2, 32], strides = [1, 1]} : vector<2x96xf32> to vector<2x32xf32>
    %83 = vector.extract_strided_slice %81 {offsets = [0, 0], sizes = [2, 32], strides = [1, 1]} : vector<2x96xf32> to vector<2x32xf32>
    %84 = arith.addf %82, %83 : vector<2x32xf32>
    %85 = arith.negf %84 : vector<2x32xf32>
    %86 = math.exp %85 : vector<2x32xf32>
    %cst_64 = arith.constant 1.000000e+00 : f32
    %87 = vector.broadcast %cst_64 : f32 to vector<2x32xf32>
    %88 = arith.addf %87, %86 : vector<2x32xf32>
    %89 = arith.divf %87, %88 : vector<2x32xf32>
    %90 = vector.extract_strided_slice %78 {offsets = [0, 32], sizes = [2, 32], strides = [1, 1]} : vector<2x96xf32> to vector<2x32xf32>
    %91 = vector.extract_strided_slice %81 {offsets = [0, 32], sizes = [2, 32], strides = [1, 1]} : vector<2x96xf32> to vector<2x32xf32>
    %92 = arith.addf %90, %91 : vector<2x32xf32>
    %93 = arith.negf %92 : vector<2x32xf32>
    %94 = math.exp %93 : vector<2x32xf32>
    %cst_65 = arith.constant 1.000000e+00 : f32
    %95 = vector.broadcast %cst_65 : f32 to vector<2x32xf32>
    %96 = arith.addf %95, %94 : vector<2x32xf32>
    %97 = arith.divf %95, %96 : vector<2x32xf32>
    %98 = vector.extract_strided_slice %78 {offsets = [0, 64], sizes = [2, 32], strides = [1, 1]} : vector<2x96xf32> to vector<2x32xf32>
    %99 = vector.extract_strided_slice %81 {offsets = [0, 64], sizes = [2, 32], strides = [1, 1]} : vector<2x96xf32> to vector<2x32xf32>
    %100 = arith.mulf %89, %99 : vector<2x32xf32>
    %101 = arith.addf %98, %100 : vector<2x32xf32>
    %102 = math.tanh %101 : vector<2x32xf32>
    %cst_66 = arith.constant 1.000000e+00 : f32
    %103 = vector.broadcast %cst_66 : f32 to vector<2x32xf32>
    %104 = arith.subf %103, %97 : vector<2x32xf32>
    %105 = arith.mulf %104, %102 : vector<2x32xf32>
    %106 = arith.mulf %97, %72 : vector<2x32xf32>
    %107 = arith.addf %105, %106 : vector<2x32xf32>
    %108 = arith.index_cast %75 : i32 to index
    %c0_67 = arith.constant 0 : index
    %c0_68 = arith.constant 0 : index
    %109 = vector.load %arg8[%108, %c0_67, %c0_68] : memref<8x2x32xf32, #tpu.memory_space<vmem>>, vector<1x2x32xf32>
    %110 = vector.shape_cast %109 : vector<1x2x32xf32> to vector<2x32xf32>
    %111 = vector.shape_cast %107 : vector<2x32xf32> to vector<1x2x32xf32>
    tpu.vector_store %arg8[%108, %c0_67, %c0_68], %111 {strides = array<i32>} : memref<8x2x32xf32, #tpu.memory_space<vmem>>, vector<1x2x32xf32>,
    %c1_i32 = arith.constant 1 : i32
    %c0_i32_69 = arith.constant 0 : i32
    %112 = arith.cmpi eq, %arg0, %c0_i32_69 : i32
    %c7_i32_70 = arith.constant 7 : i32
    %113 = arith.subi %c7_i32_70, %c1_i32 : i32
    %114 = arith.select %112, %c1_i32, %113 : i32
    %115 = arith.index_cast %114 : i32 to index
    %c0_71 = arith.constant 0 : index
    %c0_72 = arith.constant 0 : index
    %116 = vector.load %arg7[%115, %c0_71, %c0_72] : memref<8x2x96xf32, #tpu.memory_space<vmem>>, vector<1x2x96xf32>
    %117 = vector.shape_cast %116 : vector<1x2x96xf32> to vector<2x96xf32>
    %cst_73 = arith.constant dense<0.000000e+00> : vector<2x96xf32>
    %118 = tpu.matmul %107, %3, %cst_73 {dimension_numbers = #tpu.dot_dimension_numbers<[1], [0], [0], [1], [0, 0, 1, 1], [], []>} : vector<2x32xf32>, vector<32x96xf32>, vector<2x96xf32> -> vector<2x96xf32>
    %119 = vector.broadcast %7 : vector<1x96xf32> to vector<2x96xf32>
    %120 = arith.addf %118, %119 : vector<2x96xf32>
    %121 = vector.extract_strided_slice %117 {offsets = [0, 0], sizes = [2, 32], strides = [1, 1]} : vector<2x96xf32> to vector<2x32xf32>
    %122 = vector.extract_strided_slice %120 {offsets = [0, 0], sizes = [2, 32], strides = [1, 1]} : vector<2x96xf32> to vector<2x32xf32>
    %123 = arith.addf %121, %122 : vector<2x32xf32>
    %124 = arith.negf %123 : vector<2x32xf32>
    %125 = math.exp %124 : vector<2x32xf32>
    %cst_74 = arith.constant 1.000000e+00 : f32
    %126 = vector.broadcast %cst_74 : f32 to vector<2x32xf32>
    %127 = arith.addf %126, %125 : vector<2x32xf32>
    %128 = arith.divf %126, %127 : vector<2x32xf32>
    %129 = vector.extract_strided_slice %117 {offsets = [0, 32], sizes = [2, 32], strides = [1, 1]} : vector<2x96xf32> to vector<2x32xf32>
    %130 = vector.extract_strided_slice %120 {offsets = [0, 32], sizes = [2, 32], strides = [1, 1]} : vector<2x96xf32> to vector<2x32xf32>
    %131 = arith.addf %129, %130 : vector<2x32xf32>
    %132 = arith.negf %131 : vector<2x32xf32>
    %133 = math.exp %132 : vector<2x32xf32>
    %cst_75 = arith.constant 1.000000e+00 : f32
    %134 = vector.broadcast %cst_75 : f32 to vector<2x32xf32>
    %135 = arith.addf %134, %133 : vector<2x32xf32>
    %136 = arith.divf %134, %135 : vector<2x32xf32>
    %137 = vector.extract_strided_slice %117 {offsets = [0, 64], sizes = [2, 32], strides = [1, 1]} : vector<2x96xf32> to vector<2x32xf32>
    %138 = vector.extract_strided_slice %120 {offsets = [0, 64], sizes = [2, 32], strides = [1, 1]} : vector<2x96xf32> to vector<2x32xf32>
    %139 = arith.mulf %128, %138 : vector<2x32xf32>
    %140 = arith.addf %137, %139 : vector<2x32xf32>
    %141 = math.tanh %140 : vector<2x32xf32>
    %cst_76 = arith.constant 1.000000e+00 : f32
    %142 = vector.broadcast %cst_76 : f32 to vector<2x32xf32>
    %143 = arith.subf %142, %136 : vector<2x32xf32>
    %144 = arith.mulf %143, %141 : vector<2x32xf32>
    %145 = arith.mulf %136, %107 : vector<2x32xf32>
    %146 = arith.addf %144, %145 : vector<2x32xf32>
    %147 = arith.index_cast %114 : i32 to index
    %c0_77 = arith.constant 0 : index
    %c0_78 = arith.constant 0 : index
    %148 = vector.load %arg8[%147, %c0_77, %c0_78] : memref<8x2x32xf32, #tpu.memory_space<vmem>>, vector<1x2x32xf32>
    %149 = vector.shape_cast %148 : vector<1x2x32xf32> to vector<2x32xf32>
    %150 = vector.shape_cast %146 : vector<2x32xf32> to vector<1x2x32xf32>
    tpu.vector_store %arg8[%147, %c0_77, %c0_78], %150 {strides = array<i32>} : memref<8x2x32xf32, #tpu.memory_space<vmem>>, vector<1x2x32xf32>,
    %c2_i32 = arith.constant 2 : i32
    %c0_i32_79 = arith.constant 0 : i32
    %151 = arith.cmpi eq, %arg0, %c0_i32_79 : i32
    %c7_i32_80 = arith.constant 7 : i32
    %152 = arith.subi %c7_i32_80, %c2_i32 : i32
    %153 = arith.select %151, %c2_i32, %152 : i32
    %154 = arith.index_cast %153 : i32 to index
    %c0_81 = arith.constant 0 : index
    %c0_82 = arith.constant 0 : index
    %155 = vector.load %arg7[%154, %c0_81, %c0_82] : memref<8x2x96xf32, #tpu.memory_space<vmem>>, vector<1x2x96xf32>
    %156 = vector.shape_cast %155 : vector<1x2x96xf32> to vector<2x96xf32>
    %cst_83 = arith.constant dense<0.000000e+00> : vector<2x96xf32>
    %157 = tpu.matmul %146, %3, %cst_83 {dimension_numbers = #tpu.dot_dimension_numbers<[1], [0], [0], [1], [0, 0, 1, 1], [], []>} : vector<2x32xf32>, vector<32x96xf32>, vector<2x96xf32> -> vector<2x96xf32>
    %158 = vector.broadcast %7 : vector<1x96xf32> to vector<2x96xf32>
    %159 = arith.addf %157, %158 : vector<2x96xf32>
    %160 = vector.extract_strided_slice %156 {offsets = [0, 0], sizes = [2, 32], strides = [1, 1]} : vector<2x96xf32> to vector<2x32xf32>
    %161 = vector.extract_strided_slice %159 {offsets = [0, 0], sizes = [2, 32], strides = [1, 1]} : vector<2x96xf32> to vector<2x32xf32>
    %162 = arith.addf %160, %161 : vector<2x32xf32>
    %163 = arith.negf %162 : vector<2x32xf32>
    %164 = math.exp %163 : vector<2x32xf32>
    %cst_84 = arith.constant 1.000000e+00 : f32
    %165 = vector.broadcast %cst_84 : f32 to vector<2x32xf32>
    %166 = arith.addf %165, %164 : vector<2x32xf32>
    %167 = arith.divf %165, %166 : vector<2x32xf32>
    %168 = vector.extract_strided_slice %156 {offsets = [0, 32], sizes = [2, 32], strides = [1, 1]} : vector<2x96xf32> to vector<2x32xf32>
    %169 = vector.extract_strided_slice %159 {offsets = [0, 32], sizes = [2, 32], strides = [1, 1]} : vector<2x96xf32> to vector<2x32xf32>
    %170 = arith.addf %168, %169 : vector<2x32xf32>
    %171 = arith.negf %170 : vector<2x32xf32>
    %172 = math.exp %171 : vector<2x32xf32>
    %cst_85 = arith.constant 1.000000e+00 : f32
    %173 = vector.broadcast %cst_85 : f32 to vector<2x32xf32>
    %174 = arith.addf %173, %172 : vector<2x32xf32>
    %175 = arith.divf %173, %174 : vector<2x32xf32>
    %176 = vector.extract_strided_slice %156 {offsets = [0, 64], sizes = [2, 32], strides = [1, 1]} : vector<2x96xf32> to vector<2x32xf32>
    %177 = vector.extract_strided_slice %159 {offsets = [0, 64], sizes = [2, 32], strides = [1, 1]} : vector<2x96xf32> to vector<2x32xf32>
    %178 = arith.mulf %167, %177 : vector<2x32xf32>
    %179 = arith.addf %176, %178 : vector<2x32xf32>
    %180 = math.tanh %179 : vector<2x32xf32>
    %cst_86 = arith.constant 1.000000e+00 : f32
    %181 = vector.broadcast %cst_86 : f32 to vector<2x32xf32>
    %182 = arith.subf %181, %175 : vector<2x32xf32>
    %183 = arith.mulf %182, %180 : vector<2x32xf32>
    %184 = arith.mulf %175, %146 : vector<2x32xf32>
    %185 = arith.addf %183, %184 : vector<2x32xf32>
    %186 = arith.index_cast %153 : i32 to index
    %c0_87 = arith.constant 0 : index
    %c0_88 = arith.constant 0 : index
    %187 = vector.load %arg8[%186, %c0_87, %c0_88] : memref<8x2x32xf32, #tpu.memory_space<vmem>>, vector<1x2x32xf32>
    %188 = vector.shape_cast %187 : vector<1x2x32xf32> to vector<2x32xf32>
    %189 = vector.shape_cast %185 : vector<2x32xf32> to vector<1x2x32xf32>
    tpu.vector_store %arg8[%186, %c0_87, %c0_88], %189 {strides = array<i32>} : memref<8x2x32xf32, #tpu.memory_space<vmem>>, vector<1x2x32xf32>,
    %c3_i32 = arith.constant 3 : i32
    %c0_i32_89 = arith.constant 0 : i32
    %190 = arith.cmpi eq, %arg0, %c0_i32_89 : i32
    %c7_i32_90 = arith.constant 7 : i32
    %191 = arith.subi %c7_i32_90, %c3_i32 : i32
    %192 = arith.select %190, %c3_i32, %191 : i32
    %193 = arith.index_cast %192 : i32 to index
    %c0_91 = arith.constant 0 : index
    %c0_92 = arith.constant 0 : index
    %194 = vector.load %arg7[%193, %c0_91, %c0_92] : memref<8x2x96xf32, #tpu.memory_space<vmem>>, vector<1x2x96xf32>
    %195 = vector.shape_cast %194 : vector<1x2x96xf32> to vector<2x96xf32>
    %cst_93 = arith.constant dense<0.000000e+00> : vector<2x96xf32>
    %196 = tpu.matmul %185, %3, %cst_93 {dimension_numbers = #tpu.dot_dimension_numbers<[1], [0], [0], [1], [0, 0, 1, 1], [], []>} : vector<2x32xf32>, vector<32x96xf32>, vector<2x96xf32> -> vector<2x96xf32>
    %197 = vector.broadcast %7 : vector<1x96xf32> to vector<2x96xf32>
    %198 = arith.addf %196, %197 : vector<2x96xf32>
    %199 = vector.extract_strided_slice %195 {offsets = [0, 0], sizes = [2, 32], strides = [1, 1]} : vector<2x96xf32> to vector<2x32xf32>
    %200 = vector.extract_strided_slice %198 {offsets = [0, 0], sizes = [2, 32], strides = [1, 1]} : vector<2x96xf32> to vector<2x32xf32>
    %201 = arith.addf %199, %200 : vector<2x32xf32>
    %202 = arith.negf %201 : vector<2x32xf32>
    %203 = math.exp %202 : vector<2x32xf32>
    %cst_94 = arith.constant 1.000000e+00 : f32
    %204 = vector.broadcast %cst_94 : f32 to vector<2x32xf32>
    %205 = arith.addf %204, %203 : vector<2x32xf32>
    %206 = arith.divf %204, %205 : vector<2x32xf32>
    %207 = vector.extract_strided_slice %195 {offsets = [0, 32], sizes = [2, 32], strides = [1, 1]} : vector<2x96xf32> to vector<2x32xf32>
    %208 = vector.extract_strided_slice %198 {offsets = [0, 32], sizes = [2, 32], strides = [1, 1]} : vector<2x96xf32> to vector<2x32xf32>
    %209 = arith.addf %207, %208 : vector<2x32xf32>
    %210 = arith.negf %209 : vector<2x32xf32>
    %211 = math.exp %210 : vector<2x32xf32>
    %cst_95 = arith.constant 1.000000e+00 : f32
    %212 = vector.broadcast %cst_95 : f32 to vector<2x32xf32>
    %213 = arith.addf %212, %211 : vector<2x32xf32>
    %214 = arith.divf %212, %213 : vector<2x32xf32>
    %215 = vector.extract_strided_slice %195 {offsets = [0, 64], sizes = [2, 32], strides = [1, 1]} : vector<2x96xf32> to vector<2x32xf32>
    %216 = vector.extract_strided_slice %198 {offsets = [0, 64], sizes = [2, 32], strides = [1, 1]} : vector<2x96xf32> to vector<2x32xf32>
    %217 = arith.mulf %206, %216 : vector<2x32xf32>
    %218 = arith.addf %215, %217 : vector<2x32xf32>
    %219 = math.tanh %218 : vector<2x32xf32>
    %cst_96 = arith.constant 1.000000e+00 : f32
    %220 = vector.broadcast %cst_96 : f32 to vector<2x32xf32>
    %221 = arith.subf %220, %214 : vector<2x32xf32>
    %222 = arith.mulf %221, %219 : vector<2x32xf32>
    %223 = arith.mulf %214, %185 : vector<2x32xf32>
    %224 = arith.addf %222, %223 : vector<2x32xf32>
    %225 = arith.index_cast %192 : i32 to index
    %c0_97 = arith.constant 0 : index
    %c0_98 = arith.constant 0 : index
    %226 = vector.load %arg8[%225, %c0_97, %c0_98] : memref<8x2x32xf32, #tpu.memory_space<vmem>>, vector<1x2x32xf32>
    %227 = vector.shape_cast %226 : vector<1x2x32xf32> to vector<2x32xf32>
    %228 = vector.shape_cast %224 : vector<2x32xf32> to vector<1x2x32xf32>
    tpu.vector_store %arg8[%225, %c0_97, %c0_98], %228 {strides = array<i32>} : memref<8x2x32xf32, #tpu.memory_space<vmem>>, vector<1x2x32xf32>,
    %c4_i32 = arith.constant 4 : i32
    %c0_i32_99 = arith.constant 0 : i32
    %229 = arith.cmpi eq, %arg0, %c0_i32_99 : i32
    %c7_i32_100 = arith.constant 7 : i32
    %230 = arith.subi %c7_i32_100, %c4_i32 : i32
    %231 = arith.select %229, %c4_i32, %230 : i32
    %232 = arith.index_cast %231 : i32 to index
    %c0_101 = arith.constant 0 : index
    %c0_102 = arith.constant 0 : index
    %233 = vector.load %arg7[%232, %c0_101, %c0_102] : memref<8x2x96xf32, #tpu.memory_space<vmem>>, vector<1x2x96xf32>
    %234 = vector.shape_cast %233 : vector<1x2x96xf32> to vector<2x96xf32>
    %cst_103 = arith.constant dense<0.000000e+00> : vector<2x96xf32>
    %235 = tpu.matmul %224, %3, %cst_103 {dimension_numbers = #tpu.dot_dimension_numbers<[1], [0], [0], [1], [0, 0, 1, 1], [], []>} : vector<2x32xf32>, vector<32x96xf32>, vector<2x96xf32> -> vector<2x96xf32>
    %236 = vector.broadcast %7 : vector<1x96xf32> to vector<2x96xf32>
    %237 = arith.addf %235, %236 : vector<2x96xf32>
    %238 = vector.extract_strided_slice %234 {offsets = [0, 0], sizes = [2, 32], strides = [1, 1]} : vector<2x96xf32> to vector<2x32xf32>
    %239 = vector.extract_strided_slice %237 {offsets = [0, 0], sizes = [2, 32], strides = [1, 1]} : vector<2x96xf32> to vector<2x32xf32>
    %240 = arith.addf %238, %239 : vector<2x32xf32>
    %241 = arith.negf %240 : vector<2x32xf32>
    %242 = math.exp %241 : vector<2x32xf32>
    %cst_104 = arith.constant 1.000000e+00 : f32
    %243 = vector.broadcast %cst_104 : f32 to vector<2x32xf32>
    %244 = arith.addf %243, %242 : vector<2x32xf32>
    %245 = arith.divf %243, %244 : vector<2x32xf32>
    %246 = vector.extract_strided_slice %234 {offsets = [0, 32], sizes = [2, 32], strides = [1, 1]} : vector<2x96xf32> to vector<2x32xf32>
    %247 = vector.extract_strided_slice %237 {offsets = [0, 32], sizes = [2, 32], strides = [1, 1]} : vector<2x96xf32> to vector<2x32xf32>
    %248 = arith.addf %246, %247 : vector<2x32xf32>
    %249 = arith.negf %248 : vector<2x32xf32>
    %250 = math.exp %249 : vector<2x32xf32>
    %cst_105 = arith.constant 1.000000e+00 : f32
    %251 = vector.broadcast %cst_105 : f32 to vector<2x32xf32>
    %252 = arith.addf %251, %250 : vector<2x32xf32>
    %253 = arith.divf %251, %252 : vector<2x32xf32>
    %254 = vector.extract_strided_slice %234 {offsets = [0, 64], sizes = [2, 32], strides = [1, 1]} : vector<2x96xf32> to vector<2x32xf32>
    %255 = vector.extract_strided_slice %237 {offsets = [0, 64], sizes = [2, 32], strides = [1, 1]} : vector<2x96xf32> to vector<2x32xf32>
    %256 = arith.mulf %245, %255 : vector<2x32xf32>
    %257 = arith.addf %254, %256 : vector<2x32xf32>
    %258 = math.tanh %257 : vector<2x32xf32>
    %cst_106 = arith.constant 1.000000e+00 : f32
    %259 = vector.broadcast %cst_106 : f32 to vector<2x32xf32>
    %260 = arith.subf %259, %253 : vector<2x32xf32>
    %261 = arith.mulf %260, %258 : vector<2x32xf32>
    %262 = arith.mulf %253, %224 : vector<2x32xf32>
    %263 = arith.addf %261, %262 : vector<2x32xf32>
    %264 = arith.index_cast %231 : i32 to index
    %c0_107 = arith.constant 0 : index
    %c0_108 = arith.constant 0 : index
    %265 = vector.load %arg8[%264, %c0_107, %c0_108] : memref<8x2x32xf32, #tpu.memory_space<vmem>>, vector<1x2x32xf32>
    %266 = vector.shape_cast %265 : vector<1x2x32xf32> to vector<2x32xf32>
    %267 = vector.shape_cast %263 : vector<2x32xf32> to vector<1x2x32xf32>
    tpu.vector_store %arg8[%264, %c0_107, %c0_108], %267 {strides = array<i32>} : memref<8x2x32xf32, #tpu.memory_space<vmem>>, vector<1x2x32xf32>,
    %c5_i32 = arith.constant 5 : i32
    %c0_i32_109 = arith.constant 0 : i32
    %268 = arith.cmpi eq, %arg0, %c0_i32_109 : i32
    %c7_i32_110 = arith.constant 7 : i32
    %269 = arith.subi %c7_i32_110, %c5_i32 : i32
    %270 = arith.select %268, %c5_i32, %269 : i32
    %271 = arith.index_cast %270 : i32 to index
    %c0_111 = arith.constant 0 : index
    %c0_112 = arith.constant 0 : index
    %272 = vector.load %arg7[%271, %c0_111, %c0_112] : memref<8x2x96xf32, #tpu.memory_space<vmem>>, vector<1x2x96xf32>
    %273 = vector.shape_cast %272 : vector<1x2x96xf32> to vector<2x96xf32>
    %cst_113 = arith.constant dense<0.000000e+00> : vector<2x96xf32>
    %274 = tpu.matmul %263, %3, %cst_113 {dimension_numbers = #tpu.dot_dimension_numbers<[1], [0], [0], [1], [0, 0, 1, 1], [], []>} : vector<2x32xf32>, vector<32x96xf32>, vector<2x96xf32> -> vector<2x96xf32>
    %275 = vector.broadcast %7 : vector<1x96xf32> to vector<2x96xf32>
    %276 = arith.addf %274, %275 : vector<2x96xf32>
    %277 = vector.extract_strided_slice %273 {offsets = [0, 0], sizes = [2, 32], strides = [1, 1]} : vector<2x96xf32> to vector<2x32xf32>
    %278 = vector.extract_strided_slice %276 {offsets = [0, 0], sizes = [2, 32], strides = [1, 1]} : vector<2x96xf32> to vector<2x32xf32>
    %279 = arith.addf %277, %278 : vector<2x32xf32>
    %280 = arith.negf %279 : vector<2x32xf32>
    %281 = math.exp %280 : vector<2x32xf32>
    %cst_114 = arith.constant 1.000000e+00 : f32
    %282 = vector.broadcast %cst_114 : f32 to vector<2x32xf32>
    %283 = arith.addf %282, %281 : vector<2x32xf32>
    %284 = arith.divf %282, %283 : vector<2x32xf32>
    %285 = vector.extract_strided_slice %273 {offsets = [0, 32], sizes = [2, 32], strides = [1, 1]} : vector<2x96xf32> to vector<2x32xf32>
    %286 = vector.extract_strided_slice %276 {offsets = [0, 32], sizes = [2, 32], strides = [1, 1]} : vector<2x96xf32> to vector<2x32xf32>
    %287 = arith.addf %285, %286 : vector<2x32xf32>
    %288 = arith.negf %287 : vector<2x32xf32>
    %289 = math.exp %288 : vector<2x32xf32>
    %cst_115 = arith.constant 1.000000e+00 : f32
    %290 = vector.broadcast %cst_115 : f32 to vector<2x32xf32>
    %291 = arith.addf %290, %289 : vector<2x32xf32>
    %292 = arith.divf %290, %291 : vector<2x32xf32>
    %293 = vector.extract_strided_slice %273 {offsets = [0, 64], sizes = [2, 32], strides = [1, 1]} : vector<2x96xf32> to vector<2x32xf32>
    %294 = vector.extract_strided_slice %276 {offsets = [0, 64], sizes = [2, 32], strides = [1, 1]} : vector<2x96xf32> to vector<2x32xf32>
    %295 = arith.mulf %284, %294 : vector<2x32xf32>
    %296 = arith.addf %293, %295 : vector<2x32xf32>
    %297 = math.tanh %296 : vector<2x32xf32>
    %cst_116 = arith.constant 1.000000e+00 : f32
    %298 = vector.broadcast %cst_116 : f32 to vector<2x32xf32>
    %299 = arith.subf %298, %292 : vector<2x32xf32>
    %300 = arith.mulf %299, %297 : vector<2x32xf32>
    %301 = arith.mulf %292, %263 : vector<2x32xf32>
    %302 = arith.addf %300, %301 : vector<2x32xf32>
    %303 = arith.index_cast %270 : i32 to index
    %c0_117 = arith.constant 0 : index
    %c0_118 = arith.constant 0 : index
    %304 = vector.load %arg8[%303, %c0_117, %c0_118] : memref<8x2x32xf32, #tpu.memory_space<vmem>>, vector<1x2x32xf32>
    %305 = vector.shape_cast %304 : vector<1x2x32xf32> to vector<2x32xf32>
    %306 = vector.shape_cast %302 : vector<2x32xf32> to vector<1x2x32xf32>
    tpu.vector_store %arg8[%303, %c0_117, %c0_118], %306 {strides = array<i32>} : memref<8x2x32xf32, #tpu.memory_space<vmem>>, vector<1x2x32xf32>,
    %c6_i32 = arith.constant 6 : i32
    %c0_i32_119 = arith.constant 0 : i32
    %307 = arith.cmpi eq, %arg0, %c0_i32_119 : i32
    %c7_i32_120 = arith.constant 7 : i32
    %308 = arith.subi %c7_i32_120, %c6_i32 : i32
    %309 = arith.select %307, %c6_i32, %308 : i32
    %310 = arith.index_cast %309 : i32 to index
    %c0_121 = arith.constant 0 : index
    %c0_122 = arith.constant 0 : index
    %311 = vector.load %arg7[%310, %c0_121, %c0_122] : memref<8x2x96xf32, #tpu.memory_space<vmem>>, vector<1x2x96xf32>
    %312 = vector.shape_cast %311 : vector<1x2x96xf32> to vector<2x96xf32>
    %cst_123 = arith.constant dense<0.000000e+00> : vector<2x96xf32>
    %313 = tpu.matmul %302, %3, %cst_123 {dimension_numbers = #tpu.dot_dimension_numbers<[1], [0], [0], [1], [0, 0, 1, 1], [], []>} : vector<2x32xf32>, vector<32x96xf32>, vector<2x96xf32> -> vector<2x96xf32>
    %314 = vector.broadcast %7 : vector<1x96xf32> to vector<2x96xf32>
    %315 = arith.addf %313, %314 : vector<2x96xf32>
    %316 = vector.extract_strided_slice %312 {offsets = [0, 0], sizes = [2, 32], strides = [1, 1]} : vector<2x96xf32> to vector<2x32xf32>
    %317 = vector.extract_strided_slice %315 {offsets = [0, 0], sizes = [2, 32], strides = [1, 1]} : vector<2x96xf32> to vector<2x32xf32>
    %318 = arith.addf %316, %317 : vector<2x32xf32>
    %319 = arith.negf %318 : vector<2x32xf32>
    %320 = math.exp %319 : vector<2x32xf32>
    %cst_124 = arith.constant 1.000000e+00 : f32
    %321 = vector.broadcast %cst_124 : f32 to vector<2x32xf32>
    %322 = arith.addf %321, %320 : vector<2x32xf32>
    %323 = arith.divf %321, %322 : vector<2x32xf32>
    %324 = vector.extract_strided_slice %312 {offsets = [0, 32], sizes = [2, 32], strides = [1, 1]} : vector<2x96xf32> to vector<2x32xf32>
    %325 = vector.extract_strided_slice %315 {offsets = [0, 32], sizes = [2, 32], strides = [1, 1]} : vector<2x96xf32> to vector<2x32xf32>
    %326 = arith.addf %324, %325 : vector<2x32xf32>
    %327 = arith.negf %326 : vector<2x32xf32>
    %328 = math.exp %327 : vector<2x32xf32>
    %cst_125 = arith.constant 1.000000e+00 : f32
    %329 = vector.broadcast %cst_125 : f32 to vector<2x32xf32>
    %330 = arith.addf %329, %328 : vector<2x32xf32>
    %331 = arith.divf %329, %330 : vector<2x32xf32>
    %332 = vector.extract_strided_slice %312 {offsets = [0, 64], sizes = [2, 32], strides = [1, 1]} : vector<2x96xf32> to vector<2x32xf32>
    %333 = vector.extract_strided_slice %315 {offsets = [0, 64], sizes = [2, 32], strides = [1, 1]} : vector<2x96xf32> to vector<2x32xf32>
    %334 = arith.mulf %323, %333 : vector<2x32xf32>
    %335 = arith.addf %332, %334 : vector<2x32xf32>
    %336 = math.tanh %335 : vector<2x32xf32>
    %cst_126 = arith.constant 1.000000e+00 : f32
    %337 = vector.broadcast %cst_126 : f32 to vector<2x32xf32>
    %338 = arith.subf %337, %331 : vector<2x32xf32>
    %339 = arith.mulf %338, %336 : vector<2x32xf32>
    %340 = arith.mulf %331, %302 : vector<2x32xf32>
    %341 = arith.addf %339, %340 : vector<2x32xf32>
    %342 = arith.index_cast %309 : i32 to index
    %c0_127 = arith.constant 0 : index
    %c0_128 = arith.constant 0 : index
    %343 = vector.load %arg8[%342, %c0_127, %c0_128] : memref<8x2x32xf32, #tpu.memory_space<vmem>>, vector<1x2x32xf32>
    %344 = vector.shape_cast %343 : vector<1x2x32xf32> to vector<2x32xf32>
    %345 = vector.shape_cast %341 : vector<2x32xf32> to vector<1x2x32xf32>
    tpu.vector_store %arg8[%342, %c0_127, %c0_128], %345 {strides = array<i32>} : memref<8x2x32xf32, #tpu.memory_space<vmem>>, vector<1x2x32xf32>,
    %c7_i32_129 = arith.constant 7 : i32
    %c0_i32_130 = arith.constant 0 : i32
    %346 = arith.cmpi eq, %arg0, %c0_i32_130 : i32
    %c7_i32_131 = arith.constant 7 : i32
    %347 = arith.subi %c7_i32_131, %c7_i32_129 : i32
    %348 = arith.select %346, %c7_i32_129, %347 : i32
    %349 = arith.index_cast %348 : i32 to index
    %c0_132 = arith.constant 0 : index
    %c0_133 = arith.constant 0 : index
    %350 = vector.load %arg7[%349, %c0_132, %c0_133] : memref<8x2x96xf32, #tpu.memory_space<vmem>>, vector<1x2x96xf32>
    %351 = vector.shape_cast %350 : vector<1x2x96xf32> to vector<2x96xf32>
    %cst_134 = arith.constant dense<0.000000e+00> : vector<2x96xf32>
    %352 = tpu.matmul %341, %3, %cst_134 {dimension_numbers = #tpu.dot_dimension_numbers<[1], [0], [0], [1], [0, 0, 1, 1], [], []>} : vector<2x32xf32>, vector<32x96xf32>, vector<2x96xf32> -> vector<2x96xf32>
    %353 = vector.broadcast %7 : vector<1x96xf32> to vector<2x96xf32>
    %354 = arith.addf %352, %353 : vector<2x96xf32>
    %355 = vector.extract_strided_slice %351 {offsets = [0, 0], sizes = [2, 32], strides = [1, 1]} : vector<2x96xf32> to vector<2x32xf32>
    %356 = vector.extract_strided_slice %354 {offsets = [0, 0], sizes = [2, 32], strides = [1, 1]} : vector<2x96xf32> to vector<2x32xf32>
    %357 = arith.addf %355, %356 : vector<2x32xf32>
    %358 = arith.negf %357 : vector<2x32xf32>
    %359 = math.exp %358 : vector<2x32xf32>
    %cst_135 = arith.constant 1.000000e+00 : f32
    %360 = vector.broadcast %cst_135 : f32 to vector<2x32xf32>
    %361 = arith.addf %360, %359 : vector<2x32xf32>
    %362 = arith.divf %360, %361 : vector<2x32xf32>
    %363 = vector.extract_strided_slice %351 {offsets = [0, 32], sizes = [2, 32], strides = [1, 1]} : vector<2x96xf32> to vector<2x32xf32>
    %364 = vector.extract_strided_slice %354 {offsets = [0, 32], sizes = [2, 32], strides = [1, 1]} : vector<2x96xf32> to vector<2x32xf32>
    %365 = arith.addf %363, %364 : vector<2x32xf32>
    %366 = arith.negf %365 : vector<2x32xf32>
    %367 = math.exp %366 : vector<2x32xf32>
    %cst_136 = arith.constant 1.000000e+00 : f32
    %368 = vector.broadcast %cst_136 : f32 to vector<2x32xf32>
    %369 = arith.addf %368, %367 : vector<2x32xf32>
    %370 = arith.divf %368, %369 : vector<2x32xf32>
    %371 = vector.extract_strided_slice %351 {offsets = [0, 64], sizes = [2, 32], strides = [1, 1]} : vector<2x96xf32> to vector<2x32xf32>
    %372 = vector.extract_strided_slice %354 {offsets = [0, 64], sizes = [2, 32], strides = [1, 1]} : vector<2x96xf32> to vector<2x32xf32>
    %373 = arith.mulf %362, %372 : vector<2x32xf32>
    %374 = arith.addf %371, %373 : vector<2x32xf32>
    %375 = math.tanh %374 : vector<2x32xf32>
    %cst_137 = arith.constant 1.000000e+00 : f32
    %376 = vector.broadcast %cst_137 : f32 to vector<2x32xf32>
    %377 = arith.subf %376, %370 : vector<2x32xf32>
    %378 = arith.mulf %377, %375 : vector<2x32xf32>
    %379 = arith.mulf %370, %341 : vector<2x32xf32>
    %380 = arith.addf %378, %379 : vector<2x32xf32>
    %381 = arith.index_cast %348 : i32 to index
    %c0_138 = arith.constant 0 : index
    %c0_139 = arith.constant 0 : index
    %382 = vector.load %arg8[%381, %c0_138, %c0_139] : memref<8x2x32xf32, #tpu.memory_space<vmem>>, vector<1x2x32xf32>
    %383 = vector.shape_cast %382 : vector<1x2x32xf32> to vector<2x32xf32>
    %384 = vector.shape_cast %380 : vector<2x32xf32> to vector<1x2x32xf32>
    tpu.vector_store %arg8[%381, %c0_138, %c0_139], %384 {strides = array<i32>} : memref<8x2x32xf32, #tpu.memory_space<vmem>>, vector<1x2x32xf32>,
    %c8_i32 = arith.constant 8 : i32
    %c0_140 = arith.constant 0 : index
    %c0_141 = arith.constant 0 : index
    %c0_142 = arith.constant 0 : index
    %385 = vector.load %arg8[%c0_140, %c0_141, %c0_142] : memref<8x2x32xf32, #tpu.memory_space<vmem>>, vector<8x2x32xf32>
    %c0_143 = arith.constant 0 : index
    %c0_144 = arith.constant 0 : index
    %c0_145 = arith.constant 0 : index
    %c0_146 = arith.constant 0 : index
    %386 = vector.load %arg6[%c0_143, %c0_144, %c0_145, %c0_146] : memref<1x8x2x32xf32, #tpu.memory_space<vmem>>, vector<1x8x2x32xf32>
    %387 = vector.shape_cast %386 : vector<1x8x2x32xf32> to vector<8x2x32xf32>
    %388 = vector.shape_cast %385 : vector<8x2x32xf32> to vector<1x8x2x32xf32>
    tpu.vector_store %arg6[%c0_143, %c0_144, %c0_145, %c0_146], %388 {strides = array<i32>} : memref<1x8x2x32xf32, #tpu.memory_space<vmem>>, vector<1x8x2x32xf32>,
    return
  }
  func.func @transform_0(%arg0: i32) -> (i32, i32, i32) {
    %c0_i32 = arith.constant 0 : i32
    %c0_i32_0 = arith.constant 0 : i32
    %c0_i32_1 = arith.constant 0 : i32
    %c0_i32_2 = arith.constant 0 : i32
    return %c0_i32, %c0_i32_0, %c0_i32_1 : i32, i32, i32
  }
  func.func @transform_1(%arg0: i32) -> (i32, i32, i32) {
    %c0_i32 = arith.constant 0 : i32
    %c0_i32_0 = arith.constant 0 : i32
    %c0_i32_1 = arith.constant 0 : i32
    return %arg0, %c0_i32, %c0_i32_0 : i32, i32, i32
  }
  func.func @transform_2(%arg0: i32) -> (i32, i32, i32) {
    %c0_i32 = arith.constant 0 : i32
    %c0_i32_0 = arith.constant 0 : i32
    %c0_i32_1 = arith.constant 0 : i32
    return %arg0, %c0_i32, %c0_i32_0 : i32, i32, i32
  }
  func.func @transform_3(%arg0: i32) -> (i32, i32, i32) {
    %c0_i32 = arith.constant 0 : i32
    %c0_i32_0 = arith.constant 0 : i32
    %c0_i32_1 = arith.constant 0 : i32
    return %arg0, %c0_i32, %c0_i32_0 : i32, i32, i32
  }
  func.func @transform_4(%arg0: i32) -> (i32, i32, i32) {
    %c0_i32 = arith.constant 0 : i32
    %c0_i32_0 = arith.constant 0 : i32
    %c0_i32_1 = arith.constant 0 : i32
    return %arg0, %c0_i32, %c0_i32_0 : i32, i32, i32
  }
  func.func @transform_5(%arg0: i32) -> (i32, i32, i32, i32) {
    %c0_i32 = arith.constant 0 : i32
    %c0_i32_0 = arith.constant 0 : i32
    %c0_i32_1 = arith.constant 0 : i32
    %c0_i32_2 = arith.constant 0 : i32
    return %arg0, %c0_i32, %c0_i32_0, %c0_i32_1 : i32, i32, i32, i32
  }
}

module attributes {stable_mosaic.version = 11 : i64} {
  func.func @_head_kernel(%arg0: i32, %arg1: memref<1x8x64xf32, #tpu.memory_space<vmem>>, %arg2: memref<1x8x8xf32, #tpu.memory_space<vmem>>, %arg3: memref<1x8x8xf32, #tpu.memory_space<vmem>>, %arg4: memref<64x32xf32, #tpu.memory_space<vmem>>, %arg5: memref<1x32xf32, #tpu.memory_space<vmem>>, %arg6: memref<64x32xf32, #tpu.memory_space<vmem>>, %arg7: memref<1x32xf32, #tpu.memory_space<vmem>>, %arg8: memref<32x32xf32, #tpu.memory_space<vmem>>, %arg9: memref<32x32xf32, #tpu.memory_space<vmem>>, %arg10: memref<1x32xf32, #tpu.memory_space<vmem>>, %arg11: memref<32x32xf32, #tpu.memory_space<vmem>>, %arg12: memref<1x32xf32, #tpu.memory_space<vmem>>, %arg13: memref<32x128xf32, #tpu.memory_space<vmem>>, %arg14: memref<1x128xf32, #tpu.memory_space<vmem>>, %arg15: memref<1x8x128xf32, #tpu.memory_space<vmem>>) attributes {dimension_semantics = [#tpu.dimension_semantics<parallel>], iteration_bounds = array<i64: 2>, scalar_prefetch = 0 : i64, scratch_operands = 0 : i64, tpu.core_type = #tpu.core_type<tc>, window_params = [{transform_indices = @transform_0, window_bounds = array<i64: 1, 8, 64>}, {transform_indices = @transform_1, window_bounds = array<i64: 1, 8, 8>}, {transform_indices = @transform_2, window_bounds = array<i64: 1, 8, 8>}, {pipeline_mode = #tpu.pipeline_mode<synchronous>, transform_indices = @transform_3, window_bounds = array<i64: 64, 32>}, {pipeline_mode = #tpu.pipeline_mode<synchronous>, transform_indices = @transform_4, window_bounds = array<i64: 1, 32>}, {pipeline_mode = #tpu.pipeline_mode<synchronous>, transform_indices = @transform_5, window_bounds = array<i64: 64, 32>}, {pipeline_mode = #tpu.pipeline_mode<synchronous>, transform_indices = @transform_6, window_bounds = array<i64: 1, 32>}, {pipeline_mode = #tpu.pipeline_mode<synchronous>, transform_indices = @transform_7, window_bounds = array<i64: 32, 32>}, {pipeline_mode = #tpu.pipeline_mode<synchronous>, transform_indices = @transform_8, window_bounds = array<i64: 32, 32>}, {pipeline_mode = #tpu.pipeline_mode<synchronous>, transform_indices = @transform_9, window_bounds = array<i64: 1, 32>}, {pipeline_mode = #tpu.pipeline_mode<synchronous>, transform_indices = @transform_10, window_bounds = array<i64: 32, 32>}, {pipeline_mode = #tpu.pipeline_mode<synchronous>, transform_indices = @transform_11, window_bounds = array<i64: 1, 32>}, {pipeline_mode = #tpu.pipeline_mode<synchronous>, transform_indices = @transform_12, window_bounds = array<i64: 32, 128>}, {pipeline_mode = #tpu.pipeline_mode<synchronous>, transform_indices = @transform_13, window_bounds = array<i64: 1, 128>}, {transform_indices = @transform_14, window_bounds = array<i64: 1, 8, 128>}]} {
    %c0 = arith.constant 0 : index
    %c0_0 = arith.constant 0 : index
    %c0_1 = arith.constant 0 : index
    %0 = vector.load %arg1[%c0, %c0_0, %c0_1] : memref<1x8x64xf32, #tpu.memory_space<vmem>>, vector<1x8x64xf32>
    %1 = vector.shape_cast %0 : vector<1x8x64xf32> to vector<8x64xf32>
    %c0_2 = arith.constant 0 : index
    %c0_3 = arith.constant 0 : index
    %c0_4 = arith.constant 0 : index
    %2 = vector.load %arg2[%c0_2, %c0_3, %c0_4] : memref<1x8x8xf32, #tpu.memory_space<vmem>>, vector<1x8x8xf32>
    %3 = vector.shape_cast %2 : vector<1x8x8xf32> to vector<8x8xf32>
    %cst = arith.constant dense<0.000000e+00> : vector<8x64xf32>
    %4 = tpu.matmul %3, %1, %cst {dimension_numbers = #tpu.dot_dimension_numbers<[1], [0], [0], [1], [0, 0, 1, 1], [], []>} : vector<8x8xf32>, vector<8x64xf32>, vector<8x64xf32> -> vector<8x64xf32>
    %c0_5 = arith.constant 0 : index
    %c0_6 = arith.constant 0 : index
    %c0_7 = arith.constant 0 : index
    %5 = vector.load %arg3[%c0_5, %c0_6, %c0_7] : memref<1x8x8xf32, #tpu.memory_space<vmem>>, vector<1x8x8xf32>
    %6 = vector.shape_cast %5 : vector<1x8x8xf32> to vector<8x8xf32>
    %cst_8 = arith.constant dense<0.000000e+00> : vector<8x64xf32>
    %7 = tpu.matmul %6, %1, %cst_8 {dimension_numbers = #tpu.dot_dimension_numbers<[1], [0], [0], [1], [0, 0, 1, 1], [], []>} : vector<8x8xf32>, vector<8x64xf32>, vector<8x64xf32> -> vector<8x64xf32>
    %c0_9 = arith.constant 0 : index
    %c0_10 = arith.constant 0 : index
    %8 = vector.load %arg4[%c0_9, %c0_10] : memref<64x32xf32, #tpu.memory_space<vmem>>, vector<64x32xf32>
    %cst_11 = arith.constant dense<0.000000e+00> : vector<8x32xf32>
    %9 = tpu.matmul %4, %8, %cst_11 {dimension_numbers = #tpu.dot_dimension_numbers<[1], [0], [0], [1], [0, 0, 1, 1], [], []>} : vector<8x64xf32>, vector<64x32xf32>, vector<8x32xf32> -> vector<8x32xf32>
    %c0_12 = arith.constant 0 : index
    %c0_13 = arith.constant 0 : index
    %10 = vector.load %arg5[%c0_12, %c0_13] : memref<1x32xf32, #tpu.memory_space<vmem>>, vector<1x32xf32>
    %11 = vector.broadcast %10 : vector<1x32xf32> to vector<8x32xf32>
    %12 = arith.addf %9, %11 : vector<8x32xf32>
    %cst_14 = arith.constant 0.000000e+00 : f32
    %13 = vector.broadcast %cst_14 : f32 to vector<8x32xf32>
    %14 = arith.maximumf %12, %13 : vector<8x32xf32>
    %c0_15 = arith.constant 0 : index
    %c0_16 = arith.constant 0 : index
    %15 = vector.load %arg6[%c0_15, %c0_16] : memref<64x32xf32, #tpu.memory_space<vmem>>, vector<64x32xf32>
    %cst_17 = arith.constant dense<0.000000e+00> : vector<8x32xf32>
    %16 = tpu.matmul %7, %15, %cst_17 {dimension_numbers = #tpu.dot_dimension_numbers<[1], [0], [0], [1], [0, 0, 1, 1], [], []>} : vector<8x64xf32>, vector<64x32xf32>, vector<8x32xf32> -> vector<8x32xf32>
    %c0_18 = arith.constant 0 : index
    %c0_19 = arith.constant 0 : index
    %17 = vector.load %arg7[%c0_18, %c0_19] : memref<1x32xf32, #tpu.memory_space<vmem>>, vector<1x32xf32>
    %18 = vector.broadcast %17 : vector<1x32xf32> to vector<8x32xf32>
    %19 = arith.addf %16, %18 : vector<8x32xf32>
    %cst_20 = arith.constant 0.000000e+00 : f32
    %20 = vector.broadcast %cst_20 : f32 to vector<8x32xf32>
    %21 = arith.maximumf %19, %20 : vector<8x32xf32>
    %c0_21 = arith.constant 0 : index
    %c0_22 = arith.constant 0 : index
    %22 = vector.load %arg8[%c0_21, %c0_22] : memref<32x32xf32, #tpu.memory_space<vmem>>, vector<32x32xf32>
    %cst_23 = arith.constant dense<0.000000e+00> : vector<8x32xf32>
    %23 = tpu.matmul %14, %22, %cst_23 {dimension_numbers = #tpu.dot_dimension_numbers<[1], [0], [0], [1], [0, 0, 1, 1], [], []>} : vector<8x32xf32>, vector<32x32xf32>, vector<8x32xf32> -> vector<8x32xf32>
    %c0_24 = arith.constant 0 : index
    %c0_25 = arith.constant 0 : index
    %24 = vector.load %arg9[%c0_24, %c0_25] : memref<32x32xf32, #tpu.memory_space<vmem>>, vector<32x32xf32>
    %cst_26 = arith.constant dense<0.000000e+00> : vector<8x32xf32>
    %25 = tpu.matmul %21, %24, %cst_26 {dimension_numbers = #tpu.dot_dimension_numbers<[1], [0], [0], [1], [0, 0, 1, 1], [], []>} : vector<8x32xf32>, vector<32x32xf32>, vector<8x32xf32> -> vector<8x32xf32>
    %26 = arith.addf %23, %25 : vector<8x32xf32>
    %c0_27 = arith.constant 0 : index
    %c0_28 = arith.constant 0 : index
    %27 = vector.load %arg10[%c0_27, %c0_28] : memref<1x32xf32, #tpu.memory_space<vmem>>, vector<1x32xf32>
    %28 = vector.broadcast %27 : vector<1x32xf32> to vector<8x32xf32>
    %29 = arith.addf %26, %28 : vector<8x32xf32>
    %cst_29 = arith.constant 0.000000e+00 : f32
    %30 = vector.broadcast %cst_29 : f32 to vector<8x32xf32>
    %31 = arith.maximumf %29, %30 : vector<8x32xf32>
    %c0_30 = arith.constant 0 : index
    %c0_31 = arith.constant 0 : index
    %32 = vector.load %arg11[%c0_30, %c0_31] : memref<32x32xf32, #tpu.memory_space<vmem>>, vector<32x32xf32>
    %cst_32 = arith.constant dense<0.000000e+00> : vector<8x32xf32>
    %33 = tpu.matmul %31, %32, %cst_32 {dimension_numbers = #tpu.dot_dimension_numbers<[1], [0], [0], [1], [0, 0, 1, 1], [], []>} : vector<8x32xf32>, vector<32x32xf32>, vector<8x32xf32> -> vector<8x32xf32>
    %c0_33 = arith.constant 0 : index
    %c0_34 = arith.constant 0 : index
    %34 = vector.load %arg12[%c0_33, %c0_34] : memref<1x32xf32, #tpu.memory_space<vmem>>, vector<1x32xf32>
    %35 = vector.broadcast %34 : vector<1x32xf32> to vector<8x32xf32>
    %36 = arith.addf %33, %35 : vector<8x32xf32>
    %cst_35 = arith.constant 0.000000e+00 : f32
    %37 = vector.broadcast %cst_35 : f32 to vector<8x32xf32>
    %38 = arith.maximumf %36, %37 : vector<8x32xf32>
    %c0_36 = arith.constant 0 : index
    %c0_37 = arith.constant 0 : index
    %39 = vector.load %arg13[%c0_36, %c0_37] : memref<32x128xf32, #tpu.memory_space<vmem>>, vector<32x128xf32>
    %cst_38 = arith.constant dense<0.000000e+00> : vector<8x128xf32>
    %40 = tpu.matmul %38, %39, %cst_38 {dimension_numbers = #tpu.dot_dimension_numbers<[1], [0], [0], [1], [0, 0, 1, 1], [], []>} : vector<8x32xf32>, vector<32x128xf32>, vector<8x128xf32> -> vector<8x128xf32>
    %c0_39 = arith.constant 0 : index
    %c0_40 = arith.constant 0 : index
    %41 = vector.load %arg14[%c0_39, %c0_40] : memref<1x128xf32, #tpu.memory_space<vmem>>, vector<1x128xf32>
    %42 = vector.broadcast %41 : vector<1x128xf32> to vector<8x128xf32>
    %43 = arith.addf %40, %42 : vector<8x128xf32>
    %cst_41 = arith.constant dense<0xFF800000> : vector<8xf32>
    %44 = vector.multi_reduction <maximumf>, %43, %cst_41 [1] : vector<8x128xf32> to vector<8xf32>
    %45 = vector.shape_cast %44 : vector<8xf32> to vector<8x1xf32>
    %46 = vector.broadcast %45 : vector<8x1xf32> to vector<8x128xf32>
    %47 = arith.subf %43, %46 : vector<8x128xf32>
    %48 = math.exp %47 : vector<8x128xf32>
    %cst_42 = arith.constant dense<0.000000e+00> : vector<8xf32>
    %49 = vector.multi_reduction <add>, %48, %cst_42 [1] : vector<8x128xf32> to vector<8xf32>
    %50 = vector.shape_cast %49 : vector<8xf32> to vector<8x1xf32>
    %51 = math.log %50 : vector<8x1xf32>
    %52 = arith.addf %45, %51 : vector<8x1xf32>
    %53 = vector.broadcast %52 : vector<8x1xf32> to vector<8x128xf32>
    %54 = arith.subf %43, %53 : vector<8x128xf32>
    %c0_43 = arith.constant 0 : index
    %c0_44 = arith.constant 0 : index
    %c0_45 = arith.constant 0 : index
    %55 = vector.load %arg15[%c0_43, %c0_44, %c0_45] : memref<1x8x128xf32, #tpu.memory_space<vmem>>, vector<1x8x128xf32>
    %56 = vector.shape_cast %55 : vector<1x8x128xf32> to vector<8x128xf32>
    %57 = vector.shape_cast %54 : vector<8x128xf32> to vector<1x8x128xf32>
    tpu.vector_store %arg15[%c0_43, %c0_44, %c0_45], %57 {strides = array<i32>} : memref<1x8x128xf32, #tpu.memory_space<vmem>>, vector<1x8x128xf32>,
    return
  }
  func.func @transform_0(%arg0: i32) -> (i32, i32, i32) {
    %c0_i32 = arith.constant 0 : i32
    %c0_i32_0 = arith.constant 0 : i32
    %c0_i32_1 = arith.constant 0 : i32
    return %arg0, %c0_i32, %c0_i32_0 : i32, i32, i32
  }
  func.func @transform_1(%arg0: i32) -> (i32, i32, i32) {
    %c0_i32 = arith.constant 0 : i32
    %c0_i32_0 = arith.constant 0 : i32
    %c0_i32_1 = arith.constant 0 : i32
    return %arg0, %c0_i32, %c0_i32_0 : i32, i32, i32
  }
  func.func @transform_2(%arg0: i32) -> (i32, i32, i32) {
    %c0_i32 = arith.constant 0 : i32
    %c0_i32_0 = arith.constant 0 : i32
    %c0_i32_1 = arith.constant 0 : i32
    return %arg0, %c0_i32, %c0_i32_0 : i32, i32, i32
  }
  func.func @transform_3(%arg0: i32) -> (i32, i32) {
    %c0_i32 = arith.constant 0 : i32
    %c0_i32_0 = arith.constant 0 : i32
    %c0_i32_1 = arith.constant 0 : i32
    return %c0_i32, %c0_i32_0 : i32, i32
  }
  func.func @transform_4(%arg0: i32) -> (i32, i32) {
    %c0_i32 = arith.constant 0 : i32
    %c0_i32_0 = arith.constant 0 : i32
    %c0_i32_1 = arith.constant 0 : i32
    return %c0_i32, %c0_i32_0 : i32, i32
  }
  func.func @transform_5(%arg0: i32) -> (i32, i32) {
    %c0_i32 = arith.constant 0 : i32
    %c0_i32_0 = arith.constant 0 : i32
    %c0_i32_1 = arith.constant 0 : i32
    return %c0_i32, %c0_i32_0 : i32, i32
  }
  func.func @transform_6(%arg0: i32) -> (i32, i32) {
    %c0_i32 = arith.constant 0 : i32
    %c0_i32_0 = arith.constant 0 : i32
    %c0_i32_1 = arith.constant 0 : i32
    return %c0_i32, %c0_i32_0 : i32, i32
  }
  func.func @transform_7(%arg0: i32) -> (i32, i32) {
    %c0_i32 = arith.constant 0 : i32
    %c0_i32_0 = arith.constant 0 : i32
    %c0_i32_1 = arith.constant 0 : i32
    return %c0_i32, %c0_i32_0 : i32, i32
  }
  func.func @transform_8(%arg0: i32) -> (i32, i32) {
    %c0_i32 = arith.constant 0 : i32
    %c0_i32_0 = arith.constant 0 : i32
    %c0_i32_1 = arith.constant 0 : i32
    return %c0_i32, %c0_i32_0 : i32, i32
  }
  func.func @transform_9(%arg0: i32) -> (i32, i32) {
    %c0_i32 = arith.constant 0 : i32
    %c0_i32_0 = arith.constant 0 : i32
    %c0_i32_1 = arith.constant 0 : i32
    return %c0_i32, %c0_i32_0 : i32, i32
  }
  func.func @transform_10(%arg0: i32) -> (i32, i32) {
    %c0_i32 = arith.constant 0 : i32
    %c0_i32_0 = arith.constant 0 : i32
    %c0_i32_1 = arith.constant 0 : i32
    return %c0_i32, %c0_i32_0 : i32, i32
  }
  func.func @transform_11(%arg0: i32) -> (i32, i32) {
    %c0_i32 = arith.constant 0 : i32
    %c0_i32_0 = arith.constant 0 : i32
    %c0_i32_1 = arith.constant 0 : i32
    return %c0_i32, %c0_i32_0 : i32, i32
  }
  func.func @transform_12(%arg0: i32) -> (i32, i32) {
    %c0_i32 = arith.constant 0 : i32
    %c0_i32_0 = arith.constant 0 : i32
    %c0_i32_1 = arith.constant 0 : i32
    return %c0_i32, %c0_i32_0 : i32, i32
  }
  func.func @transform_13(%arg0: i32) -> (i32, i32) {
    %c0_i32 = arith.constant 0 : i32
    %c0_i32_0 = arith.constant 0 : i32
    %c0_i32_1 = arith.constant 0 : i32
    return %c0_i32, %c0_i32_0 : i32, i32
  }
  func.func @transform_14(%arg0: i32) -> (i32, i32, i32) {
    %c0_i32 = arith.constant 0 : i32
    %c0_i32_0 = arith.constant 0 : i32
    %c0_i32_1 = arith.constant 0 : i32
    return %arg0, %c0_i32, %c0_i32_0 : i32, i32, i32
  }
}

</mosaic_0001>

<llo_original>
// kernel: model_graphrel_forward.7
$region0: #{model_graphrel_forward.7}
  #allocation0 [shape = 'u32[]', space=smem, size = 0x4, offset = 0x4, fixed_abs, tag = 'smem constant byte address 0x4 - core index']
  #allocation1 [shape = 'u32[144,128]{1,0:T(1,128)}', space=vmem, size = 0x12000, scoped, tag = 'internal scratch']
  %s0 = inlined_call_operand.vmem [shape: f32[2,8,64], index: 0, kind: input, shape index: {}]
  %s1 = inlined_call_operand.vmem [shape: f32[2,8,8], index: 1, kind: input, shape index: {}]
  %s2 = inlined_call_operand.vmem [shape: f32[2,8,8], index: 2, kind: input, shape index: {}]
  %s3 = inlined_call_operand.vmem [shape: f32[64,32], index: 3, kind: input, shape index: {}]
  %s4 = inlined_call_operand.vmem [shape: f32[1,32], index: 4, kind: input, shape index: {}]
  %s5 = inlined_call_operand.vmem [shape: f32[64,32], index: 5, kind: input, shape index: {}]
  %s6 = inlined_call_operand.vmem [shape: f32[1,32], index: 6, kind: input, shape index: {}]
  %s7 = inlined_call_operand.vmem [shape: f32[32,32], index: 7, kind: input, shape index: {}]
  %s8 = inlined_call_operand.vmem [shape: f32[32,32], index: 8, kind: input, shape index: {}]
  %s9 = inlined_call_operand.vmem [shape: f32[1,32], index: 9, kind: input, shape index: {}]
  %s10 = inlined_call_operand.vmem [shape: f32[32,32], index: 10, kind: input, shape index: {}]
  %s11 = inlined_call_operand.vmem [shape: f32[1,32], index: 11, kind: input, shape index: {}]
  %s12 = inlined_call_operand.vmem [shape: f32[32,128], index: 12, kind: input, shape index: {}]
  %s13 = inlined_call_operand.vmem [shape: f32[1,128], index: 13, kind: input, shape index: {}]
  %s14 = inlined_call_operand.vmem [shape: f32[2,8,128], index: 14, kind: output, shape index: {}]
  %s15 = sld [smem:[#allocation0]]
  $region89: #{model_graphrel_forward.7} parent=0
    _
  %s17 = ssub.s32 1, %s15
  %s18 = scalar_select 0, %s17, %s15
  loop: start=0, step=1, limit=4
  $region2: #{model_graphrel_forward.7} parent=0 // loop_pre_header
    _
  $region3: #{model_graphrel_forward.7} parent=0 // loop_header
    %s20 = sphi 0, %s24
    %p21 = scmp.ge.s32.totalorder %s20, 4
    %s30 = sphi 0, %s32
    %s33 = sphi 0, %s30
    %s34 = sphi 0, %s33
    %s50 = sphi 0, %s34
    %s56 = sphi 0, %s58
    %s59 = sphi 0, %s56
    %s60 = sphi 0, %s59
    %s76 = sphi 0, %s60
    %s82 = sphi 0, %s84
    %s85 = sphi 0, %s82
    %s86 = sphi 0, %s85
    %s102 = sphi 0, %s86
    %s106 = sphi 0, %s106
    %s108 = sphi 0, %s106
    %s109 = sphi 0, %s108
    %s123 = sphi 0, %s109
    %s127 = sphi 0, %s127
    %s129 = sphi 0, %s127
    %s130 = sphi 0, %s129
    %s144 = sphi 0, %s130
    %s148 = sphi 0, %s148
    %s150 = sphi 0, %s148
    %s151 = sphi 0, %s150
    %s165 = sphi 0, %s151
    %s169 = sphi 0, %s169
    %s171 = sphi 0, %s169
    %s172 = sphi 0, %s171
    %s186 = sphi 0, %s172
    %s190 = sphi 0, %s190
    %s192 = sphi 0, %s190
    %s193 = sphi 0, %s192
    %s207 = sphi 0, %s193
    %s211 = sphi 0, %s211
    %s213 = sphi 0, %s211
    %s214 = sphi 0, %s213
    %s228 = sphi 0, %s214
    %s232 = sphi 0, %s232
    %s234 = sphi 0, %s232
    %s235 = sphi 0, %s234
    %s249 = sphi 0, %s235
    %s253 = sphi 0, %s253
    %s255 = sphi 0, %s253
    %s256 = sphi 0, %s255
    %s270 = sphi 0, %s256
    %s274 = sphi 0, %s274
    %s276 = sphi 0, %s274
    %s277 = sphi 0, %s276
    %s291 = sphi 0, %s277
    %s295 = sphi 0, %s295
    %s297 = sphi 0, %s295
    %s298 = sphi 0, %s297
    %s312 = sphi 0, %s298
    %s316 = sphi 0, %s316
    %s318 = sphi 0, %s316
    %s319 = sphi 0, %s318
    %s333 = sphi 0, %s319
    %s339 = sphi 0, %s341
    %s342 = sphi 0, %s339
    %s343 = sphi 0, %s342
    %s359 = sphi 0, %s343
  $region4: #{model_graphrel_forward.7} parent=0 // loop_header_branch
    %23 = sbr.rel (%p21) target = $region8
  $region5: #{model_graphrel_forward.7} parent=0 // loop_body
    %s25 = ssub.s32 %s20, 1
    %s26 = ssub.s32 %s20, 2
    %s27 = sadd.s32 %s20, 1
    %s28 = ssub.s32 %s20, %s27
    %p29 = scmp.eq.s32.totalorder %s28, 0
    %s31 = sadd.s32 %s30, 1
    %s32 = scalar_select %p29, %s30, %s31
    %p35 = pneg %p29
    %p36 = scmp.eq.s32.totalorder %s20, 1
    %p37 = por %p35, %p36
    %p38 = scmp.ne.s32.totalorder %s30, %s33
    %p39 = scmp.eq.s32.totalorder %s20, 0
    %p40 = por %p38, %p39
    %p41 = scmp.ne.s32.totalorder %s30, %s33
    %p42 = scmp.eq.s32.totalorder %s25, 1
    %p43 = por %p41, %p42
    %p44 = scmp.ne.s32.totalorder %s33, %s34
    %p45 = scmp.eq.s32.totalorder %s25, 0
    %p46 = por %p44, %p45
    %p47 = scmp.ne.s32.totalorder %s33, %s34
    %p48 = scmp.eq.s32.totalorder %s26, 1
    %p49 = por %p47, %p48
    %p51 = scmp.ne.s32.totalorder %s34, %s50
    %p52 = scmp.eq.s32.totalorder %s26, 0
    %p53 = por %p51, %p52
    %s54 = ssub.s32 %s20, %s27
    %p55 = scmp.eq.s32.totalorder %s54, 0
    %s57 = sadd.s32 %s56, 1
    %s58 = scalar_select %p55, %s56, %s57
    %p61 = pneg %p55
    %p62 = scmp.eq.s32.totalorder %s20, 1
    %p63 = por %p61, %p62
    %p64 = scmp.ne.s32.totalorder %s56, %s59
    %p65 = scmp.eq.s32.totalorder %s20, 0
    %p66 = por %p64, %p65
    %p67 = scmp.ne.s32.totalorder %s56, %s59
    %p68 = scmp.eq.s32.totalorder %s25, 1
    %p69 = por %p67, %p68
    %p70 = scmp.ne.s32.totalorder %s59, %s60
    %p71 = scmp.eq.s32.totalorder %s25, 0
    %p72 = por %p70, %p71
    %p73 = scmp.ne.s32.totalorder %s59, %s60
    %p74 = scmp.eq.s32.totalorder %s26, 1
    %p75 = por %p73, %p74
    %p77 = scmp.ne.s32.totalorder %s60, %s76
    %p78 = scmp.eq.s32.totalorder %s26, 0
    %p79 = por %p77, %p78
    %s80 = ssub.s32 %s20, %s27
    %p81 = scmp.eq.s32.totalorder %s80, 0
    %s83 = sadd.s32 %s82, 1
    %s84 = scalar_select %p81, %s82, %s83
    %p87 = pneg %p81
    %p88 = scmp.eq.s32.totalorder %s20, 1
    %p89 = por %p87, %p88
    %p90 = scmp.ne.s32.totalorder %s82, %s85
    %p91 = scmp.eq.s32.totalorder %s20, 0
    %p92 = por %p90, %p91
    %p93 = scmp.ne.s32.totalorder %s82, %s85
    %p94 = scmp.eq.s32.totalorder %s25, 1
    %p95 = por %p93, %p94
    %p96 = scmp.ne.s32.totalorder %s85, %s86
    %p97 = scmp.eq.s32.totalorder %s25, 0
    %p98 = por %p96, %p97
    %p99 = scmp.ne.s32.totalorder %s85, %s86
    %p100 = scmp.eq.s32.totalorder %s26, 1
    %p101 = por %p99, %p100
    %p103 = scmp.ne.s32.totalorder %s86, %s102
    %p104 = scmp.eq.s32.totalorder %s26, 0
    %p105 = por %p103, %p104
    %s107 = sadd.s32 %s106, 1
    %p110 = scmp.eq.s32.totalorder %s20, 1
    %p111 = scmp.ne.s32.totalorder %s106, %s108
    %p112 = scmp.eq.s32.totalorder %s20, 0
    %p113 = por %p111, %p112
    %p114 = scmp.ne.s32.totalorder %s106, %s108
    %p115 = scmp.eq.s32.totalorder %s25, 1
    %p116 = por %p114, %p115
    %p117 = scmp.ne.s32.totalorder %s108, %s109
    %p118 = scmp.eq.s32.totalorder %s25, 0
    %p119 = por %p117, %p118
    %p120 = scmp.ne.s32.totalorder %s108, %s109
    %p121 = scmp.eq.s32.totalorder %s26, 1
    %p122 = por %p120, %p121
    %p124 = scmp.ne.s32.totalorder %s109, %s123
    %p125 = scmp.eq.s32.totalorder %s26, 0
    %p126 = por %p124, %p125
    %s128 = sadd.s32 %s127, 1
    %p131 = scmp.eq.s32.totalorder %s20, 1
    %p132 = scmp.ne.s32.totalorder %s127, %s129
    %p133 = scmp.eq.s32.totalorder %s20, 0
    %p134 = por %p132, %p133
    %p135 = scmp.ne.s32.totalorder %s127, %s129
    %p136 = scmp.eq.s32.totalorder %s25, 1
    %p137 = por %p135, %p136
    %p138 = scmp.ne.s32.totalorder %s129, %s130
    %p139 = scmp.eq.s32.totalorder %s25, 0
    %p140 = por %p138, %p139
    %p141 = scmp.ne.s32.totalorder %s129, %s130
    %p142 = scmp.eq.s32.totalorder %s26, 1
    %p143 = por %p141, %p142
    %p145 = scmp.ne.s32.totalorder %s130, %s144
    %p146 = scmp.eq.s32.totalorder %s26, 0
    %p147 = por %p145, %p146
    %s149 = sadd.s32 %s148, 1
    %p152 = scmp.eq.s32.totalorder %s20, 1
    %p153 = scmp.ne.s32.totalorder %s148, %s150
    %p154 = scmp.eq.s32.totalorder %s20, 0
    %p155 = por %p153, %p154
    %p156 = scmp.ne.s32.totalorder %s148, %s150
    %p157 = scmp.eq.s32.totalorder %s25, 1
    %p158 = por %p156, %p157
    %p159 = scmp.ne.s32.totalorder %s150, %s151
    %p160 = scmp.eq.s32.totalorder %s25, 0
    %p161 = por %p159, %p160
    %p162 = scmp.ne.s32.totalorder %s150, %s151
    %p163 = scmp.eq.s32.totalorder %s26, 1
    %p164 = por %p162, %p163
    %p166 = scmp.ne.s32.totalorder %s151, %s165
    %p167 = scmp.eq.s32.totalorder %s26, 0
    %p168 = por %p166, %p167
    %s170 = sadd.s32 %s169, 1
    %p173 = scmp.eq.s32.totalorder %s20, 1
    %p174 = scmp.ne.s32.totalorder %s169, %s171
    %p175 = scmp.eq.s32.totalorder %s20, 0
    %p176 = por %p174, %p175
    %p177 = scmp.ne.s32.totalorder %s169, %s171
    %p178 = scmp.eq.s32.totalorder %s25, 1
    %p179 = por %p177, %p178
    %p180 = scmp.ne.s32.totalorder %s171, %s172
    %p181 = scmp.eq.s32.totalorder %s25, 0
    %p182 = por %p180, %p181
    %p183 = scmp.ne.s32.totalorder %s171, %s172
    %p184 = scmp.eq.s32.totalorder %s26, 1
    %p185 = por %p183, %p184
    %p187 = scmp.ne.s32.totalorder %s172, %s186
    %p188 = scmp.eq.s32.totalorder %s26, 0
    %p189 = por %p187, %p188
    %s191 = sadd.s32 %s190, 1
    %p194 = scmp.eq.s32.totalorder %s20, 1
    %p195 = scmp.ne.s32.totalorder %s190, %s192
    %p196 = scmp.eq.s32.totalorder %s20, 0
    %p197 = por %p195, %p196
    %p198 = scmp.ne.s32.totalorder %s190, %s192
    %p199 = scmp.eq.s32.totalorder %s25, 1
    %p200 = por %p198, %p199
    %p201 = scmp.ne.s32.totalorder %s192, %s193
    %p202 = scmp.eq.s32.totalorder %s25, 0
    %p203 = por %p201, %p202
    %p204 = scmp.ne.s32.totalorder %s192, %s193
    %p205 = scmp.eq.s32.totalorder %s26, 1
    %p206 = por %p204, %p205
    %p208 = scmp.ne.s32.totalorder %s193, %s207
    %p209 = scmp.eq.s32.totalorder %s26, 0
    %p210 = por %p208, %p209
    %s212 = sadd.s32 %s211, 1
    %p215 = scmp.eq.s32.totalorder %s20, 1
    %p216 = scmp.ne.s32.totalorder %s211, %s213
    %p217 = scmp.eq.s32.totalorder %s20, 0
    %p218 = por %p216, %p217
    %p219 = scmp.ne.s32.totalorder %s211, %s213
    %p220 = scmp.eq.s32.totalorder %s25, 1
    %p221 = por %p219, %p220
    %p222 = scmp.ne.s32.totalorder %s213, %s214
    %p223 = scmp.eq.s32.totalorder %s25, 0
    %p224 = por %p222, %p223
    %p225 = scmp.ne.s32.totalorder %s213, %s214
    %p226 = scmp.eq.s32.totalorder %s26, 1
    %p227 = por %p225, %p226
    %p229 = scmp.ne.s32.totalorder %s214, %s228
    %p230 = scmp.eq.s32.totalorder %s26, 0
    %p231 = por %p229, %p230
    %s233 = sadd.s32 %s232, 1
    %p236 = scmp.eq.s32.totalorder %s20, 1
    %p237 = scmp.ne.s32.totalorder %s232, %s234
    %p238 = scmp.eq.s32.totalorder %s20, 0
    %p239 = por %p237, %p238
    %p240 = scmp.ne.s32.totalorder %s232, %s234
    %p241 = scmp.eq.s32.totalorder %s25, 1
    %p242 = por %p240, %p241
    %p243 = scmp.ne.s32.totalorder %s234, %s235
    %p244 = scmp.eq.s32.totalorder %s25, 0
    %p245 = por %p243, %p244
    %p246 = scmp.ne.s32.totalorder %s234, %s235
    %p247 = scmp.eq.s32.totalorder %s26, 1
    %p248 = por %p246, %p247
    %p250 = scmp.ne.s32.totalorder %s235, %s249
    %p251 = scmp.eq.s32.totalorder %s26, 0
    %p252 = por %p250, %p251
    %s254 = sadd.s32 %s253, 1
    %p257 = scmp.eq.s32.totalorder %s20, 1
    %p258 = scmp.ne.s32.totalorder %s253, %s255
    %p259 = scmp.eq.s32.totalorder %s20, 0
    %p260 = por %p258, %p259
    %p261 = scmp.ne.s32.totalorder %s253, %s255
    %p262 = scmp.eq.s32.totalorder %s25, 1
    %p263 = por %p261, %p262
    %p264 = scmp.ne.s32.totalorder %s255, %s256
    %p265 = scmp.eq.s32.totalorder %s25, 0
    %p266 = por %p264, %p265
    %p267 = scmp.ne.s32.totalorder %s255, %s256
    %p268 = scmp.eq.s32.totalorder %s26, 1
    %p269 = por %p267, %p268
    %p271 = scmp.ne.s32.totalorder %s256, %s270
    %p272 = scmp.eq.s32.totalorder %s26, 0
    %p273 = por %p271, %p272
    %s275 = sadd.s32 %s274, 1
    %p278 = scmp.eq.s32.totalorder %s20, 1
    %p279 = scmp.ne.s32.totalorder %s274, %s276
    %p280 = scmp.eq.s32.totalorder %s20, 0
    %p281 = por %p279, %p280
    %p282 = scmp.ne.s32.totalorder %s274, %s276
    %p283 = scmp.eq.s32.totalorder %s25, 1
    %p284 = por %p282, %p283
    %p285 = scmp.ne.s32.totalorder %s276, %s277
    %p286 = scmp.eq.s32.totalorder %s25, 0
    %p287 = por %p285, %p286
    %p288 = scmp.ne.s32.totalorder %s276, %s277
    %p289 = scmp.eq.s32.totalorder %s26, 1
    %p290 = por %p288, %p289
    %p292 = scmp.ne.s32.totalorder %s277, %s291
    %p293 = scmp.eq.s32.totalorder %s26, 0
    %p294 = por %p292, %p293
    %s296 = sadd.s32 %s295, 1
    %p299 = scmp.eq.s32.totalorder %s20, 1
    %p300 = scmp.ne.s32.totalorder %s295, %s297
    %p301 = scmp.eq.s32.totalorder %s20, 0
    %p302 = por %p300, %p301
    %p303 = scmp.ne.s32.totalorder %s295, %s297
    %p304 = scmp.eq.s32.totalorder %s25, 1
    %p305 = por %p303, %p304
    %p306 = scmp.ne.s32.totalorder %s297, %s298
    %p307 = scmp.eq.s32.totalorder %s25, 0
    %p308 = por %p306, %p307
    %p309 = scmp.ne.s32.totalorder %s297, %s298
    %p310 = scmp.eq.s32.totalorder %s26, 1
    %p311 = por %p309, %p310
    %p313 = scmp.ne.s32.totalorder %s298, %s312
    %p314 = scmp.eq.s32.totalorder %s26, 0
    %p315 = por %p313, %p314
    %s317 = sadd.s32 %s316, 1
    %p320 = scmp.eq.s32.totalorder %s20, 1
    %p321 = scmp.ne.s32.totalorder %s316, %s318
    %p322 = scmp.eq.s32.totalorder %s20, 0
    %p323 = por %p321, %p322
    %p324 = scmp.ne.s32.totalorder %s316, %s318
    %p325 = scmp.eq.s32.totalorder %s25, 1
    %p326 = por %p324, %p325
    %p327 = scmp.ne.s32.totalorder %s318, %s319
    %p328 = scmp.eq.s32.totalorder %s25, 0
    %p329 = por %p327, %p328
    %p330 = scmp.ne.s32.totalorder %s318, %s319
    %p331 = scmp.eq.s32.totalorder %s26, 1
    %p332 = por %p330, %p331
    %p334 = scmp.ne.s32.totalorder %s319, %s333
    %p335 = scmp.eq.s32.totalorder %s26, 0
    %p336 = por %p334, %p335
    %s337 = ssub.s32 %s20, %s27
    %p338 = scmp.eq.s32.totalorder %s337, 0
    %s340 = sadd.s32 %s339, 1
    %s341 = scalar_select %p338, %s339, %s340
    %p344 = pneg %p338
    %p345 = scmp.eq.s32.totalorder %s20, 1
    %p346 = por %p344, %p345
    %p347 = scmp.ne.s32.totalorder %s339, %s342
    %p348 = scmp.eq.s32.totalorder %s20, 0
    %p349 = por %p347, %p348
    %p350 = scmp.ne.s32.totalorder %s339, %s342
    %p351 = scmp.eq.s32.totalorder %s25, 1
    %p352 = por %p350, %p351
    %p353 = scmp.ne.s32.totalorder %s342, %s343
    %p354 = scmp.eq.s32.totalorder %s25, 0
    %p355 = por %p353, %p354
    %p356 = scmp.ne.s32.totalorder %s342, %s343
    %p357 = scmp.eq.s32.totalorder %s26, 1
    %p358 = por %p356, %p357
    %p360 = scmp.ne.s32.totalorder %s343, %s359
    %p361 = scmp.eq.s32.totalorder %s26, 0
    %p362 = por %p360, %p361
    %p363 = scmp.le.s32.totalorder 1, %s20
    %p364 = scmp.lt.s32.totalorder %s20, 3
    %p365 = pnand %p363, %p364
    %p366 = pneg %p365
    // Predicated region
    $region9: #{model_graphrel_forward.7} parent=5 // pred_check
      _
    $region10: #{model_graphrel_forward.7} parent=5 // pred_check_branch
      %368 = sbr.rel (%p365) target = $region12
    $region11: #{model_graphrel_forward.7} parent=5 // pred_region
      %s369 = ssub.s32 %s20, 1
      // Predicated region
      $region13: #{model_graphrel_forward.7} parent=11 // pred_check
        %p370 = pneg %p119
      $region14: #{model_graphrel_forward.7} parent=11 // pred_check_branch
        %372 = sbr.rel (%p370) target = $region16
      $region15: #{model_graphrel_forward.7} parent=11 // pred_region
        _
      $region16: #{model_graphrel_forward.7} parent=11 // pred_fallthru
        _
      // Predicated region
      $region17: #{model_graphrel_forward.7} parent=11 // pred_check
        %p373 = pneg %p140
      $region18: #{model_graphrel_forward.7} parent=11 // pred_check_branch
        %375 = sbr.rel (%p373) target = $region20
      $region19: #{model_graphrel_forward.7} parent=11 // pred_region
        _
      $region20: #{model_graphrel_forward.7} parent=11 // pred_fallthru
        _
      // Predicated region
      $region21: #{model_graphrel_forward.7} parent=11 // pred_check
        %p376 = pneg %p161
      $region22: #{model_graphrel_forward.7} parent=11 // pred_check_branch
        %378 = sbr.rel (%p376) target = $region24
      $region23: #{model_graphrel_forward.7} parent=11 // pred_region
        _
      $region24: #{model_graphrel_forward.7} parent=11 // pred_fallthru
        _
      // Predicated region
      $region25: #{model_graphrel_forward.7} parent=11 // pred_check
        %p379 = pneg %p182
      $region26: #{model_graphrel_forward.7} parent=11 // pred_check_branch
        %381 = sbr.rel (%p379) target = $region28
      $region27: #{model_graphrel_forward.7} parent=11 // pred_region
        _
      $region28: #{model_graphrel_forward.7} parent=11 // pred_fallthru
        _
      // Predicated region
      $region29: #{model_graphrel_forward.7} parent=11 // pred_check
        %p382 = pneg %p203
      $region30: #{model_graphrel_forward.7} parent=11 // pred_check_branch
        %384 = sbr.rel (%p382) target = $region32
      $region31: #{model_graphrel_forward.7} parent=11 // pred_region
        _
      $region32: #{model_graphrel_forward.7} parent=11 // pred_fallthru
        _
      // Predicated region
      $region33: #{model_graphrel_forward.7} parent=11 // pred_check
        %p385 = pneg %p224
      $region34: #{model_graphrel_forward.7} parent=11 // pred_check_branch
        %387 = sbr.rel (%p385) target = $region36
      $region35: #{model_graphrel_forward.7} parent=11 // pred_region
        _
      $region36: #{model_graphrel_forward.7} parent=11 // pred_fallthru
        _
      // Predicated region
      $region37: #{model_graphrel_forward.7} parent=11 // pred_check
        %p388 = pneg %p245
      $region38: #{model_graphrel_forward.7} parent=11 // pred_check_branch
        %390 = sbr.rel (%p388) target = $region40
      $region39: #{model_graphrel_forward.7} parent=11 // pred_region
        _
      $region40: #{model_graphrel_forward.7} parent=11 // pred_fallthru
        _
      // Predicated region
      $region41: #{model_graphrel_forward.7} parent=11 // pred_check
        %p391 = pneg %p266
      $region42: #{model_graphrel_forward.7} parent=11 // pred_check_branch
        %393 = sbr.rel (%p391) target = $region44
      $region43: #{model_graphrel_forward.7} parent=11 // pred_region
        _
      $region44: #{model_graphrel_forward.7} parent=11 // pred_fallthru
        _
      // Predicated region
      $region45: #{model_graphrel_forward.7} parent=11 // pred_check
        %p394 = pneg %p287
      $region46: #{model_graphrel_forward.7} parent=11 // pred_check_branch
        %396 = sbr.rel (%p394) target = $region48
      $region47: #{model_graphrel_forward.7} parent=11 // pred_region
        _
      $region48: #{model_graphrel_forward.7} parent=11 // pred_fallthru
        _
      // Predicated region
      $region49: #{model_graphrel_forward.7} parent=11 // pred_check
        %p397 = pneg %p308
      $region50: #{model_graphrel_forward.7} parent=11 // pred_check_branch
        %399 = sbr.rel (%p397) target = $region52
      $region51: #{model_graphrel_forward.7} parent=11 // pred_region
        _
      $region52: #{model_graphrel_forward.7} parent=11 // pred_fallthru
        _
      // Predicated region
      $region53: #{model_graphrel_forward.7} parent=11 // pred_check
        %p400 = pneg %p329
      $region54: #{model_graphrel_forward.7} parent=11 // pred_check_branch
        %402 = sbr.rel (%p400) target = $region56
      $region55: #{model_graphrel_forward.7} parent=11 // pred_region
        _
      $region56: #{model_graphrel_forward.7} parent=11 // pred_fallthru
        _
    $region12: #{model_graphrel_forward.7} parent=5 // pred_fallthru
      _
    %p403 = scmp.lt.s32.totalorder %s20, 2
    // Predicated region
    $region57: #{model_graphrel_forward.7} parent=5 // pred_check
      %p404 = pneg %p403
    $region58: #{model_graphrel_forward.7} parent=5 // pred_check_branch
      %406 = sbr.rel (%p404) target = $region60
    $region59: #{model_graphrel_forward.7} parent=5 // pred_region
      // Predicated region
      $region61: #{model_graphrel_forward.7} parent=59 // pred_check
        %p407 = pneg %p40
      $region62: #{model_graphrel_forward.7} parent=59 // pred_check_branch
        %409 = sbr.rel (%p407) target = $region64
      $region63: #{model_graphrel_forward.7} parent=59 // pred_region
        %p410 = scmp.lt.s32.totalorder %s20, 1
        %s411 = scalar_select %p410, %s20, 1
        %s412 = smul.addr %s411, 8
        %s413 = scalar_lea.vmem %s0, %s412
      $region64: #{model_graphrel_forward.7} parent=59 // pred_fallthru
        _
      // Predicated region
      $region65: #{model_graphrel_forward.7} parent=59 // pred_check
        %p414 = pneg %p66
      $region66: #{model_graphrel_forward.7} parent=59 // pred_check_branch
        %416 = sbr.rel (%p414) target = $region68
      $region67: #{model_graphrel_forward.7} parent=59 // pred_region
        %p417 = scmp.lt.s32.totalorder %s20, 1
        %s418 = scalar_select %p417, %s20, 1
        %s419 = smul.addr %s418, 8
        %s420 = scalar_lea.vmem %s1, %s419
      $region68: #{model_graphrel_forward.7} parent=59 // pred_fallthru
        _
      // Predicated region
      $region69: #{model_graphrel_forward.7} parent=59 // pred_check
        %p421 = pneg %p92
      $region70: #{model_graphrel_forward.7} parent=59 // pred_check_branch
        %423 = sbr.rel (%p421) target = $region72
      $region71: #{model_graphrel_forward.7} parent=59 // pred_region
        %p424 = scmp.lt.s32.totalorder %s20, 1
        %s425 = scalar_select %p424, %s20, 1
        %s426 = smul.addr %s425, 8
        %s427 = scalar_lea.vmem %s2, %s426
      $region72: #{model_graphrel_forward.7} parent=59 // pred_fallthru
        _
    $region60: #{model_graphrel_forward.7} parent=5 // pred_fallthru
      _
    %p428 = scmp.le.s32.totalorder 1, %s20
    %p429 = scmp.lt.s32.totalorder %s20, 3
    %p430 = pnand %p428, %p429
    %p431 = pneg %p430
    // Predicated region
    $region73: #{model_graphrel_forward.7} parent=5 // pred_check
      _
    $region74: #{model_graphrel_forward.7} parent=5 // pred_check_branch
      %433 = sbr.rel (%p430) target = $region76
    $region75: #{model_graphrel_forward.7} parent=5 // pred_region
      %s434 = ssub.s32 %s20, 1
      %p435 = scmp.lt.s32.totalorder %s25, 1
      %s436 = scalar_select %p435, %s25, 1
      %s437 = smul.addr %s436, 8
      %s438 = scalar_lea.vmem %s0, %s437
      %p439 = pneg %p46
      %p440 = pneg %p43
      %p441 = scmp.lt.s32.totalorder %s25, 1
      %s442 = scalar_select %p441, %s25, 1
      %s443 = smul.addr %s442, 8
      %s444 = scalar_lea.vmem %s1, %s443
      %p445 = pneg %p72
      %p446 = pneg %p69
      %p447 = scmp.lt.s32.totalorder %s25, 1
      %s448 = scalar_select %p447, %s25, 1
      %s449 = smul.addr %s448, 8
      %s450 = scalar_lea.vmem %s2, %s449
      %p451 = pneg %p98
      %p452 = pneg %p95
      %p453 = pneg %p119
      %p454 = pneg %p116
      %p455 = pneg %p140
      %p456 = pneg %p137
      %p457 = pneg %p161
      %p458 = pneg %p158
      %p459 = pneg %p182
      %p460 = pneg %p179
      %p461 = pneg %p203
      %p462 = pneg %p200
      %p463 = pneg %p224
      %p464 = pneg %p221
      %p465 = pneg %p245
      %p466 = pneg %p242
      %p467 = pneg %p266
      %p468 = pneg %p263
      %p469 = pneg %p287
      %p470 = pneg %p284
      %p471 = pneg %p308
      %p472 = pneg %p305
      %p473 = pneg %p329
      %p474 = pneg %p326
      %p475 = pneg %p355
      %p476 = pneg %p352
      %p477 = scmp.lt.s32.totalorder %s25, 1
      %s478 = scalar_select %p477, %s25, 1
      %s479 = smul.addr %s478, 8
      %s480 = scalar_lea.vmem %s14, %s479
      %p481 = scmp.lt.s32.totalorder %s25, 1
      %s482 = scalar_select %p481, %s25, 1
      %s483 = smul.addr %s482, 8
      %s484 = scalar_lea.vmem %s0, %s483
      %p485 = scmp.lt.s32.totalorder %s25, 1
      %s486 = scalar_select %p485, %s25, 1
      %s487 = smul.addr %s486, 8
      %s488 = scalar_lea.vmem %s1, %s487
      %p489 = scmp.lt.s32.totalorder %s25, 1
      %s490 = scalar_select %p489, %s25, 1
      %s491 = smul.addr %s490, 8
      %s492 = scalar_lea.vmem %s2, %s491
      %p493 = scmp.lt.s32.totalorder %s25, 1
      %s494 = scalar_select %p493, %s25, 1
      %s495 = smul.addr %s494, 8
      %s496 = scalar_lea.vmem %s14, %s495
      %v497 = vld [vmem:[%s484] sm:$0xff]
      %v498 = vld [vmem:[%s488] sm:$0xff]
      %vm499 = vcmask 64512
      %v501 = vsel %vm499, %v498, 0
      %503 = vmatprep.subr.mxu0 0.0
      %504 = vmatpush1.msra.mxu0 %v497
      %505 = vmatprep.subr.mxu0 0.0
      %506 = vmatpush1.msra.mxu0 0.0
      %507 = vmatprep.subr.mxu0 0.0
      %508 = vmatpush1.msra.mxu0 0.0
      %509 = vmatprep.subr.mxu0 0.0
      %510 = vmatpush1.msra.mxu0 0.0
      %511 = vmatprep.subr.mxu0 0.0
      %512 = vmatpush1.msra.mxu0 0.0
      %513 = vmatprep.subr.mxu0 0.0
      %514 = vmatpush1.msra.mxu0 0.0
      %515 = vmatprep.subr.mxu0 0.0
      %516 = vmatpush1.msra.mxu0 0.0
      %517 = vmatprep.subr.mxu0 0.0
      %518 = vmatpush1.msra.mxu0 0.0
      %519 = vmatprep.subr.mxu0 0.0
      %520 = vmatpush1.msra.mxu0 0.0
      %521 = vmatprep.subr.mxu0 0.0
      %522 = vmatpush1.msra.mxu0 0.0
      %523 = vmatprep.subr.mxu0 0.0
      %524 = vmatpush1.msra.mxu0 0.0
      %525 = vmatprep.subr.mxu0 0.0
      %526 = vmatpush1.msra.mxu0 0.0
      %527 = vmatprep.subr.mxu0 0.0
      %528 = vmatpush1.msra.mxu0 0.0
      %529 = vmatprep.subr.mxu0 0.0
      %530 = vmatpush1.msra.mxu0 0.0
      %531 = vmatprep.subr.mxu0 0.0
      %532 = vmatpush1.msra.mxu0 0.0
      %533 = vmatprep.subr.mxu0 0.0
      %534 = vmatpush1.msra.mxu0 0.0
      %535 = vmatprep.subr.mxu0 0.0
      %536 = vmatpush1.msra.mxu0 0.0
      %537 = vmatprep.subr.mxu0 0.0
      %538 = vmatpush1.msra.mxu0 0.0
      %539 = vmatprep.subr.mxu0 0.0
      %540 = vmatpush1.msra.mxu0 0.0
      %541 = vmatprep.subr.mxu0 0.0
      %542 = vmatpush1.msra.mxu0 0.0
      %543 = vmatprep.subr.mxu0 0.0
      %544 = vmatpush1.msra.mxu0 0.0
      %545 = vmatprep.subr.mxu0 0.0
      %546 = vmatpush1.msra.mxu0 0.0
      %547 = vmatprep.subr.mxu0 0.0
      %548 = vmatpush1.msra.mxu0 0.0
      %549 = vmatprep.subr.mxu0 0.0
      %550 = vmatpush1.msra.mxu0 0.0
      %551 = vmatprep.subr.mxu0 0.0
      %552 = vmatpush1.msra.mxu0 0.0
      %553 = vmatprep.subr.mxu0 0.0
      %554 = vmatpush1.msra.mxu0 0.0
      %555 = vmatprep.subr.mxu0 0.0
      %556 = vmatpush1.msra.mxu0 0.0
      %557 = vmatprep.subr.mxu0 0.0
      %558 = vmatpush1.msra.mxu0 0.0
      %559 = vmatprep.subr.mxu0 0.0
      %560 = vmatpush1.msra.mxu0 0.0
      %561 = vmatprep.subr.mxu0 0.0
      %562 = vmatpush1.msra.mxu0 0.0
      %563 = vmatprep.subr.mxu0 0.0
      %564 = vmatpush1.msra.mxu0 0.0
      %565 = vmatprep.subr.mxu0 0.0
      %566 = vmatpush1.msra.mxu0 0.0
      %567 = vmatprep.mubr.f32.mxu0 0.0
      %568 = vmatmul.mubr.f32.gmra.mrb[0].mxu0 %v501
      %v569 = vpop.f32.mrb[0].mxu0
      %v570 = vadd.f32 0.0, %v569
      %v571 = vpop.f32.mrb[0].mxu0
      %572 = vdwg.mxu0
      %v573 = vld [vmem:[%s492] sm:$0xff]
      %v575 = vsel %vm499, %v573, 0
      %577 = vmatprep.subr.mxu0 0.0
      %578 = vmatpush1.msra.mxu0 %v497
      %579 = vmatprep.subr.mxu0 0.0
      %580 = vmatpush1.msra.mxu0 0.0
      %581 = vmatprep.subr.mxu0 0.0
      %582 = vmatpush1.msra.mxu0 0.0
      %583 = vmatprep.subr.mxu0 0.0
      %584 = vmatpush1.msra.mxu0 0.0
      %585 = vmatprep.subr.mxu0 0.0
      %586 = vmatpush1.msra.mxu0 0.0
      %587 = vmatprep.subr.mxu0 0.0
      %588 = vmatpush1.msra.mxu0 0.0
      %589 = vmatprep.subr.mxu0 0.0
      %590 = vmatpush1.msra.mxu0 0.0
      %591 = vmatprep.subr.mxu0 0.0
      %592 = vmatpush1.msra.mxu0 0.0
      %593 = vmatprep.subr.mxu0 0.0
      %594 = vmatpush1.msra.mxu0 0.0
      %595 = vmatprep.subr.mxu0 0.0
      %596 = vmatpush1.msra.mxu0 0.0
      %597 = vmatprep.subr.mxu0 0.0
      %598 = vmatpush1.msra.mxu0 0.0
      %599 = vmatprep.subr.mxu0 0.0
      %600 = vmatpush1.msra.mxu0 0.0
      %601 = vmatprep.subr.mxu0 0.0
      %602 = vmatpush1.msra.mxu0 0.0
      %603 = vmatprep.subr.mxu0 0.0
      %604 = vmatpush1.msra.mxu0 0.0
      %605 = vmatprep.subr.mxu0 0.0
      %606 = vmatpush1.msra.mxu0 0.0
      %607 = vmatprep.subr.mxu0 0.0
      %608 = vmatpush1.msra.mxu0 0.0
      %609 = vmatprep.subr.mxu0 0.0
      %610 = vmatpush1.msra.mxu0 0.0
      %611 = vmatprep.subr.mxu0 0.0
      %612 = vmatpush1.msra.mxu0 0.0
      %613 = vmatprep.subr.mxu0 0.0
      %614 = vmatpush1.msra.mxu0 0.0
      %615 = vmatprep.subr.mxu0 0.0
      %616 = vmatpush1.msra.mxu0 0.0
      %617 = vmatprep.subr.mxu0 0.0
      %618 = vmatpush1.msra.mxu0 0.0
      %619 = vmatprep.subr.mxu0 0.0
      %620 = vmatpush1.msra.mxu0 0.0
      %621 = vmatprep.subr.mxu0 0.0
      %622 = vmatpush1.msra.mxu0 0.0
      %623 = vmatprep.subr.mxu0 0.0
      %624 = vmatpush1.msra.mxu0 0.0
      %625 = vmatprep.subr.mxu0 0.0
      %626 = vmatpush1.msra.mxu0 0.0
      %627 = vmatprep.subr.mxu0 0.0
      %628 = vmatpush1.msra.mxu0 0.0
      %629 = vmatprep.subr.mxu0 0.0
      %630 = vmatpush1.msra.mxu0 0.0
      %631 = vmatprep.subr.mxu0 0.0
      %632 = vmatpush1.msra.mxu0 0.0
      %633 = vmatprep.subr.mxu0 0.0
      %634 = vmatpush1.msra.mxu0 0.0
      %635 = vmatprep.subr.mxu0 0.0
      %636 = vmatpush1.msra.mxu0 0.0
      %637 = vmatprep.subr.mxu0 0.0
      %638 = vmatpush1.msra.mxu0 0.0
      %639 = vmatprep.subr.mxu0 0.0
      %640 = vmatpush1.msra.mxu0 0.0
      %641 = vmatprep.mubr.f32.mxu0 0.0
      %642 = vmatmul.mubr.f32.gmra.mrb[0].mxu0 %v575
      %v643 = vpop.f32.mrb[0].mxu0
      %v644 = vadd.f32 0.0, %v643
      %v645 = vpop.f32.mrb[0].mxu0
      %646 = vdwg.mxu0
      %v647 = vld [vmem:[%s3] sm:$0xff]
      %v648 = vld [vmem:[%s3 + $0x8] sm:$0xff]
      %v649 = vld [vmem:[%s3 + $0x10] sm:$0xff]
      %v650 = vld [vmem:[%s3 + $0x18] sm:$0xff]
      %v651 = vld [vmem:[%s3 + $0x20] sm:$0xff]
      %v652 = vld [vmem:[%s3 + $0x28] sm:$0xff]
      %v653 = vld [vmem:[%s3 + $0x30] sm:$0xff]
      %v654 = vld [vmem:[%s3 + $0x38] sm:$0xff]
      %v655 = vld [vmem:[%s4] sm:$0x1]
      %v657 = vlaneseq
      %v658 = vshrl.u32 %v657, 7
      %v659 = vsub.s32 0, %v658
      %v660 = vrot.slane %v655, %v659
      %vm662 = vcmask 523264
      %v664 = vsel %vm662, %v570, 0
      %666 = vmatprep.subr.mxu0 0.0
      %667 = vmatpush1.msra.mxu0 %v647
      %668 = vmatprep.subr.mxu0 0.0
      %669 = vmatpush1.msra.mxu0 %v648
      %670 = vmatprep.subr.mxu0 0.0
      %671 = vmatpush1.msra.mxu0 %v649
      %672 = vmatprep.subr.mxu0 0.0
      %673 = vmatpush1.msra.mxu0 %v650
      %674 = vmatprep.subr.mxu0 0.0
      %675 = vmatpush1.msra.mxu0 %v651
      %676 = vmatprep.subr.mxu0 0.0
      %677 = vmatpush1.msra.mxu0 %v652
      %678 = vmatprep.subr.mxu0 0.0
      %679 = vmatpush1.msra.mxu0 %v653
      %680 = vmatprep.subr.mxu0 0.0
      %681 = vmatpush1.msra.mxu0 %v654
      %682 = vmatprep.subr.mxu0 0.0
      %683 = vmatpush1.msra.mxu0 0.0
      %684 = vmatprep.subr.mxu0 0.0
      %685 = vmatpush1.msra.mxu0 0.0
      %686 = vmatprep.subr.mxu0 0.0
      %687 = vmatpush1.msra.mxu0 0.0
      %688 = vmatprep.subr.mxu0 0.0
      %689 = vmatpush1.msra.mxu0 0.0
      %690 = vmatprep.subr.mxu0 0.0
      %691 = vmatpush1.msra.mxu0 0.0
      %692 = vmatprep.subr.mxu0 0.0
      %693 = vmatpush1.msra.mxu0 0.0
      %694 = vmatprep.subr.mxu0 0.0
      %695 = vmatpush1.msra.mxu0 0.0
      %696 = vmatprep.subr.mxu0 0.0
      %697 = vmatpush1.msra.mxu0 0.0
      %698 = vmatprep.subr.mxu0 0.0
      %699 = vmatpush1.msra.mxu0 0.0
      %700 = vmatprep.subr.mxu0 0.0
      %701 = vmatpush1.msra.mxu0 0.0
      %702 = vmatprep.subr.mxu0 0.0
      %703 = vmatpush1.msra.mxu0 0.0
      %704 = vmatprep.subr.mxu0 0.0
      %705 = vmatpush1.msra.mxu0 0.0
      %706 = vmatprep.subr.mxu0 0.0
      %707 = vmatpush1.msra.mxu0 0.0
      %708 = vmatprep.subr.mxu0 0.0
      %709 = vmatpush1.msra.mxu0 0.0
      %710 = vmatprep.subr.mxu0 0.0
      %711 = vmatpush1.msra.mxu0 0.0
      %712 = vmatprep.subr.mxu0 0.0
      %713 = vmatpush1.msra.mxu0 0.0
      %714 = vmatprep.subr.mxu0 0.0
      %715 = vmatpush1.msra.mxu0 0.0
      %716 = vmatprep.subr.mxu0 0.0
      %717 = vmatpush1.msra.mxu0 0.0
      %718 = vmatprep.subr.mxu0 0.0
      %719 = vmatpush1.msra.mxu0 0.0
      %720 = vmatprep.subr.mxu0 0.0
      %721 = vmatpush1.msra.mxu0 0.0
      %722 = vmatprep.subr.mxu0 0.0
      %723 = vmatpush1.msra.mxu0 0.0
      %724 = vmatprep.subr.mxu0 0.0
      %725 = vmatpush1.msra.mxu0 0.0
      %726 = vmatprep.subr.mxu0 0.0
      %727 = vmatpush1.msra.mxu0 0.0
      %728 = vmatprep.subr.mxu0 0.0
      %729 = vmatpush1.msra.mxu0 0.0
      %730 = vmatprep.mubr.f32.mxu0 0.0
      %731 = vmatmul.mubr.f32.gmra.mrb[0].mxu0 %v664
      %v732 = vpop.f32.mrb[0].mxu0
      %v733 = vadd.f32 %v660, %v732
      %v734 = vpop.f32.mrb[0].mxu0
      %735 = vdwg.mxu0
      %v736 = vmax.f32 %v733, 0.0
      %v737 = vld [vmem:[%s5] sm:$0xff]
      %v738 = vld [vmem:[%s5 + $0x8] sm:$0xff]
      %v739 = vld [vmem:[%s5 + $0x10] sm:$0xff]
      %v740 = vld [vmem:[%s5 + $0x18] sm:$0xff]
      %v741 = vld [vmem:[%s5 + $0x20] sm:$0xff]
      %v742 = vld [vmem:[%s5 + $0x28] sm:$0xff]
      %v743 = vld [vmem:[%s5 + $0x30] sm:$0xff]
      %v744 = vld [vmem:[%s5 + $0x38] sm:$0xff]
      %v745 = vld [vmem:[%s6] sm:$0x1]
      %v747 = vlaneseq
      %v748 = vshrl.u32 %v747, 7
      %v749 = vsub.s32 0, %v748
      %v750 = vrot.slane %v745, %v749
      %v753 = vsel %vm662, %v644, 0
      %755 = vmatprep.subr.mxu0 0.0
      %756 = vmatpush1.msra.mxu0 %v737
      %757 = vmatprep.subr.mxu0 0.0
      %758 = vmatpush1.msra.mxu0 %v738
      %759 = vmatprep.subr.mxu0 0.0
      %760 = vmatpush1.msra.mxu0 %v739
      %761 = vmatprep.subr.mxu0 0.0
      %762 = vmatpush1.msra.mxu0 %v740
      %763 = vmatprep.subr.mxu0 0.0
      %764 = vmatpush1.msra.mxu0 %v741
      %765 = vmatprep.subr.mxu0 0.0
      %766 = vmatpush1.msra.mxu0 %v742
      %767 = vmatprep.subr.mxu0 0.0
      %768 = vmatpush1.msra.mxu0 %v743
      %769 = vmatprep.subr.mxu0 0.0
      %770 = vmatpush1.msra.mxu0 %v744
      %771 = vmatprep.subr.mxu0 0.0
      %772 = vmatpush1.msra.mxu0 0.0
      %773 = vmatprep.subr.mxu0 0.0
      %774 = vmatpush1.msra.mxu0 0.0
      %775 = vmatprep.subr.mxu0 0.0
      %776 = vmatpush1.msra.mxu0 0.0
      %777 = vmatprep.subr.mxu0 0.0
      %778 = vmatpush1.msra.mxu0 0.0
      %779 = vmatprep.subr.mxu0 0.0
      %780 = vmatpush1.msra.mxu0 0.0
      %781 = vmatprep.subr.mxu0 0.0
      %782 = vmatpush1.msra.mxu0 0.0
      %783 = vmatprep.subr.mxu0 0.0
      %784 = vmatpush1.msra.mxu0 0.0
      %785 = vmatprep.subr.mxu0 0.0
      %786 = vmatpush1.msra.mxu0 0.0
      %787 = vmatprep.subr.mxu0 0.0
      %788 = vmatpush1.msra.mxu0 0.0
      %789 = vmatprep.subr.mxu0 0.0
      %790 = vmatpush1.msra.mxu0 0.0
      %791 = vmatprep.subr.mxu0 0.0
      %792 = vmatpush1.msra.mxu0 0.0
      %793 = vmatprep.subr.mxu0 0.0
      %794 = vmatpush1.msra.mxu0 0.0
      %795 = vmatprep.subr.mxu0 0.0
      %796 = vmatpush1.msra.mxu0 0.0
      %797 = vmatprep.subr.mxu0 0.0
      %798 = vmatpush1.msra.mxu0 0.0
      %799 = vmatprep.subr.mxu0 0.0
      %800 = vmatpush1.msra.mxu0 0.0
      %801 = vmatprep.subr.mxu0 0.0
      %802 = vmatpush1.msra.mxu0 0.0
      %803 = vmatprep.subr.mxu0 0.0
      %804 = vmatpush1.msra.mxu0 0.0
      %805 = vmatprep.subr.mxu0 0.0
      %806 = vmatpush1.msra.mxu0 0.0
      %807 = vmatprep.subr.mxu0 0.0
      %808 = vmatpush1.msra.mxu0 0.0
      %809 = vmatprep.subr.mxu0 0.0
      %810 = vmatpush1.msra.mxu0 0.0
      %811 = vmatprep.subr.mxu0 0.0
      %812 = vmatpush1.msra.mxu0 0.0
      %813 = vmatprep.subr.mxu0 0.0
      %814 = vmatpush1.msra.mxu0 0.0
      %815 = vmatprep.subr.mxu0 0.0
      %816 = vmatpush1.msra.mxu0 0.0
      %817 = vmatprep.subr.mxu0 0.0
      %818 = vmatpush1.msra.mxu0 0.0
      %819 = vmatprep.mubr.f32.mxu0 0.0
      %820 = vmatmul.mubr.f32.gmra.mrb[0].mxu0 %v753
      %v821 = vpop.f32.mrb[0].mxu0
      %v822 = vadd.f32 %v750, %v821
      %v823 = vpop.f32.mrb[0].mxu0
      %824 = vdwg.mxu0
      %v825 = vmax.f32 %v822, 0.0
      %v826 = vld [vmem:[%s7] sm:$0xff]
      %v827 = vld [vmem:[%s7 + $0x8] sm:$0xff]
      %v828 = vld [vmem:[%s7 + $0x10] sm:$0xff]
      %v829 = vld [vmem:[%s7 + $0x18] sm:$0xff]
      %v830 = vld [vmem:[%s8] sm:$0xff]
      %v831 = vld [vmem:[%s8 + $0x8] sm:$0xff]
      %v832 = vld [vmem:[%s8 + $0x10] sm:$0xff]
      %v833 = vld [vmem:[%s8 + $0x18] sm:$0xff]
      %vm834 = vcmask 261120
      %v836 = vsel %vm834, %v825, 0
      %838 = vmatprep.subr.mxu0 0.0
      %839 = vmatpush1.msra.mxu0 %v830
      %840 = vmatprep.subr.mxu0 0.0
      %841 = vmatpush1.msra.mxu0 %v831
      %842 = vmatprep.subr.mxu0 0.0
      %843 = vmatpush1.msra.mxu0 %v832
      %844 = vmatprep.subr.mxu0 0.0
      %845 = vmatpush1.msra.mxu0 %v833
      %846 = vmatprep.subr.mxu0 0.0
      %847 = vmatpush1.msra.mxu0 0.0
      %848 = vmatprep.subr.mxu0 0.0
      %849 = vmatpush1.msra.mxu0 0.0
      %850 = vmatprep.subr.mxu0 0.0
      %851 = vmatpush1.msra.mxu0 0.0
      %852 = vmatprep.subr.mxu0 0.0
      %853 = vmatpush1.msra.mxu0 0.0
      %854 = vmatprep.subr.mxu0 0.0
      %855 = vmatpush1.msra.mxu0 0.0
      %856 = vmatprep.subr.mxu0 0.0
      %857 = vmatpush1.msra.mxu0 0.0
      %858 = vmatprep.subr.mxu0 0.0
      %859 = vmatpush1.msra.mxu0 0.0
      %860 = vmatprep.subr.mxu0 0.0
      %861 = vmatpush1.msra.mxu0 0.0
      %862 = vmatprep.subr.mxu0 0.0
      %863 = vmatpush1.msra.mxu0 0.0
      %864 = vmatprep.subr.mxu0 0.0
      %865 = vmatpush1.msra.mxu0 0.0
      %866 = vmatprep.subr.mxu0 0.0
      %867 = vmatpush1.msra.mxu0 0.0
      %868 = vmatprep.subr.mxu0 0.0
      %869 = vmatpush1.msra.mxu0 0.0
      %870 = vmatprep.subr.mxu0 0.0
      %871 = vmatpush1.msra.mxu0 0.0
      %872 = vmatprep.subr.mxu0 0.0
      %873 = vmatpush1.msra.mxu0 0.0
      %874 = vmatprep.subr.mxu0 0.0
      %875 = vmatpush1.msra.mxu0 0.0
      %876 = vmatprep.subr.mxu0 0.0
      %877 = vmatpush1.msra.mxu0 0.0
      %878 = vmatprep.subr.mxu0 0.0
      %879 = vmatpush1.msra.mxu0 0.0
      %880 = vmatprep.subr.mxu0 0.0
      %881 = vmatpush1.msra.mxu0 0.0
      %882 = vmatprep.subr.mxu0 0.0
      %883 = vmatpush1.msra.mxu0 0.0
      %884 = vmatprep.subr.mxu0 0.0
      %885 = vmatpush1.msra.mxu0 0.0
      %886 = vmatprep.subr.mxu0 0.0
      %887 = vmatpush1.msra.mxu0 0.0
      %888 = vmatprep.subr.mxu0 0.0
      %889 = vmatpush1.msra.mxu0 0.0
      %890 = vmatprep.subr.mxu0 0.0
      %891 = vmatpush1.msra.mxu0 0.0
      %892 = vmatprep.subr.mxu0 0.0
      %893 = vmatpush1.msra.mxu0 0.0
      %894 = vmatprep.subr.mxu0 0.0
      %895 = vmatpush1.msra.mxu0 0.0
      %896 = vmatprep.subr.mxu0 0.0
      %897 = vmatpush1.msra.mxu0 0.0
      %898 = vmatprep.subr.mxu0 0.0
      %899 = vmatpush1.msra.mxu0 0.0
      %900 = vmatprep.subr.mxu0 0.0
      %901 = vmatpush1.msra.mxu0 0.0
      %902 = vmatprep.mubr.f32.mxu0 0.0
      %903 = vmatmul.mubr.f32.gmra.mrb[0].mxu0 %v836
      %v904 = vpop.f32.mrb[0].mxu0
      %v905 = vadd.f32 0.0, %v904
      %v906 = vpop.f32.mrb[0].mxu0
      %907 = vdwg.mxu0
      %v909 = vsel %vm834, %v736, 0
      %911 = vmatprep.subr.mxu0 0.0
      %912 = vmatpush1.msra.mxu0 %v826
      %913 = vmatprep.subr.mxu0 0.0
      %914 = vmatpush1.msra.mxu0 %v827
      %915 = vmatprep.subr.mxu0 0.0
      %916 = vmatpush1.msra.mxu0 %v828
      %917 = vmatprep.subr.mxu0 0.0
      %918 = vmatpush1.msra.mxu0 %v829
      %919 = vmatprep.subr.mxu0 0.0
      %920 = vmatpush1.msra.mxu0 0.0
      %921 = vmatprep.subr.mxu0 0.0
      %922 = vmatpush1.msra.mxu0 0.0
      %923 = vmatprep.subr.mxu0 0.0
      %924 = vmatpush1.msra.mxu0 0.0
      %925 = vmatprep.subr.mxu0 0.0
      %926 = vmatpush1.msra.mxu0 0.0
      %927 = vmatprep.subr.mxu0 0.0
      %928 = vmatpush1.msra.mxu0 0.0
      %929 = vmatprep.subr.mxu0 0.0
      %930 = vmatpush1.msra.mxu0 0.0
      %931 = vmatprep.subr.mxu0 0.0
      %932 = vmatpush1.msra.mxu0 0.0
      %933 = vmatprep.subr.mxu0 0.0
      %934 = vmatpush1.msra.mxu0 0.0
      %935 = vmatprep.subr.mxu0 0.0
      %936 = vmatpush1.msra.mxu0 0.0
      %937 = vmatprep.subr.mxu0 0.0
      %938 = vmatpush1.msra.mxu0 0.0
      %939 = vmatprep.subr.mxu0 0.0
      %940 = vmatpush1.msra.mxu0 0.0
      %941 = vmatprep.subr.mxu0 0.0
      %942 = vmatpush1.msra.mxu0 0.0
      %943 = vmatprep.subr.mxu0 0.0
      %944 = vmatpush1.msra.mxu0 0.0
      %945 = vmatprep.subr.mxu0 0.0
      %946 = vmatpush1.msra.mxu0 0.0
      %947 = vmatprep.subr.mxu0 0.0
      %948 = vmatpush1.msra.mxu0 0.0
      %949 = vmatprep.subr.mxu0 0.0
      %950 = vmatpush1.msra.mxu0 0.0
      %951 = vmatprep.subr.mxu0 0.0
      %952 = vmatpush1.msra.mxu0 0.0
      %953 = vmatprep.subr.mxu0 0.0
      %954 = vmatpush1.msra.mxu0 0.0
      %955 = vmatprep.subr.mxu0 0.0
      %956 = vmatpush1.msra.mxu0 0.0
      %957 = vmatprep.subr.mxu0 0.0
      %958 = vmatpush1.msra.mxu0 0.0
      %959 = vmatprep.subr.mxu0 0.0
      %960 = vmatpush1.msra.mxu0 0.0
      %961 = vmatprep.subr.mxu0 0.0
      %962 = vmatpush1.msra.mxu0 0.0
      %963 = vmatprep.subr.mxu0 0.0
      %964 = vmatpush1.msra.mxu0 0.0
      %965 = vmatprep.subr.mxu0 0.0
      %966 = vmatpush1.msra.mxu0 0.0
      %967 = vmatprep.subr.mxu0 0.0
      %968 = vmatpush1.msra.mxu0 0.0
      %969 = vmatprep.subr.mxu0 0.0
      %970 = vmatpush1.msra.mxu0 0.0
      %971 = vmatprep.subr.mxu0 0.0
      %972 = vmatpush1.msra.mxu0 0.0
      %973 = vmatprep.subr.mxu0 0.0
      %974 = vmatpush1.msra.mxu0 0.0
      %975 = vmatprep.mubr.f32.mxu0 0.0
      %976 = vmatmul.mubr.f32.gmra.mrb[0].mxu0 %v909
      %v977 = vpop.f32.mrb[0].mxu0
      %v978 = vadd.f32 %v905, %v977
      %v979 = vpop.f32.mrb[0].mxu0
      %980 = vdwg.mxu0
      %v981 = vld [vmem:[%s9] sm:$0x1]
      %v983 = vlaneseq
      %v984 = vshrl.u32 %v983, 7
      %v985 = vsub.s32 0, %v984
      %v986 = vrot.slane %v981, %v985
      %v988 = vadd.f32 %v978, %v986
      %v989 = vmax.f32 %v988, 0.0
      %v990 = vld [vmem:[%s10] sm:$0xff]
      %v991 = vld [vmem:[%s10 + $0x8] sm:$0xff]
      %v992 = vld [vmem:[%s10 + $0x10] sm:$0xff]
      %v993 = vld [vmem:[%s10 + $0x18] sm:$0xff]
      %v994 = vld [vmem:[%s11] sm:$0x1]
      %v996 = vlaneseq
      %v997 = vshrl.u32 %v996, 7
      %v998 = vsub.s32 0, %v997
      %v999 = vrot.slane %v994, %v998
      %v1002 = vsel %vm834, %v989, 0
      %1004 = vmatprep.subr.mxu0 0.0
      %1005 = vmatpush1.msra.mxu0 %v990
      %1006 = vmatprep.subr.mxu0 0.0
      %1007 = vmatpush1.msra.mxu0 %v991
      %1008 = vmatprep.subr.mxu0 0.0
      %1009 = vmatpush1.msra.mxu0 %v992
      %1010 = vmatprep.subr.mxu0 0.0
      %1011 = vmatpush1.msra.mxu0 %v993
      %1012 = vmatprep.subr.mxu0 0.0
      %1013 = vmatpush1.msra.mxu0 0.0
      %1014 = vmatprep.subr.mxu0 0.0
      %1015 = vmatpush1.msra.mxu0 0.0
      %1016 = vmatprep.subr.mxu0 0.0
      %1017 = vmatpush1.msra.mxu0 0.0
      %1018 = vmatprep.subr.mxu0 0.0
      %1019 = vmatpush1.msra.mxu0 0.0
      %1020 = vmatprep.subr.mxu0 0.0
      %1021 = vmatpush1.msra.mxu0 0.0
      %1022 = vmatprep.subr.mxu0 0.0
      %1023 = vmatpush1.msra.mxu0 0.0
      %1024 = vmatprep.subr.mxu0 0.0
      %1025 = vmatpush1.msra.mxu0 0.0
      %1026 = vmatprep.subr.mxu0 0.0
      %1027 = vmatpush1.msra.mxu0 0.0
      %1028 = vmatprep.subr.mxu0 0.0
      %1029 = vmatpush1.msra.mxu0 0.0
      %1030 = vmatprep.subr.mxu0 0.0
      %1031 = vmatpush1.msra.mxu0 0.0
      %1032 = vmatprep.subr.mxu0 0.0
      %1033 = vmatpush1.msra.mxu0 0.0
      %1034 = vmatprep.subr.mxu0 0.0
      %1035 = vmatpush1.msra.mxu0 0.0
      %1036 = vmatprep.subr.mxu0 0.0
      %1037 = vmatpush1.msra.mxu0 0.0
      %1038 = vmatprep.subr.mxu0 0.0
      %1039 = vmatpush1.msra.mxu0 0.0
      %1040 = vmatprep.subr.mxu0 0.0
      %1041 = vmatpush1.msra.mxu0 0.0
      %1042 = vmatprep.subr.mxu0 0.0
      %1043 = vmatpush1.msra.mxu0 0.0
      %1044 = vmatprep.subr.mxu0 0.0
      %1045 = vmatpush1.msra.mxu0 0.0
      %1046 = vmatprep.subr.mxu0 0.0
      %1047 = vmatpush1.msra.mxu0 0.0
      %1048 = vmatprep.subr.mxu0 0.0
      %1049 = vmatpush1.msra.mxu0 0.0
      %1050 = vmatprep.subr.mxu0 0.0
      %1051 = vmatpush1.msra.mxu0 0.0
      %1052 = vmatprep.subr.mxu0 0.0
      %1053 = vmatpush1.msra.mxu0 0.0
      %1054 = vmatprep.subr.mxu0 0.0
      %1055 = vmatpush1.msra.mxu0 0.0
      %1056 = vmatprep.subr.mxu0 0.0
      %1057 = vmatpush1.msra.mxu0 0.0
      %1058 = vmatprep.subr.mxu0 0.0
      %1059 = vmatpush1.msra.mxu0 0.0
      %1060 = vmatprep.subr.mxu0 0.0
      %1061 = vmatpush1.msra.mxu0 0.0
      %1062 = vmatprep.subr.mxu0 0.0
      %1063 = vmatpush1.msra.mxu0 0.0
      %1064 = vmatprep.subr.mxu0 0.0
      %1065 = vmatpush1.msra.mxu0 0.0
      %1066 = vmatprep.subr.mxu0 0.0
      %1067 = vmatpush1.msra.mxu0 0.0
      %1068 = vmatprep.mubr.f32.mxu0 0.0
      %1069 = vmatmul.mubr.f32.gmra.mrb[0].mxu0 %v1002
      %v1070 = vpop.f32.mrb[0].mxu0
      %v1071 = vadd.f32 %v999, %v1070
      %v1072 = vpop.f32.mrb[0].mxu0
      %1073 = vdwg.mxu0
      %v1074 = vmax.f32 %v1071, 0.0
      %v1075 = vld [vmem:[%s12] sm:$0xff]
      %v1076 = vld [vmem:[%s12 + $0x8] sm:$0xff]
      %v1077 = vld [vmem:[%s12 + $0x10] sm:$0xff]
      %v1078 = vld [vmem:[%s12 + $0x18] sm:$0xff]
      %v1079 = vld [vmem:[%s13] sm:$0x1]
      %v1081 = vlaneseq
      %v1082 = vshrl.u32 %v1081, 7
      %v1083 = vsub.s32 0, %v1082
      %v1084 = vrot.slane %v1079, %v1083
      %v1087 = vsel %vm834, %v1074, 0
      %1089 = vmatprep.subr.mxu0 0.0
      %1090 = vmatpush1.msra.mxu0 %v1075
      %1091 = vmatprep.subr.mxu0 0.0
      %1092 = vmatpush1.msra.mxu0 %v1076
      %1093 = vmatprep.subr.mxu0 0.0
      %1094 = vmatpush1.msra.mxu0 %v1077
      %1095 = vmatprep.subr.mxu0 0.0
      %1096 = vmatpush1.msra.mxu0 %v1078
      %1097 = vmatprep.subr.mxu0 0.0
      %1098 = vmatpush1.msra.mxu0 0.0
      %1099 = vmatprep.subr.mxu0 0.0
      %1100 = vmatpush1.msra.mxu0 0.0
      %1101 = vmatprep.subr.mxu0 0.0
      %1102 = vmatpush1.msra.mxu0 0.0
      %1103 = vmatprep.subr.mxu0 0.0
      %1104 = vmatpush1.msra.mxu0 0.0
      %1105 = vmatprep.subr.mxu0 0.0
      %1106 = vmatpush1.msra.mxu0 0.0
      %1107 = vmatprep.subr.mxu0 0.0
      %1108 = vmatpush1.msra.mxu0 0.0
      %1109 = vmatprep.subr.mxu0 0.0
      %1110 = vmatpush1.msra.mxu0 0.0
      %1111 = vmatprep.subr.mxu0 0.0
      %1112 = vmatpush1.msra.mxu0 0.0
      %1113 = vmatprep.subr.mxu0 0.0
      %1114 = vmatpush1.msra.mxu0 0.0
      %1115 = vmatprep.subr.mxu0 0.0
      %1116 = vmatpush1.msra.mxu0 0.0
      %1117 = vmatprep.subr.mxu0 0.0
      %1118 = vmatpush1.msra.mxu0 0.0
      %1119 = vmatprep.subr.mxu0 0.0
      %1120 = vmatpush1.msra.mxu0 0.0
      %1121 = vmatprep.subr.mxu0 0.0
      %1122 = vmatpush1.msra.mxu0 0.0
      %1123 = vmatprep.subr.mxu0 0.0
      %1124 = vmatpush1.msra.mxu0 0.0
      %1125 = vmatprep.subr.mxu0 0.0
      %1126 = vmatpush1.msra.mxu0 0.0
      %1127 = vmatprep.subr.mxu0 0.0
      %1128 = vmatpush1.msra.mxu0 0.0
      %1129 = vmatprep.subr.mxu0 0.0
      %1130 = vmatpush1.msra.mxu0 0.0
      %1131 = vmatprep.subr.mxu0 0.0
      %1132 = vmatpush1.msra.mxu0 0.0
      %1133 = vmatprep.subr.mxu0 0.0
      %1134 = vmatpush1.msra.mxu0 0.0
      %1135 = vmatprep.subr.mxu0 0.0
      %1136 = vmatpush1.msra.mxu0 0.0
      %1137 = vmatprep.subr.mxu0 0.0
      %1138 = vmatpush1.msra.mxu0 0.0
      %1139 = vmatprep.subr.mxu0 0.0
      %1140 = vmatpush1.msra.mxu0 0.0
      %1141 = vmatprep.subr.mxu0 0.0
      %1142 = vmatpush1.msra.mxu0 0.0
      %1143 = vmatprep.subr.mxu0 0.0
      %1144 = vmatpush1.msra.mxu0 0.0
      %1145 = vmatprep.subr.mxu0 0.0
      %1146 = vmatpush1.msra.mxu0 0.0
      %1147 = vmatprep.subr.mxu0 0.0
      %1148 = vmatpush1.msra.mxu0 0.0
      %1149 = vmatprep.subr.mxu0 0.0
      %1150 = vmatpush1.msra.mxu0 0.0
      %1151 = vmatprep.subr.mxu0 0.0
      %1152 = vmatpush1.msra.mxu0 0.0
      %1153 = vmatprep.mubr.f32.mxu0 0.0
      %1154 = vmatmul.mubr.f32.gmra.mrb[0].mxu0 %v1087
      %v1155 = vpop.f32.mrb[0].mxu0
      %v1156 = vadd.f32 %v1084, %v1155
      %v1157 = vpop.f32.mrb[0].mxu0
      %1158 = vdwg.mxu0
      %1159 = vmax.xlane.f32.xlu0 %v1156
      %v1160 = vpop.xlane.xlu0 %1159
      %v1161 = vsub.f32 %v1156, %v1160
      %v1162 = vmul.f32 %v1161, 1.442695
      %v1163 = vpow.pop %v1162
      %1164 = vadd.xlane.f32.xlu0 %v1163
      %v1165 = vpop.xlane.xlu0 %1164
      %v1166 = vlog2.pop %v1165
      %v1167 = vmul.f32 %v1166, 0.6931472
      %v1168 = vadd.f32 %v1160, %v1167
      %v1169 = vsub.f32 %v1156, %v1168
      %1170 = vst [vmem:[%s496] sm:$0xff] %v1169
      %p1171 = scmp.lt.s32.totalorder %s25, 1
      %s1172 = scalar_select %p1171, %s25, 1
      %s1173 = smul.addr %s1172, 8
      %s1174 = scalar_lea.vmem %s14, %s1173
      // Predicated region
      $region77: #{model_graphrel_forward.7} parent=75 // pred_check
        %p1175 = pneg %p352
      $region78: #{model_graphrel_forward.7} parent=75 // pred_check_branch
        %1177 = sbr.rel (%p1175) target = $region80
      $region79: #{model_graphrel_forward.7} parent=75 // pred_region
        _
      $region80: #{model_graphrel_forward.7} parent=75 // pred_fallthru
        _
    $region76: #{model_graphrel_forward.7} parent=5 // pred_fallthru
      _
    %p1178 = scmp.le.s32.totalorder 2, %s20
    // Predicated region
    $region81: #{model_graphrel_forward.7} parent=5 // pred_check
      %p1179 = pneg %p1178
    $region82: #{model_graphrel_forward.7} parent=5 // pred_check_branch
      %1181 = sbr.rel (%p1179) target = $region84
    $region83: #{model_graphrel_forward.7} parent=5 // pred_region
      %s1182 = ssub.s32 %s20, 2
      // Predicated region
      $region85: #{model_graphrel_forward.7} parent=83 // pred_check
        %p1183 = pneg %p358
      $region86: #{model_graphrel_forward.7} parent=83 // pred_check_branch
        %1185 = sbr.rel (%p1183) target = $region88
      $region87: #{model_graphrel_forward.7} parent=83 // pred_region
        %p1186 = scmp.lt.s32.totalorder %s26, 1
        %s1187 = scalar_select %p1186, %s26, 1
        %s1188 = smul.addr %s1187, 8
        %s1189 = scalar_lea.vmem %s14, %s1188
      $region88: #{model_graphrel_forward.7} parent=83 // pred_fallthru
        _
    $region84: #{model_graphrel_forward.7} parent=5 // pred_fallthru
      _
  $region6: #{model_graphrel_forward.7} parent=0 // loop_footer
    %s24 = sadd.s32 1, %s20
  $region7: #{model_graphrel_forward.7} parent=0 // loop_footer_branch
    %19 = sbr.rel target = $region3
  $region8: #{model_graphrel_forward.7} parent=0 // loop_exit
    _

// kernel: model_graphrel_forward.6
$region0: #{model_graphrel_forward.6}
  #allocation0 [shape = 'u32[]', space=smem, size = 0x4, offset = 0x4, fixed_abs, tag = 'smem constant byte address 0x4 - core index']
  #allocation1 [shape = 'u32[144,128]{1,0:T(1,128)}', space=vmem, size = 0x12000, scoped, tag = 'internal scratch']
  %s0 = inlined_call_operand.vmem [shape: f32[2,8,64], index: 0, kind: input, shape index: {}]
  %s1 = inlined_call_operand.vmem [shape: f32[2,8,8], index: 1, kind: input, shape index: {}]
  %s2 = inlined_call_operand.vmem [shape: f32[2,8,8], index: 2, kind: input, shape index: {}]
  %s3 = inlined_call_operand.vmem [shape: f32[2,64,64], index: 3, kind: input, shape index: {}]
  %s4 = inlined_call_operand.vmem [shape: f32[2,1,64], index: 4, kind: input, shape index: {}]
  %s5 = inlined_call_operand.vmem [shape: f32[2,64,64], index: 5, kind: input, shape index: {}]
  %s6 = inlined_call_operand.vmem [shape: f32[2,1,64], index: 6, kind: input, shape index: {}]
  %s7 = inlined_call_operand.vmem [shape: f32[2,8,64], index: 7, kind: output, shape index: {}]
  %s8 = sld [smem:[#allocation0]]
  $region61: #{model_graphrel_forward.6} parent=0
    _
  %s10 = ssub.s32 1, %s8
  %s11 = scalar_select 0, %s10, %s8
  loop: start=0, step=1, limit=4
  $region2: #{model_graphrel_forward.6} parent=0 // loop_pre_header
    _
  $region3: #{model_graphrel_forward.6} parent=0 // loop_header
    %s13 = sphi 0, %s17
    %p14 = scmp.ge.s32.totalorder %s13, 4
    %s23 = sphi 0, %s25
    %s26 = sphi 0, %s23
    %s27 = sphi 0, %s26
    %s43 = sphi 0, %s27
    %s49 = sphi 0, %s51
    %s52 = sphi 0, %s49
    %s53 = sphi 0, %s52
    %s69 = sphi 0, %s53
    %s75 = sphi 0, %s77
    %s78 = sphi 0, %s75
    %s79 = sphi 0, %s78
    %s95 = sphi 0, %s79
    %s99 = sphi 0, %s99
    %s101 = sphi 0, %s99
    %s102 = sphi 0, %s101
    %s116 = sphi 0, %s102
    %s120 = sphi 0, %s120
    %s122 = sphi 0, %s120
    %s123 = sphi 0, %s122
    %s137 = sphi 0, %s123
    %s141 = sphi 0, %s141
    %s143 = sphi 0, %s141
    %s144 = sphi 0, %s143
    %s158 = sphi 0, %s144
    %s162 = sphi 0, %s162
    %s164 = sphi 0, %s162
    %s165 = sphi 0, %s164
    %s179 = sphi 0, %s165
    %s185 = sphi 0, %s187
    %s188 = sphi 0, %s185
    %s189 = sphi 0, %s188
    %s205 = sphi 0, %s189
  $region4: #{model_graphrel_forward.6} parent=0 // loop_header_branch
    %16 = sbr.rel (%p14) target = $region8
  $region5: #{model_graphrel_forward.6} parent=0 // loop_body
    %s18 = ssub.s32 %s13, 1
    %s19 = ssub.s32 %s13, 2
    %s20 = sadd.s32 %s13, 1
    %s21 = ssub.s32 %s13, %s20
    %p22 = scmp.eq.s32.totalorder %s21, 0
    %s24 = sadd.s32 %s23, 1
    %s25 = scalar_select %p22, %s23, %s24
    %p28 = pneg %p22
    %p29 = scmp.eq.s32.totalorder %s13, 1
    %p30 = por %p28, %p29
    %p31 = scmp.ne.s32.totalorder %s23, %s26
    %p32 = scmp.eq.s32.totalorder %s13, 0
    %p33 = por %p31, %p32
    %p34 = scmp.ne.s32.totalorder %s23, %s26
    %p35 = scmp.eq.s32.totalorder %s18, 1
    %p36 = por %p34, %p35
    %p37 = scmp.ne.s32.totalorder %s26, %s27
    %p38 = scmp.eq.s32.totalorder %s18, 0
    %p39 = por %p37, %p38
    %p40 = scmp.ne.s32.totalorder %s26, %s27
    %p41 = scmp.eq.s32.totalorder %s19, 1
    %p42 = por %p40, %p41
    %p44 = scmp.ne.s32.totalorder %s27, %s43
    %p45 = scmp.eq.s32.totalorder %s19, 0
    %p46 = por %p44, %p45
    %s47 = ssub.s32 %s13, %s20
    %p48 = scmp.eq.s32.totalorder %s47, 0
    %s50 = sadd.s32 %s49, 1
    %s51 = scalar_select %p48, %s49, %s50
    %p54 = pneg %p48
    %p55 = scmp.eq.s32.totalorder %s13, 1
    %p56 = por %p54, %p55
    %p57 = scmp.ne.s32.totalorder %s49, %s52
    %p58 = scmp.eq.s32.totalorder %s13, 0
    %p59 = por %p57, %p58
    %p60 = scmp.ne.s32.totalorder %s49, %s52
    %p61 = scmp.eq.s32.totalorder %s18, 1
    %p62 = por %p60, %p61
    %p63 = scmp.ne.s32.totalorder %s52, %s53
    %p64 = scmp.eq.s32.totalorder %s18, 0
    %p65 = por %p63, %p64
    %p66 = scmp.ne.s32.totalorder %s52, %s53
    %p67 = scmp.eq.s32.totalorder %s19, 1
    %p68 = por %p66, %p67
    %p70 = scmp.ne.s32.totalorder %s53, %s69
    %p71 = scmp.eq.s32.totalorder %s19, 0
    %p72 = por %p70, %p71
    %s73 = ssub.s32 %s13, %s20
    %p74 = scmp.eq.s32.totalorder %s73, 0
    %s76 = sadd.s32 %s75, 1
    %s77 = scalar_select %p74, %s75, %s76
    %p80 = pneg %p74
    %p81 = scmp.eq.s32.totalorder %s13, 1
    %p82 = por %p80, %p81
    %p83 = scmp.ne.s32.totalorder %s75, %s78
    %p84 = scmp.eq.s32.totalorder %s13, 0
    %p85 = por %p83, %p84
    %p86 = scmp.ne.s32.totalorder %s75, %s78
    %p87 = scmp.eq.s32.totalorder %s18, 1
    %p88 = por %p86, %p87
    %p89 = scmp.ne.s32.totalorder %s78, %s79
    %p90 = scmp.eq.s32.totalorder %s18, 0
    %p91 = por %p89, %p90
    %p92 = scmp.ne.s32.totalorder %s78, %s79
    %p93 = scmp.eq.s32.totalorder %s19, 1
    %p94 = por %p92, %p93
    %p96 = scmp.ne.s32.totalorder %s79, %s95
    %p97 = scmp.eq.s32.totalorder %s19, 0
    %p98 = por %p96, %p97
    %s100 = sadd.s32 %s99, 1
    %p103 = scmp.eq.s32.totalorder %s13, 1
    %p104 = scmp.ne.s32.totalorder %s99, %s101
    %p105 = scmp.eq.s32.totalorder %s13, 0
    %p106 = por %p104, %p105
    %p107 = scmp.ne.s32.totalorder %s99, %s101
    %p108 = scmp.eq.s32.totalorder %s18, 1
    %p109 = por %p107, %p108
    %p110 = scmp.ne.s32.totalorder %s101, %s102
    %p111 = scmp.eq.s32.totalorder %s18, 0
    %p112 = por %p110, %p111
    %p113 = scmp.ne.s32.totalorder %s101, %s102
    %p114 = scmp.eq.s32.totalorder %s19, 1
    %p115 = por %p113, %p114
    %p117 = scmp.ne.s32.totalorder %s102, %s116
    %p118 = scmp.eq.s32.totalorder %s19, 0
    %p119 = por %p117, %p118
    %s121 = sadd.s32 %s120, 1
    %p124 = scmp.eq.s32.totalorder %s13, 1
    %p125 = scmp.ne.s32.totalorder %s120, %s122
    %p126 = scmp.eq.s32.totalorder %s13, 0
    %p127 = por %p125, %p126
    %p128 = scmp.ne.s32.totalorder %s120, %s122
    %p129 = scmp.eq.s32.totalorder %s18, 1
    %p130 = por %p128, %p129
    %p131 = scmp.ne.s32.totalorder %s122, %s123
    %p132 = scmp.eq.s32.totalorder %s18, 0
    %p133 = por %p131, %p132
    %p134 = scmp.ne.s32.totalorder %s122, %s123
    %p135 = scmp.eq.s32.totalorder %s19, 1
    %p136 = por %p134, %p135
    %p138 = scmp.ne.s32.totalorder %s123, %s137
    %p139 = scmp.eq.s32.totalorder %s19, 0
    %p140 = por %p138, %p139
    %s142 = sadd.s32 %s141, 1
    %p145 = scmp.eq.s32.totalorder %s13, 1
    %p146 = scmp.ne.s32.totalorder %s141, %s143
    %p147 = scmp.eq.s32.totalorder %s13, 0
    %p148 = por %p146, %p147
    %p149 = scmp.ne.s32.totalorder %s141, %s143
    %p150 = scmp.eq.s32.totalorder %s18, 1
    %p151 = por %p149, %p150
    %p152 = scmp.ne.s32.totalorder %s143, %s144
    %p153 = scmp.eq.s32.totalorder %s18, 0
    %p154 = por %p152, %p153
    %p155 = scmp.ne.s32.totalorder %s143, %s144
    %p156 = scmp.eq.s32.totalorder %s19, 1
    %p157 = por %p155, %p156
    %p159 = scmp.ne.s32.totalorder %s144, %s158
    %p160 = scmp.eq.s32.totalorder %s19, 0
    %p161 = por %p159, %p160
    %s163 = sadd.s32 %s162, 1
    %p166 = scmp.eq.s32.totalorder %s13, 1
    %p167 = scmp.ne.s32.totalorder %s162, %s164
    %p168 = scmp.eq.s32.totalorder %s13, 0
    %p169 = por %p167, %p168
    %p170 = scmp.ne.s32.totalorder %s162, %s164
    %p171 = scmp.eq.s32.totalorder %s18, 1
    %p172 = por %p170, %p171
    %p173 = scmp.ne.s32.totalorder %s164, %s165
    %p174 = scmp.eq.s32.totalorder %s18, 0
    %p175 = por %p173, %p174
    %p176 = scmp.ne.s32.totalorder %s164, %s165
    %p177 = scmp.eq.s32.totalorder %s19, 1
    %p178 = por %p176, %p177
    %p180 = scmp.ne.s32.totalorder %s165, %s179
    %p181 = scmp.eq.s32.totalorder %s19, 0
    %p182 = por %p180, %p181
    %s183 = ssub.s32 %s13, %s20
    %p184 = scmp.eq.s32.totalorder %s183, 0
    %s186 = sadd.s32 %s185, 1
    %s187 = scalar_select %p184, %s185, %s186
    %p190 = pneg %p184
    %p191 = scmp.eq.s32.totalorder %s13, 1
    %p192 = por %p190, %p191
    %p193 = scmp.ne.s32.totalorder %s185, %s188
    %p194 = scmp.eq.s32.totalorder %s13, 0
    %p195 = por %p193, %p194
    %p196 = scmp.ne.s32.totalorder %s185, %s188
    %p197 = scmp.eq.s32.totalorder %s18, 1
    %p198 = por %p196, %p197
    %p199 = scmp.ne.s32.totalorder %s188, %s189
    %p200 = scmp.eq.s32.totalorder %s18, 0
    %p201 = por %p199, %p200
    %p202 = scmp.ne.s32.totalorder %s188, %s189
    %p203 = scmp.eq.s32.totalorder %s19, 1
    %p204 = por %p202, %p203
    %p206 = scmp.ne.s32.totalorder %s189, %s205
    %p207 = scmp.eq.s32.totalorder %s19, 0
    %p208 = por %p206, %p207
    %p209 = scmp.le.s32.totalorder 1, %s13
    %p210 = scmp.lt.s32.totalorder %s13, 3
    %p211 = pnand %p209, %p210
    %p212 = pneg %p211
    // Predicated region
    $region9: #{model_graphrel_forward.6} parent=5 // pred_check
      _
    $region10: #{model_graphrel_forward.6} parent=5 // pred_check_branch
      %214 = sbr.rel (%p211) target = $region12
    $region11: #{model_graphrel_forward.6} parent=5 // pred_region
      %s215 = ssub.s32 %s13, 1
      // Predicated region
      $region13: #{model_graphrel_forward.6} parent=11 // pred_check
        %p216 = pneg %p112
      $region14: #{model_graphrel_forward.6} parent=11 // pred_check_branch
        %218 = sbr.rel (%p216) target = $region16
      $region15: #{model_graphrel_forward.6} parent=11 // pred_region
        _
      $region16: #{model_graphrel_forward.6} parent=11 // pred_fallthru
        _
      // Predicated region
      $region17: #{model_graphrel_forward.6} parent=11 // pred_check
        %p219 = pneg %p133
      $region18: #{model_graphrel_forward.6} parent=11 // pred_check_branch
        %221 = sbr.rel (%p219) target = $region20
      $region19: #{model_graphrel_forward.6} parent=11 // pred_region
        _
      $region20: #{model_graphrel_forward.6} parent=11 // pred_fallthru
        _
      // Predicated region
      $region21: #{model_graphrel_forward.6} parent=11 // pred_check
        %p222 = pneg %p154
      $region22: #{model_graphrel_forward.6} parent=11 // pred_check_branch
        %224 = sbr.rel (%p222) target = $region24
      $region23: #{model_graphrel_forward.6} parent=11 // pred_region
        _
      $region24: #{model_graphrel_forward.6} parent=11 // pred_fallthru
        _
      // Predicated region
      $region25: #{model_graphrel_forward.6} parent=11 // pred_check
        %p225 = pneg %p175
      $region26: #{model_graphrel_forward.6} parent=11 // pred_check_branch
        %227 = sbr.rel (%p225) target = $region28
      $region27: #{model_graphrel_forward.6} parent=11 // pred_region
        _
      $region28: #{model_graphrel_forward.6} parent=11 // pred_fallthru
        _
    $region12: #{model_graphrel_forward.6} parent=5 // pred_fallthru
      _
    %p228 = scmp.lt.s32.totalorder %s13, 2
    // Predicated region
    $region29: #{model_graphrel_forward.6} parent=5 // pred_check
      %p229 = pneg %p228
    $region30: #{model_graphrel_forward.6} parent=5 // pred_check_branch
      %231 = sbr.rel (%p229) target = $region32
    $region31: #{model_graphrel_forward.6} parent=5 // pred_region
      // Predicated region
      $region33: #{model_graphrel_forward.6} parent=31 // pred_check
        %p232 = pneg %p33
      $region34: #{model_graphrel_forward.6} parent=31 // pred_check_branch
        %234 = sbr.rel (%p232) target = $region36
      $region35: #{model_graphrel_forward.6} parent=31 // pred_region
        %p235 = scmp.lt.s32.totalorder %s13, 1
        %s236 = scalar_select %p235, %s13, 1
        %s237 = smul.addr %s236, 8
        %s238 = scalar_lea.vmem %s0, %s237
      $region36: #{model_graphrel_forward.6} parent=31 // pred_fallthru
        _
      // Predicated region
      $region37: #{model_graphrel_forward.6} parent=31 // pred_check
        %p239 = pneg %p59
      $region38: #{model_graphrel_forward.6} parent=31 // pred_check_branch
        %241 = sbr.rel (%p239) target = $region40
      $region39: #{model_graphrel_forward.6} parent=31 // pred_region
        %p242 = scmp.lt.s32.totalorder %s13, 1
        %s243 = scalar_select %p242, %s13, 1
        %s244 = smul.addr %s243, 8
        %s245 = scalar_lea.vmem %s1, %s244
      $region40: #{model_graphrel_forward.6} parent=31 // pred_fallthru
        _
      // Predicated region
      $region41: #{model_graphrel_forward.6} parent=31 // pred_check
        %p246 = pneg %p85
      $region42: #{model_graphrel_forward.6} parent=31 // pred_check_branch
        %248 = sbr.rel (%p246) target = $region44
      $region43: #{model_graphrel_forward.6} parent=31 // pred_region
        %p249 = scmp.lt.s32.totalorder %s13, 1
        %s250 = scalar_select %p249, %s13, 1
        %s251 = smul.addr %s250, 8
        %s252 = scalar_lea.vmem %s2, %s251
      $region44: #{model_graphrel_forward.6} parent=31 // pred_fallthru
        _
    $region32: #{model_graphrel_forward.6} parent=5 // pred_fallthru
      _
    %p253 = scmp.le.s32.totalorder 1, %s13
    %p254 = scmp.lt.s32.totalorder %s13, 3
    %p255 = pnand %p253, %p254
    %p256 = pneg %p255
    // Predicated region
    $region45: #{model_graphrel_forward.6} parent=5 // pred_check
      _
    $region46: #{model_graphrel_forward.6} parent=5 // pred_check_branch
      %258 = sbr.rel (%p255) target = $region48
    $region47: #{model_graphrel_forward.6} parent=5 // pred_region
      %s259 = ssub.s32 %s13, 1
      %p260 = scmp.lt.s32.totalorder %s18, 1
      %s261 = scalar_select %p260, %s18, 1
      %s262 = smul.addr %s261, 8
      %s263 = scalar_lea.vmem %s0, %s262
      %p264 = pneg %p39
      %p265 = pneg %p36
      %p266 = scmp.lt.s32.totalorder %s18, 1
      %s267 = scalar_select %p266, %s18, 1
      %s268 = smul.addr %s267, 8
      %s269 = scalar_lea.vmem %s1, %s268
      %p270 = pneg %p65
      %p271 = pneg %p62
      %p272 = scmp.lt.s32.totalorder %s18, 1
      %s273 = scalar_select %p272, %s18, 1
      %s274 = smul.addr %s273, 8
      %s275 = scalar_lea.vmem %s2, %s274
      %p276 = pneg %p91
      %p277 = pneg %p88
      %p278 = pneg %p112
      %p279 = pneg %p109
      %p280 = pneg %p133
      %p281 = pneg %p130
      %p282 = pneg %p154
      %p283 = pneg %p151
      %p284 = pneg %p175
      %p285 = pneg %p172
      %p286 = pneg %p201
      %p287 = pneg %p198
      %p288 = scmp.lt.s32.totalorder %s18, 1
      %s289 = scalar_select %p288, %s18, 1
      %s290 = smul.addr %s289, 8
      %s291 = scalar_lea.vmem %s7, %s290
      %p292 = scmp.lt.s32.totalorder %s18, 1
      %s293 = scalar_select %p292, %s18, 1
      %s294 = smul.addr %s293, 8
      %s295 = scalar_lea.vmem %s0, %s294
      %p296 = scmp.lt.s32.totalorder %s18, 1
      %s297 = scalar_select %p296, %s18, 1
      %s298 = smul.addr %s297, 8
      %s299 = scalar_lea.vmem %s1, %s298
      %p300 = scmp.lt.s32.totalorder %s18, 1
      %s301 = scalar_select %p300, %s18, 1
      %s302 = smul.addr %s301, 8
      %s303 = scalar_lea.vmem %s2, %s302
      %p304 = scmp.lt.s32.totalorder %s18, 1
      %s305 = scalar_select %p304, %s18, 1
      %s306 = smul.addr %s305, 8
      %s307 = scalar_lea.vmem %s7, %s306
      %v308 = vld [vmem:[%s295] sm:$0xff]
      %v309 = vld [vmem:[%s299] sm:$0xff]
      %v310 = vld [vmem:[%s303] sm:$0xff]
      %v311 = vld [vmem:[%s3] sm:$0xff]
      %v312 = vld [vmem:[%s3 + $0x8] sm:$0xff]
      %v313 = vld [vmem:[%s3 + $0x10] sm:$0xff]
      %v314 = vld [vmem:[%s3 + $0x18] sm:$0xff]
      %v315 = vld [vmem:[%s3 + $0x20] sm:$0xff]
      %v316 = vld [vmem:[%s3 + $0x28] sm:$0xff]
      %v317 = vld [vmem:[%s3 + $0x30] sm:$0xff]
      %v318 = vld [vmem:[%s3 + $0x38] sm:$0xff]
      %v319 = vld [vmem:[%s4] sm:$0x1]
      %v321 = vlaneseq
      %v322 = vshrl.u32 %v321, 7
      %v323 = vsub.s32 0, %v322
      %v324 = vrot.slane %v319, %v323
      %vm326 = vcmask 523264
      %v328 = vsel %vm326, %v308, 0
      %330 = vmatprep.subr.mxu0 0.0
      %331 = vmatpush1.msra.mxu0 %v311
      %332 = vmatprep.subr.mxu0 0.0
      %333 = vmatpush1.msra.mxu0 %v312
      %334 = vmatprep.subr.mxu0 0.0
      %335 = vmatpush1.msra.mxu0 %v313
      %336 = vmatprep.subr.mxu0 0.0
      %337 = vmatpush1.msra.mxu0 %v314
      %338 = vmatprep.subr.mxu0 0.0
      %339 = vmatpush1.msra.mxu0 %v315
      %340 = vmatprep.subr.mxu0 0.0
      %341 = vmatpush1.msra.mxu0 %v316
      %342 = vmatprep.subr.mxu0 0.0
      %343 = vmatpush1.msra.mxu0 %v317
      %344 = vmatprep.subr.mxu0 0.0
      %345 = vmatpush1.msra.mxu0 %v318
      %346 = vmatprep.subr.mxu0 0.0
      %347 = vmatpush1.msra.mxu0 0.0
      %348 = vmatprep.subr.mxu0 0.0
      %349 = vmatpush1.msra.mxu0 0.0
      %350 = vmatprep.subr.mxu0 0.0
      %351 = vmatpush1.msra.mxu0 0.0
      %352 = vmatprep.subr.mxu0 0.0
      %353 = vmatpush1.msra.mxu0 0.0
      %354 = vmatprep.subr.mxu0 0.0
      %355 = vmatpush1.msra.mxu0 0.0
      %356 = vmatprep.subr.mxu0 0.0
      %357 = vmatpush1.msra.mxu0 0.0
      %358 = vmatprep.subr.mxu0 0.0
      %359 = vmatpush1.msra.mxu0 0.0
      %360 = vmatprep.subr.mxu0 0.0
      %361 = vmatpush1.msra.mxu0 0.0
      %362 = vmatprep.subr.mxu0 0.0
      %363 = vmatpush1.msra.mxu0 0.0
      %364 = vmatprep.subr.mxu0 0.0
      %365 = vmatpush1.msra.mxu0 0.0
      %366 = vmatprep.subr.mxu0 0.0
      %367 = vmatpush1.msra.mxu0 0.0
      %368 = vmatprep.subr.mxu0 0.0
      %369 = vmatpush1.msra.mxu0 0.0
      %370 = vmatprep.subr.mxu0 0.0
      %371 = vmatpush1.msra.mxu0 0.0
      %372 = vmatprep.subr.mxu0 0.0
      %373 = vmatpush1.msra.mxu0 0.0
      %374 = vmatprep.subr.mxu0 0.0
      %375 = vmatpush1.msra.mxu0 0.0
      %376 = vmatprep.subr.mxu0 0.0
      %377 = vmatpush1.msra.mxu0 0.0
      %378 = vmatprep.subr.mxu0 0.0
      %379 = vmatpush1.msra.mxu0 0.0
      %380 = vmatprep.subr.mxu0 0.0
      %381 = vmatpush1.msra.mxu0 0.0
      %382 = vmatprep.subr.mxu0 0.0
      %383 = vmatpush1.msra.mxu0 0.0
      %384 = vmatprep.subr.mxu0 0.0
      %385 = vmatpush1.msra.mxu0 0.0
      %386 = vmatprep.subr.mxu0 0.0
      %387 = vmatpush1.msra.mxu0 0.0
      %388 = vmatprep.subr.mxu0 0.0
      %389 = vmatpush1.msra.mxu0 0.0
      %390 = vmatprep.subr.mxu0 0.0
      %391 = vmatpush1.msra.mxu0 0.0
      %392 = vmatprep.subr.mxu0 0.0
      %393 = vmatpush1.msra.mxu0 0.0
      %394 = vmatprep.mubr.f32.mxu0 0.0
      %395 = vmatmul.mubr.f32.gmra.mrb[0].mxu0 %v328
      %v396 = vpop.f32.mrb[0].mxu0
      %v397 = vadd.f32 %v324, %v396
      %v398 = vpop.f32.mrb[0].mxu0
      %399 = vdwg.mxu0
      %vm400 = vcmask 64512
      %v402 = vsel %vm400, %v309, 0
      %404 = vmatprep.subr.mxu0 0.0
      %405 = vmatpush1.msra.mxu0 %v397
      %406 = vmatprep.subr.mxu0 0.0
      %407 = vmatpush1.msra.mxu0 0.0
      %408 = vmatprep.subr.mxu0 0.0
      %409 = vmatpush1.msra.mxu0 0.0
      %410 = vmatprep.subr.mxu0 0.0
      %411 = vmatpush1.msra.mxu0 0.0
      %412 = vmatprep.subr.mxu0 0.0
      %413 = vmatpush1.msra.mxu0 0.0
      %414 = vmatprep.subr.mxu0 0.0
      %415 = vmatpush1.msra.mxu0 0.0
      %416 = vmatprep.subr.mxu0 0.0
      %417 = vmatpush1.msra.mxu0 0.0
      %418 = vmatprep.subr.mxu0 0.0
      %419 = vmatpush1.msra.mxu0 0.0
      %420 = vmatprep.subr.mxu0 0.0
      %421 = vmatpush1.msra.mxu0 0.0
      %422 = vmatprep.subr.mxu0 0.0
      %423 = vmatpush1.msra.mxu0 0.0
      %424 = vmatprep.subr.mxu0 0.0
      %425 = vmatpush1.msra.mxu0 0.0
      %426 = vmatprep.subr.mxu0 0.0
      %427 = vmatpush1.msra.mxu0 0.0
      %428 = vmatprep.subr.mxu0 0.0
      %429 = vmatpush1.msra.mxu0 0.0
      %430 = vmatprep.subr.mxu0 0.0
      %431 = vmatpush1.msra.mxu0 0.0
      %432 = vmatprep.subr.mxu0 0.0
      %433 = vmatpush1.msra.mxu0 0.0
      %434 = vmatprep.subr.mxu0 0.0
      %435 = vmatpush1.msra.mxu0 0.0
      %436 = vmatprep.subr.mxu0 0.0
      %437 = vmatpush1.msra.mxu0 0.0
      %438 = vmatprep.subr.mxu0 0.0
      %439 = vmatpush1.msra.mxu0 0.0
      %440 = vmatprep.subr.mxu0 0.0
      %441 = vmatpush1.msra.mxu0 0.0
      %442 = vmatprep.subr.mxu0 0.0
      %443 = vmatpush1.msra.mxu0 0.0
      %444 = vmatprep.subr.mxu0 0.0
      %445 = vmatpush1.msra.mxu0 0.0
      %446 = vmatprep.subr.mxu0 0.0
      %447 = vmatpush1.msra.mxu0 0.0
      %448 = vmatprep.subr.mxu0 0.0
      %449 = vmatpush1.msra.mxu0 0.0
      %450 = vmatprep.subr.mxu0 0.0
      %451 = vmatpush1.msra.mxu0 0.0
      %452 = vmatprep.subr.mxu0 0.0
      %453 = vmatpush1.msra.mxu0 0.0
      %454 = vmatprep.subr.mxu0 0.0
      %455 = vmatpush1.msra.mxu0 0.0
      %456 = vmatprep.subr.mxu0 0.0
      %457 = vmatpush1.msra.mxu0 0.0
      %458 = vmatprep.subr.mxu0 0.0
      %459 = vmatpush1.msra.mxu0 0.0
      %460 = vmatprep.subr.mxu0 0.0
      %461 = vmatpush1.msra.mxu0 0.0
      %462 = vmatprep.subr.mxu0 0.0
      %463 = vmatpush1.msra.mxu0 0.0
      %464 = vmatprep.subr.mxu0 0.0
      %465 = vmatpush1.msra.mxu0 0.0
      %466 = vmatprep.subr.mxu0 0.0
      %467 = vmatpush1.msra.mxu0 0.0
      %468 = vmatprep.mubr.f32.mxu0 0.0
      %469 = vmatmul.mubr.f32.gmra.mrb[0].mxu0 %v402
      %v470 = vpop.f32.mrb[0].mxu0
      %v471 = vadd.f32 0.0, %v470
      %v472 = vpop.f32.mrb[0].mxu0
      %473 = vdwg.mxu0
      %v474 = vmax.f32 %v471, 0.0
      %v475 = vadd.f32 %v308, %v474
      %v476 = vld [vmem:[%s5] sm:$0xff]
      %v477 = vld [vmem:[%s5 + $0x8] sm:$0xff]
      %v478 = vld [vmem:[%s5 + $0x10] sm:$0xff]
      %v479 = vld [vmem:[%s5 + $0x18] sm:$0xff]
      %v480 = vld [vmem:[%s5 + $0x20] sm:$0xff]
      %v481 = vld [vmem:[%s5 + $0x28] sm:$0xff]
      %v482 = vld [vmem:[%s5 + $0x30] sm:$0xff]
      %v483 = vld [vmem:[%s5 + $0x38] sm:$0xff]
      %v484 = vld [vmem:[%s6] sm:$0x1]
      %v486 = vlaneseq
      %v487 = vshrl.u32 %v486, 7
      %v488 = vsub.s32 0, %v487
      %v489 = vrot.slane %v484, %v488
      %v492 = vsel %vm326, %v475, 0
      %494 = vmatprep.subr.mxu0 0.0
      %495 = vmatpush1.msra.mxu0 %v476
      %496 = vmatprep.subr.mxu0 0.0
      %497 = vmatpush1.msra.mxu0 %v477
      %498 = vmatprep.subr.mxu0 0.0
      %499 = vmatpush1.msra.mxu0 %v478
      %500 = vmatprep.subr.mxu0 0.0
      %501 = vmatpush1.msra.mxu0 %v479
      %502 = vmatprep.subr.mxu0 0.0
      %503 = vmatpush1.msra.mxu0 %v480
      %504 = vmatprep.subr.mxu0 0.0
      %505 = vmatpush1.msra.mxu0 %v481
      %506 = vmatprep.subr.mxu0 0.0
      %507 = vmatpush1.msra.mxu0 %v482
      %508 = vmatprep.subr.mxu0 0.0
      %509 = vmatpush1.msra.mxu0 %v483
      %510 = vmatprep.subr.mxu0 0.0
      %511 = vmatpush1.msra.mxu0 0.0
      %512 = vmatprep.subr.mxu0 0.0
      %513 = vmatpush1.msra.mxu0 0.0
      %514 = vmatprep.subr.mxu0 0.0
      %515 = vmatpush1.msra.mxu0 0.0
      %516 = vmatprep.subr.mxu0 0.0
      %517 = vmatpush1.msra.mxu0 0.0
      %518 = vmatprep.subr.mxu0 0.0
      %519 = vmatpush1.msra.mxu0 0.0
      %520 = vmatprep.subr.mxu0 0.0
      %521 = vmatpush1.msra.mxu0 0.0
      %522 = vmatprep.subr.mxu0 0.0
      %523 = vmatpush1.msra.mxu0 0.0
      %524 = vmatprep.subr.mxu0 0.0
      %525 = vmatpush1.msra.mxu0 0.0
      %526 = vmatprep.subr.mxu0 0.0
      %527 = vmatpush1.msra.mxu0 0.0
      %528 = vmatprep.subr.mxu0 0.0
      %529 = vmatpush1.msra.mxu0 0.0
      %530 = vmatprep.subr.mxu0 0.0
      %531 = vmatpush1.msra.mxu0 0.0
      %532 = vmatprep.subr.mxu0 0.0
      %533 = vmatpush1.msra.mxu0 0.0
      %534 = vmatprep.subr.mxu0 0.0
      %535 = vmatpush1.msra.mxu0 0.0
      %536 = vmatprep.subr.mxu0 0.0
      %537 = vmatpush1.msra.mxu0 0.0
      %538 = vmatprep.subr.mxu0 0.0
      %539 = vmatpush1.msra.mxu0 0.0
      %540 = vmatprep.subr.mxu0 0.0
      %541 = vmatpush1.msra.mxu0 0.0
      %542 = vmatprep.subr.mxu0 0.0
      %543 = vmatpush1.msra.mxu0 0.0
      %544 = vmatprep.subr.mxu0 0.0
      %545 = vmatpush1.msra.mxu0 0.0
      %546 = vmatprep.subr.mxu0 0.0
      %547 = vmatpush1.msra.mxu0 0.0
      %548 = vmatprep.subr.mxu0 0.0
      %549 = vmatpush1.msra.mxu0 0.0
      %550 = vmatprep.subr.mxu0 0.0
      %551 = vmatpush1.msra.mxu0 0.0
      %552 = vmatprep.subr.mxu0 0.0
      %553 = vmatpush1.msra.mxu0 0.0
      %554 = vmatprep.subr.mxu0 0.0
      %555 = vmatpush1.msra.mxu0 0.0
      %556 = vmatprep.subr.mxu0 0.0
      %557 = vmatpush1.msra.mxu0 0.0
      %558 = vmatprep.mubr.f32.mxu0 0.0
      %559 = vmatmul.mubr.f32.gmra.mrb[0].mxu0 %v492
      %v560 = vpop.f32.mrb[0].mxu0
      %v561 = vadd.f32 %v489, %v560
      %v562 = vpop.f32.mrb[0].mxu0
      %563 = vdwg.mxu0
      %v565 = vsel %vm400, %v310, 0
      %567 = vmatprep.subr.mxu0 0.0
      %568 = vmatpush1.msra.mxu0 %v561
      %569 = vmatprep.subr.mxu0 0.0
      %570 = vmatpush1.msra.mxu0 0.0
      %571 = vmatprep.subr.mxu0 0.0
      %572 = vmatpush1.msra.mxu0 0.0
      %573 = vmatprep.subr.mxu0 0.0
      %574 = vmatpush1.msra.mxu0 0.0
      %575 = vmatprep.subr.mxu0 0.0
      %576 = vmatpush1.msra.mxu0 0.0
      %577 = vmatprep.subr.mxu0 0.0
      %578 = vmatpush1.msra.mxu0 0.0
      %579 = vmatprep.subr.mxu0 0.0
      %580 = vmatpush1.msra.mxu0 0.0
      %581 = vmatprep.subr.mxu0 0.0
      %582 = vmatpush1.msra.mxu0 0.0
      %583 = vmatprep.subr.mxu0 0.0
      %584 = vmatpush1.msra.mxu0 0.0
      %585 = vmatprep.subr.mxu0 0.0
      %586 = vmatpush1.msra.mxu0 0.0
      %587 = vmatprep.subr.mxu0 0.0
      %588 = vmatpush1.msra.mxu0 0.0
      %589 = vmatprep.subr.mxu0 0.0
      %590 = vmatpush1.msra.mxu0 0.0
      %591 = vmatprep.subr.mxu0 0.0
      %592 = vmatpush1.msra.mxu0 0.0
      %593 = vmatprep.subr.mxu0 0.0
      %594 = vmatpush1.msra.mxu0 0.0
      %595 = vmatprep.subr.mxu0 0.0
      %596 = vmatpush1.msra.mxu0 0.0
      %597 = vmatprep.subr.mxu0 0.0
      %598 = vmatpush1.msra.mxu0 0.0
      %599 = vmatprep.subr.mxu0 0.0
      %600 = vmatpush1.msra.mxu0 0.0
      %601 = vmatprep.subr.mxu0 0.0
      %602 = vmatpush1.msra.mxu0 0.0
      %603 = vmatprep.subr.mxu0 0.0
      %604 = vmatpush1.msra.mxu0 0.0
      %605 = vmatprep.subr.mxu0 0.0
      %606 = vmatpush1.msra.mxu0 0.0
      %607 = vmatprep.subr.mxu0 0.0
      %608 = vmatpush1.msra.mxu0 0.0
      %609 = vmatprep.subr.mxu0 0.0
      %610 = vmatpush1.msra.mxu0 0.0
      %611 = vmatprep.subr.mxu0 0.0
      %612 = vmatpush1.msra.mxu0 0.0
      %613 = vmatprep.subr.mxu0 0.0
      %614 = vmatpush1.msra.mxu0 0.0
      %615 = vmatprep.subr.mxu0 0.0
      %616 = vmatpush1.msra.mxu0 0.0
      %617 = vmatprep.subr.mxu0 0.0
      %618 = vmatpush1.msra.mxu0 0.0
      %619 = vmatprep.subr.mxu0 0.0
      %620 = vmatpush1.msra.mxu0 0.0
      %621 = vmatprep.subr.mxu0 0.0
      %622 = vmatpush1.msra.mxu0 0.0
      %623 = vmatprep.subr.mxu0 0.0
      %624 = vmatpush1.msra.mxu0 0.0
      %625 = vmatprep.subr.mxu0 0.0
      %626 = vmatpush1.msra.mxu0 0.0
      %627 = vmatprep.subr.mxu0 0.0
      %628 = vmatpush1.msra.mxu0 0.0
      %629 = vmatprep.subr.mxu0 0.0
      %630 = vmatpush1.msra.mxu0 0.0
      %631 = vmatprep.mubr.f32.mxu0 0.0
      %632 = vmatmul.mubr.f32.gmra.mrb[0].mxu0 %v565
      %v633 = vpop.f32.mrb[0].mxu0
      %v634 = vadd.f32 0.0, %v633
      %v635 = vpop.f32.mrb[0].mxu0
      %636 = vdwg.mxu0
      %v637 = vmax.f32 %v634, 0.0
      %v638 = vadd.f32 %v475, %v637
      %s639 = scalar_lea.vmem %s3, 64
      %v640 = vld [vmem:[%s639] sm:$0xff]
      %v641 = vld [vmem:[%s639 + $0x8] sm:$0xff]
      %v642 = vld [vmem:[%s639 + $0x10] sm:$0xff]
      %v643 = vld [vmem:[%s639 + $0x18] sm:$0xff]
      %v644 = vld [vmem:[%s639 + $0x20] sm:$0xff]
      %v645 = vld [vmem:[%s639 + $0x28] sm:$0xff]
      %v646 = vld [vmem:[%s639 + $0x30] sm:$0xff]
      %v647 = vld [vmem:[%s639 + $0x38] sm:$0xff]
      %s648 = scalar_lea.vmem %s4, 1
      %v649 = vld [vmem:[%s648] sm:$0x1]
      %v651 = vlaneseq
      %v652 = vshrl.u32 %v651, 7
      %v653 = vsub.s32 0, %v652
      %v654 = vrot.slane %v649, %v653
      %v657 = vsel %vm326, %v638, 0
      %659 = vmatprep.subr.mxu0 0.0
      %660 = vmatpush1.msra.mxu0 %v640
      %661 = vmatprep.subr.mxu0 0.0
      %662 = vmatpush1.msra.mxu0 %v641
      %663 = vmatprep.subr.mxu0 0.0
      %664 = vmatpush1.msra.mxu0 %v642
      %665 = vmatprep.subr.mxu0 0.0
      %666 = vmatpush1.msra.mxu0 %v643
      %667 = vmatprep.subr.mxu0 0.0
      %668 = vmatpush1.msra.mxu0 %v644
      %669 = vmatprep.subr.mxu0 0.0
      %670 = vmatpush1.msra.mxu0 %v645
      %671 = vmatprep.subr.mxu0 0.0
      %672 = vmatpush1.msra.mxu0 %v646
      %673 = vmatprep.subr.mxu0 0.0
      %674 = vmatpush1.msra.mxu0 %v647
      %675 = vmatprep.subr.mxu0 0.0
      %676 = vmatpush1.msra.mxu0 0.0
      %677 = vmatprep.subr.mxu0 0.0
      %678 = vmatpush1.msra.mxu0 0.0
      %679 = vmatprep.subr.mxu0 0.0
      %680 = vmatpush1.msra.mxu0 0.0
      %681 = vmatprep.subr.mxu0 0.0
      %682 = vmatpush1.msra.mxu0 0.0
      %683 = vmatprep.subr.mxu0 0.0
      %684 = vmatpush1.msra.mxu0 0.0
      %685 = vmatprep.subr.mxu0 0.0
      %686 = vmatpush1.msra.mxu0 0.0
      %687 = vmatprep.subr.mxu0 0.0
      %688 = vmatpush1.msra.mxu0 0.0
      %689 = vmatprep.subr.mxu0 0.0
      %690 = vmatpush1.msra.mxu0 0.0
      %691 = vmatprep.subr.mxu0 0.0
      %692 = vmatpush1.msra.mxu0 0.0
      %693 = vmatprep.subr.mxu0 0.0
      %694 = vmatpush1.msra.mxu0 0.0
      %695 = vmatprep.subr.mxu0 0.0
      %696 = vmatpush1.msra.mxu0 0.0
      %697 = vmatprep.subr.mxu0 0.0
      %698 = vmatpush1.msra.mxu0 0.0
      %699 = vmatprep.subr.mxu0 0.0
      %700 = vmatpush1.msra.mxu0 0.0
      %701 = vmatprep.subr.mxu0 0.0
      %702 = vmatpush1.msra.mxu0 0.0
      %703 = vmatprep.subr.mxu0 0.0
      %704 = vmatpush1.msra.mxu0 0.0
      %705 = vmatprep.subr.mxu0 0.0
      %706 = vmatpush1.msra.mxu0 0.0
      %707 = vmatprep.subr.mxu0 0.0
      %708 = vmatpush1.msra.mxu0 0.0
      %709 = vmatprep.subr.mxu0 0.0
      %710 = vmatpush1.msra.mxu0 0.0
      %711 = vmatprep.subr.mxu0 0.0
      %712 = vmatpush1.msra.mxu0 0.0
      %713 = vmatprep.subr.mxu0 0.0
      %714 = vmatpush1.msra.mxu0 0.0
      %715 = vmatprep.subr.mxu0 0.0
      %716 = vmatpush1.msra.mxu0 0.0
      %717 = vmatprep.subr.mxu0 0.0
      %718 = vmatpush1.msra.mxu0 0.0
      %719 = vmatprep.subr.mxu0 0.0
      %720 = vmatpush1.msra.mxu0 0.0
      %721 = vmatprep.subr.mxu0 0.0
      %722 = vmatpush1.msra.mxu0 0.0
      %723 = vmatprep.mubr.f32.mxu0 0.0
      %724 = vmatmul.mubr.f32.gmra.mrb[0].mxu0 %v657
      %v725 = vpop.f32.mrb[0].mxu0
      %v726 = vadd.f32 %v654, %v725
      %v727 = vpop.f32.mrb[0].mxu0
      %728 = vdwg.mxu0
      %729 = vmatprep.subr.mxu0 0.0
      %730 = vmatpush1.msra.mxu0 %v726
      %731 = vmatprep.subr.mxu0 0.0
      %732 = vmatpush1.msra.mxu0 0.0
      %733 = vmatprep.subr.mxu0 0.0
      %734 = vmatpush1.msra.mxu0 0.0
      %735 = vmatprep.subr.mxu0 0.0
      %736 = vmatpush1.msra.mxu0 0.0
      %737 = vmatprep.subr.mxu0 0.0
      %738 = vmatpush1.msra.mxu0 0.0
      %739 = vmatprep.subr.mxu0 0.0
      %740 = vmatpush1.msra.mxu0 0.0
      %741 = vmatprep.subr.mxu0 0.0
      %742 = vmatpush1.msra.mxu0 0.0
      %743 = vmatprep.subr.mxu0 0.0
      %744 = vmatpush1.msra.mxu0 0.0
      %745 = vmatprep.subr.mxu0 0.0
      %746 = vmatpush1.msra.mxu0 0.0
      %747 = vmatprep.subr.mxu0 0.0
      %748 = vmatpush1.msra.mxu0 0.0
      %749 = vmatprep.subr.mxu0 0.0
      %750 = vmatpush1.msra.mxu0 0.0
      %751 = vmatprep.subr.mxu0 0.0
      %752 = vmatpush1.msra.mxu0 0.0
      %753 = vmatprep.subr.mxu0 0.0
      %754 = vmatpush1.msra.mxu0 0.0
      %755 = vmatprep.subr.mxu0 0.0
      %756 = vmatpush1.msra.mxu0 0.0
      %757 = vmatprep.subr.mxu0 0.0
      %758 = vmatpush1.msra.mxu0 0.0
      %759 = vmatprep.subr.mxu0 0.0
      %760 = vmatpush1.msra.mxu0 0.0
      %761 = vmatprep.subr.mxu0 0.0
      %762 = vmatpush1.msra.mxu0 0.0
      %763 = vmatprep.subr.mxu0 0.0
      %764 = vmatpush1.msra.mxu0 0.0
      %765 = vmatprep.subr.mxu0 0.0
      %766 = vmatpush1.msra.mxu0 0.0
      %767 = vmatprep.subr.mxu0 0.0
      %768 = vmatpush1.msra.mxu0 0.0
      %769 = vmatprep.subr.mxu0 0.0
      %770 = vmatpush1.msra.mxu0 0.0
      %771 = vmatprep.subr.mxu0 0.0
      %772 = vmatpush1.msra.mxu0 0.0
      %773 = vmatprep.subr.mxu0 0.0
      %774 = vmatpush1.msra.mxu0 0.0
      %775 = vmatprep.subr.mxu0 0.0
      %776 = vmatpush1.msra.mxu0 0.0
      %777 = vmatprep.subr.mxu0 0.0
      %778 = vmatpush1.msra.mxu0 0.0
      %779 = vmatprep.subr.mxu0 0.0
      %780 = vmatpush1.msra.mxu0 0.0
      %781 = vmatprep.subr.mxu0 0.0
      %782 = vmatpush1.msra.mxu0 0.0
      %783 = vmatprep.subr.mxu0 0.0
      %784 = vmatpush1.msra.mxu0 0.0
      %785 = vmatprep.subr.mxu0 0.0
      %786 = vmatpush1.msra.mxu0 0.0
      %787 = vmatprep.subr.mxu0 0.0
      %788 = vmatpush1.msra.mxu0 0.0
      %789 = vmatprep.subr.mxu0 0.0
      %790 = vmatpush1.msra.mxu0 0.0
      %791 = vmatprep.subr.mxu0 0.0
      %792 = vmatpush1.msra.mxu0 0.0
      %793 = vmatprep.mubr.f32.mxu0 0.0
      %794 = vmatmul.mubr.f32.gmra.mrb[0].mxu0 %v402
      %v795 = vpop.f32.mrb[0].mxu0
      %v796 = vadd.f32 0.0, %v795
      %v797 = vpop.f32.mrb[0].mxu0
      %798 = vdwg.mxu0
      %v799 = vmax.f32 %v796, 0.0
      %v800 = vadd.f32 %v638, %v799
      %s801 = scalar_lea.vmem %s5, 64
      %v802 = vld [vmem:[%s801] sm:$0xff]
      %v803 = vld [vmem:[%s801 + $0x8] sm:$0xff]
      %v804 = vld [vmem:[%s801 + $0x10] sm:$0xff]
      %v805 = vld [vmem:[%s801 + $0x18] sm:$0xff]
      %v806 = vld [vmem:[%s801 + $0x20] sm:$0xff]
      %v807 = vld [vmem:[%s801 + $0x28] sm:$0xff]
      %v808 = vld [vmem:[%s801 + $0x30] sm:$0xff]
      %v809 = vld [vmem:[%s801 + $0x38] sm:$0xff]
      %s810 = scalar_lea.vmem %s6, 1
      %v811 = vld [vmem:[%s810] sm:$0x1]
      %v813 = vlaneseq
      %v814 = vshrl.u32 %v813, 7
      %v815 = vsub.s32 0, %v814
      %v816 = vrot.slane %v811, %v815
      %v819 = vsel %vm326, %v800, 0
      %821 = vmatprep.subr.mxu0 0.0
      %822 = vmatpush1.msra.mxu0 %v802
      %823 = vmatprep.subr.mxu0 0.0
      %824 = vmatpush1.msra.mxu0 %v803
      %825 = vmatprep.subr.mxu0 0.0
      %826 = vmatpush1.msra.mxu0 %v804
      %827 = vmatprep.subr.mxu0 0.0
      %828 = vmatpush1.msra.mxu0 %v805
      %829 = vmatprep.subr.mxu0 0.0
      %830 = vmatpush1.msra.mxu0 %v806
      %831 = vmatprep.subr.mxu0 0.0
      %832 = vmatpush1.msra.mxu0 %v807
      %833 = vmatprep.subr.mxu0 0.0
      %834 = vmatpush1.msra.mxu0 %v808
      %835 = vmatprep.subr.mxu0 0.0
      %836 = vmatpush1.msra.mxu0 %v809
      %837 = vmatprep.subr.mxu0 0.0
      %838 = vmatpush1.msra.mxu0 0.0
      %839 = vmatprep.subr.mxu0 0.0
      %840 = vmatpush1.msra.mxu0 0.0
      %841 = vmatprep.subr.mxu0 0.0
      %842 = vmatpush1.msra.mxu0 0.0
      %843 = vmatprep.subr.mxu0 0.0
      %844 = vmatpush1.msra.mxu0 0.0
      %845 = vmatprep.subr.mxu0 0.0
      %846 = vmatpush1.msra.mxu0 0.0
      %847 = vmatprep.subr.mxu0 0.0
      %848 = vmatpush1.msra.mxu0 0.0
      %849 = vmatprep.subr.mxu0 0.0
      %850 = vmatpush1.msra.mxu0 0.0
      %851 = vmatprep.subr.mxu0 0.0
      %852 = vmatpush1.msra.mxu0 0.0
      %853 = vmatprep.subr.mxu0 0.0
      %854 = vmatpush1.msra.mxu0 0.0
      %855 = vmatprep.subr.mxu0 0.0
      %856 = vmatpush1.msra.mxu0 0.0
      %857 = vmatprep.subr.mxu0 0.0
      %858 = vmatpush1.msra.mxu0 0.0
      %859 = vmatprep.subr.mxu0 0.0
      %860 = vmatpush1.msra.mxu0 0.0
      %861 = vmatprep.subr.mxu0 0.0
      %862 = vmatpush1.msra.mxu0 0.0
      %863 = vmatprep.subr.mxu0 0.0
      %864 = vmatpush1.msra.mxu0 0.0
      %865 = vmatprep.subr.mxu0 0.0
      %866 = vmatpush1.msra.mxu0 0.0
      %867 = vmatprep.subr.mxu0 0.0
      %868 = vmatpush1.msra.mxu0 0.0
      %869 = vmatprep.subr.mxu0 0.0
      %870 = vmatpush1.msra.mxu0 0.0
      %871 = vmatprep.subr.mxu0 0.0
      %872 = vmatpush1.msra.mxu0 0.0
      %873 = vmatprep.subr.mxu0 0.0
      %874 = vmatpush1.msra.mxu0 0.0
      %875 = vmatprep.subr.mxu0 0.0
      %876 = vmatpush1.msra.mxu0 0.0
      %877 = vmatprep.subr.mxu0 0.0
      %878 = vmatpush1.msra.mxu0 0.0
      %879 = vmatprep.subr.mxu0 0.0
      %880 = vmatpush1.msra.mxu0 0.0
      %881 = vmatprep.subr.mxu0 0.0
      %882 = vmatpush1.msra.mxu0 0.0
      %883 = vmatprep.subr.mxu0 0.0
      %884 = vmatpush1.msra.mxu0 0.0
      %885 = vmatprep.mubr.f32.mxu0 0.0
      %886 = vmatmul.mubr.f32.gmra.mrb[0].mxu0 %v819
      %v887 = vpop.f32.mrb[0].mxu0
      %v888 = vadd.f32 %v816, %v887
      %v889 = vpop.f32.mrb[0].mxu0
      %890 = vdwg.mxu0
      %891 = vmatprep.subr.mxu0 0.0
      %892 = vmatpush1.msra.mxu0 %v888
      %893 = vmatprep.subr.mxu0 0.0
      %894 = vmatpush1.msra.mxu0 0.0
      %895 = vmatprep.subr.mxu0 0.0
      %896 = vmatpush1.msra.mxu0 0.0
      %897 = vmatprep.subr.mxu0 0.0
      %898 = vmatpush1.msra.mxu0 0.0
      %899 = vmatprep.subr.mxu0 0.0
      %900 = vmatpush1.msra.mxu0 0.0
      %901 = vmatprep.subr.mxu0 0.0
      %902 = vmatpush1.msra.mxu0 0.0
      %903 = vmatprep.subr.mxu0 0.0
      %904 = vmatpush1.msra.mxu0 0.0
      %905 = vmatprep.subr.mxu0 0.0
      %906 = vmatpush1.msra.mxu0 0.0
      %907 = vmatprep.subr.mxu0 0.0
      %908 = vmatpush1.msra.mxu0 0.0
      %909 = vmatprep.subr.mxu0 0.0
      %910 = vmatpush1.msra.mxu0 0.0
      %911 = vmatprep.subr.mxu0 0.0
      %912 = vmatpush1.msra.mxu0 0.0
      %913 = vmatprep.subr.mxu0 0.0
      %914 = vmatpush1.msra.mxu0 0.0
      %915 = vmatprep.subr.mxu0 0.0
      %916 = vmatpush1.msra.mxu0 0.0
      %917 = vmatprep.subr.mxu0 0.0
      %918 = vmatpush1.msra.mxu0 0.0
      %919 = vmatprep.subr.mxu0 0.0
      %920 = vmatpush1.msra.mxu0 0.0
      %921 = vmatprep.subr.mxu0 0.0
      %922 = vmatpush1.msra.mxu0 0.0
      %923 = vmatprep.subr.mxu0 0.0
      %924 = vmatpush1.msra.mxu0 0.0
      %925 = vmatprep.subr.mxu0 0.0
      %926 = vmatpush1.msra.mxu0 0.0
      %927 = vmatprep.subr.mxu0 0.0
      %928 = vmatpush1.msra.mxu0 0.0
      %929 = vmatprep.subr.mxu0 0.0
      %930 = vmatpush1.msra.mxu0 0.0
      %931 = vmatprep.subr.mxu0 0.0
      %932 = vmatpush1.msra.mxu0 0.0
      %933 = vmatprep.subr.mxu0 0.0
      %934 = vmatpush1.msra.mxu0 0.0
      %935 = vmatprep.subr.mxu0 0.0
      %936 = vmatpush1.msra.mxu0 0.0
      %937 = vmatprep.subr.mxu0 0.0
      %938 = vmatpush1.msra.mxu0 0.0
      %939 = vmatprep.subr.mxu0 0.0
      %940 = vmatpush1.msra.mxu0 0.0
      %941 = vmatprep.subr.mxu0 0.0
      %942 = vmatpush1.msra.mxu0 0.0
      %943 = vmatprep.subr.mxu0 0.0
      %944 = vmatpush1.msra.mxu0 0.0
      %945 = vmatprep.subr.mxu0 0.0
      %946 = vmatpush1.msra.mxu0 0.0
      %947 = vmatprep.subr.mxu0 0.0
      %948 = vmatpush1.msra.mxu0 0.0
      %949 = vmatprep.subr.mxu0 0.0
      %950 = vmatpush1.msra.mxu0 0.0
      %951 = vmatprep.subr.mxu0 0.0
      %952 = vmatpush1.msra.mxu0 0.0
      %953 = vmatprep.subr.mxu0 0.0
      %954 = vmatpush1.msra.mxu0 0.0
      %955 = vmatprep.mubr.f32.mxu0 0.0
      %956 = vmatmul.mubr.f32.gmra.mrb[0].mxu0 %v565
      %v957 = vpop.f32.mrb[0].mxu0
      %v958 = vadd.f32 0.0, %v957
      %v959 = vpop.f32.mrb[0].mxu0
      %960 = vdwg.mxu0
      %v961 = vmax.f32 %v958, 0.0
      %v962 = vadd.f32 %v800, %v961
      %963 = vst.msk [vmem:[%s307] sm:$0xff] %vm326, %v962
      %p964 = scmp.lt.s32.totalorder %s18, 1
      %s965 = scalar_select %p964, %s18, 1
      %s966 = smul.addr %s965, 8
      %s967 = scalar_lea.vmem %s7, %s966
      // Predicated region
      $region49: #{model_graphrel_forward.6} parent=47 // pred_check
        %p968 = pneg %p198
      $region50: #{model_graphrel_forward.6} parent=47 // pred_check_branch
        %970 = sbr.rel (%p968) target = $region52
      $region51: #{model_graphrel_forward.6} parent=47 // pred_region
        _
      $region52: #{model_graphrel_forward.6} parent=47 // pred_fallthru
        _
    $region48: #{model_graphrel_forward.6} parent=5 // pred_fallthru
      _
    %p971 = scmp.le.s32.totalorder 2, %s13
    // Predicated region
    $region53: #{model_graphrel_forward.6} parent=5 // pred_check
      %p972 = pneg %p971
    $region54: #{model_graphrel_forward.6} parent=5 // pred_check_branch
      %974 = sbr.rel (%p972) target = $region56
    $region55: #{model_graphrel_forward.6} parent=5 // pred_region
      %s975 = ssub.s32 %s13, 2
      // Predicated region
      $region57: #{model_graphrel_forward.6} parent=55 // pred_check
        %p976 = pneg %p204
      $region58: #{model_graphrel_forward.6} parent=55 // pred_check_branch
        %978 = sbr.rel (%p976) target = $region60
      $region59: #{model_graphrel_forward.6} parent=55 // pred_region
        %p979 = scmp.lt.s32.totalorder %s19, 1
        %s980 = scalar_select %p979, %s19, 1
        %s981 = smul.addr %s980, 8
        %s982 = scalar_lea.vmem %s7, %s981
      $region60: #{model_graphrel_forward.6} parent=55 // pred_fallthru
        _
    $region56: #{model_graphrel_forward.6} parent=5 // pred_fallthru
      _
  $region6: #{model_graphrel_forward.6} parent=0 // loop_footer
    %s17 = sadd.s32 1, %s13
  $region7: #{model_graphrel_forward.6} parent=0 // loop_footer_branch
    %12 = sbr.rel target = $region3
  $region8: #{model_graphrel_forward.6} parent=0 // loop_exit
    _

// kernel: model_graphrel_forward.4
$region0: #{model_graphrel_forward.4}
  #allocation0 [shape = 'u32[]', space=smem, size = 0x4, offset = 0x4, fixed_abs, tag = 'smem constant byte address 0x4 - core index']
  #allocation1 [shape = 'u32[144,128]{1,0:T(1,128)}', space=vmem, size = 0x12000, scoped, tag = 'internal scratch']
  #allocation2 [shape = 'f32[8,2,96]{2,1,0:T(2,128)}', space=vmem, size = 0x2000, scoped, tag = 'scratch operand']
  #allocation3 [shape = 'f32[8,2,32]{2,1,0:T(2,128)}', space=vmem, size = 0x2000, scoped, tag = 'scratch operand']
  %s0 = inlined_call_operand.vmem [shape: f32[8,2,32], index: 0, kind: input, shape index: {}]
  %s1 = inlined_call_operand.hbm [shape: f32[2,32,96], index: 1, kind: input, shape index: {}]
  %s2 = inlined_call_operand.hbm [shape: f32[2,32,96], index: 2, kind: input, shape index: {}]
  %s3 = inlined_call_operand.vmem [shape: f32[2,1,96], index: 3, kind: input, shape index: {}]
  %s4 = inlined_call_operand.vmem [shape: f32[2,1,96], index: 4, kind: input, shape index: {}]
  %s5 = inlined_call_operand.vmem [shape: f32[2,8,2,32], index: 5, kind: output, shape index: {}]
  %s6 = sld [smem:[#allocation0]]
  $region61: #{model_graphrel_forward.4} parent=0
    _
  %s8 = ssub.s32 1, %s6
  %s9 = scalar_select 0, %s8, %s6
  $region1: #{model_graphrel_forward.4} parent=0
    #allocation4 [shape = 'u8[32768]{0}', space=vmem, size = 0x8000, scoped, tag = 'input window, operand 1']
    #allocation5 [shape = 's32[2]{0}', space=sflag, size = 0x8, scoped, tag = 'scoped memory for model_graphrel_forward.4']
    #allocation6 [shape = 'u8[32768]{0}', space=vmem, size = 0x8000, scoped, tag = 'input window, operand 2']
    #allocation7 [shape = 's32[2]{0}', space=sflag, size = 0x8, scoped, tag = 'scoped memory for model_graphrel_forward.4']
    %10 = vsyncpa [#allocation5], 0
    %s11 = scalar_lea.sflag [#allocation5], 1
    %12 = vsyncpa %s11, 0
    %13 = vsyncpa [#allocation7], 0
    %s14 = scalar_lea.sflag [#allocation7], 1
    %15 = vsyncpa %s14, 0
    loop: start=0, step=1, limit=4
    $region2: #{model_graphrel_forward.4} parent=1 // loop_pre_header
      _
    $region3: #{model_graphrel_forward.4} parent=1 // loop_header
      %s17 = sphi 0, %s21
      %p18 = scmp.ge.s32.totalorder %s17, 4
      %s25 = sphi 0, %s25
      %s27 = sphi 0, %s25
      %s28 = sphi 0, %s27
      %s42 = sphi 0, %s28
      %s48 = sphi 0, %s50
      %s51 = sphi 0, %s48
      %s52 = sphi 0, %s51
      %s68 = sphi 0, %s52
      %s74 = sphi 0, %s76
      %s77 = sphi 0, %s74
      %s78 = sphi 0, %s77
      %s94 = sphi 0, %s78
      %s100 = sphi 0, %s102
      %s103 = sphi 0, %s100
      %s104 = sphi 0, %s103
      %s120 = sphi 0, %s104
      %s126 = sphi 0, %s128
      %s129 = sphi 0, %s126
      %s130 = sphi 0, %s129
      %s146 = sphi 0, %s130
      %s152 = sphi 0, %s154
      %s155 = sphi 0, %s152
      %s156 = sphi 0, %s155
      %s172 = sphi 0, %s156
    $region4: #{model_graphrel_forward.4} parent=1 // loop_header_branch
      %20 = sbr.rel (%p18) target = $region8
    $region5: #{model_graphrel_forward.4} parent=1 // loop_body
      %s22 = ssub.s32 %s17, 1
      %s23 = ssub.s32 %s17, 2
      %s24 = sadd.s32 %s17, 1
      %s26 = sadd.s32 %s25, 1
      %p29 = scmp.eq.s32.totalorder %s17, 1
      %p30 = scmp.ne.s32.totalorder %s25, %s27
      %p31 = scmp.eq.s32.totalorder %s17, 0
      %p32 = por %p30, %p31
      %p33 = scmp.ne.s32.totalorder %s25, %s27
      %p34 = scmp.eq.s32.totalorder %s22, 1
      %p35 = por %p33, %p34
      %p36 = scmp.ne.s32.totalorder %s27, %s28
      %p37 = scmp.eq.s32.totalorder %s22, 0
      %p38 = por %p36, %p37
      %p39 = scmp.ne.s32.totalorder %s27, %s28
      %p40 = scmp.eq.s32.totalorder %s23, 1
      %p41 = por %p39, %p40
      %p43 = scmp.ne.s32.totalorder %s28, %s42
      %p44 = scmp.eq.s32.totalorder %s23, 0
      %p45 = por %p43, %p44
      %s46 = ssub.s32 %s17, %s24
      %p47 = scmp.eq.s32.totalorder %s46, 0
      %s49 = sadd.s32 %s48, 1
      %s50 = scalar_select %p47, %s48, %s49
      %p53 = pneg %p47
      %p54 = scmp.eq.s32.totalorder %s17, 1
      %p55 = por %p53, %p54
      %p56 = scmp.ne.s32.totalorder %s48, %s51
      %p57 = scmp.eq.s32.totalorder %s17, 0
      %p58 = por %p56, %p57
      %p59 = scmp.ne.s32.totalorder %s48, %s51
      %p60 = scmp.eq.s32.totalorder %s22, 1
      %p61 = por %p59, %p60
      %p62 = scmp.ne.s32.totalorder %s51, %s52
      %p63 = scmp.eq.s32.totalorder %s22, 0
      %p64 = por %p62, %p63
      %p65 = scmp.ne.s32.totalorder %s51, %s52
      %p66 = scmp.eq.s32.totalorder %s23, 1
      %p67 = por %p65, %p66
      %p69 = scmp.ne.s32.totalorder %s52, %s68
      %p70 = scmp.eq.s32.totalorder %s23, 0
      %p71 = por %p69, %p70
      %s72 = ssub.s32 %s17, %s24
      %p73 = scmp.eq.s32.totalorder %s72, 0
      %s75 = sadd.s32 %s74, 1
      %s76 = scalar_select %p73, %s74, %s75
      %p79 = pneg %p73
      %p80 = scmp.eq.s32.totalorder %s17, 1
      %p81 = por %p79, %p80
      %p82 = scmp.ne.s32.totalorder %s74, %s77
      %p83 = scmp.eq.s32.totalorder %s17, 0
      %p84 = por %p82, %p83
      %p85 = scmp.ne.s32.totalorder %s74, %s77
      %p86 = scmp.eq.s32.totalorder %s22, 1
      %p87 = por %p85, %p86
      %p88 = scmp.ne.s32.totalorder %s77, %s78
      %p89 = scmp.eq.s32.totalorder %s22, 0
      %p90 = por %p88, %p89
      %p91 = scmp.ne.s32.totalorder %s77, %s78
      %p92 = scmp.eq.s32.totalorder %s23, 1
      %p93 = por %p91, %p92
      %p95 = scmp.ne.s32.totalorder %s78, %s94
      %p96 = scmp.eq.s32.totalorder %s23, 0
      %p97 = por %p95, %p96
      %s98 = ssub.s32 %s17, %s24
      %p99 = scmp.eq.s32.totalorder %s98, 0
      %s101 = sadd.s32 %s100, 1
      %s102 = scalar_select %p99, %s100, %s101
      %p105 = pneg %p99
      %p106 = scmp.eq.s32.totalorder %s17, 1
      %p107 = por %p105, %p106
      %p108 = scmp.ne.s32.totalorder %s100, %s103
      %p109 = scmp.eq.s32.totalorder %s17, 0
      %p110 = por %p108, %p109
      %p111 = scmp.ne.s32.totalorder %s100, %s103
      %p112 = scmp.eq.s32.totalorder %s22, 1
      %p113 = por %p111, %p112
      %p114 = scmp.ne.s32.totalorder %s103, %s104
      %p115 = scmp.eq.s32.totalorder %s22, 0
      %p116 = por %p114, %p115
      %p117 = scmp.ne.s32.totalorder %s103, %s104
      %p118 = scmp.eq.s32.totalorder %s23, 1
      %p119 = por %p117, %p118
      %p121 = scmp.ne.s32.totalorder %s104, %s120
      %p122 = scmp.eq.s32.totalorder %s23, 0
      %p123 = por %p121, %p122
      %s124 = ssub.s32 %s17, %s24
      %p125 = scmp.eq.s32.totalorder %s124, 0
      %s127 = sadd.s32 %s126, 1
      %s128 = scalar_select %p125, %s126, %s127
      %p131 = pneg %p125
      %p132 = scmp.eq.s32.totalorder %s17, 1
      %p133 = por %p131, %p132
      %p134 = scmp.ne.s32.totalorder %s126, %s129
      %p135 = scmp.eq.s32.totalorder %s17, 0
      %p136 = por %p134, %p135
      %p137 = scmp.ne.s32.totalorder %s126, %s129
      %p138 = scmp.eq.s32.totalorder %s22, 1
      %p139 = por %p137, %p138
      %p140 = scmp.ne.s32.totalorder %s129, %s130
      %p141 = scmp.eq.s32.totalorder %s22, 0
      %p142 = por %p140, %p141
      %p143 = scmp.ne.s32.totalorder %s129, %s130
      %p144 = scmp.eq.s32.totalorder %s23, 1
      %p145 = por %p143, %p144
      %p147 = scmp.ne.s32.totalorder %s130, %s146
      %p148 = scmp.eq.s32.totalorder %s23, 0
      %p149 = por %p147, %p148
      %s150 = ssub.s32 %s17, %s24
      %p151 = scmp.eq.s32.totalorder %s150, 0
      %s153 = sadd.s32 %s152, 1
      %s154 = scalar_select %p151, %s152, %s153
      %p157 = pneg %p151
      %p158 = scmp.eq.s32.totalorder %s17, 1
      %p159 = por %p157, %p158
      %p160 = scmp.ne.s32.totalorder %s152, %s155
      %p161 = scmp.eq.s32.totalorder %s17, 0
      %p162 = por %p160, %p161
      %p163 = scmp.ne.s32.totalorder %s152, %s155
      %p164 = scmp.eq.s32.totalorder %s22, 1
      %p165 = por %p163, %p164
      %p166 = scmp.ne.s32.totalorder %s155, %s156
      %p167 = scmp.eq.s32.totalorder %s22, 0
      %p168 = por %p166, %p167
      %p169 = scmp.ne.s32.totalorder %s155, %s156
      %p170 = scmp.eq.s32.totalorder %s23, 1
      %p171 = por %p169, %p170
      %p173 = scmp.ne.s32.totalorder %s156, %s172
      %p174 = scmp.eq.s32.totalorder %s23, 0
      %p175 = por %p173, %p174
      %p176 = scmp.le.s32.totalorder 1, %s17
      %p177 = scmp.lt.s32.totalorder %s17, 3
      %p178 = pnand %p176, %p177
      %p179 = pneg %p178
      // Predicated region
      $region9: #{model_graphrel_forward.4} parent=5 // pred_check
        _
      $region10: #{model_graphrel_forward.4} parent=5 // pred_check_branch
        %181 = sbr.rel (%p178) target = $region12
      $region11: #{model_graphrel_forward.4} parent=5 // pred_region
        %s182 = ssub.s32 %s17, 1
        // Predicated region
        $region13: #{model_graphrel_forward.4} parent=11 // pred_check
          %p183 = pneg %p38
        $region14: #{model_graphrel_forward.4} parent=11 // pred_check_branch
          %185 = sbr.rel (%p183) target = $region16
        $region15: #{model_graphrel_forward.4} parent=11 // pred_region
          _
        $region16: #{model_graphrel_forward.4} parent=11 // pred_fallthru
          _
      $region12: #{model_graphrel_forward.4} parent=5 // pred_fallthru
        _
      %p186 = scmp.lt.s32.totalorder %s17, 2
      // Predicated region
      $region17: #{model_graphrel_forward.4} parent=5 // pred_check
        %p187 = pneg %p186
      $region18: #{model_graphrel_forward.4} parent=5 // pred_check_branch
        %189 = sbr.rel (%p187) target = $region20
      $region19: #{model_graphrel_forward.4} parent=5 // pred_region
        // Predicated region
        $region21: #{model_graphrel_forward.4} parent=19 // pred_check
          %p190 = pneg %p58
        $region22: #{model_graphrel_forward.4} parent=19 // pred_check_branch
          %192 = sbr.rel (%p190) target = $region24
        $region23: #{model_graphrel_forward.4} parent=19 // pred_region
          %s193 = sand.u32 %s48, 1
          %s194 = scalar_lea.sflag [#allocation5], %s193
          %s195 = sand.u32 %s48, 1
          %s196 = smul.addr %s195, 32
          %s197 = scalar_lea.vmem [#allocation4], %s196
          %s199 = ssub.s32 512, 512
          %200 = vsyncadd %s194, %s199
          %s201 = smul.addr %s17, 4
          %s202 = smul.addr %s201, 128
          %s203 = scalar_lea.hbm %s1, %s202
          %s204 = sshll.u32 %s197, 4
          %s205 = int_to_ptr.vmem [resolvable:$true] %s204
          %210 = dma.hbm_to_vmem [thread:$0]  %s203, 512, %s205, %s194, 128, 128, 8
        $region24: #{model_graphrel_forward.4} parent=19 // pred_fallthru
          _
        // Predicated region
        $region25: #{model_graphrel_forward.4} parent=19 // pred_check
          %p211 = pneg %p84
        $region26: #{model_graphrel_forward.4} parent=19 // pred_check_branch
          %213 = sbr.rel (%p211) target = $region28
        $region27: #{model_graphrel_forward.4} parent=19 // pred_region
          %s214 = sand.u32 %s74, 1
          %s215 = scalar_lea.sflag [#allocation7], %s214
          %s216 = sand.u32 %s74, 1
          %s217 = smul.addr %s216, 32
          %s218 = scalar_lea.vmem [#allocation6], %s217
          %s220 = ssub.s32 512, 512
          %221 = vsyncadd %s215, %s220
          %s222 = smul.addr %s17, 4
          %s223 = smul.addr %s222, 128
          %s224 = scalar_lea.hbm %s2, %s223
          %s225 = sshll.u32 %s218, 4
          %s226 = int_to_ptr.vmem [resolvable:$true] %s225
          %231 = dma.hbm_to_vmem [thread:$0]  %s224, 512, %s226, %s215, 128, 128, 8
        $region28: #{model_graphrel_forward.4} parent=19 // pred_fallthru
          _
        // Predicated region
        $region29: #{model_graphrel_forward.4} parent=19 // pred_check
          %p232 = pneg %p110
        $region30: #{model_graphrel_forward.4} parent=19 // pred_check_branch
          %234 = sbr.rel (%p232) target = $region32
        $region31: #{model_graphrel_forward.4} parent=19 // pred_region
          %p235 = scmp.lt.s32.totalorder %s17, 1
          %s236 = scalar_select %p235, %s17, 1
          %s237 = scalar_lea.vmem %s3, %s236
        $region32: #{model_graphrel_forward.4} parent=19 // pred_fallthru
          _
        // Predicated region
        $region33: #{model_graphrel_forward.4} parent=19 // pred_check
          %p238 = pneg %p136
        $region34: #{model_graphrel_forward.4} parent=19 // pred_check_branch
          %240 = sbr.rel (%p238) target = $region36
        $region35: #{model_graphrel_forward.4} parent=19 // pred_region
          %p241 = scmp.lt.s32.totalorder %s17, 1
          %s242 = scalar_select %p241, %s17, 1
          %s243 = scalar_lea.vmem %s4, %s242
        $region36: #{model_graphrel_forward.4} parent=19 // pred_fallthru
          _
      $region20: #{model_graphrel_forward.4} parent=5 // pred_fallthru
        _
      %p244 = scmp.le.s32.totalorder 1, %s17
      %p245 = scmp.lt.s32.totalorder %s17, 3
      %p246 = pnand %p244, %p245
      %p247 = pneg %p246
      // Predicated region
      $region37: #{model_graphrel_forward.4} parent=5 // pred_check
        _
      $region38: #{model_graphrel_forward.4} parent=5 // pred_check_branch
        %249 = sbr.rel (%p246) target = $region40
      $region39: #{model_graphrel_forward.4} parent=5 // pred_region
        %s250 = ssub.s32 %s17, 1
        %s251 = sand.u32 %s51, 1
        %s252 = scalar_lea.sflag [#allocation5], %s251
        %s253 = sand.u32 %s51, 1
        %s254 = smul.addr %s253, 32
        %s255 = scalar_lea.vmem [#allocation4], %s254
        // Predicated region
        $region41: #{model_graphrel_forward.4} parent=39 // pred_check
          %p256 = pneg %p64
        $region42: #{model_graphrel_forward.4} parent=39 // pred_check_branch
          %258 = sbr.rel (%p256) target = $region44
        $region43: #{model_graphrel_forward.4} parent=39 // pred_region
          %259 = dma.done %s252, 512
        $region44: #{model_graphrel_forward.4} parent=39 // pred_fallthru
          _
        %s260 = sand.u32 %s77, 1
        %s261 = scalar_lea.sflag [#allocation7], %s260
        %s262 = sand.u32 %s77, 1
        %s263 = smul.addr %s262, 32
        %s264 = scalar_lea.vmem [#allocation6], %s263
        // Predicated region
        $region45: #{model_graphrel_forward.4} parent=39 // pred_check
          %p265 = pneg %p90
        $region46: #{model_graphrel_forward.4} parent=39 // pred_check_branch
          %267 = sbr.rel (%p265) target = $region48
        $region47: #{model_graphrel_forward.4} parent=39 // pred_region
          %268 = dma.done %s261, 512
        $region48: #{model_graphrel_forward.4} parent=39 // pred_fallthru
          _
        %p269 = pneg %p38
        %p270 = pneg %p35
        %s271 = sand.u32 %s51, 1
        %s272 = scalar_lea.sflag [#allocation5], %s271
        %s273 = sand.u32 %s51, 1
        %s274 = smul.addr %s273, 32
        %s275 = scalar_lea.vmem [#allocation4], %s274
        %p276 = pneg %p64
        %p277 = pneg %p61
        %s278 = sand.u32 %s77, 1
        %s279 = scalar_lea.sflag [#allocation7], %s278
        %s280 = sand.u32 %s77, 1
        %s281 = smul.addr %s280, 32
        %s282 = scalar_lea.vmem [#allocation6], %s281
        %p283 = pneg %p90
        %p284 = pneg %p87
        %p285 = scmp.lt.s32.totalorder %s22, 1
        %s286 = scalar_select %p285, %s22, 1
        %s287 = scalar_lea.vmem %s3, %s286
        %p288 = pneg %p116
        %p289 = pneg %p113
        %p290 = scmp.lt.s32.totalorder %s22, 1
        %s291 = scalar_select %p290, %s22, 1
        %s292 = scalar_lea.vmem %s4, %s291
        %p293 = pneg %p142
        %p294 = pneg %p139
        %p295 = pneg %p168
        %p296 = pneg %p165
        %p297 = scmp.lt.s32.totalorder %s22, 1
        %s298 = scalar_select %p297, %s22, 1
        %s299 = smul.addr %s298, 8
        %s300 = smul.addr %s299, 2
        %s301 = scalar_lea.vmem %s5, %s300
        %p302 = scmp.lt.s32.totalorder %s22, 1
        %s303 = scalar_select %p302, %s22, 1
        %s304 = scalar_lea.vmem %s3, %s303
        %p305 = scmp.lt.s32.totalorder %s22, 1
        %s306 = scalar_select %p305, %s22, 1
        %s307 = scalar_lea.vmem %s4, %s306
        %p308 = scmp.lt.s32.totalorder %s22, 1
        %s309 = scalar_select %p308, %s22, 1
        %s310 = smul.addr %s309, 8
        %s311 = smul.addr %s310, 2
        %s312 = scalar_lea.vmem %s5, %s311
        %v313 = vld [vmem:[%s255] sm:$0xff]
        %v314 = vld [vmem:[%s255 + $0x8] sm:$0xff]
        %v315 = vld [vmem:[%s255 + $0x10] sm:$0xff]
        %v316 = vld [vmem:[%s255 + $0x18] sm:$0xff]
        %v317 = vld [vmem:[%s264] sm:$0xff]
        %v318 = vld [vmem:[%s264 + $0x8] sm:$0xff]
        %v319 = vld [vmem:[%s264 + $0x10] sm:$0xff]
        %v320 = vld [vmem:[%s264 + $0x18] sm:$0xff]
        %v321 = vld [vmem:[%s304] sm:$0x1]
        %v322 = vld [vmem:[%s307] sm:$0x1]
        %v323 = vld [vmem:[%s0] sm:$0x3]
        %v325 = vlaneseq
        %v326 = vshrl.u32 %v325, 7
        %v327 = vsub.s32 0, %v326
        %v328 = vrot.slane %v321, %v327
        %vm330 = vcmask 261120
        %v332 = vsel %vm330, %v323, 0
        %334 = vmatprep.subr.mxu0 0.0
        %335 = vmatpush1.msra.mxu0 %v313
        %336 = vmatprep.subr.mxu0 0.0
        %337 = vmatpush1.msra.mxu0 %v314
        %338 = vmatprep.subr.mxu0 0.0
        %339 = vmatpush1.msra.mxu0 %v315
        %340 = vmatprep.subr.mxu0 0.0
        %341 = vmatpush1.msra.mxu0 %v316
        %342 = vmatprep.subr.mxu0 0.0
        %343 = vmatpush1.msra.mxu0 0.0
        %344 = vmatprep.subr.mxu0 0.0
        %345 = vmatpush1.msra.mxu0 0.0
        %346 = vmatprep.subr.mxu0 0.0
        %347 = vmatpush1.msra.mxu0 0.0
        %348 = vmatprep.subr.mxu0 0.0
        %349 = vmatpush1.msra.mxu0 0.0
        %350 = vmatprep.subr.mxu0 0.0
        %351 = vmatpush1.msra.mxu0 0.0
        %352 = vmatprep.subr.mxu0 0.0
        %353 = vmatpush1.msra.mxu0 0.0
        %354 = vmatprep.subr.mxu0 0.0
        %355 = vmatpush1.msra.mxu0 0.0
        %356 = vmatprep.subr.mxu0 0.0
        %357 = vmatpush1.msra.mxu0 0.0
        %358 = vmatprep.subr.mxu0 0.0
        %359 = vmatpush1.msra.mxu0 0.0
        %360 = vmatprep.subr.mxu0 0.0
        %361 = vmatpush1.msra.mxu0 0.0
        %362 = vmatprep.subr.mxu0 0.0
        %363 = vmatpush1.msra.mxu0 0.0
        %364 = vmatprep.subr.mxu0 0.0
        %365 = vmatpush1.msra.mxu0 0.0
        %366 = vmatprep.subr.mxu0 0.0
        %367 = vmatpush1.msra.mxu0 0.0
        %368 = vmatprep.subr.mxu0 0.0
        %369 = vmatpush1.msra.mxu0 0.0
        %370 = vmatprep.subr.mxu0 0.0
        %371 = vmatpush1.msra.mxu0 0.0
        %372 = vmatprep.subr.mxu0 0.0
        %373 = vmatpush1.msra.mxu0 0.0
        %374 = vmatprep.subr.mxu0 0.0
        %375 = vmatpush1.msra.mxu0 0.0
        %376 = vmatprep.subr.mxu0 0.0
        %377 = vmatpush1.msra.mxu0 0.0
        %378 = vmatprep.subr.mxu0 0.0
        %379 = vmatpush1.msra.mxu0 0.0
        %380 = vmatprep.subr.mxu0 0.0
        %381 = vmatpush1.msra.mxu0 0.0
        %382 = vmatprep.subr.mxu0 0.0
        %383 = vmatpush1.msra.mxu0 0.0
        %384 = vmatprep.subr.mxu0 0.0
        %385 = vmatpush1.msra.mxu0 0.0
        %386 = vmatprep.subr.mxu0 0.0
        %387 = vmatpush1.msra.mxu0 0.0
        %388 = vmatprep.subr.mxu0 0.0
        %389 = vmatpush1.msra.mxu0 0.0
        %390 = vmatprep.subr.mxu0 0.0
        %391 = vmatpush1.msra.mxu0 0.0
        %392 = vmatprep.subr.mxu0 0.0
        %393 = vmatpush1.msra.mxu0 0.0
        %394 = vmatprep.subr.mxu0 0.0
        %395 = vmatpush1.msra.mxu0 0.0
        %396 = vmatprep.subr.mxu0 0.0
        %397 = vmatpush1.msra.mxu0 0.0
        %398 = vmatprep.mubr.f32.mxu0 0.0
        %399 = vmatmul.mubr.f32.gmra.mrb[0].mxu0 %v332
        %v400 = vpop.f32.mrb[0].mxu0
        %v401 = vadd.f32 %v328, %v400
        %v402 = vpop.f32.mrb[0].mxu0
        %403 = vdwg.mxu0
        %vm404 = vcmask 779264
        %405 = vst.msk [vmem:[#allocation2] sm:$0x3] %vm404, %v401
        %s406 = scalar_lea.vmem %s0, 2
        %v407 = vld [vmem:[%s406] sm:$0x3]
        %v409 = vsel %vm330, %v407, 0
        %411 = vmatprep.subr.mxu0 0.0
        %412 = vmatpush1.msra.mxu0 %v313
        %413 = vmatprep.subr.mxu0 0.0
        %414 = vmatpush1.msra.mxu0 %v314
        %415 = vmatprep.subr.mxu0 0.0
        %416 = vmatpush1.msra.mxu0 %v315
        %417 = vmatprep.subr.mxu0 0.0
        %418 = vmatpush1.msra.mxu0 %v316
        %419 = vmatprep.subr.mxu0 0.0
        %420 = vmatpush1.msra.mxu0 0.0
        %421 = vmatprep.subr.mxu0 0.0
        %422 = vmatpush1.msra.mxu0 0.0
        %423 = vmatprep.subr.mxu0 0.0
        %424 = vmatpush1.msra.mxu0 0.0
        %425 = vmatprep.subr.mxu0 0.0
        %426 = vmatpush1.msra.mxu0 0.0
        %427 = vmatprep.subr.mxu0 0.0
        %428 = vmatpush1.msra.mxu0 0.0
        %429 = vmatprep.subr.mxu0 0.0
        %430 = vmatpush1.msra.mxu0 0.0
        %431 = vmatprep.subr.mxu0 0.0
        %432 = vmatpush1.msra.mxu0 0.0
        %433 = vmatprep.subr.mxu0 0.0
        %434 = vmatpush1.msra.mxu0 0.0
        %435 = vmatprep.subr.mxu0 0.0
        %436 = vmatpush1.msra.mxu0 0.0
        %437 = vmatprep.subr.mxu0 0.0
        %438 = vmatpush1.msra.mxu0 0.0
        %439 = vmatprep.subr.mxu0 0.0
        %440 = vmatpush1.msra.mxu0 0.0
        %441 = vmatprep.subr.mxu0 0.0
        %442 = vmatpush1.msra.mxu0 0.0
        %443 = vmatprep.subr.mxu0 0.0
        %444 = vmatpush1.msra.mxu0 0.0
        %445 = vmatprep.subr.mxu0 0.0
        %446 = vmatpush1.msra.mxu0 0.0
        %447 = vmatprep.subr.mxu0 0.0
        %448 = vmatpush1.msra.mxu0 0.0
        %449 = vmatprep.subr.mxu0 0.0
        %450 = vmatpush1.msra.mxu0 0.0
        %451 = vmatprep.subr.mxu0 0.0
        %452 = vmatpush1.msra.mxu0 0.0
        %453 = vmatprep.subr.mxu0 0.0
        %454 = vmatpush1.msra.mxu0 0.0
        %455 = vmatprep.subr.mxu0 0.0
        %456 = vmatpush1.msra.mxu0 0.0
        %457 = vmatprep.subr.mxu0 0.0
        %458 = vmatpush1.msra.mxu0 0.0
        %459 = vmatprep.subr.mxu0 0.0
        %460 = vmatpush1.msra.mxu0 0.0
        %461 = vmatprep.subr.mxu0 0.0
        %462 = vmatpush1.msra.mxu0 0.0
        %463 = vmatprep.subr.mxu0 0.0
        %464 = vmatpush1.msra.mxu0 0.0
        %465 = vmatprep.subr.mxu0 0.0
        %466 = vmatpush1.msra.mxu0 0.0
        %467 = vmatprep.subr.mxu0 0.0
        %468 = vmatpush1.msra.mxu0 0.0
        %469 = vmatprep.subr.mxu0 0.0
        %470 = vmatpush1.msra.mxu0 0.0
        %471 = vmatprep.subr.mxu0 0.0
        %472 = vmatpush1.msra.mxu0 0.0
        %473 = vmatprep.subr.mxu0 0.0
        %474 = vmatpush1.msra.mxu0 0.0
        %475 = vmatprep.mubr.f32.mxu0 0.0
        %476 = vmatmul.mubr.f32.gmra.mrb[0].mxu0 %v409
        %v477 = vpop.f32.mrb[0].mxu0
        %v478 = vadd.f32 %v328, %v477
        %v479 = vpop.f32.mrb[0].mxu0
        %480 = vdwg.mxu0
        %s481 = scalar_lea.vmem [#allocation2], 2
        %482 = vst.msk [vmem:[%s481] sm:$0x3] %vm404, %v478
        %s483 = scalar_lea.vmem %s0, 4
        %v484 = vld [vmem:[%s483] sm:$0x3]
        %v486 = vsel %vm330, %v484, 0
        %488 = vmatprep.subr.mxu0 0.0
        %489 = vmatpush1.msra.mxu0 %v313
        %490 = vmatprep.subr.mxu0 0.0
        %491 = vmatpush1.msra.mxu0 %v314
        %492 = vmatprep.subr.mxu0 0.0
        %493 = vmatpush1.msra.mxu0 %v315
        %494 = vmatprep.subr.mxu0 0.0
        %495 = vmatpush1.msra.mxu0 %v316
        %496 = vmatprep.subr.mxu0 0.0
        %497 = vmatpush1.msra.mxu0 0.0
        %498 = vmatprep.subr.mxu0 0.0
        %499 = vmatpush1.msra.mxu0 0.0
        %500 = vmatprep.subr.mxu0 0.0
        %501 = vmatpush1.msra.mxu0 0.0
        %502 = vmatprep.subr.mxu0 0.0
        %503 = vmatpush1.msra.mxu0 0.0
        %504 = vmatprep.subr.mxu0 0.0
        %505 = vmatpush1.msra.mxu0 0.0
        %506 = vmatprep.subr.mxu0 0.0
        %507 = vmatpush1.msra.mxu0 0.0
        %508 = vmatprep.subr.mxu0 0.0
        %509 = vmatpush1.msra.mxu0 0.0
        %510 = vmatprep.subr.mxu0 0.0
        %511 = vmatpush1.msra.mxu0 0.0
        %512 = vmatprep.subr.mxu0 0.0
        %513 = vmatpush1.msra.mxu0 0.0
        %514 = vmatprep.subr.mxu0 0.0
        %515 = vmatpush1.msra.mxu0 0.0
        %516 = vmatprep.subr.mxu0 0.0
        %517 = vmatpush1.msra.mxu0 0.0
        %518 = vmatprep.subr.mxu0 0.0
        %519 = vmatpush1.msra.mxu0 0.0
        %520 = vmatprep.subr.mxu0 0.0
        %521 = vmatpush1.msra.mxu0 0.0
        %522 = vmatprep.subr.mxu0 0.0
        %523 = vmatpush1.msra.mxu0 0.0
        %524 = vmatprep.subr.mxu0 0.0
        %525 = vmatpush1.msra.mxu0 0.0
        %526 = vmatprep.subr.mxu0 0.0
        %527 = vmatpush1.msra.mxu0 0.0
        %528 = vmatprep.subr.mxu0 0.0
        %529 = vmatpush1.msra.mxu0 0.0
        %530 = vmatprep.subr.mxu0 0.0
        %531 = vmatpush1.msra.mxu0 0.0
        %532 = vmatprep.subr.mxu0 0.0
        %533 = vmatpush1.msra.mxu0 0.0
        %534 = vmatprep.subr.mxu0 0.0
        %535 = vmatpush1.msra.mxu0 0.0
        %536 = vmatprep.subr.mxu0 0.0
        %537 = vmatpush1.msra.mxu0 0.0
        %538 = vmatprep.subr.mxu0 0.0
        %539 = vmatpush1.msra.mxu0 0.0
        %540 = vmatprep.subr.mxu0 0.0
        %541 = vmatpush1.msra.mxu0 0.0
        %542 = vmatprep.subr.mxu0 0.0
        %543 = vmatpush1.msra.mxu0 0.0
        %544 = vmatprep.subr.mxu0 0.0
        %545 = vmatpush1.msra.mxu0 0.0
        %546 = vmatprep.subr.mxu0 0.0
        %547 = vmatpush1.msra.mxu0 0.0
        %548 = vmatprep.subr.mxu0 0.0
        %549 = vmatpush1.msra.mxu0 0.0
        %550 = vmatprep.subr.mxu0 0.0
        %551 = vmatpush1.msra.mxu0 0.0
        %552 = vmatprep.mubr.f32.mxu0 0.0
        %553 = vmatmul.mubr.f32.gmra.mrb[0].mxu0 %v486
        %v554 = vpop.f32.mrb[0].mxu0
        %v555 = vadd.f32 %v328, %v554
        %v556 = vpop.f32.mrb[0].mxu0
        %557 = vdwg.mxu0
        %s558 = scalar_lea.vmem [#allocation2], 4
        %559 = vst.msk [vmem:[%s558] sm:$0x3] %vm404, %v555
        %s560 = scalar_lea.vmem %s0, 6
        %v561 = vld [vmem:[%s560] sm:$0x3]
        %v563 = vsel %vm330, %v561, 0
        %565 = vmatprep.subr.mxu0 0.0
        %566 = vmatpush1.msra.mxu0 %v313
        %567 = vmatprep.subr.mxu0 0.0
        %568 = vmatpush1.msra.mxu0 %v314
        %569 = vmatprep.subr.mxu0 0.0
        %570 = vmatpush1.msra.mxu0 %v315
        %571 = vmatprep.subr.mxu0 0.0
        %572 = vmatpush1.msra.mxu0 %v316
        %573 = vmatprep.subr.mxu0 0.0
        %574 = vmatpush1.msra.mxu0 0.0
        %575 = vmatprep.subr.mxu0 0.0
        %576 = vmatpush1.msra.mxu0 0.0
        %577 = vmatprep.subr.mxu0 0.0
        %578 = vmatpush1.msra.mxu0 0.0
        %579 = vmatprep.subr.mxu0 0.0
        %580 = vmatpush1.msra.mxu0 0.0
        %581 = vmatprep.subr.mxu0 0.0
        %582 = vmatpush1.msra.mxu0 0.0
        %583 = vmatprep.subr.mxu0 0.0
        %584 = vmatpush1.msra.mxu0 0.0
        %585 = vmatprep.subr.mxu0 0.0
        %586 = vmatpush1.msra.mxu0 0.0
        %587 = vmatprep.subr.mxu0 0.0
        %588 = vmatpush1.msra.mxu0 0.0
        %589 = vmatprep.subr.mxu0 0.0
        %590 = vmatpush1.msra.mxu0 0.0
        %591 = vmatprep.subr.mxu0 0.0
        %592 = vmatpush1.msra.mxu0 0.0
        %593 = vmatprep.subr.mxu0 0.0
        %594 = vmatpush1.msra.mxu0 0.0
        %595 = vmatprep.subr.mxu0 0.0
        %596 = vmatpush1.msra.mxu0 0.0
        %597 = vmatprep.subr.mxu0 0.0
        %598 = vmatpush1.msra.mxu0 0.0
        %599 = vmatprep.subr.mxu0 0.0
        %600 = vmatpush1.msra.mxu0 0.0
        %601 = vmatprep.subr.mxu0 0.0
        %602 = vmatpush1.msra.mxu0 0.0
        %603 = vmatprep.subr.mxu0 0.0
        %604 = vmatpush1.msra.mxu0 0.0
        %605 = vmatprep.subr.mxu0 0.0
        %606 = vmatpush1.msra.mxu0 0.0
        %607 = vmatprep.subr.mxu0 0.0
        %608 = vmatpush1.msra.mxu0 0.0
        %609 = vmatprep.subr.mxu0 0.0
        %610 = vmatpush1.msra.mxu0 0.0
        %611 = vmatprep.subr.mxu0 0.0
        %612 = vmatpush1.msra.mxu0 0.0
        %613 = vmatprep.subr.mxu0 0.0
        %614 = vmatpush1.msra.mxu0 0.0
        %615 = vmatprep.subr.mxu0 0.0
        %616 = vmatpush1.msra.mxu0 0.0
        %617 = vmatprep.subr.mxu0 0.0
        %618 = vmatpush1.msra.mxu0 0.0
        %619 = vmatprep.subr.mxu0 0.0
        %620 = vmatpush1.msra.mxu0 0.0
        %621 = vmatprep.subr.mxu0 0.0
        %622 = vmatpush1.msra.mxu0 0.0
        %623 = vmatprep.subr.mxu0 0.0
        %624 = vmatpush1.msra.mxu0 0.0
        %625 = vmatprep.subr.mxu0 0.0
        %626 = vmatpush1.msra.mxu0 0.0
        %627 = vmatprep.subr.mxu0 0.0
        %628 = vmatpush1.msra.mxu0 0.0
        %629 = vmatprep.mubr.f32.mxu0 0.0
        %630 = vmatmul.mubr.f32.gmra.mrb[0].mxu0 %v563
        %v631 = vpop.f32.mrb[0].mxu0
        %v632 = vadd.f32 %v328, %v631
        %v633 = vpop.f32.mrb[0].mxu0
        %634 = vdwg.mxu0
        %s635 = scalar_lea.vmem [#allocation2], 6
        %636 = vst.msk [vmem:[%s635] sm:$0x3] %vm404, %v632
        %s637 = scalar_lea.vmem %s0, 8
        %v638 = vld [vmem:[%s637] sm:$0x3]
        %v640 = vsel %vm330, %v638, 0
        %642 = vmatprep.subr.mxu0 0.0
        %643 = vmatpush1.msra.mxu0 %v313
        %644 = vmatprep.subr.mxu0 0.0
        %645 = vmatpush1.msra.mxu0 %v314
        %646 = vmatprep.subr.mxu0 0.0
        %647 = vmatpush1.msra.mxu0 %v315
        %648 = vmatprep.subr.mxu0 0.0
        %649 = vmatpush1.msra.mxu0 %v316
        %650 = vmatprep.subr.mxu0 0.0
        %651 = vmatpush1.msra.mxu0 0.0
        %652 = vmatprep.subr.mxu0 0.0
        %653 = vmatpush1.msra.mxu0 0.0
        %654 = vmatprep.subr.mxu0 0.0
        %655 = vmatpush1.msra.mxu0 0.0
        %656 = vmatprep.subr.mxu0 0.0
        %657 = vmatpush1.msra.mxu0 0.0
        %658 = vmatprep.subr.mxu0 0.0
        %659 = vmatpush1.msra.mxu0 0.0
        %660 = vmatprep.subr.mxu0 0.0
        %661 = vmatpush1.msra.mxu0 0.0
        %662 = vmatprep.subr.mxu0 0.0
        %663 = vmatpush1.msra.mxu0 0.0
        %664 = vmatprep.subr.mxu0 0.0
        %665 = vmatpush1.msra.mxu0 0.0
        %666 = vmatprep.subr.mxu0 0.0
        %667 = vmatpush1.msra.mxu0 0.0
        %668 = vmatprep.subr.mxu0 0.0
        %669 = vmatpush1.msra.mxu0 0.0
        %670 = vmatprep.subr.mxu0 0.0
        %671 = vmatpush1.msra.mxu0 0.0
        %672 = vmatprep.subr.mxu0 0.0
        %673 = vmatpush1.msra.mxu0 0.0
        %674 = vmatprep.subr.mxu0 0.0
        %675 = vmatpush1.msra.mxu0 0.0
        %676 = vmatprep.subr.mxu0 0.0
        %677 = vmatpush1.msra.mxu0 0.0
        %678 = vmatprep.subr.mxu0 0.0
        %679 = vmatpush1.msra.mxu0 0.0
        %680 = vmatprep.subr.mxu0 0.0
        %681 = vmatpush1.msra.mxu0 0.0
        %682 = vmatprep.subr.mxu0 0.0
        %683 = vmatpush1.msra.mxu0 0.0
        %684 = vmatprep.subr.mxu0 0.0
        %685 = vmatpush1.msra.mxu0 0.0
        %686 = vmatprep.subr.mxu0 0.0
        %687 = vmatpush1.msra.mxu0 0.0
        %688 = vmatprep.subr.mxu0 0.0
        %689 = vmatpush1.msra.mxu0 0.0
        %690 = vmatprep.subr.mxu0 0.0
        %691 = vmatpush1.msra.mxu0 0.0
        %692 = vmatprep.subr.mxu0 0.0
        %693 = vmatpush1.msra.mxu0 0.0
        %694 = vmatprep.subr.mxu0 0.0
        %695 = vmatpush1.msra.mxu0 0.0
        %696 = vmatprep.subr.mxu0 0.0
        %697 = vmatpush1.msra.mxu0 0.0
        %698 = vmatprep.subr.mxu0 0.0
        %699 = vmatpush1.msra.mxu0 0.0
        %700 = vmatprep.subr.mxu0 0.0
        %701 = vmatpush1.msra.mxu0 0.0
        %702 = vmatprep.subr.mxu0 0.0
        %703 = vmatpush1.msra.mxu0 0.0
        %704 = vmatprep.subr.mxu0 0.0
        %705 = vmatpush1.msra.mxu0 0.0
        %706 = vmatprep.mubr.f32.mxu0 0.0
        %707 = vmatmul.mubr.f32.gmra.mrb[0].mxu0 %v640
        %v708 = vpop.f32.mrb[0].mxu0
        %v709 = vadd.f32 %v328, %v708
        %v710 = vpop.f32.mrb[0].mxu0
        %711 = vdwg.mxu0
        %s712 = scalar_lea.vmem [#allocation2], 8
        %713 = vst.msk [vmem:[%s712] sm:$0x3] %vm404, %v709
        %s714 = scalar_lea.vmem %s0, 10
        %v715 = vld [vmem:[%s714] sm:$0x3]
        %v717 = vsel %vm330, %v715, 0
        %719 = vmatprep.subr.mxu0 0.0
        %720 = vmatpush1.msra.mxu0 %v313
        %721 = vmatprep.subr.mxu0 0.0
        %722 = vmatpush1.msra.mxu0 %v314
        %723 = vmatprep.subr.mxu0 0.0
        %724 = vmatpush1.msra.mxu0 %v315
        %725 = vmatprep.subr.mxu0 0.0
        %726 = vmatpush1.msra.mxu0 %v316
        %727 = vmatprep.subr.mxu0 0.0
        %728 = vmatpush1.msra.mxu0 0.0
        %729 = vmatprep.subr.mxu0 0.0
        %730 = vmatpush1.msra.mxu0 0.0
        %731 = vmatprep.subr.mxu0 0.0
        %732 = vmatpush1.msra.mxu0 0.0
        %733 = vmatprep.subr.mxu0 0.0
        %734 = vmatpush1.msra.mxu0 0.0
        %735 = vmatprep.subr.mxu0 0.0
        %736 = vmatpush1.msra.mxu0 0.0
        %737 = vmatprep.subr.mxu0 0.0
        %738 = vmatpush1.msra.mxu0 0.0
        %739 = vmatprep.subr.mxu0 0.0
        %740 = vmatpush1.msra.mxu0 0.0
        %741 = vmatprep.subr.mxu0 0.0
        %742 = vmatpush1.msra.mxu0 0.0
        %743 = vmatprep.subr.mxu0 0.0
        %744 = vmatpush1.msra.mxu0 0.0
        %745 = vmatprep.subr.mxu0 0.0
        %746 = vmatpush1.msra.mxu0 0.0
        %747 = vmatprep.subr.mxu0 0.0
        %748 = vmatpush1.msra.mxu0 0.0
        %749 = vmatprep.subr.mxu0 0.0
        %750 = vmatpush1.msra.mxu0 0.0
        %751 = vmatprep.subr.mxu0 0.0
        %752 = vmatpush1.msra.mxu0 0.0
        %753 = vmatprep.subr.mxu0 0.0
        %754 = vmatpush1.msra.mxu0 0.0
        %755 = vmatprep.subr.mxu0 0.0
        %756 = vmatpush1.msra.mxu0 0.0
        %757 = vmatprep.subr.mxu0 0.0
        %758 = vmatpush1.msra.mxu0 0.0
        %759 = vmatprep.subr.mxu0 0.0
        %760 = vmatpush1.msra.mxu0 0.0
        %761 = vmatprep.subr.mxu0 0.0
        %762 = vmatpush1.msra.mxu0 0.0
        %763 = vmatprep.subr.mxu0 0.0
        %764 = vmatpush1.msra.mxu0 0.0
        %765 = vmatprep.subr.mxu0 0.0
        %766 = vmatpush1.msra.mxu0 0.0
        %767 = vmatprep.subr.mxu0 0.0
        %768 = vmatpush1.msra.mxu0 0.0
        %769 = vmatprep.subr.mxu0 0.0
        %770 = vmatpush1.msra.mxu0 0.0
        %771 = vmatprep.subr.mxu0 0.0
        %772 = vmatpush1.msra.mxu0 0.0
        %773 = vmatprep.subr.mxu0 0.0
        %774 = vmatpush1.msra.mxu0 0.0
        %775 = vmatprep.subr.mxu0 0.0
        %776 = vmatpush1.msra.mxu0 0.0
        %777 = vmatprep.subr.mxu0 0.0
        %778 = vmatpush1.msra.mxu0 0.0
        %779 = vmatprep.subr.mxu0 0.0
        %780 = vmatpush1.msra.mxu0 0.0
        %781 = vmatprep.subr.mxu0 0.0
        %782 = vmatpush1.msra.mxu0 0.0
        %783 = vmatprep.mubr.f32.mxu0 0.0
        %784 = vmatmul.mubr.f32.gmra.mrb[0].mxu0 %v717
        %v785 = vpop.f32.mrb[0].mxu0
        %v786 = vadd.f32 %v328, %v785
        %v787 = vpop.f32.mrb[0].mxu0
        %788 = vdwg.mxu0
        %s789 = scalar_lea.vmem [#allocation2], 10
        %790 = vst.msk [vmem:[%s789] sm:$0x3] %vm404, %v786
        %s791 = scalar_lea.vmem %s0, 12
        %v792 = vld [vmem:[%s791] sm:$0x3]
        %v794 = vsel %vm330, %v792, 0
        %796 = vmatprep.subr.mxu0 0.0
        %797 = vmatpush1.msra.mxu0 %v313
        %798 = vmatprep.subr.mxu0 0.0
        %799 = vmatpush1.msra.mxu0 %v314
        %800 = vmatprep.subr.mxu0 0.0
        %801 = vmatpush1.msra.mxu0 %v315
        %802 = vmatprep.subr.mxu0 0.0
        %803 = vmatpush1.msra.mxu0 %v316
        %804 = vmatprep.subr.mxu0 0.0
        %805 = vmatpush1.msra.mxu0 0.0
        %806 = vmatprep.subr.mxu0 0.0
        %807 = vmatpush1.msra.mxu0 0.0
        %808 = vmatprep.subr.mxu0 0.0
        %809 = vmatpush1.msra.mxu0 0.0
        %810 = vmatprep.subr.mxu0 0.0
        %811 = vmatpush1.msra.mxu0 0.0
        %812 = vmatprep.subr.mxu0 0.0
        %813 = vmatpush1.msra.mxu0 0.0
        %814 = vmatprep.subr.mxu0 0.0
        %815 = vmatpush1.msra.mxu0 0.0
        %816 = vmatprep.subr.mxu0 0.0
        %817 = vmatpush1.msra.mxu0 0.0
        %818 = vmatprep.subr.mxu0 0.0
        %819 = vmatpush1.msra.mxu0 0.0
        %820 = vmatprep.subr.mxu0 0.0
        %821 = vmatpush1.msra.mxu0 0.0
        %822 = vmatprep.subr.mxu0 0.0
        %823 = vmatpush1.msra.mxu0 0.0
        %824 = vmatprep.subr.mxu0 0.0
        %825 = vmatpush1.msra.mxu0 0.0
        %826 = vmatprep.subr.mxu0 0.0
        %827 = vmatpush1.msra.mxu0 0.0
        %828 = vmatprep.subr.mxu0 0.0
        %829 = vmatpush1.msra.mxu0 0.0
        %830 = vmatprep.subr.mxu0 0.0
        %831 = vmatpush1.msra.mxu0 0.0
        %832 = vmatprep.subr.mxu0 0.0
        %833 = vmatpush1.msra.mxu0 0.0
        %834 = vmatprep.subr.mxu0 0.0
        %835 = vmatpush1.msra.mxu0 0.0
        %836 = vmatprep.subr.mxu0 0.0
        %837 = vmatpush1.msra.mxu0 0.0
        %838 = vmatprep.subr.mxu0 0.0
        %839 = vmatpush1.msra.mxu0 0.0
        %840 = vmatprep.subr.mxu0 0.0
        %841 = vmatpush1.msra.mxu0 0.0
        %842 = vmatprep.subr.mxu0 0.0
        %843 = vmatpush1.msra.mxu0 0.0
        %844 = vmatprep.subr.mxu0 0.0
        %845 = vmatpush1.msra.mxu0 0.0
        %846 = vmatprep.subr.mxu0 0.0
        %847 = vmatpush1.msra.mxu0 0.0
        %848 = vmatprep.subr.mxu0 0.0
        %849 = vmatpush1.msra.mxu0 0.0
        %850 = vmatprep.subr.mxu0 0.0
        %851 = vmatpush1.msra.mxu0 0.0
        %852 = vmatprep.subr.mxu0 0.0
        %853 = vmatpush1.msra.mxu0 0.0
        %854 = vmatprep.subr.mxu0 0.0
        %855 = vmatpush1.msra.mxu0 0.0
        %856 = vmatprep.subr.mxu0 0.0
        %857 = vmatpush1.msra.mxu0 0.0
        %858 = vmatprep.subr.mxu0 0.0
        %859 = vmatpush1.msra.mxu0 0.0
        %860 = vmatprep.mubr.f32.mxu0 0.0
        %861 = vmatmul.mubr.f32.gmra.mrb[0].mxu0 %v794
        %v862 = vpop.f32.mrb[0].mxu0
        %v863 = vadd.f32 %v328, %v862
        %v864 = vpop.f32.mrb[0].mxu0
        %865 = vdwg.mxu0
        %s866 = scalar_lea.vmem [#allocation2], 12
        %867 = vst.msk [vmem:[%s866] sm:$0x3] %vm404, %v863
        %s868 = scalar_lea.vmem %s0, 14
        %v869 = vld [vmem:[%s868] sm:$0x3]
        %v871 = vsel %vm330, %v869, 0
        %873 = vmatprep.subr.mxu0 0.0
        %874 = vmatpush1.msra.mxu0 %v313
        %875 = vmatprep.subr.mxu0 0.0
        %876 = vmatpush1.msra.mxu0 %v314
        %877 = vmatprep.subr.mxu0 0.0
        %878 = vmatpush1.msra.mxu0 %v315
        %879 = vmatprep.subr.mxu0 0.0
        %880 = vmatpush1.msra.mxu0 %v316
        %881 = vmatprep.subr.mxu0 0.0
        %882 = vmatpush1.msra.mxu0 0.0
        %883 = vmatprep.subr.mxu0 0.0
        %884 = vmatpush1.msra.mxu0 0.0
        %885 = vmatprep.subr.mxu0 0.0
        %886 = vmatpush1.msra.mxu0 0.0
        %887 = vmatprep.subr.mxu0 0.0
        %888 = vmatpush1.msra.mxu0 0.0
        %889 = vmatprep.subr.mxu0 0.0
        %890 = vmatpush1.msra.mxu0 0.0
        %891 = vmatprep.subr.mxu0 0.0
        %892 = vmatpush1.msra.mxu0 0.0
        %893 = vmatprep.subr.mxu0 0.0
        %894 = vmatpush1.msra.mxu0 0.0
        %895 = vmatprep.subr.mxu0 0.0
        %896 = vmatpush1.msra.mxu0 0.0
        %897 = vmatprep.subr.mxu0 0.0
        %898 = vmatpush1.msra.mxu0 0.0
        %899 = vmatprep.subr.mxu0 0.0
        %900 = vmatpush1.msra.mxu0 0.0
        %901 = vmatprep.subr.mxu0 0.0
        %902 = vmatpush1.msra.mxu0 0.0
        %903 = vmatprep.subr.mxu0 0.0
        %904 = vmatpush1.msra.mxu0 0.0
        %905 = vmatprep.subr.mxu0 0.0
        %906 = vmatpush1.msra.mxu0 0.0
        %907 = vmatprep.subr.mxu0 0.0
        %908 = vmatpush1.msra.mxu0 0.0
        %909 = vmatprep.subr.mxu0 0.0
        %910 = vmatpush1.msra.mxu0 0.0
        %911 = vmatprep.subr.mxu0 0.0
        %912 = vmatpush1.msra.mxu0 0.0
        %913 = vmatprep.subr.mxu0 0.0
        %914 = vmatpush1.msra.mxu0 0.0
        %915 = vmatprep.subr.mxu0 0.0
        %916 = vmatpush1.msra.mxu0 0.0
        %917 = vmatprep.subr.mxu0 0.0
        %918 = vmatpush1.msra.mxu0 0.0
        %919 = vmatprep.subr.mxu0 0.0
        %920 = vmatpush1.msra.mxu0 0.0
        %921 = vmatprep.subr.mxu0 0.0
        %922 = vmatpush1.msra.mxu0 0.0
        %923 = vmatprep.subr.mxu0 0.0
        %924 = vmatpush1.msra.mxu0 0.0
        %925 = vmatprep.subr.mxu0 0.0
        %926 = vmatpush1.msra.mxu0 0.0
        %927 = vmatprep.subr.mxu0 0.0
        %928 = vmatpush1.msra.mxu0 0.0
        %929 = vmatprep.subr.mxu0 0.0
        %930 = vmatpush1.msra.mxu0 0.0
        %931 = vmatprep.subr.mxu0 0.0
        %932 = vmatpush1.msra.mxu0 0.0
        %933 = vmatprep.subr.mxu0 0.0
        %934 = vmatpush1.msra.mxu0 0.0
        %935 = vmatprep.subr.mxu0 0.0
        %936 = vmatpush1.msra.mxu0 0.0
        %937 = vmatprep.mubr.f32.mxu0 0.0
        %938 = vmatmul.mubr.f32.gmra.mrb[0].mxu0 %v871
        %v939 = vpop.f32.mrb[0].mxu0
        %v940 = vadd.f32 %v328, %v939
        %v941 = vpop.f32.mrb[0].mxu0
        %942 = vdwg.mxu0
        %s943 = scalar_lea.vmem [#allocation2], 14
        %944 = vst.msk [vmem:[%s943] sm:$0x3] %vm404, %v940
        %p945 = scmp.eq.s32.totalorder %s22, 0
        %s946 = scalar_select %p945, 0, 7
        %s947 = smul.u32 %s946, 2
        %s948 = scalar_lea.vmem [#allocation2], %s947
        %v949 = vld [vmem:[%s948] sm:$0x3]
        %v951 = vlaneseq
        %v952 = vshrl.u32 %v951, 7
        %v953 = vsub.s32 0, %v952
        %v954 = vrot.slane %v322, %v953
        %v957 = vsel %vm330, 0.0, 0
        %959 = vmatprep.subr.mxu0 0.0
        %960 = vmatpush1.msra.mxu0 %v317
        %961 = vmatprep.subr.mxu0 0.0
        %962 = vmatpush1.msra.mxu0 %v318
        %963 = vmatprep.subr.mxu0 0.0
        %964 = vmatpush1.msra.mxu0 %v319
        %965 = vmatprep.subr.mxu0 0.0
        %966 = vmatpush1.msra.mxu0 %v320
        %967 = vmatprep.subr.mxu0 0.0
        %968 = vmatpush1.msra.mxu0 0.0
        %969 = vmatprep.subr.mxu0 0.0
        %970 = vmatpush1.msra.mxu0 0.0
        %971 = vmatprep.subr.mxu0 0.0
        %972 = vmatpush1.msra.mxu0 0.0
        %973 = vmatprep.subr.mxu0 0.0
        %974 = vmatpush1.msra.mxu0 0.0
        %975 = vmatprep.subr.mxu0 0.0
        %976 = vmatpush1.msra.mxu0 0.0
        %977 = vmatprep.subr.mxu0 0.0
        %978 = vmatpush1.msra.mxu0 0.0
        %979 = vmatprep.subr.mxu0 0.0
        %980 = vmatpush1.msra.mxu0 0.0
        %981 = vmatprep.subr.mxu0 0.0
        %982 = vmatpush1.msra.mxu0 0.0
        %983 = vmatprep.subr.mxu0 0.0
        %984 = vmatpush1.msra.mxu0 0.0
        %985 = vmatprep.subr.mxu0 0.0
        %986 = vmatpush1.msra.mxu0 0.0
        %987 = vmatprep.subr.mxu0 0.0
        %988 = vmatpush1.msra.mxu0 0.0
        %989 = vmatprep.subr.mxu0 0.0
        %990 = vmatpush1.msra.mxu0 0.0
        %991 = vmatprep.subr.mxu0 0.0
        %992 = vmatpush1.msra.mxu0 0.0
        %993 = vmatprep.subr.mxu0 0.0
        %994 = vmatpush1.msra.mxu0 0.0
        %995 = vmatprep.subr.mxu0 0.0
        %996 = vmatpush1.msra.mxu0 0.0
        %997 = vmatprep.subr.mxu0 0.0
        %998 = vmatpush1.msra.mxu0 0.0
        %999 = vmatprep.subr.mxu0 0.0
        %1000 = vmatpush1.msra.mxu0 0.0
        %1001 = vmatprep.subr.mxu0 0.0
        %1002 = vmatpush1.msra.mxu0 0.0
        %1003 = vmatprep.subr.mxu0 0.0
        %1004 = vmatpush1.msra.mxu0 0.0
        %1005 = vmatprep.subr.mxu0 0.0
        %1006 = vmatpush1.msra.mxu0 0.0
        %1007 = vmatprep.subr.mxu0 0.0
        %1008 = vmatpush1.msra.mxu0 0.0
        %1009 = vmatprep.subr.mxu0 0.0
        %1010 = vmatpush1.msra.mxu0 0.0
        %1011 = vmatprep.subr.mxu0 0.0
        %1012 = vmatpush1.msra.mxu0 0.0
        %1013 = vmatprep.subr.mxu0 0.0
        %1014 = vmatpush1.msra.mxu0 0.0
        %1015 = vmatprep.subr.mxu0 0.0
        %1016 = vmatpush1.msra.mxu0 0.0
        %1017 = vmatprep.subr.mxu0 0.0
        %1018 = vmatpush1.msra.mxu0 0.0
        %1019 = vmatprep.subr.mxu0 0.0
        %1020 = vmatpush1.msra.mxu0 0.0
        %1021 = vmatprep.subr.mxu0 0.0
        %1022 = vmatpush1.msra.mxu0 0.0
        %1023 = vmatprep.mubr.f32.mxu0 0.0
        %1024 = vmatmul.mubr.f32.gmra.mrb[0].mxu0 %v957
        %v1025 = vpop.f32.mrb[0].mxu0
        %v1026 = vadd.f32 %v954, %v1025
        %v1027 = vpop.f32.mrb[0].mxu0
        %1028 = vdwg.mxu0
        %v1029 = vadd.f32 %v949, %v1026
        %v1030 = vxor.u32 %v1029, 2147483648
        %v1031 = vmul.f32 %v1030, 1.442695
        %v1032 = vpow.pop %v1031
        %v1033 = vadd.f32 %v1032, 1.0
        %v1034 = vrcp.pop %v1033
        %v1035 = vmul.f32 1.0, %v1034
        %1037 = vrot.lane.b32.xlu0 %v1026, 64
        %v1038 = vpop.permute.xlu0 %1037
        %v1040 = vmul.f32 %v1035, %v1038
        %1042 = vrot.lane.b32.xlu0 %v1040, 64
        %v1043 = vpop.permute.xlu0 %1042
        %v1045 = vadd.f32 %v949, %v1043
        %v1046 = vtanh.pop %v1045
        %v1047 = vsub.f32 1.0, %v1035
        %1049 = vrot.lane.b32.xlu0 %v1046, 96
        %v1050 = vpop.permute.xlu0 %1049
        %v1052 = vmul.f32 %v1047, %v1050
        %v1053 = vmul.f32 %v1035, 0.0
        %v1054 = vadd.f32 %v1052, %v1053
        %1056 = vrot.lane.b32.xlu0 %v1054, 96
        %v1057 = vpop.permute.xlu0 %1056
        %s1059 = scalar_lea.vmem [#allocation3], %s947
        %vm1060 = vcmask 254976
        %1061 = vst.msk [vmem:[%s1059] sm:$0x3] %vm1060, %v1057
        %s1062 = scalar_select %p945, 1, 6
        %s1063 = smul.u32 %s1062, 2
        %s1064 = scalar_lea.vmem [#allocation2], %s1063
        %v1065 = vld [vmem:[%s1064] sm:$0x3]
        %v1066 = vsel %vm330, %v1057, 0
        %1068 = vmatprep.subr.mxu0 0.0
        %1069 = vmatpush1.msra.mxu0 %v317
        %1070 = vmatprep.subr.mxu0 0.0
        %1071 = vmatpush1.msra.mxu0 %v318
        %1072 = vmatprep.subr.mxu0 0.0
        %1073 = vmatpush1.msra.mxu0 %v319
        %1074 = vmatprep.subr.mxu0 0.0
        %1075 = vmatpush1.msra.mxu0 %v320
        %1076 = vmatprep.subr.mxu0 0.0
        %1077 = vmatpush1.msra.mxu0 0.0
        %1078 = vmatprep.subr.mxu0 0.0
        %1079 = vmatpush1.msra.mxu0 0.0
        %1080 = vmatprep.subr.mxu0 0.0
        %1081 = vmatpush1.msra.mxu0 0.0
        %1082 = vmatprep.subr.mxu0 0.0
        %1083 = vmatpush1.msra.mxu0 0.0
        %1084 = vmatprep.subr.mxu0 0.0
        %1085 = vmatpush1.msra.mxu0 0.0
        %1086 = vmatprep.subr.mxu0 0.0
        %1087 = vmatpush1.msra.mxu0 0.0
        %1088 = vmatprep.subr.mxu0 0.0
        %1089 = vmatpush1.msra.mxu0 0.0
        %1090 = vmatprep.subr.mxu0 0.0
        %1091 = vmatpush1.msra.mxu0 0.0
        %1092 = vmatprep.subr.mxu0 0.0
        %1093 = vmatpush1.msra.mxu0 0.0
        %1094 = vmatprep.subr.mxu0 0.0
        %1095 = vmatpush1.msra.mxu0 0.0
        %1096 = vmatprep.subr.mxu0 0.0
        %1097 = vmatpush1.msra.mxu0 0.0
        %1098 = vmatprep.subr.mxu0 0.0
        %1099 = vmatpush1.msra.mxu0 0.0
        %1100 = vmatprep.subr.mxu0 0.0
        %1101 = vmatpush1.msra.mxu0 0.0
        %1102 = vmatprep.subr.mxu0 0.0
        %1103 = vmatpush1.msra.mxu0 0.0
        %1104 = vmatprep.subr.mxu0 0.0
        %1105 = vmatpush1.msra.mxu0 0.0
        %1106 = vmatprep.subr.mxu0 0.0
        %1107 = vmatpush1.msra.mxu0 0.0
        %1108 = vmatprep.subr.mxu0 0.0
        %1109 = vmatpush1.msra.mxu0 0.0
        %1110 = vmatprep.subr.mxu0 0.0
        %1111 = vmatpush1.msra.mxu0 0.0
        %1112 = vmatprep.subr.mxu0 0.0
        %1113 = vmatpush1.msra.mxu0 0.0
        %1114 = vmatprep.subr.mxu0 0.0
        %1115 = vmatpush1.msra.mxu0 0.0
        %1116 = vmatprep.subr.mxu0 0.0
        %1117 = vmatpush1.msra.mxu0 0.0
        %1118 = vmatprep.subr.mxu0 0.0
        %1119 = vmatpush1.msra.mxu0 0.0
        %1120 = vmatprep.subr.mxu0 0.0
        %1121 = vmatpush1.msra.mxu0 0.0
        %1122 = vmatprep.subr.mxu0 0.0
        %1123 = vmatpush1.msra.mxu0 0.0
        %1124 = vmatprep.subr.mxu0 0.0
        %1125 = vmatpush1.msra.mxu0 0.0
        %1126 = vmatprep.subr.mxu0 0.0
        %1127 = vmatpush1.msra.mxu0 0.0
        %1128 = vmatprep.subr.mxu0 0.0
        %1129 = vmatpush1.msra.mxu0 0.0
        %1130 = vmatprep.subr.mxu0 0.0
        %1131 = vmatpush1.msra.mxu0 0.0
        %1132 = vmatprep.mubr.f32.mxu0 0.0
        %1133 = vmatmul.mubr.f32.gmra.mrb[0].mxu0 %v1066
        %v1134 = vpop.f32.mrb[0].mxu0
        %v1135 = vadd.f32 %v954, %v1134
        %v1136 = vpop.f32.mrb[0].mxu0
        %1137 = vdwg.mxu0
        %v1138 = vadd.f32 %v1065, %v1135
        %v1139 = vxor.u32 %v1138, 2147483648
        %v1140 = vmul.f32 %v1139, 1.442695
        %v1141 = vpow.pop %v1140
        %v1142 = vadd.f32 %v1141, 1.0
        %v1143 = vrcp.pop %v1142
        %v1144 = vmul.f32 1.0, %v1143
        %1146 = vrot.lane.b32.xlu0 %v1135, 64
        %v1147 = vpop.permute.xlu0 %1146
        %v1149 = vmul.f32 %v1144, %v1147
        %1151 = vrot.lane.b32.xlu0 %v1149, 64
        %v1152 = vpop.permute.xlu0 %1151
        %v1154 = vadd.f32 %v1065, %v1152
        %v1155 = vtanh.pop %v1154
        %v1156 = vsub.f32 1.0, %v1144
        %1158 = vrot.lane.b32.xlu0 %v1155, 96
        %v1159 = vpop.permute.xlu0 %1158
        %v1161 = vmul.f32 %v1156, %v1159
        %v1162 = vmul.f32 %v1144, %v1054
        %v1163 = vadd.f32 %v1161, %v1162
        %1165 = vrot.lane.b32.xlu0 %v1163, 96
        %v1166 = vpop.permute.xlu0 %1165
        %s1168 = scalar_lea.vmem [#allocation3], %s1063
        %1169 = vst.msk [vmem:[%s1168] sm:$0x3] %vm1060, %v1166
        %s1170 = scalar_select %p945, 2, 5
        %s1171 = smul.u32 %s1170, 2
        %s1172 = scalar_lea.vmem [#allocation2], %s1171
        %v1173 = vld [vmem:[%s1172] sm:$0x3]
        %v1174 = vsel %vm330, %v1166, 0
        %1176 = vmatprep.subr.mxu0 0.0
        %1177 = vmatpush1.msra.mxu0 %v317
        %1178 = vmatprep.subr.mxu0 0.0
        %1179 = vmatpush1.msra.mxu0 %v318
        %1180 = vmatprep.subr.mxu0 0.0
        %1181 = vmatpush1.msra.mxu0 %v319
        %1182 = vmatprep.subr.mxu0 0.0
        %1183 = vmatpush1.msra.mxu0 %v320
        %1184 = vmatprep.subr.mxu0 0.0
        %1185 = vmatpush1.msra.mxu0 0.0
        %1186 = vmatprep.subr.mxu0 0.0
        %1187 = vmatpush1.msra.mxu0 0.0
        %1188 = vmatprep.subr.mxu0 0.0
        %1189 = vmatpush1.msra.mxu0 0.0
        %1190 = vmatprep.subr.mxu0 0.0
        %1191 = vmatpush1.msra.mxu0 0.0
        %1192 = vmatprep.subr.mxu0 0.0
        %1193 = vmatpush1.msra.mxu0 0.0
        %1194 = vmatprep.subr.mxu0 0.0
        %1195 = vmatpush1.msra.mxu0 0.0
        %1196 = vmatprep.subr.mxu0 0.0
        %1197 = vmatpush1.msra.mxu0 0.0
        %1198 = vmatprep.subr.mxu0 0.0
        %1199 = vmatpush1.msra.mxu0 0.0
        %1200 = vmatprep.subr.mxu0 0.0
        %1201 = vmatpush1.msra.mxu0 0.0
        %1202 = vmatprep.subr.mxu0 0.0
        %1203 = vmatpush1.msra.mxu0 0.0
        %1204 = vmatprep.subr.mxu0 0.0
        %1205 = vmatpush1.msra.mxu0 0.0
        %1206 = vmatprep.subr.mxu0 0.0
        %1207 = vmatpush1.msra.mxu0 0.0
        %1208 = vmatprep.subr.mxu0 0.0
        %1209 = vmatpush1.msra.mxu0 0.0
        %1210 = vmatprep.subr.mxu0 0.0
        %1211 = vmatpush1.msra.mxu0 0.0
        %1212 = vmatprep.subr.mxu0 0.0
        %1213 = vmatpush1.msra.mxu0 0.0
        %1214 = vmatprep.subr.mxu0 0.0
        %1215 = vmatpush1.msra.mxu0 0.0
        %1216 = vmatprep.subr.mxu0 0.0
        %1217 = vmatpush1.msra.mxu0 0.0
        %1218 = vmatprep.subr.mxu0 0.0
        %1219 = vmatpush1.msra.mxu0 0.0
        %1220 = vmatprep.subr.mxu0 0.0
        %1221 = vmatpush1.msra.mxu0 0.0
        %1222 = vmatprep.subr.mxu0 0.0
        %1223 = vmatpush1.msra.mxu0 0.0
        %1224 = vmatprep.subr.mxu0 0.0
        %1225 = vmatpush1.msra.mxu0 0.0
        %1226 = vmatprep.subr.mxu0 0.0
        %1227 = vmatpush1.msra.mxu0 0.0
        %1228 = vmatprep.subr.mxu0 0.0
        %1229 = vmatpush1.msra.mxu0 0.0
        %1230 = vmatprep.subr.mxu0 0.0
        %1231 = vmatpush1.msra.mxu0 0.0
        %1232 = vmatprep.subr.mxu0 0.0
        %1233 = vmatpush1.msra.mxu0 0.0
        %1234 = vmatprep.subr.mxu0 0.0
        %1235 = vmatpush1.msra.mxu0 0.0
        %1236 = vmatprep.subr.mxu0 0.0
        %1237 = vmatpush1.msra.mxu0 0.0
        %1238 = vmatprep.subr.mxu0 0.0
        %1239 = vmatpush1.msra.mxu0 0.0
        %1240 = vmatprep.mubr.f32.mxu0 0.0
        %1241 = vmatmul.mubr.f32.gmra.mrb[0].mxu0 %v1174
        %v1242 = vpop.f32.mrb[0].mxu0
        %v1243 = vadd.f32 %v954, %v1242
        %v1244 = vpop.f32.mrb[0].mxu0
        %1245 = vdwg.mxu0
        %v1246 = vadd.f32 %v1173, %v1243
        %v1247 = vxor.u32 %v1246, 2147483648
        %v1248 = vmul.f32 %v1247, 1.442695
        %v1249 = vpow.pop %v1248
        %v1250 = vadd.f32 %v1249, 1.0
        %v1251 = vrcp.pop %v1250
        %v1252 = vmul.f32 1.0, %v1251
        %1254 = vrot.lane.b32.xlu0 %v1243, 64
        %v1255 = vpop.permute.xlu0 %1254
        %v1257 = vmul.f32 %v1252, %v1255
        %1259 = vrot.lane.b32.xlu0 %v1257, 64
        %v1260 = vpop.permute.xlu0 %1259
        %v1262 = vadd.f32 %v1173, %v1260
        %v1263 = vtanh.pop %v1262
        %v1264 = vsub.f32 1.0, %v1252
        %1266 = vrot.lane.b32.xlu0 %v1263, 96
        %v1267 = vpop.permute.xlu0 %1266
        %v1269 = vmul.f32 %v1264, %v1267
        %v1270 = vmul.f32 %v1252, %v1163
        %v1271 = vadd.f32 %v1269, %v1270
        %1273 = vrot.lane.b32.xlu0 %v1271, 96
        %v1274 = vpop.permute.xlu0 %1273
        %s1276 = scalar_lea.vmem [#allocation3], %s1171
        %1277 = vst.msk [vmem:[%s1276] sm:$0x3] %vm1060, %v1274
        %s1278 = scalar_select %p945, 3, 4
        %s1279 = smul.u32 %s1278, 2
        %s1280 = scalar_lea.vmem [#allocation2], %s1279
        %v1281 = vld [vmem:[%s1280] sm:$0x3]
        %v1282 = vsel %vm330, %v1274, 0
        %1284 = vmatprep.subr.mxu0 0.0
        %1285 = vmatpush1.msra.mxu0 %v317
        %1286 = vmatprep.subr.mxu0 0.0
        %1287 = vmatpush1.msra.mxu0 %v318
        %1288 = vmatprep.subr.mxu0 0.0
        %1289 = vmatpush1.msra.mxu0 %v319
        %1290 = vmatprep.subr.mxu0 0.0
        %1291 = vmatpush1.msra.mxu0 %v320
        %1292 = vmatprep.subr.mxu0 0.0
        %1293 = vmatpush1.msra.mxu0 0.0
        %1294 = vmatprep.subr.mxu0 0.0
        %1295 = vmatpush1.msra.mxu0 0.0
        %1296 = vmatprep.subr.mxu0 0.0
        %1297 = vmatpush1.msra.mxu0 0.0
        %1298 = vmatprep.subr.mxu0 0.0
        %1299 = vmatpush1.msra.mxu0 0.0
        %1300 = vmatprep.subr.mxu0 0.0
        %1301 = vmatpush1.msra.mxu0 0.0
        %1302 = vmatprep.subr.mxu0 0.0
        %1303 = vmatpush1.msra.mxu0 0.0
        %1304 = vmatprep.subr.mxu0 0.0
        %1305 = vmatpush1.msra.mxu0 0.0
        %1306 = vmatprep.subr.mxu0 0.0
        %1307 = vmatpush1.msra.mxu0 0.0
        %1308 = vmatprep.subr.mxu0 0.0
        %1309 = vmatpush1.msra.mxu0 0.0
        %1310 = vmatprep.subr.mxu0 0.0
        %1311 = vmatpush1.msra.mxu0 0.0
        %1312 = vmatprep.subr.mxu0 0.0
        %1313 = vmatpush1.msra.mxu0 0.0
        %1314 = vmatprep.subr.mxu0 0.0
        %1315 = vmatpush1.msra.mxu0 0.0
        %1316 = vmatprep.subr.mxu0 0.0
        %1317 = vmatpush1.msra.mxu0 0.0
        %1318 = vmatprep.subr.mxu0 0.0
        %1319 = vmatpush1.msra.mxu0 0.0
        %1320 = vmatprep.subr.mxu0 0.0
        %1321 = vmatpush1.msra.mxu0 0.0
        %1322 = vmatprep.subr.mxu0 0.0
        %1323 = vmatpush1.msra.mxu0 0.0
        %1324 = vmatprep.subr.mxu0 0.0
        %1325 = vmatpush1.msra.mxu0 0.0
        %1326 = vmatprep.subr.mxu0 0.0
        %1327 = vmatpush1.msra.mxu0 0.0
        %1328 = vmatprep.subr.mxu0 0.0
        %1329 = vmatpush1.msra.mxu0 0.0
        %1330 = vmatprep.subr.mxu0 0.0
        %1331 = vmatpush1.msra.mxu0 0.0
        %1332 = vmatprep.subr.mxu0 0.0
        %1333 = vmatpush1.msra.mxu0 0.0
        %1334 = vmatprep.subr.mxu0 0.0
        %1335 = vmatpush1.msra.mxu0 0.0
        %1336 = vmatprep.subr.mxu0 0.0
        %1337 = vmatpush1.msra.mxu0 0.0
        %1338 = vmatprep.subr.mxu0 0.0
        %1339 = vmatpush1.msra.mxu0 0.0
        %1340 = vmatprep.subr.mxu0 0.0
        %1341 = vmatpush1.msra.mxu0 0.0
        %1342 = vmatprep.subr.mxu0 0.0
        %1343 = vmatpush1.msra.mxu0 0.0
        %1344 = vmatprep.subr.mxu0 0.0
        %1345 = vmatpush1.msra.mxu0 0.0
        %1346 = vmatprep.subr.mxu0 0.0
        %1347 = vmatpush1.msra.mxu0 0.0
        %1348 = vmatprep.mubr.f32.mxu0 0.0
        %1349 = vmatmul.mubr.f32.gmra.mrb[0].mxu0 %v1282
        %v1350 = vpop.f32.mrb[0].mxu0
        %v1351 = vadd.f32 %v954, %v1350
        %v1352 = vpop.f32.mrb[0].mxu0
        %1353 = vdwg.mxu0
        %v1354 = vadd.f32 %v1281, %v1351
        %v1355 = vxor.u32 %v1354, 2147483648
        %v1356 = vmul.f32 %v1355, 1.442695
        %v1357 = vpow.pop %v1356
        %v1358 = vadd.f32 %v1357, 1.0
        %v1359 = vrcp.pop %v1358
        %v1360 = vmul.f32 1.0, %v1359
        %1362 = vrot.lane.b32.xlu0 %v1351, 64
        %v1363 = vpop.permute.xlu0 %1362
        %v1365 = vmul.f32 %v1360, %v1363
        %1367 = vrot.lane.b32.xlu0 %v1365, 64
        %v1368 = vpop.permute.xlu0 %1367
        %v1370 = vadd.f32 %v1281, %v1368
        %v1371 = vtanh.pop %v1370
        %v1372 = vsub.f32 1.0, %v1360
        %1374 = vrot.lane.b32.xlu0 %v1371, 96
        %v1375 = vpop.permute.xlu0 %1374
        %v1377 = vmul.f32 %v1372, %v1375
        %v1378 = vmul.f32 %v1360, %v1271
        %v1379 = vadd.f32 %v1377, %v1378
        %1381 = vrot.lane.b32.xlu0 %v1379, 96
        %v1382 = vpop.permute.xlu0 %1381
        %s1384 = scalar_lea.vmem [#allocation3], %s1279
        %1385 = vst.msk [vmem:[%s1384] sm:$0x3] %vm1060, %v1382
        %s1386 = scalar_select %p945, 4, 3
        %s1387 = smul.u32 %s1386, 2
        %s1388 = scalar_lea.vmem [#allocation2], %s1387
        %v1389 = vld [vmem:[%s1388] sm:$0x3]
        %v1390 = vsel %vm330, %v1382, 0
        %1392 = vmatprep.subr.mxu0 0.0
        %1393 = vmatpush1.msra.mxu0 %v317
        %1394 = vmatprep.subr.mxu0 0.0
        %1395 = vmatpush1.msra.mxu0 %v318
        %1396 = vmatprep.subr.mxu0 0.0
        %1397 = vmatpush1.msra.mxu0 %v319
        %1398 = vmatprep.subr.mxu0 0.0
        %1399 = vmatpush1.msra.mxu0 %v320
        %1400 = vmatprep.subr.mxu0 0.0
        %1401 = vmatpush1.msra.mxu0 0.0
        %1402 = vmatprep.subr.mxu0 0.0
        %1403 = vmatpush1.msra.mxu0 0.0
        %1404 = vmatprep.subr.mxu0 0.0
        %1405 = vmatpush1.msra.mxu0 0.0
        %1406 = vmatprep.subr.mxu0 0.0
        %1407 = vmatpush1.msra.mxu0 0.0
        %1408 = vmatprep.subr.mxu0 0.0
        %1409 = vmatpush1.msra.mxu0 0.0
        %1410 = vmatprep.subr.mxu0 0.0
        %1411 = vmatpush1.msra.mxu0 0.0
        %1412 = vmatprep.subr.mxu0 0.0
        %1413 = vmatpush1.msra.mxu0 0.0
        %1414 = vmatprep.subr.mxu0 0.0
        %1415 = vmatpush1.msra.mxu0 0.0
        %1416 = vmatprep.subr.mxu0 0.0
        %1417 = vmatpush1.msra.mxu0 0.0
        %1418 = vmatprep.subr.mxu0 0.0
        %1419 = vmatpush1.msra.mxu0 0.0
        %1420 = vmatprep.subr.mxu0 0.0
        %1421 = vmatpush1.msra.mxu0 0.0
        %1422 = vmatprep.subr.mxu0 0.0
        %1423 = vmatpush1.msra.mxu0 0.0
        %1424 = vmatprep.subr.mxu0 0.0
        %1425 = vmatpush1.msra.mxu0 0.0
        %1426 = vmatprep.subr.mxu0 0.0
        %1427 = vmatpush1.msra.mxu0 0.0
        %1428 = vmatprep.subr.mxu0 0.0
        %1429 = vmatpush1.msra.mxu0 0.0
        %1430 = vmatprep.subr.mxu0 0.0
        %1431 = vmatpush1.msra.mxu0 0.0
        %1432 = vmatprep.subr.mxu0 0.0
        %1433 = vmatpush1.msra.mxu0 0.0
        %1434 = vmatprep.subr.mxu0 0.0
        %1435 = vmatpush1.msra.mxu0 0.0
        %1436 = vmatprep.subr.mxu0 0.0
        %1437 = vmatpush1.msra.mxu0 0.0
        %1438 = vmatprep.subr.mxu0 0.0
        %1439 = vmatpush1.msra.mxu0 0.0
        %1440 = vmatprep.subr.mxu0 0.0
        %1441 = vmatpush1.msra.mxu0 0.0
        %1442 = vmatprep.subr.mxu0 0.0
        %1443 = vmatpush1.msra.mxu0 0.0
        %1444 = vmatprep.subr.mxu0 0.0
        %1445 = vmatpush1.msra.mxu0 0.0
        %1446 = vmatprep.subr.mxu0 0.0
        %1447 = vmatpush1.msra.mxu0 0.0
        %1448 = vmatprep.subr.mxu0 0.0
        %1449 = vmatpush1.msra.mxu0 0.0
        %1450 = vmatprep.subr.mxu0 0.0
        %1451 = vmatpush1.msra.mxu0 0.0
        %1452 = vmatprep.subr.mxu0 0.0
        %1453 = vmatpush1.msra.mxu0 0.0
        %1454 = vmatprep.subr.mxu0 0.0
        %1455 = vmatpush1.msra.mxu0 0.0
        %1456 = vmatprep.mubr.f32.mxu0 0.0
        %1457 = vmatmul.mubr.f32.gmra.mrb[0].mxu0 %v1390
        %v1458 = vpop.f32.mrb[0].mxu0
        %v1459 = vadd.f32 %v954, %v1458
        %v1460 = vpop.f32.mrb[0].mxu0
        %1461 = vdwg.mxu0
        %v1462 = vadd.f32 %v1389, %v1459
        %v1463 = vxor.u32 %v1462, 2147483648
        %v1464 = vmul.f32 %v1463, 1.442695
        %v1465 = vpow.pop %v1464
        %v1466 = vadd.f32 %v1465, 1.0
        %v1467 = vrcp.pop %v1466
        %v1468 = vmul.f32 1.0, %v1467
        %1470 = vrot.lane.b32.xlu0 %v1459, 64
        %v1471 = vpop.permute.xlu0 %1470
        %v1473 = vmul.f32 %v1468, %v1471
        %1475 = vrot.lane.b32.xlu0 %v1473, 64
        %v1476 = vpop.permute.xlu0 %1475
        %v1478 = vadd.f32 %v1389, %v1476
        %v1479 = vtanh.pop %v1478
        %v1480 = vsub.f32 1.0, %v1468
        %1482 = vrot.lane.b32.xlu0 %v1479, 96
        %v1483 = vpop.permute.xlu0 %1482
        %v1485 = vmul.f32 %v1480, %v1483
        %v1486 = vmul.f32 %v1468, %v1379
        %v1487 = vadd.f32 %v1485, %v1486
        %1489 = vrot.lane.b32.xlu0 %v1487, 96
        %v1490 = vpop.permute.xlu0 %1489
        %s1492 = scalar_lea.vmem [#allocation3], %s1387
        %1493 = vst.msk [vmem:[%s1492] sm:$0x3] %vm1060, %v1490
        %s1494 = scalar_select %p945, 5, 2
        %s1495 = smul.u32 %s1494, 2
        %s1496 = scalar_lea.vmem [#allocation2], %s1495
        %v1497 = vld [vmem:[%s1496] sm:$0x3]
        %v1498 = vsel %vm330, %v1490, 0
        %1500 = vmatprep.subr.mxu0 0.0
        %1501 = vmatpush1.msra.mxu0 %v317
        %1502 = vmatprep.subr.mxu0 0.0
        %1503 = vmatpush1.msra.mxu0 %v318
        %1504 = vmatprep.subr.mxu0 0.0
        %1505 = vmatpush1.msra.mxu0 %v319
        %1506 = vmatprep.subr.mxu0 0.0
        %1507 = vmatpush1.msra.mxu0 %v320
        %1508 = vmatprep.subr.mxu0 0.0
        %1509 = vmatpush1.msra.mxu0 0.0
        %1510 = vmatprep.subr.mxu0 0.0
        %1511 = vmatpush1.msra.mxu0 0.0
        %1512 = vmatprep.subr.mxu0 0.0
        %1513 = vmatpush1.msra.mxu0 0.0
        %1514 = vmatprep.subr.mxu0 0.0
        %1515 = vmatpush1.msra.mxu0 0.0
        %1516 = vmatprep.subr.mxu0 0.0
        %1517 = vmatpush1.msra.mxu0 0.0
        %1518 = vmatprep.subr.mxu0 0.0
        %1519 = vmatpush1.msra.mxu0 0.0
        %1520 = vmatprep.subr.mxu0 0.0
        %1521 = vmatpush1.msra.mxu0 0.0
        %1522 = vmatprep.subr.mxu0 0.0
        %1523 = vmatpush1.msra.mxu0 0.0
        %1524 = vmatprep.subr.mxu0 0.0
        %1525 = vmatpush1.msra.mxu0 0.0
        %1526 = vmatprep.subr.mxu0 0.0
        %1527 = vmatpush1.msra.mxu0 0.0
        %1528 = vmatprep.subr.mxu0 0.0
        %1529 = vmatpush1.msra.mxu0 0.0
        %1530 = vmatprep.subr.mxu0 0.0
        %1531 = vmatpush1.msra.mxu0 0.0
        %1532 = vmatprep.subr.mxu0 0.0
        %1533 = vmatpush1.msra.mxu0 0.0
        %1534 = vmatprep.subr.mxu0 0.0
        %1535 = vmatpush1.msra.mxu0 0.0
        %1536 = vmatprep.subr.mxu0 0.0
        %1537 = vmatpush1.msra.mxu0 0.0
        %1538 = vmatprep.subr.mxu0 0.0
        %1539 = vmatpush1.msra.mxu0 0.0
        %1540 = vmatprep.subr.mxu0 0.0
        %1541 = vmatpush1.msra.mxu0 0.0
        %1542 = vmatprep.subr.mxu0 0.0
        %1543 = vmatpush1.msra.mxu0 0.0
        %1544 = vmatprep.subr.mxu0 0.0
        %1545 = vmatpush1.msra.mxu0 0.0
        %1546 = vmatprep.subr.mxu0 0.0
        %1547 = vmatpush1.msra.mxu0 0.0
        %1548 = vmatprep.subr.mxu0 0.0
        %1549 = vmatpush1.msra.mxu0 0.0
        %1550 = vmatprep.subr.mxu0 0.0
        %1551 = vmatpush1.msra.mxu0 0.0
        %1552 = vmatprep.subr.mxu0 0.0
        %1553 = vmatpush1.msra.mxu0 0.0
        %1554 = vmatprep.subr.mxu0 0.0
        %1555 = vmatpush1.msra.mxu0 0.0
        %1556 = vmatprep.subr.mxu0 0.0
        %1557 = vmatpush1.msra.mxu0 0.0
        %1558 = vmatprep.subr.mxu0 0.0
        %1559 = vmatpush1.msra.mxu0 0.0
        %1560 = vmatprep.subr.mxu0 0.0
        %1561 = vmatpush1.msra.mxu0 0.0
        %1562 = vmatprep.subr.mxu0 0.0
        %1563 = vmatpush1.msra.mxu0 0.0
        %1564 = vmatprep.mubr.f32.mxu0 0.0
        %1565 = vmatmul.mubr.f32.gmra.mrb[0].mxu0 %v1498
        %v1566 = vpop.f32.mrb[0].mxu0
        %v1567 = vadd.f32 %v954, %v1566
        %v1568 = vpop.f32.mrb[0].mxu0
        %1569 = vdwg.mxu0
        %v1570 = vadd.f32 %v1497, %v1567
        %v1571 = vxor.u32 %v1570, 2147483648
        %v1572 = vmul.f32 %v1571, 1.442695
        %v1573 = vpow.pop %v1572
        %v1574 = vadd.f32 %v1573, 1.0
        %v1575 = vrcp.pop %v1574
        %v1576 = vmul.f32 1.0, %v1575
        %1578 = vrot.lane.b32.xlu0 %v1567, 64
        %v1579 = vpop.permute.xlu0 %1578
        %v1581 = vmul.f32 %v1576, %v1579
        %1583 = vrot.lane.b32.xlu0 %v1581, 64
        %v1584 = vpop.permute.xlu0 %1583
        %v1586 = vadd.f32 %v1497, %v1584
        %v1587 = vtanh.pop %v1586
        %v1588 = vsub.f32 1.0, %v1576
        %1590 = vrot.lane.b32.xlu0 %v1587, 96
        %v1591 = vpop.permute.xlu0 %1590
        %v1593 = vmul.f32 %v1588, %v1591
        %v1594 = vmul.f32 %v1576, %v1487
        %v1595 = vadd.f32 %v1593, %v1594
        %1597 = vrot.lane.b32.xlu0 %v1595, 96
        %v1598 = vpop.permute.xlu0 %1597
        %s1600 = scalar_lea.vmem [#allocation3], %s1495
        %1601 = vst.msk [vmem:[%s1600] sm:$0x3] %vm1060, %v1598
        %s1602 = scalar_select %p945, 6, 1
        %s1603 = smul.u32 %s1602, 2
        %s1604 = scalar_lea.vmem [#allocation2], %s1603
        %v1605 = vld [vmem:[%s1604] sm:$0x3]
        %v1606 = vsel %vm330, %v1598, 0
        %1608 = vmatprep.subr.mxu0 0.0
        %1609 = vmatpush1.msra.mxu0 %v317
        %1610 = vmatprep.subr.mxu0 0.0
        %1611 = vmatpush1.msra.mxu0 %v318
        %1612 = vmatprep.subr.mxu0 0.0
        %1613 = vmatpush1.msra.mxu0 %v319
        %1614 = vmatprep.subr.mxu0 0.0
        %1615 = vmatpush1.msra.mxu0 %v320
        %1616 = vmatprep.subr.mxu0 0.0
        %1617 = vmatpush1.msra.mxu0 0.0
        %1618 = vmatprep.subr.mxu0 0.0
        %1619 = vmatpush1.msra.mxu0 0.0
        %1620 = vmatprep.subr.mxu0 0.0
        %1621 = vmatpush1.msra.mxu0 0.0
        %1622 = vmatprep.subr.mxu0 0.0
        %1623 = vmatpush1.msra.mxu0 0.0
        %1624 = vmatprep.subr.mxu0 0.0
        %1625 = vmatpush1.msra.mxu0 0.0
        %1626 = vmatprep.subr.mxu0 0.0
        %1627 = vmatpush1.msra.mxu0 0.0
        %1628 = vmatprep.subr.mxu0 0.0
        %1629 = vmatpush1.msra.mxu0 0.0
        %1630 = vmatprep.subr.mxu0 0.0
        %1631 = vmatpush1.msra.mxu0 0.0
        %1632 = vmatprep.subr.mxu0 0.0
        %1633 = vmatpush1.msra.mxu0 0.0
        %1634 = vmatprep.subr.mxu0 0.0
        %1635 = vmatpush1.msra.mxu0 0.0
        %1636 = vmatprep.subr.mxu0 0.0
        %1637 = vmatpush1.msra.mxu0 0.0
        %1638 = vmatprep.subr.mxu0 0.0
        %1639 = vmatpush1.msra.mxu0 0.0
        %1640 = vmatprep.subr.mxu0 0.0
        %1641 = vmatpush1.msra.mxu0 0.0
        %1642 = vmatprep.subr.mxu0 0.0
        %1643 = vmatpush1.msra.mxu0 0.0
        %1644 = vmatprep.subr.mxu0 0.0
        %1645 = vmatpush1.msra.mxu0 0.0
        %1646 = vmatprep.subr.mxu0 0.0
        %1647 = vmatpush1.msra.mxu0 0.0
        %1648 = vmatprep.subr.mxu0 0.0
        %1649 = vmatpush1.msra.mxu0 0.0
        %1650 = vmatprep.subr.mxu0 0.0
        %1651 = vmatpush1.msra.mxu0 0.0
        %1652 = vmatprep.subr.mxu0 0.0
        %1653 = vmatpush1.msra.mxu0 0.0
        %1654 = vmatprep.subr.mxu0 0.0
        %1655 = vmatpush1.msra.mxu0 0.0
        %1656 = vmatprep.subr.mxu0 0.0
        %1657 = vmatpush1.msra.mxu0 0.0
        %1658 = vmatprep.subr.mxu0 0.0
        %1659 = vmatpush1.msra.mxu0 0.0
        %1660 = vmatprep.subr.mxu0 0.0
        %1661 = vmatpush1.msra.mxu0 0.0
        %1662 = vmatprep.subr.mxu0 0.0
        %1663 = vmatpush1.msra.mxu0 0.0
        %1664 = vmatprep.subr.mxu0 0.0
        %1665 = vmatpush1.msra.mxu0 0.0
        %1666 = vmatprep.subr.mxu0 0.0
        %1667 = vmatpush1.msra.mxu0 0.0
        %1668 = vmatprep.subr.mxu0 0.0
        %1669 = vmatpush1.msra.mxu0 0.0
        %1670 = vmatprep.subr.mxu0 0.0
        %1671 = vmatpush1.msra.mxu0 0.0
        %1672 = vmatprep.mubr.f32.mxu0 0.0
        %1673 = vmatmul.mubr.f32.gmra.mrb[0].mxu0 %v1606
        %v1674 = vpop.f32.mrb[0].mxu0
        %v1675 = vadd.f32 %v954, %v1674
        %v1676 = vpop.f32.mrb[0].mxu0
        %1677 = vdwg.mxu0
        %v1678 = vadd.f32 %v1605, %v1675
        %v1679 = vxor.u32 %v1678, 2147483648
        %v1680 = vmul.f32 %v1679, 1.442695
        %v1681 = vpow.pop %v1680
        %v1682 = vadd.f32 %v1681, 1.0
        %v1683 = vrcp.pop %v1682
        %v1684 = vmul.f32 1.0, %v1683
        %1686 = vrot.lane.b32.xlu0 %v1675, 64
        %v1687 = vpop.permute.xlu0 %1686
        %v1689 = vmul.f32 %v1684, %v1687
        %1691 = vrot.lane.b32.xlu0 %v1689, 64
        %v1692 = vpop.permute.xlu0 %1691
        %v1694 = vadd.f32 %v1605, %v1692
        %v1695 = vtanh.pop %v1694
        %v1696 = vsub.f32 1.0, %v1684
        %1698 = vrot.lane.b32.xlu0 %v1695, 96
        %v1699 = vpop.permute.xlu0 %1698
        %v1701 = vmul.f32 %v1696, %v1699
        %v1702 = vmul.f32 %v1684, %v1595
        %v1703 = vadd.f32 %v1701, %v1702
        %1705 = vrot.lane.b32.xlu0 %v1703, 96
        %v1706 = vpop.permute.xlu0 %1705
        %s1708 = scalar_lea.vmem [#allocation3], %s1603
        %1709 = vst.msk [vmem:[%s1708] sm:$0x3] %vm1060, %v1706
        %s1710 = scalar_select %p945, 7, 0
        %s1711 = smul.u32 %s1710, 2
        %s1712 = scalar_lea.vmem [#allocation2], %s1711
        %v1713 = vld [vmem:[%s1712] sm:$0x3]
        %v1714 = vsel %vm330, %v1706, 0
        %1716 = vmatprep.subr.mxu0 0.0
        %1717 = vmatpush1.msra.mxu0 %v317
        %1718 = vmatprep.subr.mxu0 0.0
        %1719 = vmatpush1.msra.mxu0 %v318
        %1720 = vmatprep.subr.mxu0 0.0
        %1721 = vmatpush1.msra.mxu0 %v319
        %1722 = vmatprep.subr.mxu0 0.0
        %1723 = vmatpush1.msra.mxu0 %v320
        %1724 = vmatprep.subr.mxu0 0.0
        %1725 = vmatpush1.msra.mxu0 0.0
        %1726 = vmatprep.subr.mxu0 0.0
        %1727 = vmatpush1.msra.mxu0 0.0
        %1728 = vmatprep.subr.mxu0 0.0
        %1729 = vmatpush1.msra.mxu0 0.0
        %1730 = vmatprep.subr.mxu0 0.0
        %1731 = vmatpush1.msra.mxu0 0.0
        %1732 = vmatprep.subr.mxu0 0.0
        %1733 = vmatpush1.msra.mxu0 0.0
        %1734 = vmatprep.subr.mxu0 0.0
        %1735 = vmatpush1.msra.mxu0 0.0
        %1736 = vmatprep.subr.mxu0 0.0
        %1737 = vmatpush1.msra.mxu0 0.0
        %1738 = vmatprep.subr.mxu0 0.0
        %1739 = vmatpush1.msra.mxu0 0.0
        %1740 = vmatprep.subr.mxu0 0.0
        %1741 = vmatpush1.msra.mxu0 0.0
        %1742 = vmatprep.subr.mxu0 0.0
        %1743 = vmatpush1.msra.mxu0 0.0
        %1744 = vmatprep.subr.mxu0 0.0
        %1745 = vmatpush1.msra.mxu0 0.0
        %1746 = vmatprep.subr.mxu0 0.0
        %1747 = vmatpush1.msra.mxu0 0.0
        %1748 = vmatprep.subr.mxu0 0.0
        %1749 = vmatpush1.msra.mxu0 0.0
        %1750 = vmatprep.subr.mxu0 0.0
        %1751 = vmatpush1.msra.mxu0 0.0
        %1752 = vmatprep.subr.mxu0 0.0
        %1753 = vmatpush1.msra.mxu0 0.0
        %1754 = vmatprep.subr.mxu0 0.0
        %1755 = vmatpush1.msra.mxu0 0.0
        %1756 = vmatprep.subr.mxu0 0.0
        %1757 = vmatpush1.msra.mxu0 0.0
        %1758 = vmatprep.subr.mxu0 0.0
        %1759 = vmatpush1.msra.mxu0 0.0
        %1760 = vmatprep.subr.mxu0 0.0
        %1761 = vmatpush1.msra.mxu0 0.0
        %1762 = vmatprep.subr.mxu0 0.0
        %1763 = vmatpush1.msra.mxu0 0.0
        %1764 = vmatprep.subr.mxu0 0.0
        %1765 = vmatpush1.msra.mxu0 0.0
        %1766 = vmatprep.subr.mxu0 0.0
        %1767 = vmatpush1.msra.mxu0 0.0
        %1768 = vmatprep.subr.mxu0 0.0
        %1769 = vmatpush1.msra.mxu0 0.0
        %1770 = vmatprep.subr.mxu0 0.0
        %1771 = vmatpush1.msra.mxu0 0.0
        %1772 = vmatprep.subr.mxu0 0.0
        %1773 = vmatpush1.msra.mxu0 0.0
        %1774 = vmatprep.subr.mxu0 0.0
        %1775 = vmatpush1.msra.mxu0 0.0
        %1776 = vmatprep.subr.mxu0 0.0
        %1777 = vmatpush1.msra.mxu0 0.0
        %1778 = vmatprep.subr.mxu0 0.0
        %1779 = vmatpush1.msra.mxu0 0.0
        %1780 = vmatprep.mubr.f32.mxu0 0.0
        %1781 = vmatmul.mubr.f32.gmra.mrb[0].mxu0 %v1714
        %v1782 = vpop.f32.mrb[0].mxu0
        %v1783 = vadd.f32 %v954, %v1782
        %v1784 = vpop.f32.mrb[0].mxu0
        %1785 = vdwg.mxu0
        %v1786 = vadd.f32 %v1713, %v1783
        %v1787 = vxor.u32 %v1786, 2147483648
        %v1788 = vmul.f32 %v1787, 1.442695
        %v1789 = vpow.pop %v1788
        %v1790 = vadd.f32 %v1789, 1.0
        %v1791 = vrcp.pop %v1790
        %v1792 = vmul.f32 1.0, %v1791
        %1794 = vrot.lane.b32.xlu0 %v1783, 64
        %v1795 = vpop.permute.xlu0 %1794
        %v1797 = vmul.f32 %v1792, %v1795
        %1799 = vrot.lane.b32.xlu0 %v1797, 64
        %v1800 = vpop.permute.xlu0 %1799
        %v1802 = vadd.f32 %v1713, %v1800
        %v1803 = vtanh.pop %v1802
        %v1804 = vsub.f32 1.0, %v1792
        %1806 = vrot.lane.b32.xlu0 %v1803, 96
        %v1807 = vpop.permute.xlu0 %1806
        %v1809 = vmul.f32 %v1804, %v1807
        %v1810 = vmul.f32 %v1792, %v1703
        %v1811 = vadd.f32 %v1809, %v1810
        %1813 = vrot.lane.b32.xlu0 %v1811, 96
        %v1814 = vpop.permute.xlu0 %1813
        %s1816 = scalar_lea.vmem [#allocation3], %s1711
        %1817 = vst.msk [vmem:[%s1816] sm:$0x3] %vm1060, %v1814
        %v1818 = vld [vmem:[#allocation3] sm:$0x3]
        %v1819 = vld [vmem:[#allocation3 + $0x2] sm:$0x3]
        %v1820 = vld [vmem:[#allocation3 + $0x4] sm:$0x3]
        %v1821 = vld [vmem:[#allocation3 + $0x6] sm:$0x3]
        %v1822 = vld [vmem:[#allocation3 + $0x8] sm:$0x3]
        %v1823 = vld [vmem:[#allocation3 + $0xa] sm:$0x3]
        %v1824 = vld [vmem:[#allocation3 + $0xc] sm:$0x3]
        %v1825 = vld [vmem:[#allocation3 + $0xe] sm:$0x3]
        %1826 = vst.msk [vmem:[%s312] sm:$0x3] %vm1060, %v1818
        %1827 = vst.msk [vmem:[%s312 + $0x2] sm:$0x3] %vm1060, %v1819
        %1828 = vst.msk [vmem:[%s312 + $0x4] sm:$0x3] %vm1060, %v1820
        %1829 = vst.msk [vmem:[%s312 + $0x6] sm:$0x3] %vm1060, %v1821
        %1830 = vst.msk [vmem:[%s312 + $0x8] sm:$0x3] %vm1060, %v1822
        %1831 = vst.msk [vmem:[%s312 + $0xa] sm:$0x3] %vm1060, %v1823
        %1832 = vst.msk [vmem:[%s312 + $0xc] sm:$0x3] %vm1060, %v1824
        %1833 = vst.msk [vmem:[%s312 + $0xe] sm:$0x3] %vm1060, %v1825
        %p1834 = scmp.lt.s32.totalorder %s22, 1
        %s1835 = scalar_select %p1834, %s22, 1
        %s1836 = smul.addr %s1835, 8
        %s1837 = smul.addr %s1836, 2
        %s1838 = scalar_lea.vmem %s5, %s1837
        // Predicated region
        $region49: #{model_graphrel_forward.4} parent=39 // pred_check
          %p1839 = pneg %p165
        $region50: #{model_graphrel_forward.4} parent=39 // pred_check_branch
          %1841 = sbr.rel (%p1839) target = $region52
        $region51: #{model_graphrel_forward.4} parent=39 // pred_region
          _
        $region52: #{model_graphrel_forward.4} parent=39 // pred_fallthru
          _
      $region40: #{model_graphrel_forward.4} parent=5 // pred_fallthru
        _
      %p1842 = scmp.le.s32.totalorder 2, %s17
      // Predicated region
      $region53: #{model_graphrel_forward.4} parent=5 // pred_check
        %p1843 = pneg %p1842
      $region54: #{model_graphrel_forward.4} parent=5 // pred_check_branch
        %1845 = sbr.rel (%p1843) target = $region56
      $region55: #{model_graphrel_forward.4} parent=5 // pred_region
        %s1846 = ssub.s32 %s17, 2
        // Predicated region
        $region57: #{model_graphrel_forward.4} parent=55 // pred_check
          %p1847 = pneg %p171
        $region58: #{model_graphrel_forward.4} parent=55 // pred_check_branch
          %1849 = sbr.rel (%p1847) target = $region60
        $region59: #{model_graphrel_forward.4} parent=55 // pred_region
          %p1850 = scmp.lt.s32.totalorder %s23, 1
          %s1851 = scalar_select %p1850, %s23, 1
          %s1852 = smul.addr %s1851, 8
          %s1853 = smul.addr %s1852, 2
          %s1854 = scalar_lea.vmem %s5, %s1853
        $region60: #{model_graphrel_forward.4} parent=55 // pred_fallthru
          _
      $region56: #{model_graphrel_forward.4} parent=5 // pred_fallthru
        _
    $region6: #{model_graphrel_forward.4} parent=1 // loop_footer
      %s21 = sadd.s32 1, %s17
    $region7: #{model_graphrel_forward.4} parent=1 // loop_footer_branch
      %16 = sbr.rel target = $region3
    $region8: #{model_graphrel_forward.4} parent=1 // loop_exit
      _
    %1855 = vsyncpa [#allocation5], 1
    %s1856 = scalar_lea.sflag [#allocation5], 1
    %1857 = vsyncpa %s1856, 1
    %1858 = vsyncpa [#allocation7], 1
    %s1859 = scalar_lea.sflag [#allocation7], 1
    %1860 = vsyncpa %s1859, 1

// kernel: model_graphrel_forward.5
$region0: #{model_graphrel_forward.5}
  #allocation0 [shape = 'u32[]', space=smem, size = 0x4, offset = 0x4, fixed_abs, tag = 'smem constant byte address 0x4 - core index']
  #allocation1 [shape = 'u32[144,128]{1,0:T(1,128)}', space=vmem, size = 0x12000, scoped, tag = 'internal scratch']
  #allocation2 [shape = 'f32[8,2,96]{2,1,0:T(2,128)}', space=vmem, size = 0x2000, scoped, tag = 'scratch operand']
  #allocation3 [shape = 'f32[8,2,32]{2,1,0:T(2,128)}', space=vmem, size = 0x2000, scoped, tag = 'scratch operand']
  %s0 = inlined_call_operand.vmem [shape: f32[8,2,64], index: 0, kind: input, shape index: {}]
  %s1 = inlined_call_operand.vmem [shape: f32[2,64,96], index: 1, kind: input, shape index: {}]
  %s2 = inlined_call_operand.vmem [shape: f32[2,32,96], index: 2, kind: input, shape index: {}]
  %s3 = inlined_call_operand.vmem [shape: f32[2,1,96], index: 3, kind: input, shape index: {}]
  %s4 = inlined_call_operand.vmem [shape: f32[2,1,96], index: 4, kind: input, shape index: {}]
  %s5 = inlined_call_operand.vmem [shape: f32[2,8,2,32], index: 5, kind: output, shape index: {}]
  %s6 = sld [smem:[#allocation0]]
  $region53: #{model_graphrel_forward.5} parent=0
    _
  %s8 = ssub.s32 1, %s6
  %s9 = scalar_select 0, %s8, %s6
  loop: start=0, step=1, limit=4
  $region2: #{model_graphrel_forward.5} parent=0 // loop_pre_header
    _
  $region3: #{model_graphrel_forward.5} parent=0 // loop_header
    %s11 = sphi 0, %s15
    %p12 = scmp.ge.s32.totalorder %s11, 4
    %s19 = sphi 0, %s19
    %s21 = sphi 0, %s19
    %s22 = sphi 0, %s21
    %s36 = sphi 0, %s22
    %s42 = sphi 0, %s44
    %s45 = sphi 0, %s42
    %s46 = sphi 0, %s45
    %s62 = sphi 0, %s46
    %s68 = sphi 0, %s70
    %s71 = sphi 0, %s68
    %s72 = sphi 0, %s71
    %s88 = sphi 0, %s72
    %s94 = sphi 0, %s96
    %s97 = sphi 0, %s94
    %s98 = sphi 0, %s97
    %s114 = sphi 0, %s98
    %s120 = sphi 0, %s122
    %s123 = sphi 0, %s120
    %s124 = sphi 0, %s123
    %s140 = sphi 0, %s124
    %s146 = sphi 0, %s148
    %s149 = sphi 0, %s146
    %s150 = sphi 0, %s149
    %s166 = sphi 0, %s150
  $region4: #{model_graphrel_forward.5} parent=0 // loop_header_branch
    %14 = sbr.rel (%p12) target = $region8
  $region5: #{model_graphrel_forward.5} parent=0 // loop_body
    %s16 = ssub.s32 %s11, 1
    %s17 = ssub.s32 %s11, 2
    %s18 = sadd.s32 %s11, 1
    %s20 = sadd.s32 %s19, 1
    %p23 = scmp.eq.s32.totalorder %s11, 1
    %p24 = scmp.ne.s32.totalorder %s19, %s21
    %p25 = scmp.eq.s32.totalorder %s11, 0
    %p26 = por %p24, %p25
    %p27 = scmp.ne.s32.totalorder %s19, %s21
    %p28 = scmp.eq.s32.totalorder %s16, 1
    %p29 = por %p27, %p28
    %p30 = scmp.ne.s32.totalorder %s21, %s22
    %p31 = scmp.eq.s32.totalorder %s16, 0
    %p32 = por %p30, %p31
    %p33 = scmp.ne.s32.totalorder %s21, %s22
    %p34 = scmp.eq.s32.totalorder %s17, 1
    %p35 = por %p33, %p34
    %p37 = scmp.ne.s32.totalorder %s22, %s36
    %p38 = scmp.eq.s32.totalorder %s17, 0
    %p39 = por %p37, %p38
    %s40 = ssub.s32 %s11, %s18
    %p41 = scmp.eq.s32.totalorder %s40, 0
    %s43 = sadd.s32 %s42, 1
    %s44 = scalar_select %p41, %s42, %s43
    %p47 = pneg %p41
    %p48 = scmp.eq.s32.totalorder %s11, 1
    %p49 = por %p47, %p48
    %p50 = scmp.ne.s32.totalorder %s42, %s45
    %p51 = scmp.eq.s32.totalorder %s11, 0
    %p52 = por %p50, %p51
    %p53 = scmp.ne.s32.totalorder %s42, %s45
    %p54 = scmp.eq.s32.totalorder %s16, 1
    %p55 = por %p53, %p54
    %p56 = scmp.ne.s32.totalorder %s45, %s46
    %p57 = scmp.eq.s32.totalorder %s16, 0
    %p58 = por %p56, %p57
    %p59 = scmp.ne.s32.totalorder %s45, %s46
    %p60 = scmp.eq.s32.totalorder %s17, 1
    %p61 = por %p59, %p60
    %p63 = scmp.ne.s32.totalorder %s46, %s62
    %p64 = scmp.eq.s32.totalorder %s17, 0
    %p65 = por %p63, %p64
    %s66 = ssub.s32 %s11, %s18
    %p67 = scmp.eq.s32.totalorder %s66, 0
    %s69 = sadd.s32 %s68, 1
    %s70 = scalar_select %p67, %s68, %s69
    %p73 = pneg %p67
    %p74 = scmp.eq.s32.totalorder %s11, 1
    %p75 = por %p73, %p74
    %p76 = scmp.ne.s32.totalorder %s68, %s71
    %p77 = scmp.eq.s32.totalorder %s11, 0
    %p78 = por %p76, %p77
    %p79 = scmp.ne.s32.totalorder %s68, %s71
    %p80 = scmp.eq.s32.totalorder %s16, 1
    %p81 = por %p79, %p80
    %p82 = scmp.ne.s32.totalorder %s71, %s72
    %p83 = scmp.eq.s32.totalorder %s16, 0
    %p84 = por %p82, %p83
    %p85 = scmp.ne.s32.totalorder %s71, %s72
    %p86 = scmp.eq.s32.totalorder %s17, 1
    %p87 = por %p85, %p86
    %p89 = scmp.ne.s32.totalorder %s72, %s88
    %p90 = scmp.eq.s32.totalorder %s17, 0
    %p91 = por %p89, %p90
    %s92 = ssub.s32 %s11, %s18
    %p93 = scmp.eq.s32.totalorder %s92, 0
    %s95 = sadd.s32 %s94, 1
    %s96 = scalar_select %p93, %s94, %s95
    %p99 = pneg %p93
    %p100 = scmp.eq.s32.totalorder %s11, 1
    %p101 = por %p99, %p100
    %p102 = scmp.ne.s32.totalorder %s94, %s97
    %p103 = scmp.eq.s32.totalorder %s11, 0
    %p104 = por %p102, %p103
    %p105 = scmp.ne.s32.totalorder %s94, %s97
    %p106 = scmp.eq.s32.totalorder %s16, 1
    %p107 = por %p105, %p106
    %p108 = scmp.ne.s32.totalorder %s97, %s98
    %p109 = scmp.eq.s32.totalorder %s16, 0
    %p110 = por %p108, %p109
    %p111 = scmp.ne.s32.totalorder %s97, %s98
    %p112 = scmp.eq.s32.totalorder %s17, 1
    %p113 = por %p111, %p112
    %p115 = scmp.ne.s32.totalorder %s98, %s114
    %p116 = scmp.eq.s32.totalorder %s17, 0
    %p117 = por %p115, %p116
    %s118 = ssub.s32 %s11, %s18
    %p119 = scmp.eq.s32.totalorder %s118, 0
    %s121 = sadd.s32 %s120, 1
    %s122 = scalar_select %p119, %s120, %s121
    %p125 = pneg %p119
    %p126 = scmp.eq.s32.totalorder %s11, 1
    %p127 = por %p125, %p126
    %p128 = scmp.ne.s32.totalorder %s120, %s123
    %p129 = scmp.eq.s32.totalorder %s11, 0
    %p130 = por %p128, %p129
    %p131 = scmp.ne.s32.totalorder %s120, %s123
    %p132 = scmp.eq.s32.totalorder %s16, 1
    %p133 = por %p131, %p132
    %p134 = scmp.ne.s32.totalorder %s123, %s124
    %p135 = scmp.eq.s32.totalorder %s16, 0
    %p136 = por %p134, %p135
    %p137 = scmp.ne.s32.totalorder %s123, %s124
    %p138 = scmp.eq.s32.totalorder %s17, 1
    %p139 = por %p137, %p138
    %p141 = scmp.ne.s32.totalorder %s124, %s140
    %p142 = scmp.eq.s32.totalorder %s17, 0
    %p143 = por %p141, %p142
    %s144 = ssub.s32 %s11, %s18
    %p145 = scmp.eq.s32.totalorder %s144, 0
    %s147 = sadd.s32 %s146, 1
    %s148 = scalar_select %p145, %s146, %s147
    %p151 = pneg %p145
    %p152 = scmp.eq.s32.totalorder %s11, 1
    %p153 = por %p151, %p152
    %p154 = scmp.ne.s32.totalorder %s146, %s149
    %p155 = scmp.eq.s32.totalorder %s11, 0
    %p156 = por %p154, %p155
    %p157 = scmp.ne.s32.totalorder %s146, %s149
    %p158 = scmp.eq.s32.totalorder %s16, 1
    %p159 = por %p157, %p158
    %p160 = scmp.ne.s32.totalorder %s149, %s150
    %p161 = scmp.eq.s32.totalorder %s16, 0
    %p162 = por %p160, %p161
    %p163 = scmp.ne.s32.totalorder %s149, %s150
    %p164 = scmp.eq.s32.totalorder %s17, 1
    %p165 = por %p163, %p164
    %p167 = scmp.ne.s32.totalorder %s150, %s166
    %p168 = scmp.eq.s32.totalorder %s17, 0
    %p169 = por %p167, %p168
    %p170 = scmp.le.s32.totalorder 1, %s11
    %p171 = scmp.lt.s32.totalorder %s11, 3
    %p172 = pnand %p170, %p171
    %p173 = pneg %p172
    // Predicated region
    $region9: #{model_graphrel_forward.5} parent=5 // pred_check
      _
    $region10: #{model_graphrel_forward.5} parent=5 // pred_check_branch
      %175 = sbr.rel (%p172) target = $region12
    $region11: #{model_graphrel_forward.5} parent=5 // pred_region
      %s176 = ssub.s32 %s11, 1
      // Predicated region
      $region13: #{model_graphrel_forward.5} parent=11 // pred_check
        %p177 = pneg %p32
      $region14: #{model_graphrel_forward.5} parent=11 // pred_check_branch
        %179 = sbr.rel (%p177) target = $region16
      $region15: #{model_graphrel_forward.5} parent=11 // pred_region
        _
      $region16: #{model_graphrel_forward.5} parent=11 // pred_fallthru
        _
    $region12: #{model_graphrel_forward.5} parent=5 // pred_fallthru
      _
    %p180 = scmp.lt.s32.totalorder %s11, 2
    // Predicated region
    $region17: #{model_graphrel_forward.5} parent=5 // pred_check
      %p181 = pneg %p180
    $region18: #{model_graphrel_forward.5} parent=5 // pred_check_branch
      %183 = sbr.rel (%p181) target = $region20
    $region19: #{model_graphrel_forward.5} parent=5 // pred_region
      // Predicated region
      $region21: #{model_graphrel_forward.5} parent=19 // pred_check
        %p184 = pneg %p52
      $region22: #{model_graphrel_forward.5} parent=19 // pred_check_branch
        %186 = sbr.rel (%p184) target = $region24
      $region23: #{model_graphrel_forward.5} parent=19 // pred_region
        %p187 = scmp.lt.s32.totalorder %s11, 1
        %s188 = scalar_select %p187, %s11, 1
        %s189 = smul.addr %s188, 8
        %s190 = smul.addr %s189, 8
        %s191 = scalar_lea.vmem %s1, %s190
      $region24: #{model_graphrel_forward.5} parent=19 // pred_fallthru
        _
      // Predicated region
      $region25: #{model_graphrel_forward.5} parent=19 // pred_check
        %p192 = pneg %p78
      $region26: #{model_graphrel_forward.5} parent=19 // pred_check_branch
        %194 = sbr.rel (%p192) target = $region28
      $region27: #{model_graphrel_forward.5} parent=19 // pred_region
        %p195 = scmp.lt.s32.totalorder %s11, 1
        %s196 = scalar_select %p195, %s11, 1
        %s197 = smul.addr %s196, 4
        %s198 = smul.addr %s197, 8
        %s199 = scalar_lea.vmem %s2, %s198
      $region28: #{model_graphrel_forward.5} parent=19 // pred_fallthru
        _
      // Predicated region
      $region29: #{model_graphrel_forward.5} parent=19 // pred_check
        %p200 = pneg %p104
      $region30: #{model_graphrel_forward.5} parent=19 // pred_check_branch
        %202 = sbr.rel (%p200) target = $region32
      $region31: #{model_graphrel_forward.5} parent=19 // pred_region
        %p203 = scmp.lt.s32.totalorder %s11, 1
        %s204 = scalar_select %p203, %s11, 1
        %s205 = scalar_lea.vmem %s3, %s204
      $region32: #{model_graphrel_forward.5} parent=19 // pred_fallthru
        _
      // Predicated region
      $region33: #{model_graphrel_forward.5} parent=19 // pred_check
        %p206 = pneg %p130
      $region34: #{model_graphrel_forward.5} parent=19 // pred_check_branch
        %208 = sbr.rel (%p206) target = $region36
      $region35: #{model_graphrel_forward.5} parent=19 // pred_region
        %p209 = scmp.lt.s32.totalorder %s11, 1
        %s210 = scalar_select %p209, %s11, 1
        %s211 = scalar_lea.vmem %s4, %s210
      $region36: #{model_graphrel_forward.5} parent=19 // pred_fallthru
        _
    $region20: #{model_graphrel_forward.5} parent=5 // pred_fallthru
      _
    %p212 = scmp.le.s32.totalorder 1, %s11
    %p213 = scmp.lt.s32.totalorder %s11, 3
    %p214 = pnand %p212, %p213
    %p215 = pneg %p214
    // Predicated region
    $region37: #{model_graphrel_forward.5} parent=5 // pred_check
      _
    $region38: #{model_graphrel_forward.5} parent=5 // pred_check_branch
      %217 = sbr.rel (%p214) target = $region40
    $region39: #{model_graphrel_forward.5} parent=5 // pred_region
      %s218 = ssub.s32 %s11, 1
      %p219 = pneg %p32
      %p220 = pneg %p29
      %p221 = scmp.lt.s32.totalorder %s16, 1
      %s222 = scalar_select %p221, %s16, 1
      %s223 = smul.addr %s222, 8
      %s224 = smul.addr %s223, 8
      %s225 = scalar_lea.vmem %s1, %s224
      %p226 = pneg %p58
      %p227 = pneg %p55
      %p228 = scmp.lt.s32.totalorder %s16, 1
      %s229 = scalar_select %p228, %s16, 1
      %s230 = smul.addr %s229, 4
      %s231 = smul.addr %s230, 8
      %s232 = scalar_lea.vmem %s2, %s231
      %p233 = pneg %p84
      %p234 = pneg %p81
      %p235 = scmp.lt.s32.totalorder %s16, 1
      %s236 = scalar_select %p235, %s16, 1
      %s237 = scalar_lea.vmem %s3, %s236
      %p238 = pneg %p110
      %p239 = pneg %p107
      %p240 = scmp.lt.s32.totalorder %s16, 1
      %s241 = scalar_select %p240, %s16, 1
      %s242 = scalar_lea.vmem %s4, %s241
      %p243 = pneg %p136
      %p244 = pneg %p133
      %p245 = pneg %p162
      %p246 = pneg %p159
      %p247 = scmp.lt.s32.totalorder %s16, 1
      %s248 = scalar_select %p247, %s16, 1
      %s249 = smul.addr %s248, 8
      %s250 = smul.addr %s249, 2
      %s251 = scalar_lea.vmem %s5, %s250
      %p252 = scmp.lt.s32.totalorder %s16, 1
      %s253 = scalar_select %p252, %s16, 1
      %s254 = smul.addr %s253, 8
      %s255 = smul.addr %s254, 8
      %s256 = scalar_lea.vmem %s1, %s255
      %p257 = scmp.lt.s32.totalorder %s16, 1
      %s258 = scalar_select %p257, %s16, 1
      %s259 = smul.addr %s258, 4
      %s260 = smul.addr %s259, 8
      %s261 = scalar_lea.vmem %s2, %s260
      %p262 = scmp.lt.s32.totalorder %s16, 1
      %s263 = scalar_select %p262, %s16, 1
      %s264 = scalar_lea.vmem %s3, %s263
      %p265 = scmp.lt.s32.totalorder %s16, 1
      %s266 = scalar_select %p265, %s16, 1
      %s267 = scalar_lea.vmem %s4, %s266
      %p268 = scmp.lt.s32.totalorder %s16, 1
      %s269 = scalar_select %p268, %s16, 1
      %s270 = smul.addr %s269, 8
      %s271 = smul.addr %s270, 2
      %s272 = scalar_lea.vmem %s5, %s271
      %v273 = vld [vmem:[%s256] sm:$0xff]
      %v274 = vld [vmem:[%s256 + $0x8] sm:$0xff]
      %v275 = vld [vmem:[%s256 + $0x10] sm:$0xff]
      %v276 = vld [vmem:[%s256 + $0x18] sm:$0xff]
      %v277 = vld [vmem:[%s256 + $0x20] sm:$0xff]
      %v278 = vld [vmem:[%s256 + $0x28] sm:$0xff]
      %v279 = vld [vmem:[%s256 + $0x30] sm:$0xff]
      %v280 = vld [vmem:[%s256 + $0x38] sm:$0xff]
      %v281 = vld [vmem:[%s261] sm:$0xff]
      %v282 = vld [vmem:[%s261 + $0x8] sm:$0xff]
      %v283 = vld [vmem:[%s261 + $0x10] sm:$0xff]
      %v284 = vld [vmem:[%s261 + $0x18] sm:$0xff]
      %v285 = vld [vmem:[%s264] sm:$0x1]
      %v286 = vld [vmem:[%s267] sm:$0x1]
      %v287 = vld [vmem:[%s0] sm:$0x3]
      %v289 = vlaneseq
      %v290 = vshrl.u32 %v289, 7
      %v291 = vsub.s32 0, %v290
      %v292 = vrot.slane %v285, %v291
      %vm294 = vcmask 523264
      %v296 = vsel %vm294, %v287, 0
      %298 = vmatprep.subr.mxu0 0.0
      %299 = vmatpush1.msra.mxu0 %v273
      %300 = vmatprep.subr.mxu0 0.0
      %301 = vmatpush1.msra.mxu0 %v274
      %302 = vmatprep.subr.mxu0 0.0
      %303 = vmatpush1.msra.mxu0 %v275
      %304 = vmatprep.subr.mxu0 0.0
      %305 = vmatpush1.msra.mxu0 %v276
      %306 = vmatprep.subr.mxu0 0.0
      %307 = vmatpush1.msra.mxu0 %v277
      %308 = vmatprep.subr.mxu0 0.0
      %309 = vmatpush1.msra.mxu0 %v278
      %310 = vmatprep.subr.mxu0 0.0
      %311 = vmatpush1.msra.mxu0 %v279
      %312 = vmatprep.subr.mxu0 0.0
      %313 = vmatpush1.msra.mxu0 %v280
      %314 = vmatprep.subr.mxu0 0.0
      %315 = vmatpush1.msra.mxu0 0.0
      %316 = vmatprep.subr.mxu0 0.0
      %317 = vmatpush1.msra.mxu0 0.0
      %318 = vmatprep.subr.mxu0 0.0
      %319 = vmatpush1.msra.mxu0 0.0
      %320 = vmatprep.subr.mxu0 0.0
      %321 = vmatpush1.msra.mxu0 0.0
      %322 = vmatprep.subr.mxu0 0.0
      %323 = vmatpush1.msra.mxu0 0.0
      %324 = vmatprep.subr.mxu0 0.0
      %325 = vmatpush1.msra.mxu0 0.0
      %326 = vmatprep.subr.mxu0 0.0
      %327 = vmatpush1.msra.mxu0 0.0
      %328 = vmatprep.subr.mxu0 0.0
      %329 = vmatpush1.msra.mxu0 0.0
      %330 = vmatprep.subr.mxu0 0.0
      %331 = vmatpush1.msra.mxu0 0.0
      %332 = vmatprep.subr.mxu0 0.0
      %333 = vmatpush1.msra.mxu0 0.0
      %334 = vmatprep.subr.mxu0 0.0
      %335 = vmatpush1.msra.mxu0 0.0
      %336 = vmatprep.subr.mxu0 0.0
      %337 = vmatpush1.msra.mxu0 0.0
      %338 = vmatprep.subr.mxu0 0.0
      %339 = vmatpush1.msra.mxu0 0.0
      %340 = vmatprep.subr.mxu0 0.0
      %341 = vmatpush1.msra.mxu0 0.0
      %342 = vmatprep.subr.mxu0 0.0
      %343 = vmatpush1.msra.mxu0 0.0
      %344 = vmatprep.subr.mxu0 0.0
      %345 = vmatpush1.msra.mxu0 0.0
      %346 = vmatprep.subr.mxu0 0.0
      %347 = vmatpush1.msra.mxu0 0.0
      %348 = vmatprep.subr.mxu0 0.0
      %349 = vmatpush1.msra.mxu0 0.0
      %350 = vmatprep.subr.mxu0 0.0
      %351 = vmatpush1.msra.mxu0 0.0
      %352 = vmatprep.subr.mxu0 0.0
      %353 = vmatpush1.msra.mxu0 0.0
      %354 = vmatprep.subr.mxu0 0.0
      %355 = vmatpush1.msra.mxu0 0.0
      %356 = vmatprep.subr.mxu0 0.0
      %357 = vmatpush1.msra.mxu0 0.0
      %358 = vmatprep.subr.mxu0 0.0
      %359 = vmatpush1.msra.mxu0 0.0
      %360 = vmatprep.subr.mxu0 0.0
      %361 = vmatpush1.msra.mxu0 0.0
      %362 = vmatprep.mubr.f32.mxu0 0.0
      %363 = vmatmul.mubr.f32.gmra.mrb[0].mxu0 %v296
      %v364 = vpop.f32.mrb[0].mxu0
      %v365 = vadd.f32 %v292, %v364
      %v366 = vpop.f32.mrb[0].mxu0
      %367 = vdwg.mxu0
      %vm368 = vcmask 779264
      %369 = vst.msk [vmem:[#allocation2] sm:$0x3] %vm368, %v365
      %s370 = scalar_lea.vmem %s0, 2
      %v371 = vld [vmem:[%s370] sm:$0x3]
      %v373 = vsel %vm294, %v371, 0
      %375 = vmatprep.subr.mxu0 0.0
      %376 = vmatpush1.msra.mxu0 %v273
      %377 = vmatprep.subr.mxu0 0.0
      %378 = vmatpush1.msra.mxu0 %v274
      %379 = vmatprep.subr.mxu0 0.0
      %380 = vmatpush1.msra.mxu0 %v275
      %381 = vmatprep.subr.mxu0 0.0
      %382 = vmatpush1.msra.mxu0 %v276
      %383 = vmatprep.subr.mxu0 0.0
      %384 = vmatpush1.msra.mxu0 %v277
      %385 = vmatprep.subr.mxu0 0.0
      %386 = vmatpush1.msra.mxu0 %v278
      %387 = vmatprep.subr.mxu0 0.0
      %388 = vmatpush1.msra.mxu0 %v279
      %389 = vmatprep.subr.mxu0 0.0
      %390 = vmatpush1.msra.mxu0 %v280
      %391 = vmatprep.subr.mxu0 0.0
      %392 = vmatpush1.msra.mxu0 0.0
      %393 = vmatprep.subr.mxu0 0.0
      %394 = vmatpush1.msra.mxu0 0.0
      %395 = vmatprep.subr.mxu0 0.0
      %396 = vmatpush1.msra.mxu0 0.0
      %397 = vmatprep.subr.mxu0 0.0
      %398 = vmatpush1.msra.mxu0 0.0
      %399 = vmatprep.subr.mxu0 0.0
      %400 = vmatpush1.msra.mxu0 0.0
      %401 = vmatprep.subr.mxu0 0.0
      %402 = vmatpush1.msra.mxu0 0.0
      %403 = vmatprep.subr.mxu0 0.0
      %404 = vmatpush1.msra.mxu0 0.0
      %405 = vmatprep.subr.mxu0 0.0
      %406 = vmatpush1.msra.mxu0 0.0
      %407 = vmatprep.subr.mxu0 0.0
      %408 = vmatpush1.msra.mxu0 0.0
      %409 = vmatprep.subr.mxu0 0.0
      %410 = vmatpush1.msra.mxu0 0.0
      %411 = vmatprep.subr.mxu0 0.0
      %412 = vmatpush1.msra.mxu0 0.0
      %413 = vmatprep.subr.mxu0 0.0
      %414 = vmatpush1.msra.mxu0 0.0
      %415 = vmatprep.subr.mxu0 0.0
      %416 = vmatpush1.msra.mxu0 0.0
      %417 = vmatprep.subr.mxu0 0.0
      %418 = vmatpush1.msra.mxu0 0.0
      %419 = vmatprep.subr.mxu0 0.0
      %420 = vmatpush1.msra.mxu0 0.0
      %421 = vmatprep.subr.mxu0 0.0
      %422 = vmatpush1.msra.mxu0 0.0
      %423 = vmatprep.subr.mxu0 0.0
      %424 = vmatpush1.msra.mxu0 0.0
      %425 = vmatprep.subr.mxu0 0.0
      %426 = vmatpush1.msra.mxu0 0.0
      %427 = vmatprep.subr.mxu0 0.0
      %428 = vmatpush1.msra.mxu0 0.0
      %429 = vmatprep.subr.mxu0 0.0
      %430 = vmatpush1.msra.mxu0 0.0
      %431 = vmatprep.subr.mxu0 0.0
      %432 = vmatpush1.msra.mxu0 0.0
      %433 = vmatprep.subr.mxu0 0.0
      %434 = vmatpush1.msra.mxu0 0.0
      %435 = vmatprep.subr.mxu0 0.0
      %436 = vmatpush1.msra.mxu0 0.0
      %437 = vmatprep.subr.mxu0 0.0
      %438 = vmatpush1.msra.mxu0 0.0
      %439 = vmatprep.mubr.f32.mxu0 0.0
      %440 = vmatmul.mubr.f32.gmra.mrb[0].mxu0 %v373
      %v441 = vpop.f32.mrb[0].mxu0
      %v442 = vadd.f32 %v292, %v441
      %v443 = vpop.f32.mrb[0].mxu0
      %444 = vdwg.mxu0
      %s445 = scalar_lea.vmem [#allocation2], 2
      %446 = vst.msk [vmem:[%s445] sm:$0x3] %vm368, %v442
      %s447 = scalar_lea.vmem %s0, 4
      %v448 = vld [vmem:[%s447] sm:$0x3]
      %v450 = vsel %vm294, %v448, 0
      %452 = vmatprep.subr.mxu0 0.0
      %453 = vmatpush1.msra.mxu0 %v273
      %454 = vmatprep.subr.mxu0 0.0
      %455 = vmatpush1.msra.mxu0 %v274
      %456 = vmatprep.subr.mxu0 0.0
      %457 = vmatpush1.msra.mxu0 %v275
      %458 = vmatprep.subr.mxu0 0.0
      %459 = vmatpush1.msra.mxu0 %v276
      %460 = vmatprep.subr.mxu0 0.0
      %461 = vmatpush1.msra.mxu0 %v277
      %462 = vmatprep.subr.mxu0 0.0
      %463 = vmatpush1.msra.mxu0 %v278
      %464 = vmatprep.subr.mxu0 0.0
      %465 = vmatpush1.msra.mxu0 %v279
      %466 = vmatprep.subr.mxu0 0.0
      %467 = vmatpush1.msra.mxu0 %v280
      %468 = vmatprep.subr.mxu0 0.0
      %469 = vmatpush1.msra.mxu0 0.0
      %470 = vmatprep.subr.mxu0 0.0
      %471 = vmatpush1.msra.mxu0 0.0
      %472 = vmatprep.subr.mxu0 0.0
      %473 = vmatpush1.msra.mxu0 0.0
      %474 = vmatprep.subr.mxu0 0.0
      %475 = vmatpush1.msra.mxu0 0.0
      %476 = vmatprep.subr.mxu0 0.0
      %477 = vmatpush1.msra.mxu0 0.0
      %478 = vmatprep.subr.mxu0 0.0
      %479 = vmatpush1.msra.mxu0 0.0
      %480 = vmatprep.subr.mxu0 0.0
      %481 = vmatpush1.msra.mxu0 0.0
      %482 = vmatprep.subr.mxu0 0.0
      %483 = vmatpush1.msra.mxu0 0.0
      %484 = vmatprep.subr.mxu0 0.0
      %485 = vmatpush1.msra.mxu0 0.0
      %486 = vmatprep.subr.mxu0 0.0
      %487 = vmatpush1.msra.mxu0 0.0
      %488 = vmatprep.subr.mxu0 0.0
      %489 = vmatpush1.msra.mxu0 0.0
      %490 = vmatprep.subr.mxu0 0.0
      %491 = vmatpush1.msra.mxu0 0.0
      %492 = vmatprep.subr.mxu0 0.0
      %493 = vmatpush1.msra.mxu0 0.0
      %494 = vmatprep.subr.mxu0 0.0
      %495 = vmatpush1.msra.mxu0 0.0
      %496 = vmatprep.subr.mxu0 0.0
      %497 = vmatpush1.msra.mxu0 0.0
      %498 = vmatprep.subr.mxu0 0.0
      %499 = vmatpush1.msra.mxu0 0.0
      %500 = vmatprep.subr.mxu0 0.0
      %501 = vmatpush1.msra.mxu0 0.0
      %502 = vmatprep.subr.mxu0 0.0
      %503 = vmatpush1.msra.mxu0 0.0
      %504 = vmatprep.subr.mxu0 0.0
      %505 = vmatpush1.msra.mxu0 0.0
      %506 = vmatprep.subr.mxu0 0.0
      %507 = vmatpush1.msra.mxu0 0.0
      %508 = vmatprep.subr.mxu0 0.0
      %509 = vmatpush1.msra.mxu0 0.0
      %510 = vmatprep.subr.mxu0 0.0
      %511 = vmatpush1.msra.mxu0 0.0
      %512 = vmatprep.subr.mxu0 0.0
      %513 = vmatpush1.msra.mxu0 0.0
      %514 = vmatprep.subr.mxu0 0.0
      %515 = vmatpush1.msra.mxu0 0.0
      %516 = vmatprep.mubr.f32.mxu0 0.0
      %517 = vmatmul.mubr.f32.gmra.mrb[0].mxu0 %v450
      %v518 = vpop.f32.mrb[0].mxu0
      %v519 = vadd.f32 %v292, %v518
      %v520 = vpop.f32.mrb[0].mxu0
      %521 = vdwg.mxu0
      %s522 = scalar_lea.vmem [#allocation2], 4
      %523 = vst.msk [vmem:[%s522] sm:$0x3] %vm368, %v519
      %s524 = scalar_lea.vmem %s0, 6
      %v525 = vld [vmem:[%s524] sm:$0x3]
      %v527 = vsel %vm294, %v525, 0
      %529 = vmatprep.subr.mxu0 0.0
      %530 = vmatpush1.msra.mxu0 %v273
      %531 = vmatprep.subr.mxu0 0.0
      %532 = vmatpush1.msra.mxu0 %v274
      %533 = vmatprep.subr.mxu0 0.0
      %534 = vmatpush1.msra.mxu0 %v275
      %535 = vmatprep.subr.mxu0 0.0
      %536 = vmatpush1.msra.mxu0 %v276
      %537 = vmatprep.subr.mxu0 0.0
      %538 = vmatpush1.msra.mxu0 %v277
      %539 = vmatprep.subr.mxu0 0.0
      %540 = vmatpush1.msra.mxu0 %v278
      %541 = vmatprep.subr.mxu0 0.0
      %542 = vmatpush1.msra.mxu0 %v279
      %543 = vmatprep.subr.mxu0 0.0
      %544 = vmatpush1.msra.mxu0 %v280
      %545 = vmatprep.subr.mxu0 0.0
      %546 = vmatpush1.msra.mxu0 0.0
      %547 = vmatprep.subr.mxu0 0.0
      %548 = vmatpush1.msra.mxu0 0.0
      %549 = vmatprep.subr.mxu0 0.0
      %550 = vmatpush1.msra.mxu0 0.0
      %551 = vmatprep.subr.mxu0 0.0
      %552 = vmatpush1.msra.mxu0 0.0
      %553 = vmatprep.subr.mxu0 0.0
      %554 = vmatpush1.msra.mxu0 0.0
      %555 = vmatprep.subr.mxu0 0.0
      %556 = vmatpush1.msra.mxu0 0.0
      %557 = vmatprep.subr.mxu0 0.0
      %558 = vmatpush1.msra.mxu0 0.0
      %559 = vmatprep.subr.mxu0 0.0
      %560 = vmatpush1.msra.mxu0 0.0
      %561 = vmatprep.subr.mxu0 0.0
      %562 = vmatpush1.msra.mxu0 0.0
      %563 = vmatprep.subr.mxu0 0.0
      %564 = vmatpush1.msra.mxu0 0.0
      %565 = vmatprep.subr.mxu0 0.0
      %566 = vmatpush1.msra.mxu0 0.0
      %567 = vmatprep.subr.mxu0 0.0
      %568 = vmatpush1.msra.mxu0 0.0
      %569 = vmatprep.subr.mxu0 0.0
      %570 = vmatpush1.msra.mxu0 0.0
      %571 = vmatprep.subr.mxu0 0.0
      %572 = vmatpush1.msra.mxu0 0.0
      %573 = vmatprep.subr.mxu0 0.0
      %574 = vmatpush1.msra.mxu0 0.0
      %575 = vmatprep.subr.mxu0 0.0
      %576 = vmatpush1.msra.mxu0 0.0
      %577 = vmatprep.subr.mxu0 0.0
      %578 = vmatpush1.msra.mxu0 0.0
      %579 = vmatprep.subr.mxu0 0.0
      %580 = vmatpush1.msra.mxu0 0.0
      %581 = vmatprep.subr.mxu0 0.0
      %582 = vmatpush1.msra.mxu0 0.0
      %583 = vmatprep.subr.mxu0 0.0
      %584 = vmatpush1.msra.mxu0 0.0
      %585 = vmatprep.subr.mxu0 0.0
      %586 = vmatpush1.msra.mxu0 0.0
      %587 = vmatprep.subr.mxu0 0.0
      %588 = vmatpush1.msra.mxu0 0.0
      %589 = vmatprep.subr.mxu0 0.0
      %590 = vmatpush1.msra.mxu0 0.0
      %591 = vmatprep.subr.mxu0 0.0
      %592 = vmatpush1.msra.mxu0 0.0
      %593 = vmatprep.mubr.f32.mxu0 0.0
      %594 = vmatmul.mubr.f32.gmra.mrb[0].mxu0 %v527
      %v595 = vpop.f32.mrb[0].mxu0
      %v596 = vadd.f32 %v292, %v595
      %v597 = vpop.f32.mrb[0].mxu0
      %598 = vdwg.mxu0
      %s599 = scalar_lea.vmem [#allocation2], 6
      %600 = vst.msk [vmem:[%s599] sm:$0x3] %vm368, %v596
      %s601 = scalar_lea.vmem %s0, 8
      %v602 = vld [vmem:[%s601] sm:$0x3]
      %v604 = vsel %vm294, %v602, 0
      %606 = vmatprep.subr.mxu0 0.0
      %607 = vmatpush1.msra.mxu0 %v273
      %608 = vmatprep.subr.mxu0 0.0
      %609 = vmatpush1.msra.mxu0 %v274
      %610 = vmatprep.subr.mxu0 0.0
      %611 = vmatpush1.msra.mxu0 %v275
      %612 = vmatprep.subr.mxu0 0.0
      %613 = vmatpush1.msra.mxu0 %v276
      %614 = vmatprep.subr.mxu0 0.0
      %615 = vmatpush1.msra.mxu0 %v277
      %616 = vmatprep.subr.mxu0 0.0
      %617 = vmatpush1.msra.mxu0 %v278
      %618 = vmatprep.subr.mxu0 0.0
      %619 = vmatpush1.msra.mxu0 %v279
      %620 = vmatprep.subr.mxu0 0.0
      %621 = vmatpush1.msra.mxu0 %v280
      %622 = vmatprep.subr.mxu0 0.0
      %623 = vmatpush1.msra.mxu0 0.0
      %624 = vmatprep.subr.mxu0 0.0
      %625 = vmatpush1.msra.mxu0 0.0
      %626 = vmatprep.subr.mxu0 0.0
      %627 = vmatpush1.msra.mxu0 0.0
      %628 = vmatprep.subr.mxu0 0.0
      %629 = vmatpush1.msra.mxu0 0.0
      %630 = vmatprep.subr.mxu0 0.0
      %631 = vmatpush1.msra.mxu0 0.0
      %632 = vmatprep.subr.mxu0 0.0
      %633 = vmatpush1.msra.mxu0 0.0
      %634 = vmatprep.subr.mxu0 0.0
      %635 = vmatpush1.msra.mxu0 0.0
      %636 = vmatprep.subr.mxu0 0.0
      %637 = vmatpush1.msra.mxu0 0.0
      %638 = vmatprep.subr.mxu0 0.0
      %639 = vmatpush1.msra.mxu0 0.0
      %640 = vmatprep.subr.mxu0 0.0
      %641 = vmatpush1.msra.mxu0 0.0
      %642 = vmatprep.subr.mxu0 0.0
      %643 = vmatpush1.msra.mxu0 0.0
      %644 = vmatprep.subr.mxu0 0.0
      %645 = vmatpush1.msra.mxu0 0.0
      %646 = vmatprep.subr.mxu0 0.0
      %647 = vmatpush1.msra.mxu0 0.0
      %648 = vmatprep.subr.mxu0 0.0
      %649 = vmatpush1.msra.mxu0 0.0
      %650 = vmatprep.subr.mxu0 0.0
      %651 = vmatpush1.msra.mxu0 0.0
      %652 = vmatprep.subr.mxu0 0.0
      %653 = vmatpush1.msra.mxu0 0.0
      %654 = vmatprep.subr.mxu0 0.0
      %655 = vmatpush1.msra.mxu0 0.0
      %656 = vmatprep.subr.mxu0 0.0
      %657 = vmatpush1.msra.mxu0 0.0
      %658 = vmatprep.subr.mxu0 0.0
      %659 = vmatpush1.msra.mxu0 0.0
      %660 = vmatprep.subr.mxu0 0.0
      %661 = vmatpush1.msra.mxu0 0.0
      %662 = vmatprep.subr.mxu0 0.0
      %663 = vmatpush1.msra.mxu0 0.0
      %664 = vmatprep.subr.mxu0 0.0
      %665 = vmatpush1.msra.mxu0 0.0
      %666 = vmatprep.subr.mxu0 0.0
      %667 = vmatpush1.msra.mxu0 0.0
      %668 = vmatprep.subr.mxu0 0.0
      %669 = vmatpush1.msra.mxu0 0.0
      %670 = vmatprep.mubr.f32.mxu0 0.0
      %671 = vmatmul.mubr.f32.gmra.mrb[0].mxu0 %v604
      %v672 = vpop.f32.mrb[0].mxu0
      %v673 = vadd.f32 %v292, %v672
      %v674 = vpop.f32.mrb[0].mxu0
      %675 = vdwg.mxu0
      %s676 = scalar_lea.vmem [#allocation2], 8
      %677 = vst.msk [vmem:[%s676] sm:$0x3] %vm368, %v673
      %s678 = scalar_lea.vmem %s0, 10
      %v679 = vld [vmem:[%s678] sm:$0x3]
      %v681 = vsel %vm294, %v679, 0
      %683 = vmatprep.subr.mxu0 0.0
      %684 = vmatpush1.msra.mxu0 %v273
      %685 = vmatprep.subr.mxu0 0.0
      %686 = vmatpush1.msra.mxu0 %v274
      %687 = vmatprep.subr.mxu0 0.0
      %688 = vmatpush1.msra.mxu0 %v275
      %689 = vmatprep.subr.mxu0 0.0
      %690 = vmatpush1.msra.mxu0 %v276
      %691 = vmatprep.subr.mxu0 0.0
      %692 = vmatpush1.msra.mxu0 %v277
      %693 = vmatprep.subr.mxu0 0.0
      %694 = vmatpush1.msra.mxu0 %v278
      %695 = vmatprep.subr.mxu0 0.0
      %696 = vmatpush1.msra.mxu0 %v279
      %697 = vmatprep.subr.mxu0 0.0
      %698 = vmatpush1.msra.mxu0 %v280
      %699 = vmatprep.subr.mxu0 0.0
      %700 = vmatpush1.msra.mxu0 0.0
      %701 = vmatprep.subr.mxu0 0.0
      %702 = vmatpush1.msra.mxu0 0.0
      %703 = vmatprep.subr.mxu0 0.0
      %704 = vmatpush1.msra.mxu0 0.0
      %705 = vmatprep.subr.mxu0 0.0
      %706 = vmatpush1.msra.mxu0 0.0
      %707 = vmatprep.subr.mxu0 0.0
      %708 = vmatpush1.msra.mxu0 0.0
      %709 = vmatprep.subr.mxu0 0.0
      %710 = vmatpush1.msra.mxu0 0.0
      %711 = vmatprep.subr.mxu0 0.0
      %712 = vmatpush1.msra.mxu0 0.0
      %713 = vmatprep.subr.mxu0 0.0
      %714 = vmatpush1.msra.mxu0 0.0
      %715 = vmatprep.subr.mxu0 0.0
      %716 = vmatpush1.msra.mxu0 0.0
      %717 = vmatprep.subr.mxu0 0.0
      %718 = vmatpush1.msra.mxu0 0.0
      %719 = vmatprep.subr.mxu0 0.0
      %720 = vmatpush1.msra.mxu0 0.0
      %721 = vmatprep.subr.mxu0 0.0
      %722 = vmatpush1.msra.mxu0 0.0
      %723 = vmatprep.subr.mxu0 0.0
      %724 = vmatpush1.msra.mxu0 0.0
      %725 = vmatprep.subr.mxu0 0.0
      %726 = vmatpush1.msra.mxu0 0.0
      %727 = vmatprep.subr.mxu0 0.0
      %728 = vmatpush1.msra.mxu0 0.0
      %729 = vmatprep.subr.mxu0 0.0
      %730 = vmatpush1.msra.mxu0 0.0
      %731 = vmatprep.subr.mxu0 0.0
      %732 = vmatpush1.msra.mxu0 0.0
      %733 = vmatprep.subr.mxu0 0.0
      %734 = vmatpush1.msra.mxu0 0.0
      %735 = vmatprep.subr.mxu0 0.0
      %736 = vmatpush1.msra.mxu0 0.0
      %737 = vmatprep.subr.mxu0 0.0
      %738 = vmatpush1.msra.mxu0 0.0
      %739 = vmatprep.subr.mxu0 0.0
      %740 = vmatpush1.msra.mxu0 0.0
      %741 = vmatprep.subr.mxu0 0.0
      %742 = vmatpush1.msra.mxu0 0.0
      %743 = vmatprep.subr.mxu0 0.0
      %744 = vmatpush1.msra.mxu0 0.0
      %745 = vmatprep.subr.mxu0 0.0
      %746 = vmatpush1.msra.mxu0 0.0
      %747 = vmatprep.mubr.f32.mxu0 0.0
      %748 = vmatmul.mubr.f32.gmra.mrb[0].mxu0 %v681
      %v749 = vpop.f32.mrb[0].mxu0
      %v750 = vadd.f32 %v292, %v749
      %v751 = vpop.f32.mrb[0].mxu0
      %752 = vdwg.mxu0
      %s753 = scalar_lea.vmem [#allocation2], 10
      %754 = vst.msk [vmem:[%s753] sm:$0x3] %vm368, %v750
      %s755 = scalar_lea.vmem %s0, 12
      %v756 = vld [vmem:[%s755] sm:$0x3]
      %v758 = vsel %vm294, %v756, 0
      %760 = vmatprep.subr.mxu0 0.0
      %761 = vmatpush1.msra.mxu0 %v273
      %762 = vmatprep.subr.mxu0 0.0
      %763 = vmatpush1.msra.mxu0 %v274
      %764 = vmatprep.subr.mxu0 0.0
      %765 = vmatpush1.msra.mxu0 %v275
      %766 = vmatprep.subr.mxu0 0.0
      %767 = vmatpush1.msra.mxu0 %v276
      %768 = vmatprep.subr.mxu0 0.0
      %769 = vmatpush1.msra.mxu0 %v277
      %770 = vmatprep.subr.mxu0 0.0
      %771 = vmatpush1.msra.mxu0 %v278
      %772 = vmatprep.subr.mxu0 0.0
      %773 = vmatpush1.msra.mxu0 %v279
      %774 = vmatprep.subr.mxu0 0.0
      %775 = vmatpush1.msra.mxu0 %v280
      %776 = vmatprep.subr.mxu0 0.0
      %777 = vmatpush1.msra.mxu0 0.0
      %778 = vmatprep.subr.mxu0 0.0
      %779 = vmatpush1.msra.mxu0 0.0
      %780 = vmatprep.subr.mxu0 0.0
      %781 = vmatpush1.msra.mxu0 0.0
      %782 = vmatprep.subr.mxu0 0.0
      %783 = vmatpush1.msra.mxu0 0.0
      %784 = vmatprep.subr.mxu0 0.0
      %785 = vmatpush1.msra.mxu0 0.0
      %786 = vmatprep.subr.mxu0 0.0
      %787 = vmatpush1.msra.mxu0 0.0
      %788 = vmatprep.subr.mxu0 0.0
      %789 = vmatpush1.msra.mxu0 0.0
      %790 = vmatprep.subr.mxu0 0.0
      %791 = vmatpush1.msra.mxu0 0.0
      %792 = vmatprep.subr.mxu0 0.0
      %793 = vmatpush1.msra.mxu0 0.0
      %794 = vmatprep.subr.mxu0 0.0
      %795 = vmatpush1.msra.mxu0 0.0
      %796 = vmatprep.subr.mxu0 0.0
      %797 = vmatpush1.msra.mxu0 0.0
      %798 = vmatprep.subr.mxu0 0.0
      %799 = vmatpush1.msra.mxu0 0.0
      %800 = vmatprep.subr.mxu0 0.0
      %801 = vmatpush1.msra.mxu0 0.0
      %802 = vmatprep.subr.mxu0 0.0
      %803 = vmatpush1.msra.mxu0 0.0
      %804 = vmatprep.subr.mxu0 0.0
      %805 = vmatpush1.msra.mxu0 0.0
      %806 = vmatprep.subr.mxu0 0.0
      %807 = vmatpush1.msra.mxu0 0.0
      %808 = vmatprep.subr.mxu0 0.0
      %809 = vmatpush1.msra.mxu0 0.0
      %810 = vmatprep.subr.mxu0 0.0
      %811 = vmatpush1.msra.mxu0 0.0
      %812 = vmatprep.subr.mxu0 0.0
      %813 = vmatpush1.msra.mxu0 0.0
      %814 = vmatprep.subr.mxu0 0.0
      %815 = vmatpush1.msra.mxu0 0.0
      %816 = vmatprep.subr.mxu0 0.0
      %817 = vmatpush1.msra.mxu0 0.0
      %818 = vmatprep.subr.mxu0 0.0
      %819 = vmatpush1.msra.mxu0 0.0
      %820 = vmatprep.subr.mxu0 0.0
      %821 = vmatpush1.msra.mxu0 0.0
      %822 = vmatprep.subr.mxu0 0.0
      %823 = vmatpush1.msra.mxu0 0.0
      %824 = vmatprep.mubr.f32.mxu0 0.0
      %825 = vmatmul.mubr.f32.gmra.mrb[0].mxu0 %v758
      %v826 = vpop.f32.mrb[0].mxu0
      %v827 = vadd.f32 %v292, %v826
      %v828 = vpop.f32.mrb[0].mxu0
      %829 = vdwg.mxu0
      %s830 = scalar_lea.vmem [#allocation2], 12
      %831 = vst.msk [vmem:[%s830] sm:$0x3] %vm368, %v827
      %s832 = scalar_lea.vmem %s0, 14
      %v833 = vld [vmem:[%s832] sm:$0x3]
      %v835 = vsel %vm294, %v833, 0
      %837 = vmatprep.subr.mxu0 0.0
      %838 = vmatpush1.msra.mxu0 %v273
      %839 = vmatprep.subr.mxu0 0.0
      %840 = vmatpush1.msra.mxu0 %v274
      %841 = vmatprep.subr.mxu0 0.0
      %842 = vmatpush1.msra.mxu0 %v275
      %843 = vmatprep.subr.mxu0 0.0
      %844 = vmatpush1.msra.mxu0 %v276
      %845 = vmatprep.subr.mxu0 0.0
      %846 = vmatpush1.msra.mxu0 %v277
      %847 = vmatprep.subr.mxu0 0.0
      %848 = vmatpush1.msra.mxu0 %v278
      %849 = vmatprep.subr.mxu0 0.0
      %850 = vmatpush1.msra.mxu0 %v279
      %851 = vmatprep.subr.mxu0 0.0
      %852 = vmatpush1.msra.mxu0 %v280
      %853 = vmatprep.subr.mxu0 0.0
      %854 = vmatpush1.msra.mxu0 0.0
      %855 = vmatprep.subr.mxu0 0.0
      %856 = vmatpush1.msra.mxu0 0.0
      %857 = vmatprep.subr.mxu0 0.0
      %858 = vmatpush1.msra.mxu0 0.0
      %859 = vmatprep.subr.mxu0 0.0
      %860 = vmatpush1.msra.mxu0 0.0
      %861 = vmatprep.subr.mxu0 0.0
      %862 = vmatpush1.msra.mxu0 0.0
      %863 = vmatprep.subr.mxu0 0.0
      %864 = vmatpush1.msra.mxu0 0.0
      %865 = vmatprep.subr.mxu0 0.0
      %866 = vmatpush1.msra.mxu0 0.0
      %867 = vmatprep.subr.mxu0 0.0
      %868 = vmatpush1.msra.mxu0 0.0
      %869 = vmatprep.subr.mxu0 0.0
      %870 = vmatpush1.msra.mxu0 0.0
      %871 = vmatprep.subr.mxu0 0.0
      %872 = vmatpush1.msra.mxu0 0.0
      %873 = vmatprep.subr.mxu0 0.0
      %874 = vmatpush1.msra.mxu0 0.0
      %875 = vmatprep.subr.mxu0 0.0
      %876 = vmatpush1.msra.mxu0 0.0
      %877 = vmatprep.subr.mxu0 0.0
      %878 = vmatpush1.msra.mxu0 0.0
      %879 = vmatprep.subr.mxu0 0.0
      %880 = vmatpush1.msra.mxu0 0.0
      %881 = vmatprep.subr.mxu0 0.0
      %882 = vmatpush1.msra.mxu0 0.0
      %883 = vmatprep.subr.mxu0 0.0
      %884 = vmatpush1.msra.mxu0 0.0
      %885 = vmatprep.subr.mxu0 0.0
      %886 = vmatpush1.msra.mxu0 0.0
      %887 = vmatprep.subr.mxu0 0.0
      %888 = vmatpush1.msra.mxu0 0.0
      %889 = vmatprep.subr.mxu0 0.0
      %890 = vmatpush1.msra.mxu0 0.0
      %891 = vmatprep.subr.mxu0 0.0
      %892 = vmatpush1.msra.mxu0 0.0
      %893 = vmatprep.subr.mxu0 0.0
      %894 = vmatpush1.msra.mxu0 0.0
      %895 = vmatprep.subr.mxu0 0.0
      %896 = vmatpush1.msra.mxu0 0.0
      %897 = vmatprep.subr.mxu0 0.0
      %898 = vmatpush1.msra.mxu0 0.0
      %899 = vmatprep.subr.mxu0 0.0
      %900 = vmatpush1.msra.mxu0 0.0
      %901 = vmatprep.mubr.f32.mxu0 0.0
      %902 = vmatmul.mubr.f32.gmra.mrb[0].mxu0 %v835
      %v903 = vpop.f32.mrb[0].mxu0
      %v904 = vadd.f32 %v292, %v903
      %v905 = vpop.f32.mrb[0].mxu0
      %906 = vdwg.mxu0
      %s907 = scalar_lea.vmem [#allocation2], 14
      %908 = vst.msk [vmem:[%s907] sm:$0x3] %vm368, %v904
      %p909 = scmp.eq.s32.totalorder %s16, 0
      %s910 = scalar_select %p909, 0, 7
      %s911 = smul.u32 %s910, 2
      %s912 = scalar_lea.vmem [#allocation2], %s911
      %v913 = vld [vmem:[%s912] sm:$0x3]
      %v915 = vlaneseq
      %v916 = vshrl.u32 %v915, 7
      %v917 = vsub.s32 0, %v916
      %v918 = vrot.slane %v286, %v917
      %vm920 = vcmask 261120
      %v922 = vsel %vm920, 0.0, 0
      %924 = vmatprep.subr.mxu0 0.0
      %925 = vmatpush1.msra.mxu0 %v281
      %926 = vmatprep.subr.mxu0 0.0
      %927 = vmatpush1.msra.mxu0 %v282
      %928 = vmatprep.subr.mxu0 0.0
      %929 = vmatpush1.msra.mxu0 %v283
      %930 = vmatprep.subr.mxu0 0.0
      %931 = vmatpush1.msra.mxu0 %v284
      %932 = vmatprep.subr.mxu0 0.0
      %933 = vmatpush1.msra.mxu0 0.0
      %934 = vmatprep.subr.mxu0 0.0
      %935 = vmatpush1.msra.mxu0 0.0
      %936 = vmatprep.subr.mxu0 0.0
      %937 = vmatpush1.msra.mxu0 0.0
      %938 = vmatprep.subr.mxu0 0.0
      %939 = vmatpush1.msra.mxu0 0.0
      %940 = vmatprep.subr.mxu0 0.0
      %941 = vmatpush1.msra.mxu0 0.0
      %942 = vmatprep.subr.mxu0 0.0
      %943 = vmatpush1.msra.mxu0 0.0
      %944 = vmatprep.subr.mxu0 0.0
      %945 = vmatpush1.msra.mxu0 0.0
      %946 = vmatprep.subr.mxu0 0.0
      %947 = vmatpush1.msra.mxu0 0.0
      %948 = vmatprep.subr.mxu0 0.0
      %949 = vmatpush1.msra.mxu0 0.0
      %950 = vmatprep.subr.mxu0 0.0
      %951 = vmatpush1.msra.mxu0 0.0
      %952 = vmatprep.subr.mxu0 0.0
      %953 = vmatpush1.msra.mxu0 0.0
      %954 = vmatprep.subr.mxu0 0.0
      %955 = vmatpush1.msra.mxu0 0.0
      %956 = vmatprep.subr.mxu0 0.0
      %957 = vmatpush1.msra.mxu0 0.0
      %958 = vmatprep.subr.mxu0 0.0
      %959 = vmatpush1.msra.mxu0 0.0
      %960 = vmatprep.subr.mxu0 0.0
      %961 = vmatpush1.msra.mxu0 0.0
      %962 = vmatprep.subr.mxu0 0.0
      %963 = vmatpush1.msra.mxu0 0.0
      %964 = vmatprep.subr.mxu0 0.0
      %965 = vmatpush1.msra.mxu0 0.0
      %966 = vmatprep.subr.mxu0 0.0
      %967 = vmatpush1.msra.mxu0 0.0
      %968 = vmatprep.subr.mxu0 0.0
      %969 = vmatpush1.msra.mxu0 0.0
      %970 = vmatprep.subr.mxu0 0.0
      %971 = vmatpush1.msra.mxu0 0.0
      %972 = vmatprep.subr.mxu0 0.0
      %973 = vmatpush1.msra.mxu0 0.0
      %974 = vmatprep.subr.mxu0 0.0
      %975 = vmatpush1.msra.mxu0 0.0
      %976 = vmatprep.subr.mxu0 0.0
      %977 = vmatpush1.msra.mxu0 0.0
      %978 = vmatprep.subr.mxu0 0.0
      %979 = vmatpush1.msra.mxu0 0.0
      %980 = vmatprep.subr.mxu0 0.0
      %981 = vmatpush1.msra.mxu0 0.0
      %982 = vmatprep.subr.mxu0 0.0
      %983 = vmatpush1.msra.mxu0 0.0
      %984 = vmatprep.subr.mxu0 0.0
      %985 = vmatpush1.msra.mxu0 0.0
      %986 = vmatprep.subr.mxu0 0.0
      %987 = vmatpush1.msra.mxu0 0.0
      %988 = vmatprep.mubr.f32.mxu0 0.0
      %989 = vmatmul.mubr.f32.gmra.mrb[0].mxu0 %v922
      %v990 = vpop.f32.mrb[0].mxu0
      %v991 = vadd.f32 %v918, %v990
      %v992 = vpop.f32.mrb[0].mxu0
      %993 = vdwg.mxu0
      %v994 = vadd.f32 %v913, %v991
      %v995 = vxor.u32 %v994, 2147483648
      %v996 = vmul.f32 %v995, 1.442695
      %v997 = vpow.pop %v996
      %v998 = vadd.f32 %v997, 1.0
      %v999 = vrcp.pop %v998
      %v1000 = vmul.f32 1.0, %v999
      %1002 = vrot.lane.b32.xlu0 %v991, 64
      %v1003 = vpop.permute.xlu0 %1002
      %v1005 = vmul.f32 %v1000, %v1003
      %1007 = vrot.lane.b32.xlu0 %v1005, 64
      %v1008 = vpop.permute.xlu0 %1007
      %v1010 = vadd.f32 %v913, %v1008
      %v1011 = vtanh.pop %v1010
      %v1012 = vsub.f32 1.0, %v1000
      %1014 = vrot.lane.b32.xlu0 %v1011, 96
      %v1015 = vpop.permute.xlu0 %1014
      %v1017 = vmul.f32 %v1012, %v1015
      %v1018 = vmul.f32 %v1000, 0.0
      %v1019 = vadd.f32 %v1017, %v1018
      %1021 = vrot.lane.b32.xlu0 %v1019, 96
      %v1022 = vpop.permute.xlu0 %1021
      %s1024 = scalar_lea.vmem [#allocation3], %s911
      %vm1025 = vcmask 254976
      %1026 = vst.msk [vmem:[%s1024] sm:$0x3] %vm1025, %v1022
      %s1027 = scalar_select %p909, 1, 6
      %s1028 = smul.u32 %s1027, 2
      %s1029 = scalar_lea.vmem [#allocation2], %s1028
      %v1030 = vld [vmem:[%s1029] sm:$0x3]
      %v1031 = vsel %vm920, %v1022, 0
      %1033 = vmatprep.subr.mxu0 0.0
      %1034 = vmatpush1.msra.mxu0 %v281
      %1035 = vmatprep.subr.mxu0 0.0
      %1036 = vmatpush1.msra.mxu0 %v282
      %1037 = vmatprep.subr.mxu0 0.0
      %1038 = vmatpush1.msra.mxu0 %v283
      %1039 = vmatprep.subr.mxu0 0.0
      %1040 = vmatpush1.msra.mxu0 %v284
      %1041 = vmatprep.subr.mxu0 0.0
      %1042 = vmatpush1.msra.mxu0 0.0
      %1043 = vmatprep.subr.mxu0 0.0
      %1044 = vmatpush1.msra.mxu0 0.0
      %1045 = vmatprep.subr.mxu0 0.0
      %1046 = vmatpush1.msra.mxu0 0.0
      %1047 = vmatprep.subr.mxu0 0.0
      %1048 = vmatpush1.msra.mxu0 0.0
      %1049 = vmatprep.subr.mxu0 0.0
      %1050 = vmatpush1.msra.mxu0 0.0
      %1051 = vmatprep.subr.mxu0 0.0
      %1052 = vmatpush1.msra.mxu0 0.0
      %1053 = vmatprep.subr.mxu0 0.0
      %1054 = vmatpush1.msra.mxu0 0.0
      %1055 = vmatprep.subr.mxu0 0.0
      %1056 = vmatpush1.msra.mxu0 0.0
      %1057 = vmatprep.subr.mxu0 0.0
      %1058 = vmatpush1.msra.mxu0 0.0
      %1059 = vmatprep.subr.mxu0 0.0
      %1060 = vmatpush1.msra.mxu0 0.0
      %1061 = vmatprep.subr.mxu0 0.0
      %1062 = vmatpush1.msra.mxu0 0.0
      %1063 = vmatprep.subr.mxu0 0.0
      %1064 = vmatpush1.msra.mxu0 0.0
      %1065 = vmatprep.subr.mxu0 0.0
      %1066 = vmatpush1.msra.mxu0 0.0
      %1067 = vmatprep.subr.mxu0 0.0
      %1068 = vmatpush1.msra.mxu0 0.0
      %1069 = vmatprep.subr.mxu0 0.0
      %1070 = vmatpush1.msra.mxu0 0.0
      %1071 = vmatprep.subr.mxu0 0.0
      %1072 = vmatpush1.msra.mxu0 0.0
      %1073 = vmatprep.subr.mxu0 0.0
      %1074 = vmatpush1.msra.mxu0 0.0
      %1075 = vmatprep.subr.mxu0 0.0
      %1076 = vmatpush1.msra.mxu0 0.0
      %1077 = vmatprep.subr.mxu0 0.0
      %1078 = vmatpush1.msra.mxu0 0.0
      %1079 = vmatprep.subr.mxu0 0.0
      %1080 = vmatpush1.msra.mxu0 0.0
      %1081 = vmatprep.subr.mxu0 0.0
      %1082 = vmatpush1.msra.mxu0 0.0
      %1083 = vmatprep.subr.mxu0 0.0
      %1084 = vmatpush1.msra.mxu0 0.0
      %1085 = vmatprep.subr.mxu0 0.0
      %1086 = vmatpush1.msra.mxu0 0.0
      %1087 = vmatprep.subr.mxu0 0.0
      %1088 = vmatpush1.msra.mxu0 0.0
      %1089 = vmatprep.subr.mxu0 0.0
      %1090 = vmatpush1.msra.mxu0 0.0
      %1091 = vmatprep.subr.mxu0 0.0
      %1092 = vmatpush1.msra.mxu0 0.0
      %1093 = vmatprep.subr.mxu0 0.0
      %1094 = vmatpush1.msra.mxu0 0.0
      %1095 = vmatprep.subr.mxu0 0.0
      %1096 = vmatpush1.msra.mxu0 0.0
      %1097 = vmatprep.mubr.f32.mxu0 0.0
      %1098 = vmatmul.mubr.f32.gmra.mrb[0].mxu0 %v1031
      %v1099 = vpop.f32.mrb[0].mxu0
      %v1100 = vadd.f32 %v918, %v1099
      %v1101 = vpop.f32.mrb[0].mxu0
      %1102 = vdwg.mxu0
      %v1103 = vadd.f32 %v1030, %v1100
      %v1104 = vxor.u32 %v1103, 2147483648
      %v1105 = vmul.f32 %v1104, 1.442695
      %v1106 = vpow.pop %v1105
      %v1107 = vadd.f32 %v1106, 1.0
      %v1108 = vrcp.pop %v1107
      %v1109 = vmul.f32 1.0, %v1108
      %1111 = vrot.lane.b32.xlu0 %v1100, 64
      %v1112 = vpop.permute.xlu0 %1111
      %v1114 = vmul.f32 %v1109, %v1112
      %1116 = vrot.lane.b32.xlu0 %v1114, 64
      %v1117 = vpop.permute.xlu0 %1116
      %v1119 = vadd.f32 %v1030, %v1117
      %v1120 = vtanh.pop %v1119
      %v1121 = vsub.f32 1.0, %v1109
      %1123 = vrot.lane.b32.xlu0 %v1120, 96
      %v1124 = vpop.permute.xlu0 %1123
      %v1126 = vmul.f32 %v1121, %v1124
      %v1127 = vmul.f32 %v1109, %v1019
      %v1128 = vadd.f32 %v1126, %v1127
      %1130 = vrot.lane.b32.xlu0 %v1128, 96
      %v1131 = vpop.permute.xlu0 %1130
      %s1133 = scalar_lea.vmem [#allocation3], %s1028
      %1134 = vst.msk [vmem:[%s1133] sm:$0x3] %vm1025, %v1131
      %s1135 = scalar_select %p909, 2, 5
      %s1136 = smul.u32 %s1135, 2
      %s1137 = scalar_lea.vmem [#allocation2], %s1136
      %v1138 = vld [vmem:[%s1137] sm:$0x3]
      %v1139 = vsel %vm920, %v1131, 0
      %1141 = vmatprep.subr.mxu0 0.0
      %1142 = vmatpush1.msra.mxu0 %v281
      %1143 = vmatprep.subr.mxu0 0.0
      %1144 = vmatpush1.msra.mxu0 %v282
      %1145 = vmatprep.subr.mxu0 0.0
      %1146 = vmatpush1.msra.mxu0 %v283
      %1147 = vmatprep.subr.mxu0 0.0
      %1148 = vmatpush1.msra.mxu0 %v284
      %1149 = vmatprep.subr.mxu0 0.0
      %1150 = vmatpush1.msra.mxu0 0.0
      %1151 = vmatprep.subr.mxu0 0.0
      %1152 = vmatpush1.msra.mxu0 0.0
      %1153 = vmatprep.subr.mxu0 0.0
      %1154 = vmatpush1.msra.mxu0 0.0
      %1155 = vmatprep.subr.mxu0 0.0
      %1156 = vmatpush1.msra.mxu0 0.0
      %1157 = vmatprep.subr.mxu0 0.0
      %1158 = vmatpush1.msra.mxu0 0.0
      %1159 = vmatprep.subr.mxu0 0.0
      %1160 = vmatpush1.msra.mxu0 0.0
      %1161 = vmatprep.subr.mxu0 0.0
      %1162 = vmatpush1.msra.mxu0 0.0
      %1163 = vmatprep.subr.mxu0 0.0
      %1164 = vmatpush1.msra.mxu0 0.0
      %1165 = vmatprep.subr.mxu0 0.0
      %1166 = vmatpush1.msra.mxu0 0.0
      %1167 = vmatprep.subr.mxu0 0.0
      %1168 = vmatpush1.msra.mxu0 0.0
      %1169 = vmatprep.subr.mxu0 0.0
      %1170 = vmatpush1.msra.mxu0 0.0
      %1171 = vmatprep.subr.mxu0 0.0
      %1172 = vmatpush1.msra.mxu0 0.0
      %1173 = vmatprep.subr.mxu0 0.0
      %1174 = vmatpush1.msra.mxu0 0.0
      %1175 = vmatprep.subr.mxu0 0.0
      %1176 = vmatpush1.msra.mxu0 0.0
      %1177 = vmatprep.subr.mxu0 0.0
      %1178 = vmatpush1.msra.mxu0 0.0
      %1179 = vmatprep.subr.mxu0 0.0
      %1180 = vmatpush1.msra.mxu0 0.0
      %1181 = vmatprep.subr.mxu0 0.0
      %1182 = vmatpush1.msra.mxu0 0.0
      %1183 = vmatprep.subr.mxu0 0.0
      %1184 = vmatpush1.msra.mxu0 0.0
      %1185 = vmatprep.subr.mxu0 0.0
      %1186 = vmatpush1.msra.mxu0 0.0
      %1187 = vmatprep.subr.mxu0 0.0
      %1188 = vmatpush1.msra.mxu0 0.0
      %1189 = vmatprep.subr.mxu0 0.0
      %1190 = vmatpush1.msra.mxu0 0.0
      %1191 = vmatprep.subr.mxu0 0.0
      %1192 = vmatpush1.msra.mxu0 0.0
      %1193 = vmatprep.subr.mxu0 0.0
      %1194 = vmatpush1.msra.mxu0 0.0
      %1195 = vmatprep.subr.mxu0 0.0
      %1196 = vmatpush1.msra.mxu0 0.0
      %1197 = vmatprep.subr.mxu0 0.0
      %1198 = vmatpush1.msra.mxu0 0.0
      %1199 = vmatprep.subr.mxu0 0.0
      %1200 = vmatpush1.msra.mxu0 0.0
      %1201 = vmatprep.subr.mxu0 0.0
      %1202 = vmatpush1.msra.mxu0 0.0
      %1203 = vmatprep.subr.mxu0 0.0
      %1204 = vmatpush1.msra.mxu0 0.0
      %1205 = vmatprep.mubr.f32.mxu0 0.0
      %1206 = vmatmul.mubr.f32.gmra.mrb[0].mxu0 %v1139
      %v1207 = vpop.f32.mrb[0].mxu0
      %v1208 = vadd.f32 %v918, %v1207
      %v1209 = vpop.f32.mrb[0].mxu0
      %1210 = vdwg.mxu0
      %v1211 = vadd.f32 %v1138, %v1208
      %v1212 = vxor.u32 %v1211, 2147483648
      %v1213 = vmul.f32 %v1212, 1.442695
      %v1214 = vpow.pop %v1213
      %v1215 = vadd.f32 %v1214, 1.0
      %v1216 = vrcp.pop %v1215
      %v1217 = vmul.f32 1.0, %v1216
      %1219 = vrot.lane.b32.xlu0 %v1208, 64
      %v1220 = vpop.permute.xlu0 %1219
      %v1222 = vmul.f32 %v1217, %v1220
      %1224 = vrot.lane.b32.xlu0 %v1222, 64
      %v1225 = vpop.permute.xlu0 %1224
      %v1227 = vadd.f32 %v1138, %v1225
      %v1228 = vtanh.pop %v1227
      %v1229 = vsub.f32 1.0, %v1217
      %1231 = vrot.lane.b32.xlu0 %v1228, 96
      %v1232 = vpop.permute.xlu0 %1231
      %v1234 = vmul.f32 %v1229, %v1232
      %v1235 = vmul.f32 %v1217, %v1128
      %v1236 = vadd.f32 %v1234, %v1235
      %1238 = vrot.lane.b32.xlu0 %v1236, 96
      %v1239 = vpop.permute.xlu0 %1238
      %s1241 = scalar_lea.vmem [#allocation3], %s1136
      %1242 = vst.msk [vmem:[%s1241] sm:$0x3] %vm1025, %v1239
      %s1243 = scalar_select %p909, 3, 4
      %s1244 = smul.u32 %s1243, 2
      %s1245 = scalar_lea.vmem [#allocation2], %s1244
      %v1246 = vld [vmem:[%s1245] sm:$0x3]
      %v1247 = vsel %vm920, %v1239, 0
      %1249 = vmatprep.subr.mxu0 0.0
      %1250 = vmatpush1.msra.mxu0 %v281
      %1251 = vmatprep.subr.mxu0 0.0
      %1252 = vmatpush1.msra.mxu0 %v282
      %1253 = vmatprep.subr.mxu0 0.0
      %1254 = vmatpush1.msra.mxu0 %v283
      %1255 = vmatprep.subr.mxu0 0.0
      %1256 = vmatpush1.msra.mxu0 %v284
      %1257 = vmatprep.subr.mxu0 0.0
      %1258 = vmatpush1.msra.mxu0 0.0
      %1259 = vmatprep.subr.mxu0 0.0
      %1260 = vmatpush1.msra.mxu0 0.0
      %1261 = vmatprep.subr.mxu0 0.0
      %1262 = vmatpush1.msra.mxu0 0.0
      %1263 = vmatprep.subr.mxu0 0.0
      %1264 = vmatpush1.msra.mxu0 0.0
      %1265 = vmatprep.subr.mxu0 0.0
      %1266 = vmatpush1.msra.mxu0 0.0
      %1267 = vmatprep.subr.mxu0 0.0
      %1268 = vmatpush1.msra.mxu0 0.0
      %1269 = vmatprep.subr.mxu0 0.0
      %1270 = vmatpush1.msra.mxu0 0.0
      %1271 = vmatprep.subr.mxu0 0.0
      %1272 = vmatpush1.msra.mxu0 0.0
      %1273 = vmatprep.subr.mxu0 0.0
      %1274 = vmatpush1.msra.mxu0 0.0
      %1275 = vmatprep.subr.mxu0 0.0
      %1276 = vmatpush1.msra.mxu0 0.0
      %1277 = vmatprep.subr.mxu0 0.0
      %1278 = vmatpush1.msra.mxu0 0.0
      %1279 = vmatprep.subr.mxu0 0.0
      %1280 = vmatpush1.msra.mxu0 0.0
      %1281 = vmatprep.subr.mxu0 0.0
      %1282 = vmatpush1.msra.mxu0 0.0
      %1283 = vmatprep.subr.mxu0 0.0
      %1284 = vmatpush1.msra.mxu0 0.0
      %1285 = vmatprep.subr.mxu0 0.0
      %1286 = vmatpush1.msra.mxu0 0.0
      %1287 = vmatprep.subr.mxu0 0.0
      %1288 = vmatpush1.msra.mxu0 0.0
      %1289 = vmatprep.subr.mxu0 0.0
      %1290 = vmatpush1.msra.mxu0 0.0
      %1291 = vmatprep.subr.mxu0 0.0
      %1292 = vmatpush1.msra.mxu0 0.0
      %1293 = vmatprep.subr.mxu0 0.0
      %1294 = vmatpush1.msra.mxu0 0.0
      %1295 = vmatprep.subr.mxu0 0.0
      %1296 = vmatpush1.msra.mxu0 0.0
      %1297 = vmatprep.subr.mxu0 0.0
      %1298 = vmatpush1.msra.mxu0 0.0
      %1299 = vmatprep.subr.mxu0 0.0
      %1300 = vmatpush1.msra.mxu0 0.0
      %1301 = vmatprep.subr.mxu0 0.0
      %1302 = vmatpush1.msra.mxu0 0.0
      %1303 = vmatprep.subr.mxu0 0.0
      %1304 = vmatpush1.msra.mxu0 0.0
      %1305 = vmatprep.subr.mxu0 0.0
      %1306 = vmatpush1.msra.mxu0 0.0
      %1307 = vmatprep.subr.mxu0 0.0
      %1308 = vmatpush1.msra.mxu0 0.0
      %1309 = vmatprep.subr.mxu0 0.0
      %1310 = vmatpush1.msra.mxu0 0.0
      %1311 = vmatprep.subr.mxu0 0.0
      %1312 = vmatpush1.msra.mxu0 0.0
      %1313 = vmatprep.mubr.f32.mxu0 0.0
      %1314 = vmatmul.mubr.f32.gmra.mrb[0].mxu0 %v1247
      %v1315 = vpop.f32.mrb[0].mxu0
      %v1316 = vadd.f32 %v918, %v1315
      %v1317 = vpop.f32.mrb[0].mxu0
      %1318 = vdwg.mxu0
      %v1319 = vadd.f32 %v1246, %v1316
      %v1320 = vxor.u32 %v1319, 2147483648
      %v1321 = vmul.f32 %v1320, 1.442695
      %v1322 = vpow.pop %v1321
      %v1323 = vadd.f32 %v1322, 1.0
      %v1324 = vrcp.pop %v1323
      %v1325 = vmul.f32 1.0, %v1324
      %1327 = vrot.lane.b32.xlu0 %v1316, 64
      %v1328 = vpop.permute.xlu0 %1327
      %v1330 = vmul.f32 %v1325, %v1328
      %1332 = vrot.lane.b32.xlu0 %v1330, 64
      %v1333 = vpop.permute.xlu0 %1332
      %v1335 = vadd.f32 %v1246, %v1333
      %v1336 = vtanh.pop %v1335
      %v1337 = vsub.f32 1.0, %v1325
      %1339 = vrot.lane.b32.xlu0 %v1336, 96
      %v1340 = vpop.permute.xlu0 %1339
      %v1342 = vmul.f32 %v1337, %v1340
      %v1343 = vmul.f32 %v1325, %v1236
      %v1344 = vadd.f32 %v1342, %v1343
      %1346 = vrot.lane.b32.xlu0 %v1344, 96
      %v1347 = vpop.permute.xlu0 %1346
      %s1349 = scalar_lea.vmem [#allocation3], %s1244
      %1350 = vst.msk [vmem:[%s1349] sm:$0x3] %vm1025, %v1347
      %s1351 = scalar_select %p909, 4, 3
      %s1352 = smul.u32 %s1351, 2
      %s1353 = scalar_lea.vmem [#allocation2], %s1352
      %v1354 = vld [vmem:[%s1353] sm:$0x3]
      %v1355 = vsel %vm920, %v1347, 0
      %1357 = vmatprep.subr.mxu0 0.0
      %1358 = vmatpush1.msra.mxu0 %v281
      %1359 = vmatprep.subr.mxu0 0.0
      %1360 = vmatpush1.msra.mxu0 %v282
      %1361 = vmatprep.subr.mxu0 0.0
      %1362 = vmatpush1.msra.mxu0 %v283
      %1363 = vmatprep.subr.mxu0 0.0
      %1364 = vmatpush1.msra.mxu0 %v284
      %1365 = vmatprep.subr.mxu0 0.0
      %1366 = vmatpush1.msra.mxu0 0.0
      %1367 = vmatprep.subr.mxu0 0.0
      %1368 = vmatpush1.msra.mxu0 0.0
      %1369 = vmatprep.subr.mxu0 0.0
      %1370 = vmatpush1.msra.mxu0 0.0
      %1371 = vmatprep.subr.mxu0 0.0
      %1372 = vmatpush1.msra.mxu0 0.0
      %1373 = vmatprep.subr.mxu0 0.0
      %1374 = vmatpush1.msra.mxu0 0.0
      %1375 = vmatprep.subr.mxu0 0.0
      %1376 = vmatpush1.msra.mxu0 0.0
      %1377 = vmatprep.subr.mxu0 0.0
      %1378 = vmatpush1.msra.mxu0 0.0
      %1379 = vmatprep.subr.mxu0 0.0
      %1380 = vmatpush1.msra.mxu0 0.0
      %1381 = vmatprep.subr.mxu0 0.0
      %1382 = vmatpush1.msra.mxu0 0.0
      %1383 = vmatprep.subr.mxu0 0.0
      %1384 = vmatpush1.msra.mxu0 0.0
      %1385 = vmatprep.subr.mxu0 0.0
      %1386 = vmatpush1.msra.mxu0 0.0
      %1387 = vmatprep.subr.mxu0 0.0
      %1388 = vmatpush1.msra.mxu0 0.0
      %1389 = vmatprep.subr.mxu0 0.0
      %1390 = vmatpush1.msra.mxu0 0.0
      %1391 = vmatprep.subr.mxu0 0.0
      %1392 = vmatpush1.msra.mxu0 0.0
      %1393 = vmatprep.subr.mxu0 0.0
      %1394 = vmatpush1.msra.mxu0 0.0
      %1395 = vmatprep.subr.mxu0 0.0
      %1396 = vmatpush1.msra.mxu0 0.0
      %1397 = vmatprep.subr.mxu0 0.0
      %1398 = vmatpush1.msra.mxu0 0.0
      %1399 = vmatprep.subr.mxu0 0.0
      %1400 = vmatpush1.msra.mxu0 0.0
      %1401 = vmatprep.subr.mxu0 0.0
      %1402 = vmatpush1.msra.mxu0 0.0
      %1403 = vmatprep.subr.mxu0 0.0
      %1404 = vmatpush1.msra.mxu0 0.0
      %1405 = vmatprep.subr.mxu0 0.0
      %1406 = vmatpush1.msra.mxu0 0.0
      %1407 = vmatprep.subr.mxu0 0.0
      %1408 = vmatpush1.msra.mxu0 0.0
      %1409 = vmatprep.subr.mxu0 0.0
      %1410 = vmatpush1.msra.mxu0 0.0
      %1411 = vmatprep.subr.mxu0 0.0
      %1412 = vmatpush1.msra.mxu0 0.0
      %1413 = vmatprep.subr.mxu0 0.0
      %1414 = vmatpush1.msra.mxu0 0.0
      %1415 = vmatprep.subr.mxu0 0.0
      %1416 = vmatpush1.msra.mxu0 0.0
      %1417 = vmatprep.subr.mxu0 0.0
      %1418 = vmatpush1.msra.mxu0 0.0
      %1419 = vmatprep.subr.mxu0 0.0
      %1420 = vmatpush1.msra.mxu0 0.0
      %1421 = vmatprep.mubr.f32.mxu0 0.0
      %1422 = vmatmul.mubr.f32.gmra.mrb[0].mxu0 %v1355
      %v1423 = vpop.f32.mrb[0].mxu0
      %v1424 = vadd.f32 %v918, %v1423
      %v1425 = vpop.f32.mrb[0].mxu0
      %1426 = vdwg.mxu0
      %v1427 = vadd.f32 %v1354, %v1424
      %v1428 = vxor.u32 %v1427, 2147483648
      %v1429 = vmul.f32 %v1428, 1.442695
      %v1430 = vpow.pop %v1429
      %v1431 = vadd.f32 %v1430, 1.0
      %v1432 = vrcp.pop %v1431
      %v1433 = vmul.f32 1.0, %v1432
      %1435 = vrot.lane.b32.xlu0 %v1424, 64
      %v1436 = vpop.permute.xlu0 %1435
      %v1438 = vmul.f32 %v1433, %v1436
      %1440 = vrot.lane.b32.xlu0 %v1438, 64
      %v1441 = vpop.permute.xlu0 %1440
      %v1443 = vadd.f32 %v1354, %v1441
      %v1444 = vtanh.pop %v1443
      %v1445 = vsub.f32 1.0, %v1433
      %1447 = vrot.lane.b32.xlu0 %v1444, 96
      %v1448 = vpop.permute.xlu0 %1447
      %v1450 = vmul.f32 %v1445, %v1448
      %v1451 = vmul.f32 %v1433, %v1344
      %v1452 = vadd.f32 %v1450, %v1451
      %1454 = vrot.lane.b32.xlu0 %v1452, 96
      %v1455 = vpop.permute.xlu0 %1454
      %s1457 = scalar_lea.vmem [#allocation3], %s1352
      %1458 = vst.msk [vmem:[%s1457] sm:$0x3] %vm1025, %v1455
      %s1459 = scalar_select %p909, 5, 2
      %s1460 = smul.u32 %s1459, 2
      %s1461 = scalar_lea.vmem [#allocation2], %s1460
      %v1462 = vld [vmem:[%s1461] sm:$0x3]
      %v1463 = vsel %vm920, %v1455, 0
      %1465 = vmatprep.subr.mxu0 0.0
      %1466 = vmatpush1.msra.mxu0 %v281
      %1467 = vmatprep.subr.mxu0 0.0
      %1468 = vmatpush1.msra.mxu0 %v282
      %1469 = vmatprep.subr.mxu0 0.0
      %1470 = vmatpush1.msra.mxu0 %v283
      %1471 = vmatprep.subr.mxu0 0.0
      %1472 = vmatpush1.msra.mxu0 %v284
      %1473 = vmatprep.subr.mxu0 0.0
      %1474 = vmatpush1.msra.mxu0 0.0
      %1475 = vmatprep.subr.mxu0 0.0
      %1476 = vmatpush1.msra.mxu0 0.0
      %1477 = vmatprep.subr.mxu0 0.0
      %1478 = vmatpush1.msra.mxu0 0.0
      %1479 = vmatprep.subr.mxu0 0.0
      %1480 = vmatpush1.msra.mxu0 0.0
      %1481 = vmatprep.subr.mxu0 0.0
      %1482 = vmatpush1.msra.mxu0 0.0
      %1483 = vmatprep.subr.mxu0 0.0
      %1484 = vmatpush1.msra.mxu0 0.0
      %1485 = vmatprep.subr.mxu0 0.0
      %1486 = vmatpush1.msra.mxu0 0.0
      %1487 = vmatprep.subr.mxu0 0.0
      %1488 = vmatpush1.msra.mxu0 0.0
      %1489 = vmatprep.subr.mxu0 0.0
      %1490 = vmatpush1.msra.mxu0 0.0
      %1491 = vmatprep.subr.mxu0 0.0
      %1492 = vmatpush1.msra.mxu0 0.0
      %1493 = vmatprep.subr.mxu0 0.0
      %1494 = vmatpush1.msra.mxu0 0.0
      %1495 = vmatprep.subr.mxu0 0.0
      %1496 = vmatpush1.msra.mxu0 0.0
      %1497 = vmatprep.subr.mxu0 0.0
      %1498 = vmatpush1.msra.mxu0 0.0
      %1499 = vmatprep.subr.mxu0 0.0
      %1500 = vmatpush1.msra.mxu0 0.0
      %1501 = vmatprep.subr.mxu0 0.0
      %1502 = vmatpush1.msra.mxu0 0.0
      %1503 = vmatprep.subr.mxu0 0.0
      %1504 = vmatpush1.msra.mxu0 0.0
      %1505 = vmatprep.subr.mxu0 0.0
      %1506 = vmatpush1.msra.mxu0 0.0
      %1507 = vmatprep.subr.mxu0 0.0
      %1508 = vmatpush1.msra.mxu0 0.0
      %1509 = vmatprep.subr.mxu0 0.0
      %1510 = vmatpush1.msra.mxu0 0.0
      %1511 = vmatprep.subr.mxu0 0.0
      %1512 = vmatpush1.msra.mxu0 0.0
      %1513 = vmatprep.subr.mxu0 0.0
      %1514 = vmatpush1.msra.mxu0 0.0
      %1515 = vmatprep.subr.mxu0 0.0
      %1516 = vmatpush1.msra.mxu0 0.0
      %1517 = vmatprep.subr.mxu0 0.0
      %1518 = vmatpush1.msra.mxu0 0.0
      %1519 = vmatprep.subr.mxu0 0.0
      %1520 = vmatpush1.msra.mxu0 0.0
      %1521 = vmatprep.subr.mxu0 0.0
      %1522 = vmatpush1.msra.mxu0 0.0
      %1523 = vmatprep.subr.mxu0 0.0
      %1524 = vmatpush1.msra.mxu0 0.0
      %1525 = vmatprep.subr.mxu0 0.0
      %1526 = vmatpush1.msra.mxu0 0.0
      %1527 = vmatprep.subr.mxu0 0.0
      %1528 = vmatpush1.msra.mxu0 0.0
      %1529 = vmatprep.mubr.f32.mxu0 0.0
      %1530 = vmatmul.mubr.f32.gmra.mrb[0].mxu0 %v1463
      %v1531 = vpop.f32.mrb[0].mxu0
      %v1532 = vadd.f32 %v918, %v1531
      %v1533 = vpop.f32.mrb[0].mxu0
      %1534 = vdwg.mxu0
      %v1535 = vadd.f32 %v1462, %v1532
      %v1536 = vxor.u32 %v1535, 2147483648
      %v1537 = vmul.f32 %v1536, 1.442695
      %v1538 = vpow.pop %v1537
      %v1539 = vadd.f32 %v1538, 1.0
      %v1540 = vrcp.pop %v1539
      %v1541 = vmul.f32 1.0, %v1540
      %1543 = vrot.lane.b32.xlu0 %v1532, 64
      %v1544 = vpop.permute.xlu0 %1543
      %v1546 = vmul.f32 %v1541, %v1544
      %1548 = vrot.lane.b32.xlu0 %v1546, 64
      %v1549 = vpop.permute.xlu0 %1548
      %v1551 = vadd.f32 %v1462, %v1549
      %v1552 = vtanh.pop %v1551
      %v1553 = vsub.f32 1.0, %v1541
      %1555 = vrot.lane.b32.xlu0 %v1552, 96
      %v1556 = vpop.permute.xlu0 %1555
      %v1558 = vmul.f32 %v1553, %v1556
      %v1559 = vmul.f32 %v1541, %v1452
      %v1560 = vadd.f32 %v1558, %v1559
      %1562 = vrot.lane.b32.xlu0 %v1560, 96
      %v1563 = vpop.permute.xlu0 %1562
      %s1565 = scalar_lea.vmem [#allocation3], %s1460
      %1566 = vst.msk [vmem:[%s1565] sm:$0x3] %vm1025, %v1563
      %s1567 = scalar_select %p909, 6, 1
      %s1568 = smul.u32 %s1567, 2
      %s1569 = scalar_lea.vmem [#allocation2], %s1568
      %v1570 = vld [vmem:[%s1569] sm:$0x3]
      %v1571 = vsel %vm920, %v1563, 0
      %1573 = vmatprep.subr.mxu0 0.0
      %1574 = vmatpush1.msra.mxu0 %v281
      %1575 = vmatprep.subr.mxu0 0.0
      %1576 = vmatpush1.msra.mxu0 %v282
      %1577 = vmatprep.subr.mxu0 0.0
      %1578 = vmatpush1.msra.mxu0 %v283
      %1579 = vmatprep.subr.mxu0 0.0
      %1580 = vmatpush1.msra.mxu0 %v284
      %1581 = vmatprep.subr.mxu0 0.0
      %1582 = vmatpush1.msra.mxu0 0.0
      %1583 = vmatprep.subr.mxu0 0.0
      %1584 = vmatpush1.msra.mxu0 0.0
      %1585 = vmatprep.subr.mxu0 0.0
      %1586 = vmatpush1.msra.mxu0 0.0
      %1587 = vmatprep.subr.mxu0 0.0
      %1588 = vmatpush1.msra.mxu0 0.0
      %1589 = vmatprep.subr.mxu0 0.0
      %1590 = vmatpush1.msra.mxu0 0.0
      %1591 = vmatprep.subr.mxu0 0.0
      %1592 = vmatpush1.msra.mxu0 0.0
      %1593 = vmatprep.subr.mxu0 0.0
      %1594 = vmatpush1.msra.mxu0 0.0
      %1595 = vmatprep.subr.mxu0 0.0
      %1596 = vmatpush1.msra.mxu0 0.0
      %1597 = vmatprep.subr.mxu0 0.0
      %1598 = vmatpush1.msra.mxu0 0.0
      %1599 = vmatprep.subr.mxu0 0.0
      %1600 = vmatpush1.msra.mxu0 0.0
      %1601 = vmatprep.subr.mxu0 0.0
      %1602 = vmatpush1.msra.mxu0 0.0
      %1603 = vmatprep.subr.mxu0 0.0
      %1604 = vmatpush1.msra.mxu0 0.0
      %1605 = vmatprep.subr.mxu0 0.0
      %1606 = vmatpush1.msra.mxu0 0.0
      %1607 = vmatprep.subr.mxu0 0.0
      %1608 = vmatpush1.msra.mxu0 0.0
      %1609 = vmatprep.subr.mxu0 0.0
      %1610 = vmatpush1.msra.mxu0 0.0
      %1611 = vmatprep.subr.mxu0 0.0
      %1612 = vmatpush1.msra.mxu0 0.0
      %1613 = vmatprep.subr.mxu0 0.0
      %1614 = vmatpush1.msra.mxu0 0.0
      %1615 = vmatprep.subr.mxu0 0.0
      %1616 = vmatpush1.msra.mxu0 0.0
      %1617 = vmatprep.subr.mxu0 0.0
      %1618 = vmatpush1.msra.mxu0 0.0
      %1619 = vmatprep.subr.mxu0 0.0
      %1620 = vmatpush1.msra.mxu0 0.0
      %1621 = vmatprep.subr.mxu0 0.0
      %1622 = vmatpush1.msra.mxu0 0.0
      %1623 = vmatprep.subr.mxu0 0.0
      %1624 = vmatpush1.msra.mxu0 0.0
      %1625 = vmatprep.subr.mxu0 0.0
      %1626 = vmatpush1.msra.mxu0 0.0
      %1627 = vmatprep.subr.mxu0 0.0
      %1628 = vmatpush1.msra.mxu0 0.0
      %1629 = vmatprep.subr.mxu0 0.0
      %1630 = vmatpush1.msra.mxu0 0.0
      %1631 = vmatprep.subr.mxu0 0.0
      %1632 = vmatpush1.msra.mxu0 0.0
      %1633 = vmatprep.subr.mxu0 0.0
      %1634 = vmatpush1.msra.mxu0 0.0
      %1635 = vmatprep.subr.mxu0 0.0
      %1636 = vmatpush1.msra.mxu0 0.0
      %1637 = vmatprep.mubr.f32.mxu0 0.0
      %1638 = vmatmul.mubr.f32.gmra.mrb[0].mxu0 %v1571
      %v1639 = vpop.f32.mrb[0].mxu0
      %v1640 = vadd.f32 %v918, %v1639
      %v1641 = vpop.f32.mrb[0].mxu0
      %1642 = vdwg.mxu0
      %v1643 = vadd.f32 %v1570, %v1640
      %v1644 = vxor.u32 %v1643, 2147483648
      %v1645 = vmul.f32 %v1644, 1.442695
      %v1646 = vpow.pop %v1645
      %v1647 = vadd.f32 %v1646, 1.0
      %v1648 = vrcp.pop %v1647
      %v1649 = vmul.f32 1.0, %v1648
      %1651 = vrot.lane.b32.xlu0 %v1640, 64
      %v1652 = vpop.permute.xlu0 %1651
      %v1654 = vmul.f32 %v1649, %v1652
      %1656 = vrot.lane.b32.xlu0 %v1654, 64
      %v1657 = vpop.permute.xlu0 %1656
      %v1659 = vadd.f32 %v1570, %v1657
      %v1660 = vtanh.pop %v1659
      %v1661 = vsub.f32 1.0, %v1649
      %1663 = vrot.lane.b32.xlu0 %v1660, 96
      %v1664 = vpop.permute.xlu0 %1663
      %v1666 = vmul.f32 %v1661, %v1664
      %v1667 = vmul.f32 %v1649, %v1560
      %v1668 = vadd.f32 %v1666, %v1667
      %1670 = vrot.lane.b32.xlu0 %v1668, 96
      %v1671 = vpop.permute.xlu0 %1670
      %s1673 = scalar_lea.vmem [#allocation3], %s1568
      %1674 = vst.msk [vmem:[%s1673] sm:$0x3] %vm1025, %v1671
      %s1675 = scalar_select %p909, 7, 0
      %s1676 = smul.u32 %s1675, 2
      %s1677 = scalar_lea.vmem [#allocation2], %s1676
      %v1678 = vld [vmem:[%s1677] sm:$0x3]
      %v1679 = vsel %vm920, %v1671, 0
      %1681 = vmatprep.subr.mxu0 0.0
      %1682 = vmatpush1.msra.mxu0 %v281
      %1683 = vmatprep.subr.mxu0 0.0
      %1684 = vmatpush1.msra.mxu0 %v282
      %1685 = vmatprep.subr.mxu0 0.0
      %1686 = vmatpush1.msra.mxu0 %v283
      %1687 = vmatprep.subr.mxu0 0.0
      %1688 = vmatpush1.msra.mxu0 %v284
      %1689 = vmatprep.subr.mxu0 0.0
      %1690 = vmatpush1.msra.mxu0 0.0
      %1691 = vmatprep.subr.mxu0 0.0
      %1692 = vmatpush1.msra.mxu0 0.0
      %1693 = vmatprep.subr.mxu0 0.0
      %1694 = vmatpush1.msra.mxu0 0.0
      %1695 = vmatprep.subr.mxu0 0.0
      %1696 = vmatpush1.msra.mxu0 0.0
      %1697 = vmatprep.subr.mxu0 0.0
      %1698 = vmatpush1.msra.mxu0 0.0
      %1699 = vmatprep.subr.mxu0 0.0
      %1700 = vmatpush1.msra.mxu0 0.0
      %1701 = vmatprep.subr.mxu0 0.0
      %1702 = vmatpush1.msra.mxu0 0.0
      %1703 = vmatprep.subr.mxu0 0.0
      %1704 = vmatpush1.msra.mxu0 0.0
      %1705 = vmatprep.subr.mxu0 0.0
      %1706 = vmatpush1.msra.mxu0 0.0
      %1707 = vmatprep.subr.mxu0 0.0
      %1708 = vmatpush1.msra.mxu0 0.0
      %1709 = vmatprep.subr.mxu0 0.0
      %1710 = vmatpush1.msra.mxu0 0.0
      %1711 = vmatprep.subr.mxu0 0.0
      %1712 = vmatpush1.msra.mxu0 0.0
      %1713 = vmatprep.subr.mxu0 0.0
      %1714 = vmatpush1.msra.mxu0 0.0
      %1715 = vmatprep.subr.mxu0 0.0
      %1716 = vmatpush1.msra.mxu0 0.0
      %1717 = vmatprep.subr.mxu0 0.0
      %1718 = vmatpush1.msra.mxu0 0.0
      %1719 = vmatprep.subr.mxu0 0.0
      %1720 = vmatpush1.msra.mxu0 0.0
      %1721 = vmatprep.subr.mxu0 0.0
      %1722 = vmatpush1.msra.mxu0 0.0
      %1723 = vmatprep.subr.mxu0 0.0
      %1724 = vmatpush1.msra.mxu0 0.0
      %1725 = vmatprep.subr.mxu0 0.0
      %1726 = vmatpush1.msra.mxu0 0.0
      %1727 = vmatprep.subr.mxu0 0.0
      %1728 = vmatpush1.msra.mxu0 0.0
      %1729 = vmatprep.subr.mxu0 0.0
      %1730 = vmatpush1.msra.mxu0 0.0
      %1731 = vmatprep.subr.mxu0 0.0
      %1732 = vmatpush1.msra.mxu0 0.0
      %1733 = vmatprep.subr.mxu0 0.0
      %1734 = vmatpush1.msra.mxu0 0.0
      %1735 = vmatprep.subr.mxu0 0.0
      %1736 = vmatpush1.msra.mxu0 0.0
      %1737 = vmatprep.subr.mxu0 0.0
      %1738 = vmatpush1.msra.mxu0 0.0
      %1739 = vmatprep.subr.mxu0 0.0
      %1740 = vmatpush1.msra.mxu0 0.0
      %1741 = vmatprep.subr.mxu0 0.0
      %1742 = vmatpush1.msra.mxu0 0.0
      %1743 = vmatprep.subr.mxu0 0.0
      %1744 = vmatpush1.msra.mxu0 0.0
      %1745 = vmatprep.mubr.f32.mxu0 0.0
      %1746 = vmatmul.mubr.f32.gmra.mrb[0].mxu0 %v1679
      %v1747 = vpop.f32.mrb[0].mxu0
      %v1748 = vadd.f32 %v918, %v1747
      %v1749 = vpop.f32.mrb[0].mxu0
      %1750 = vdwg.mxu0
      %v1751 = vadd.f32 %v1678, %v1748
      %v1752 = vxor.u32 %v1751, 2147483648
      %v1753 = vmul.f32 %v1752, 1.442695
      %v1754 = vpow.pop %v1753
      %v1755 = vadd.f32 %v1754, 1.0
      %v1756 = vrcp.pop %v1755
      %v1757 = vmul.f32 1.0, %v1756
      %1759 = vrot.lane.b32.xlu0 %v1748, 64
      %v1760 = vpop.permute.xlu0 %1759
      %v1762 = vmul.f32 %v1757, %v1760
      %1764 = vrot.lane.b32.xlu0 %v1762, 64
      %v1765 = vpop.permute.xlu0 %1764
      %v1767 = vadd.f32 %v1678, %v1765
      %v1768 = vtanh.pop %v1767
      %v1769 = vsub.f32 1.0, %v1757
      %1771 = vrot.lane.b32.xlu0 %v1768, 96
      %v1772 = vpop.permute.xlu0 %1771
      %v1774 = vmul.f32 %v1769, %v1772
      %v1775 = vmul.f32 %v1757, %v1668
      %v1776 = vadd.f32 %v1774, %v1775
      %1778 = vrot.lane.b32.xlu0 %v1776, 96
      %v1779 = vpop.permute.xlu0 %1778
      %s1781 = scalar_lea.vmem [#allocation3], %s1676
      %1782 = vst.msk [vmem:[%s1781] sm:$0x3] %vm1025, %v1779
      %v1783 = vld [vmem:[#allocation3] sm:$0x3]
      %v1784 = vld [vmem:[#allocation3 + $0x2] sm:$0x3]
      %v1785 = vld [vmem:[#allocation3 + $0x4] sm:$0x3]
      %v1786 = vld [vmem:[#allocation3 + $0x6] sm:$0x3]
      %v1787 = vld [vmem:[#allocation3 + $0x8] sm:$0x3]
      %v1788 = vld [vmem:[#allocation3 + $0xa] sm:$0x3]
      %v1789 = vld [vmem:[#allocation3 + $0xc] sm:$0x3]
      %v1790 = vld [vmem:[#allocation3 + $0xe] sm:$0x3]
      %1791 = vst.msk [vmem:[%s272] sm:$0x3] %vm1025, %v1783
      %1792 = vst.msk [vmem:[%s272 + $0x2] sm:$0x3] %vm1025, %v1784
      %1793 = vst.msk [vmem:[%s272 + $0x4] sm:$0x3] %vm1025, %v1785
      %1794 = vst.msk [vmem:[%s272 + $0x6] sm:$0x3] %vm1025, %v1786
      %1795 = vst.msk [vmem:[%s272 + $0x8] sm:$0x3] %vm1025, %v1787
      %1796 = vst.msk [vmem:[%s272 + $0xa] sm:$0x3] %vm1025, %v1788
      %1797 = vst.msk [vmem:[%s272 + $0xc] sm:$0x3] %vm1025, %v1789
      %1798 = vst.msk [vmem:[%s272 + $0xe] sm:$0x3] %vm1025, %v1790
      %p1799 = scmp.lt.s32.totalorder %s16, 1
      %s1800 = scalar_select %p1799, %s16, 1
      %s1801 = smul.addr %s1800, 8
      %s1802 = smul.addr %s1801, 2
      %s1803 = scalar_lea.vmem %s5, %s1802
      // Predicated region
      $region41: #{model_graphrel_forward.5} parent=39 // pred_check
        %p1804 = pneg %p159
      $region42: #{model_graphrel_forward.5} parent=39 // pred_check_branch
        %1806 = sbr.rel (%p1804) target = $region44
      $region43: #{model_graphrel_forward.5} parent=39 // pred_region
        _
      $region44: #{model_graphrel_forward.5} parent=39 // pred_fallthru
        _
    $region40: #{model_graphrel_forward.5} parent=5 // pred_fallthru
      _
    %p1807 = scmp.le.s32.totalorder 2, %s11
    // Predicated region
    $region45: #{model_graphrel_forward.5} parent=5 // pred_check
      %p1808 = pneg %p1807
    $region46: #{model_graphrel_forward.5} parent=5 // pred_check_branch
      %1810 = sbr.rel (%p1808) target = $region48
    $region47: #{model_graphrel_forward.5} parent=5 // pred_region
      %s1811 = ssub.s32 %s11, 2
      // Predicated region
      $region49: #{model_graphrel_forward.5} parent=47 // pred_check
        %p1812 = pneg %p165
      $region50: #{model_graphrel_forward.5} parent=47 // pred_check_branch
        %1814 = sbr.rel (%p1812) target = $region52
      $region51: #{model_graphrel_forward.5} parent=47 // pred_region
        %p1815 = scmp.lt.s32.totalorder %s17, 1
        %s1816 = scalar_select %p1815, %s17, 1
        %s1817 = smul.addr %s1816, 8
        %s1818 = smul.addr %s1817, 2
        %s1819 = scalar_lea.vmem %s5, %s1818
      $region52: #{model_graphrel_forward.5} parent=47 // pred_fallthru
        _
    $region48: #{model_graphrel_forward.5} parent=5 // pred_fallthru
      _
  $region6: #{model_graphrel_forward.5} parent=0 // loop_footer
    %s15 = sadd.s32 1, %s11
  $region7: #{model_graphrel_forward.5} parent=0 // loop_footer_branch
    %10 = sbr.rel target = $region3
  $region8: #{model_graphrel_forward.5} parent=0 // loop_exit
    _

</llo_original>
